<compile_context>
chip_gen: v7x
topology: tpu7x:2x2x1
jax: 0.10.0
libtpu: 0.0.40
codegen_flags: <defaults>
</compile_context>

<pallas_src>
import functools
import jax
import jax.numpy as jnp
from jax.experimental import pallas as pl
from jax.experimental.pallas import tpu as pltpu

_VMEM_LIMIT = 32 * 1024 * 1024  # explicit scoped-VMEM budget (safe on v5e/v6e/v7x)


def _cparams(*sems):
    return pltpu.CompilerParams(dimension_semantics=sems,
                                vmem_limit_bytes=_VMEM_LIMIT)


# ----------------------------------------------------------------------------
# Pallas kernels
# ----------------------------------------------------------------------------

def _matmul_bias_act_kernel(x_ref, w_ref, b_ref, o_ref, *, act):
    y = jnp.dot(x_ref[...], w_ref[...], preferred_element_type=jnp.float32)
    y = y + b_ref[...]
    if act == "relu":
        y = jnp.maximum(y, 0.0)
    elif act == "tanh":
        y = jnp.tanh(y)
    o_ref[...] = y.astype(o_ref.dtype)


def matmul_bias_act(x, w, b, act="none", tm=512):
    """y = act(x @ w + b); x:(M,K), w:(K,N), b:(N,). bf16 MXU feed, f32 accum.
    Tiled over M so DMA double-buffers and per-step VMEM stays bounded."""
    M, K = x.shape
    N = w.shape[1]
    xb = x.astype(jnp.bfloat16)
    wb = w.astype(jnp.bfloat16)
    b2 = b.reshape(1, N).astype(jnp.float32)
    if M <= tm:
        bm, Mp = M, M
    else:
        bm = tm
        Mp = pl.cdiv(M, tm) * tm
        if Mp != M:
            xb = jnp.pad(xb, ((0, Mp - M), (0, 0)))
    out = pl.pallas_call(
        functools.partial(_matmul_bias_act_kernel, act=act),
        out_shape=jax.ShapeDtypeStruct((Mp, N), jnp.float32),
        grid_spec=pl.GridSpec(
            grid=(Mp // bm,),
            in_specs=[pl.BlockSpec((bm, K), lambda i: (i, 0)),
                      pl.BlockSpec((K, N), lambda i: (0, 0)),
                      pl.BlockSpec((1, N), lambda i: (0, 0))],
            out_specs=pl.BlockSpec((bm, N), lambda i: (i, 0)),
        ),
        compiler_params=_cparams("parallel"),
    )(xb, wb, b2)
    return out[:M] if Mp != M else out


def _conv1d_kernel(x_ref, w_ref, b_ref, o_ref, *, K):
    # x: (1, T+K-1, Cin) bf16, w: (K, Cin, Cout) bf16, b: (1, Cout) f32
    T = o_ref.shape[1]
    acc = jnp.dot(x_ref[0, pl.ds(0, T), :], w_ref[0],
                  preferred_element_type=jnp.float32)
    for k in range(1, K):
        acc = acc + jnp.dot(x_ref[0, pl.ds(k, T), :], w_ref[k],
                            preferred_element_type=jnp.float32)
    o_ref[0] = acc + b_ref[...]


def conv1d_bn_relu(x, w, b):
    """Conv1d('same') with kernel-tap accumulation inside the Pallas kernel,
    then BatchNorm (batch stats, gamma=1 beta=0) + ReLU."""
    B, T, Cin = x.shape
    K, _, Cout = w.shape
    pad_l = (K - 1) // 2
    pad_r = K - 1 - pad_l
    xp = jnp.pad(x, ((0, 0), (pad_l, pad_r), (0, 0))).astype(jnp.bfloat16)
    Tp = T + K - 1
    y = pl.pallas_call(
        functools.partial(_conv1d_kernel, K=K),
        out_shape=jax.ShapeDtypeStruct((B, T, Cout), jnp.float32),
        grid_spec=pl.GridSpec(
            grid=(B,),
            in_specs=[pl.BlockSpec((1, Tp, Cin), lambda i: (i, 0, 0)),
                      pl.BlockSpec((K, Cin, Cout), lambda i: (0, 0, 0)),
                      pl.BlockSpec((1, Cout), lambda i: (0, 0))],
            out_specs=pl.BlockSpec((1, T, Cout), lambda i: (i, 0, 0)),
        ),
        compiler_params=_cparams("parallel"),
    )(xp, w.astype(jnp.bfloat16), b.reshape(1, Cout).astype(jnp.float32))
    mean = y.mean(axis=(0, 1), keepdims=True)
    var = y.var(axis=(0, 1), keepdims=True)
    y = (y - mean) * jax.lax.rsqrt(var + 1e-5)
    return jnp.maximum(y, 0.0)


def _warp_kernel(c_ref, i_ref, p_ref, o_ref):
    # c: (g, T_out, 4) f32 bicubic coefficients, i: (g, T_out, 4) int32 taps
    # p: (g, T_in, C) bf16 base prototypes
    g, T_out, _ = c_ref.shape
    T_in = p_ref.shape[1]
    j = jax.lax.broadcasted_iota(jnp.int32, (g, T_out, T_in), 2)
    W = jnp.zeros((g, T_out, T_in), jnp.float32)
    for k in range(4):
        hit = (i_ref[:, :, k:k + 1] == j).astype(jnp.float32)
        W = W + hit * c_ref[:, :, k:k + 1]
    o_ref[...] = jnp.einsum(
        "gij,gjc->gic", W.astype(jnp.bfloat16), p_ref[...],
        preferred_element_type=jnp.float32).astype(o_ref.dtype)


def warp_prototypes(coeffs, taps, protos, group=8):
    """out[b*P + p] = W(b,p) @ protos[p].  The interpolation matrix W is built
    inside the kernel from the 4 bicubic taps (iota compare + scale), so the
    O(BP*T^2) matrix never touches HBM and the base prototypes are fetched
    straight from their (P,T,C) parameter (no (B,P,T,C) broadcast copy)."""
    BP, T, _ = coeffs.shape
    P, _, C = protos.shape
    g = min(group, P)
    while P % g:
        g -= 1
    pb = P // g                       # prototypes blocks per batch
    return pl.pallas_call(
        _warp_kernel,
        out_shape=jax.ShapeDtypeStruct((BP, T, C), jnp.float32),
        grid_spec=pl.GridSpec(
            grid=(BP // g,),
            in_specs=[pl.BlockSpec((g, T, 4), lambda i: (i, 0, 0)),
                      pl.BlockSpec((g, T, 4), lambda i: (i, 0, 0)),
                      pl.BlockSpec((g, T, C), lambda i: (i % pb, 0, 0))],
            out_specs=pl.BlockSpec((g, T, C), lambda i: (i, 0, 0)),
        ),
        compiler_params=_cparams("parallel"),
    )(coeffs.astype(jnp.float32), taps.astype(jnp.int32),
      protos.astype(jnp.bfloat16))


def _dist_kernel(x_ref, p_ref, off_ref, sel_ref, m_ref, d_ref):
    # x: (1,1,TC), p: (1,P,TC), off: (1,P,C), sel: (C,TC), m: (1,1,TC)
    P = p_ref.shape[1]
    off_flat = jnp.dot(off_ref[0], sel_ref[...],
                       preferred_element_type=jnp.float32)        # (P, TC)
    diff = (x_ref[0] - p_ref[0]) - off_flat                        # (P, TC)
    s = diff * diff * m_ref[0]
    d_ref[...] = jnp.sum(s, axis=-1).reshape(1, 1, P)


def masked_sq_distances(x, proto, off, mask):
    """distances[b,p] = sum_{t,c} mask[b,t]*(x[b,t,c]-proto[b,p,t,c]-off[b,p,c])^2.
    (T,C) flattened to a lane-dense T*C trailing axis; only (B,P) distances
    written to HBM."""
    B, P, T, C = proto.shape
    TC = T * C
    x_flat = x.reshape(B, 1, TC).astype(jnp.float32)
    p_flat = proto.reshape(B, P, TC).astype(jnp.float32)
    m_flat = jnp.broadcast_to(mask[:, :, None], (B, T, C)).reshape(B, 1, TC)
    m_flat = m_flat.astype(jnp.float32)
    sel = jnp.tile(jnp.eye(C, dtype=jnp.float32), (1, T))          # (C, TC)
    d = pl.pallas_call(
        _dist_kernel,
        out_shape=jax.ShapeDtypeStruct((B, 1, P), jnp.float32),
        grid_spec=pl.GridSpec(
            grid=(B,),
            in_specs=[pl.BlockSpec((1, 1, TC), lambda b: (b, 0, 0)),
                      pl.BlockSpec((1, P, TC), lambda b: (b, 0, 0)),
                      pl.BlockSpec((1, P, C), lambda b: (b, 0, 0)),
                      pl.BlockSpec((C, TC), lambda b: (0, 0)),
                      pl.BlockSpec((1, 1, TC), lambda b: (b, 0, 0))],
            out_specs=pl.BlockSpec((1, 1, P), lambda b: (b, 0, 0)),
        ),
        compiler_params=_cparams("parallel"),
    )(x_flat, p_flat, off.astype(jnp.float32), sel, m_flat)
    return d[:, 0, :]


# ----------------------------------------------------------------------------
# Encoder (assumed FCNBaseline)
# ----------------------------------------------------------------------------

def encoder_forward(x, enc):
    h = x
    for (w, b) in enc["convs"]:
        h = conv1d_bn_relu(h, w, b)
    feat = h.mean(axis=1)                              # global avg pool (time)
    w, b = enc["head"]
    return matmul_bias_act(feat, w, b, act="none")     # (B, feature_size)


# ----------------------------------------------------------------------------
# TPS grid generator + bicubic tap/coefficient computation
# ----------------------------------------------------------------------------

def tps_precompute(target_cp, T):
    N = target_cp.shape[0]

    def U(d2):
        return jnp.where(d2 == 0.0, 0.0,
                         0.5 * d2 * jnp.log(jnp.where(d2 == 0.0, 1.0, d2)))

    diff = target_cp[:, None, :] - target_cp[None, :, :]
    Kmat = U((diff ** 2).sum(-1))
    Pmat = jnp.concatenate([jnp.ones((N, 1)), target_cp], axis=1)        # (N,3)
    L = jnp.concatenate([
        jnp.concatenate([Kmat, Pmat], axis=1),
        jnp.concatenate([Pmat.T, jnp.zeros((3, 3))], axis=1)], axis=0)   # (N+3,N+3)
    L_inv = jnp.linalg.inv(L)
    # dense target coords: x = 0 (degenerate width axis), y = time in [-1,1]
    y = jnp.linspace(-1.0, 1.0, T)
    coords = jnp.stack([jnp.zeros_like(y), y], axis=1)                   # (T,2)
    dd = coords[:, None, :] - target_cp[None, :, :]
    rep = U((dd ** 2).sum(-1))
    coord_repr = jnp.concatenate([rep, jnp.ones((T, 1)), coords], axis=1)  # (T,N+3)
    return L_inv, coord_repr


def cubic_coeffs_taps(grid_y, T):
    """PyTorch-style bicubic (a=-0.75, align_corners=True, border padding)
    reduced to 1-D along time -> per-output-step 4 tap indices + weights."""
    A = -0.75
    iy = (grid_y + 1.0) * 0.5 * (T - 1)
    i0 = jnp.floor(iy)
    t = iy - i0
    c0 = ((A * (t + 1) - 5 * A) * (t + 1) + 8 * A) * (t + 1) - 4 * A
    c1 = ((A + 2) * t - (A + 3)) * t * t + 1
    c2 = ((A + 2) * (1 - t) - (A + 3)) * (1 - t) * (1 - t) + 1
    c3 = 1.0 - c0 - c1 - c2
    coeffs = jnp.stack([c0, c1, c2, c3], axis=-1)                 # (BP,T,4)
    base = i0.astype(jnp.int32)
    taps = jnp.stack([base - 1, base, base + 1, base + 2], axis=-1)
    taps = jnp.clip(taps, 0, T - 1)                               # border padding
    return coeffs, taps


# ----------------------------------------------------------------------------
# DTI_TS parameters + forward
# ----------------------------------------------------------------------------

def init_params(key, *, input_dim, num_steps, num_prototypes, feature_size,
                amplitude=0.5, h1=32, h2=64):
    ncp = num_steps // 30 - 1
    keys = jax.random.split(key, 8)
    convs = []
    cins = [input_dim, h1, h2]
    couts = [h1, h2, h1]
    ksz = [8, 5, 3]
    for i in range(3):
        w = jax.random.normal(keys[i], (ksz[i], cins[i], couts[i]), jnp.float32) * 0.1
        b = jnp.zeros((couts[i],), jnp.float32)
        convs.append((w, b))
    head = (jax.random.normal(keys[3], (h1, feature_size), jnp.float32) * 0.1,
            jnp.zeros((feature_size,), jnp.float32))
    prototypes = jax.random.normal(keys[4], (num_prototypes, num_steps, input_dim),
                                   jnp.float32)
    # trans / offset predictors are zero-initialized in the PyTorch module
    trans = [(jnp.zeros((feature_size, num_prototypes), jnp.float32),
              jnp.zeros((num_prototypes,), jnp.float32)) for _ in range(ncp)]
    offset = (jnp.zeros((feature_size, num_prototypes * input_dim), jnp.float32),
              jnp.zeros((num_prototypes * input_dim,), jnp.float32))
    n2 = ncp + 2
    lin = jnp.linspace(-1.0, 1.0, n2)
    target_cp = jnp.stack([jnp.concatenate([-jnp.ones(n2), jnp.ones(n2)]),
                           jnp.concatenate([lin, lin])], axis=1)     # (2*(ncp+2), 2)
    L_inv, coord_repr = tps_precompute(target_cp, num_steps)
    return dict(encoder=dict(convs=convs, head=head),
                prototypes=prototypes, trans=trans, offset=offset,
                target_control_points=target_cp, tps_Linv=L_inv,
                tps_repr=coord_repr, num_control_points=ncp,
                amplitude=float(amplitude))


def dti_ts_forward(params, input_seq, label, mask,
                   trans_activ=True, offset_activ=True):
    B, T, C = input_seq.shape
    P = params["prototypes"].shape[0]
    ncp = params["num_control_points"]

    feature = encoder_forward(input_seq, params["encoder"])          # (B, F)
    # (feature is expanded to num_attention identical rows in torch; the split
    #  chunks feature_trans / feature_offset / feature_scale are all == feature)

    if trans_activ and ncp > 0:
        amplitude = params["amplitude"] * 0.5 * 2.0 / (ncp + 1)
        # fused trans predictors: one (B,F)x(F,ncp*P) matmul instead of ncp calls
        w_all = jnp.concatenate([w for (w, _) in params["trans"]], axis=1)
        b_all = jnp.concatenate([b for (_, b) in params["trans"]], axis=0)
        t_all = matmul_bias_act(feature, w_all, b_all, act="tanh") * amplitude
        time_map = t_all.reshape(B, ncp, P).transpose(0, 2, 1).reshape(B * P, ncp)
        time_map = jnp.pad(time_map, ((0, 0), (1, 1)))
        time_map = jnp.stack([jnp.zeros_like(time_map), time_map], axis=2)
        time_map = jnp.concatenate([time_map, time_map], axis=1)     # (BP,N,2)
        source_cp = time_map + params["target_control_points"][None]
        # thin-plate-spline grid (tiny linear algebra -> JAX glue)
        Y = jnp.concatenate([source_cp, jnp.zeros((B * P, 3, 2))], axis=1)
        mapping = jnp.einsum('ij,bjk->bik', params["tps_Linv"], Y)
        grid = jnp.einsum('tj,bjk->btk', params["tps_repr"], mapping)  # (BP,T,2)
        coeffs, taps = cubic_coeffs_taps(grid[..., 1], T)              # (BP,T,4)
        prototypes = warp_prototypes(coeffs, taps,
                                     params["prototypes"]).reshape(B, P, T, C)
    else:
        prototypes = jnp.broadcast_to(params["prototypes"][None], (B, P, T, C))

    if offset_activ:
        w, b = params["offset"]
        off = matmul_bias_act(feature, w, b, act="tanh").reshape(B, P, C)
    else:
        off = jnp.zeros((B, P, C), jnp.float32)

    # lane-dense masked squared distances; no (B,P,T,C) offset-proto writeback
    distances = masked_sq_distances(input_seq, prototypes, off, mask)  # (B,P)

    indices = jnp.argmin(distances, axis=1)                            # (B,)
    # reconstruct output_seq for the selected prototype only (cheap gather+add)
    proto_sel = jnp.take_along_axis(
        prototypes, indices[:, None, None, None], axis=1)[:, 0]        # (B,T,C)
    off_sel = jnp.take_along_axis(off, indices[:, None, None], axis=1)[:, 0]
    output_seq = proto_sel + off_sel[:, None, :]

    return (output_seq, input_seq, distances, indices,
            label.reshape(B), mask.reshape(B, T))


# ----------------------------------------------------------------------------

if __name__ == "__main__":
    key = jax.random.PRNGKey(0)
    B, C, T = 2, 4, 64           # batch, input_dim, num_steps (=> 1 control pt)
    P, F = 8, 32                 # num_prototypes, feature_size
    NUM_CLASSES = 9

    k1, k2, k3, k4 = jax.random.split(key, 4)
    params = init_params(k1, input_dim=C, num_steps=T, num_prototypes=P,
                         feature_size=F)
    input_seq = jax.random.normal(k2, (B, T, C), jnp.float32)
    label = jax.random.randint(k3, (B,), 0, NUM_CLASSES)
    mask = jax.random.bernoulli(k4, 0.9, (B, T)).astype(jnp.float32)

    fwd = jax.jit(lambda x, lab, m: dti_ts_forward(params, x, lab, m))
    outs = fwd(input_seq, label, mask)
    outs = jax.tree_util.tree_map(jax.block_until_ready, outs)

    output_seq, inp, distances, indices, lab, msk = outs
    assert output_seq.shape == (B, T, C)
    assert distances.shape == (B, P)
    assert indices.shape == (B,)
    assert bool(jnp.all(jnp.isfinite(output_seq)))
    assert bool(jnp.all(jnp.isfinite(distances)))
    print("KERNEL_OK")
</pallas_src>

<mosaic_0001>
module attributes {stable_mosaic.version = 11 : i64} {
  func.func @_conv1d_kernel(%arg0: i32, %arg1: memref<1x71x4xbf16, #tpu.memory_space<vmem>>, %arg2: memref<8x4x32xbf16, #tpu.memory_space<vmem>>, %arg3: memref<1x32xf32, #tpu.memory_space<vmem>>, %arg4: memref<1x64x32xf32, #tpu.memory_space<vmem>>) attributes {dimension_semantics = [#tpu.dimension_semantics<parallel>], iteration_bounds = array<i64: 2>, scalar_prefetch = 0 : i64, scratch_operands = 0 : i64, tpu.core_type = #tpu.core_type<tc>, window_params = [{transform_indices = @transform_0, window_bounds = array<i64: 1, 71, 4>}, {pipeline_mode = #tpu.pipeline_mode<synchronous>, transform_indices = @transform_1, window_bounds = array<i64: 8, 4, 32>}, {pipeline_mode = #tpu.pipeline_mode<synchronous>, transform_indices = @transform_2, window_bounds = array<i64: 1, 32>}, {transform_indices = @transform_3, window_bounds = array<i64: 1, 64, 32>}]} {
    %c0 = arith.constant 0 : index
    %c0_0 = arith.constant 0 : index
    %c0_1 = arith.constant 0 : index
    %0 = vector.load %arg1[%c0, %c0_0, %c0_1] : memref<1x71x4xbf16, #tpu.memory_space<vmem>>, vector<1x64x4xbf16>
    %1 = vector.shape_cast %0 : vector<1x64x4xbf16> to vector<64x4xbf16>
    %c0_2 = arith.constant 0 : index
    %c0_3 = arith.constant 0 : index
    %c0_4 = arith.constant 0 : index
    %2 = vector.load %arg2[%c0_2, %c0_3, %c0_4] : memref<8x4x32xbf16, #tpu.memory_space<vmem>>, vector<1x4x32xbf16>
    %3 = vector.shape_cast %2 : vector<1x4x32xbf16> to vector<4x32xbf16>
    %cst = arith.constant dense<0.000000e+00> : vector<64x32xf32>
    %4 = tpu.matmul %1, %3, %cst {dimension_numbers = #tpu.dot_dimension_numbers<[1], [0], [0], [1], [0, 0, 1, 1], [], []>} : vector<64x4xbf16>, vector<4x32xbf16>, vector<64x32xf32> -> vector<64x32xf32>
    %c0_5 = arith.constant 0 : index
    %c1 = arith.constant 1 : index
    %c0_6 = arith.constant 0 : index
    %5 = vector.load %arg1[%c0_5, %c1, %c0_6] : memref<1x71x4xbf16, #tpu.memory_space<vmem>>, vector<1x64x4xbf16>
    %6 = vector.shape_cast %5 : vector<1x64x4xbf16> to vector<64x4xbf16>
    %c1_7 = arith.constant 1 : index
    %c0_8 = arith.constant 0 : index
    %c0_9 = arith.constant 0 : index
    %7 = vector.load %arg2[%c1_7, %c0_8, %c0_9] : memref<8x4x32xbf16, #tpu.memory_space<vmem>>, vector<1x4x32xbf16>
    %8 = vector.shape_cast %7 : vector<1x4x32xbf16> to vector<4x32xbf16>
    %cst_10 = arith.constant dense<0.000000e+00> : vector<64x32xf32>
    %9 = tpu.matmul %6, %8, %cst_10 {dimension_numbers = #tpu.dot_dimension_numbers<[1], [0], [0], [1], [0, 0, 1, 1], [], []>} : vector<64x4xbf16>, vector<4x32xbf16>, vector<64x32xf32> -> vector<64x32xf32>
    %10 = arith.addf %4, %9 : vector<64x32xf32>
    %c0_11 = arith.constant 0 : index
    %c2 = arith.constant 2 : index
    %c0_12 = arith.constant 0 : index
    %11 = vector.load %arg1[%c0_11, %c2, %c0_12] : memref<1x71x4xbf16, #tpu.memory_space<vmem>>, vector<1x64x4xbf16>
    %12 = vector.shape_cast %11 : vector<1x64x4xbf16> to vector<64x4xbf16>
    %c2_13 = arith.constant 2 : index
    %c0_14 = arith.constant 0 : index
    %c0_15 = arith.constant 0 : index
    %13 = vector.load %arg2[%c2_13, %c0_14, %c0_15] : memref<8x4x32xbf16, #tpu.memory_space<vmem>>, vector<1x4x32xbf16>
    %14 = vector.shape_cast %13 : vector<1x4x32xbf16> to vector<4x32xbf16>
    %cst_16 = arith.constant dense<0.000000e+00> : vector<64x32xf32>
    %15 = tpu.matmul %12, %14, %cst_16 {dimension_numbers = #tpu.dot_dimension_numbers<[1], [0], [0], [1], [0, 0, 1, 1], [], []>} : vector<64x4xbf16>, vector<4x32xbf16>, vector<64x32xf32> -> vector<64x32xf32>
    %16 = arith.addf %10, %15 : vector<64x32xf32>
    %c0_17 = arith.constant 0 : index
    %c3 = arith.constant 3 : index
    %c0_18 = arith.constant 0 : index
    %17 = vector.load %arg1[%c0_17, %c3, %c0_18] : memref<1x71x4xbf16, #tpu.memory_space<vmem>>, vector<1x64x4xbf16>
    %18 = vector.shape_cast %17 : vector<1x64x4xbf16> to vector<64x4xbf16>
    %c3_19 = arith.constant 3 : index
    %c0_20 = arith.constant 0 : index
    %c0_21 = arith.constant 0 : index
    %19 = vector.load %arg2[%c3_19, %c0_20, %c0_21] : memref<8x4x32xbf16, #tpu.memory_space<vmem>>, vector<1x4x32xbf16>
    %20 = vector.shape_cast %19 : vector<1x4x32xbf16> to vector<4x32xbf16>
    %cst_22 = arith.constant dense<0.000000e+00> : vector<64x32xf32>
    %21 = tpu.matmul %18, %20, %cst_22 {dimension_numbers = #tpu.dot_dimension_numbers<[1], [0], [0], [1], [0, 0, 1, 1], [], []>} : vector<64x4xbf16>, vector<4x32xbf16>, vector<64x32xf32> -> vector<64x32xf32>
    %22 = arith.addf %16, %21 : vector<64x32xf32>
    %c0_23 = arith.constant 0 : index
    %c4 = arith.constant 4 : index
    %c0_24 = arith.constant 0 : index
    %23 = vector.load %arg1[%c0_23, %c4, %c0_24] : memref<1x71x4xbf16, #tpu.memory_space<vmem>>, vector<1x64x4xbf16>
    %24 = vector.shape_cast %23 : vector<1x64x4xbf16> to vector<64x4xbf16>
    %c4_25 = arith.constant 4 : index
    %c0_26 = arith.constant 0 : index
    %c0_27 = arith.constant 0 : index
    %25 = vector.load %arg2[%c4_25, %c0_26, %c0_27] : memref<8x4x32xbf16, #tpu.memory_space<vmem>>, vector<1x4x32xbf16>
    %26 = vector.shape_cast %25 : vector<1x4x32xbf16> to vector<4x32xbf16>
    %cst_28 = arith.constant dense<0.000000e+00> : vector<64x32xf32>
    %27 = tpu.matmul %24, %26, %cst_28 {dimension_numbers = #tpu.dot_dimension_numbers<[1], [0], [0], [1], [0, 0, 1, 1], [], []>} : vector<64x4xbf16>, vector<4x32xbf16>, vector<64x32xf32> -> vector<64x32xf32>
    %28 = arith.addf %22, %27 : vector<64x32xf32>
    %c0_29 = arith.constant 0 : index
    %c5 = arith.constant 5 : index
    %c0_30 = arith.constant 0 : index
    %29 = vector.load %arg1[%c0_29, %c5, %c0_30] : memref<1x71x4xbf16, #tpu.memory_space<vmem>>, vector<1x64x4xbf16>
    %30 = vector.shape_cast %29 : vector<1x64x4xbf16> to vector<64x4xbf16>
    %c5_31 = arith.constant 5 : index
    %c0_32 = arith.constant 0 : index
    %c0_33 = arith.constant 0 : index
    %31 = vector.load %arg2[%c5_31, %c0_32, %c0_33] : memref<8x4x32xbf16, #tpu.memory_space<vmem>>, vector<1x4x32xbf16>
    %32 = vector.shape_cast %31 : vector<1x4x32xbf16> to vector<4x32xbf16>
    %cst_34 = arith.constant dense<0.000000e+00> : vector<64x32xf32>
    %33 = tpu.matmul %30, %32, %cst_34 {dimension_numbers = #tpu.dot_dimension_numbers<[1], [0], [0], [1], [0, 0, 1, 1], [], []>} : vector<64x4xbf16>, vector<4x32xbf16>, vector<64x32xf32> -> vector<64x32xf32>
    %34 = arith.addf %28, %33 : vector<64x32xf32>
    %c0_35 = arith.constant 0 : index
    %c6 = arith.constant 6 : index
    %c0_36 = arith.constant 0 : index
    %35 = vector.load %arg1[%c0_35, %c6, %c0_36] : memref<1x71x4xbf16, #tpu.memory_space<vmem>>, vector<1x64x4xbf16>
    %36 = vector.shape_cast %35 : vector<1x64x4xbf16> to vector<64x4xbf16>
    %c6_37 = arith.constant 6 : index
    %c0_38 = arith.constant 0 : index
    %c0_39 = arith.constant 0 : index
    %37 = vector.load %arg2[%c6_37, %c0_38, %c0_39] : memref<8x4x32xbf16, #tpu.memory_space<vmem>>, vector<1x4x32xbf16>
    %38 = vector.shape_cast %37 : vector<1x4x32xbf16> to vector<4x32xbf16>
    %cst_40 = arith.constant dense<0.000000e+00> : vector<64x32xf32>
    %39 = tpu.matmul %36, %38, %cst_40 {dimension_numbers = #tpu.dot_dimension_numbers<[1], [0], [0], [1], [0, 0, 1, 1], [], []>} : vector<64x4xbf16>, vector<4x32xbf16>, vector<64x32xf32> -> vector<64x32xf32>
    %40 = arith.addf %34, %39 : vector<64x32xf32>
    %c0_41 = arith.constant 0 : index
    %c7 = arith.constant 7 : index
    %c0_42 = arith.constant 0 : index
    %41 = vector.load %arg1[%c0_41, %c7, %c0_42] : memref<1x71x4xbf16, #tpu.memory_space<vmem>>, vector<1x64x4xbf16>
    %42 = vector.shape_cast %41 : vector<1x64x4xbf16> to vector<64x4xbf16>
    %c7_43 = arith.constant 7 : index
    %c0_44 = arith.constant 0 : index
    %c0_45 = arith.constant 0 : index
    %43 = vector.load %arg2[%c7_43, %c0_44, %c0_45] : memref<8x4x32xbf16, #tpu.memory_space<vmem>>, vector<1x4x32xbf16>
    %44 = vector.shape_cast %43 : vector<1x4x32xbf16> to vector<4x32xbf16>
    %cst_46 = arith.constant dense<0.000000e+00> : vector<64x32xf32>
    %45 = tpu.matmul %42, %44, %cst_46 {dimension_numbers = #tpu.dot_dimension_numbers<[1], [0], [0], [1], [0, 0, 1, 1], [], []>} : vector<64x4xbf16>, vector<4x32xbf16>, vector<64x32xf32> -> vector<64x32xf32>
    %46 = arith.addf %40, %45 : vector<64x32xf32>
    %c0_47 = arith.constant 0 : index
    %c0_48 = arith.constant 0 : index
    %47 = vector.load %arg3[%c0_47, %c0_48] : memref<1x32xf32, #tpu.memory_space<vmem>>, vector<1x32xf32>
    %48 = vector.broadcast %47 : vector<1x32xf32> to vector<64x32xf32>
    %49 = arith.addf %46, %48 : vector<64x32xf32>
    %c0_49 = arith.constant 0 : index
    %c0_50 = arith.constant 0 : index
    %c0_51 = arith.constant 0 : index
    %50 = vector.load %arg4[%c0_49, %c0_50, %c0_51] : memref<1x64x32xf32, #tpu.memory_space<vmem>>, vector<1x64x32xf32>
    %51 = vector.shape_cast %50 : vector<1x64x32xf32> to vector<64x32xf32>
    %52 = vector.shape_cast %49 : vector<64x32xf32> to vector<1x64x32xf32>
    tpu.vector_store %arg4[%c0_49, %c0_50, %c0_51], %52 {strides = array<i32>} : memref<1x64x32xf32, #tpu.memory_space<vmem>>, vector<1x64x32xf32>,
    return
  }
  func.func @transform_0(%arg0: i32) -> (i32, i32, i32) {
    %c0_i32 = arith.constant 0 : i32
    %c0_i32_0 = arith.constant 0 : i32
    %c0_i32_1 = arith.constant 0 : i32
    return %arg0, %c0_i32, %c0_i32_0 : i32, i32, i32
  }
  func.func @transform_1(%arg0: i32) -> (i32, i32, i32) {
    %c0_i32 = arith.constant 0 : i32
    %c0_i32_0 = arith.constant 0 : i32
    %c0_i32_1 = arith.constant 0 : i32
    %c0_i32_2 = arith.constant 0 : i32
    return %c0_i32, %c0_i32_0, %c0_i32_1 : i32, i32, i32
  }
  func.func @transform_2(%arg0: i32) -> (i32, i32) {
    %c0_i32 = arith.constant 0 : i32
    %c0_i32_0 = arith.constant 0 : i32
    %c0_i32_1 = arith.constant 0 : i32
    return %c0_i32, %c0_i32_0 : i32, i32
  }
  func.func @transform_3(%arg0: i32) -> (i32, i32, i32) {
    %c0_i32 = arith.constant 0 : i32
    %c0_i32_0 = arith.constant 0 : i32
    %c0_i32_1 = arith.constant 0 : i32
    return %arg0, %c0_i32, %c0_i32_0 : i32, i32, i32
  }
}

module attributes {stable_mosaic.version = 11 : i64} {
  func.func @_conv1d_kernel(%arg0: i32, %arg1: memref<1x68x32xbf16, #tpu.memory_space<vmem>>, %arg2: memref<5x32x64xbf16, #tpu.memory_space<vmem>>, %arg3: memref<1x64xf32, #tpu.memory_space<vmem>>, %arg4: memref<1x64x64xf32, #tpu.memory_space<vmem>>) attributes {dimension_semantics = [#tpu.dimension_semantics<parallel>], iteration_bounds = array<i64: 2>, scalar_prefetch = 0 : i64, scratch_operands = 0 : i64, tpu.core_type = #tpu.core_type<tc>, window_params = [{transform_indices = @transform_0, window_bounds = array<i64: 1, 68, 32>}, {pipeline_mode = #tpu.pipeline_mode<synchronous>, transform_indices = @transform_1, window_bounds = array<i64: 5, 32, 64>}, {pipeline_mode = #tpu.pipeline_mode<synchronous>, transform_indices = @transform_2, window_bounds = array<i64: 1, 64>}, {transform_indices = @transform_3, window_bounds = array<i64: 1, 64, 64>}]} {
    %c0 = arith.constant 0 : index
    %c0_0 = arith.constant 0 : index
    %c0_1 = arith.constant 0 : index
    %0 = vector.load %arg1[%c0, %c0_0, %c0_1] : memref<1x68x32xbf16, #tpu.memory_space<vmem>>, vector<1x64x32xbf16>
    %1 = vector.shape_cast %0 : vector<1x64x32xbf16> to vector<64x32xbf16>
    %c0_2 = arith.constant 0 : index
    %c0_3 = arith.constant 0 : index
    %c0_4 = arith.constant 0 : index
    %2 = vector.load %arg2[%c0_2, %c0_3, %c0_4] : memref<5x32x64xbf16, #tpu.memory_space<vmem>>, vector<1x32x64xbf16>
    %3 = vector.shape_cast %2 : vector<1x32x64xbf16> to vector<32x64xbf16>
    %cst = arith.constant dense<0.000000e+00> : vector<64x64xf32>
    %4 = tpu.matmul %1, %3, %cst {dimension_numbers = #tpu.dot_dimension_numbers<[1], [0], [0], [1], [0, 0, 1, 1], [], []>} : vector<64x32xbf16>, vector<32x64xbf16>, vector<64x64xf32> -> vector<64x64xf32>
    %c0_5 = arith.constant 0 : index
    %c1 = arith.constant 1 : index
    %c0_6 = arith.constant 0 : index
    %5 = vector.load %arg1[%c0_5, %c1, %c0_6] : memref<1x68x32xbf16, #tpu.memory_space<vmem>>, vector<1x64x32xbf16>
    %6 = vector.shape_cast %5 : vector<1x64x32xbf16> to vector<64x32xbf16>
    %c1_7 = arith.constant 1 : index
    %c0_8 = arith.constant 0 : index
    %c0_9 = arith.constant 0 : index
    %7 = vector.load %arg2[%c1_7, %c0_8, %c0_9] : memref<5x32x64xbf16, #tpu.memory_space<vmem>>, vector<1x32x64xbf16>
    %8 = vector.shape_cast %7 : vector<1x32x64xbf16> to vector<32x64xbf16>
    %cst_10 = arith.constant dense<0.000000e+00> : vector<64x64xf32>
    %9 = tpu.matmul %6, %8, %cst_10 {dimension_numbers = #tpu.dot_dimension_numbers<[1], [0], [0], [1], [0, 0, 1, 1], [], []>} : vector<64x32xbf16>, vector<32x64xbf16>, vector<64x64xf32> -> vector<64x64xf32>
    %10 = arith.addf %4, %9 : vector<64x64xf32>
    %c0_11 = arith.constant 0 : index
    %c2 = arith.constant 2 : index
    %c0_12 = arith.constant 0 : index
    %11 = vector.load %arg1[%c0_11, %c2, %c0_12] : memref<1x68x32xbf16, #tpu.memory_space<vmem>>, vector<1x64x32xbf16>
    %12 = vector.shape_cast %11 : vector<1x64x32xbf16> to vector<64x32xbf16>
    %c2_13 = arith.constant 2 : index
    %c0_14 = arith.constant 0 : index
    %c0_15 = arith.constant 0 : index
    %13 = vector.load %arg2[%c2_13, %c0_14, %c0_15] : memref<5x32x64xbf16, #tpu.memory_space<vmem>>, vector<1x32x64xbf16>
    %14 = vector.shape_cast %13 : vector<1x32x64xbf16> to vector<32x64xbf16>
    %cst_16 = arith.constant dense<0.000000e+00> : vector<64x64xf32>
    %15 = tpu.matmul %12, %14, %cst_16 {dimension_numbers = #tpu.dot_dimension_numbers<[1], [0], [0], [1], [0, 0, 1, 1], [], []>} : vector<64x32xbf16>, vector<32x64xbf16>, vector<64x64xf32> -> vector<64x64xf32>
    %16 = arith.addf %10, %15 : vector<64x64xf32>
    %c0_17 = arith.constant 0 : index
    %c3 = arith.constant 3 : index
    %c0_18 = arith.constant 0 : index
    %17 = vector.load %arg1[%c0_17, %c3, %c0_18] : memref<1x68x32xbf16, #tpu.memory_space<vmem>>, vector<1x64x32xbf16>
    %18 = vector.shape_cast %17 : vector<1x64x32xbf16> to vector<64x32xbf16>
    %c3_19 = arith.constant 3 : index
    %c0_20 = arith.constant 0 : index
    %c0_21 = arith.constant 0 : index
    %19 = vector.load %arg2[%c3_19, %c0_20, %c0_21] : memref<5x32x64xbf16, #tpu.memory_space<vmem>>, vector<1x32x64xbf16>
    %20 = vector.shape_cast %19 : vector<1x32x64xbf16> to vector<32x64xbf16>
    %cst_22 = arith.constant dense<0.000000e+00> : vector<64x64xf32>
    %21 = tpu.matmul %18, %20, %cst_22 {dimension_numbers = #tpu.dot_dimension_numbers<[1], [0], [0], [1], [0, 0, 1, 1], [], []>} : vector<64x32xbf16>, vector<32x64xbf16>, vector<64x64xf32> -> vector<64x64xf32>
    %22 = arith.addf %16, %21 : vector<64x64xf32>
    %c0_23 = arith.constant 0 : index
    %c4 = arith.constant 4 : index
    %c0_24 = arith.constant 0 : index
    %23 = vector.load %arg1[%c0_23, %c4, %c0_24] : memref<1x68x32xbf16, #tpu.memory_space<vmem>>, vector<1x64x32xbf16>
    %24 = vector.shape_cast %23 : vector<1x64x32xbf16> to vector<64x32xbf16>
    %c4_25 = arith.constant 4 : index
    %c0_26 = arith.constant 0 : index
    %c0_27 = arith.constant 0 : index
    %25 = vector.load %arg2[%c4_25, %c0_26, %c0_27] : memref<5x32x64xbf16, #tpu.memory_space<vmem>>, vector<1x32x64xbf16>
    %26 = vector.shape_cast %25 : vector<1x32x64xbf16> to vector<32x64xbf16>
    %cst_28 = arith.constant dense<0.000000e+00> : vector<64x64xf32>
    %27 = tpu.matmul %24, %26, %cst_28 {dimension_numbers = #tpu.dot_dimension_numbers<[1], [0], [0], [1], [0, 0, 1, 1], [], []>} : vector<64x32xbf16>, vector<32x64xbf16>, vector<64x64xf32> -> vector<64x64xf32>
    %28 = arith.addf %22, %27 : vector<64x64xf32>
    %c0_29 = arith.constant 0 : index
    %c0_30 = arith.constant 0 : index
    %29 = vector.load %arg3[%c0_29, %c0_30] : memref<1x64xf32, #tpu.memory_space<vmem>>, vector<1x64xf32>
    %30 = vector.broadcast %29 : vector<1x64xf32> to vector<64x64xf32>
    %31 = arith.addf %28, %30 : vector<64x64xf32>
    %c0_31 = arith.constant 0 : index
    %c0_32 = arith.constant 0 : index
    %c0_33 = arith.constant 0 : index
    %32 = vector.load %arg4[%c0_31, %c0_32, %c0_33] : memref<1x64x64xf32, #tpu.memory_space<vmem>>, vector<1x64x64xf32>
    %33 = vector.shape_cast %32 : vector<1x64x64xf32> to vector<64x64xf32>
    %34 = vector.shape_cast %31 : vector<64x64xf32> to vector<1x64x64xf32>
    tpu.vector_store %arg4[%c0_31, %c0_32, %c0_33], %34 {strides = array<i32>} : memref<1x64x64xf32, #tpu.memory_space<vmem>>, vector<1x64x64xf32>,
    return
  }
  func.func @transform_0(%arg0: i32) -> (i32, i32, i32) {
    %c0_i32 = arith.constant 0 : i32
    %c0_i32_0 = arith.constant 0 : i32
    %c0_i32_1 = arith.constant 0 : i32
    return %arg0, %c0_i32, %c0_i32_0 : i32, i32, i32
  }
  func.func @transform_1(%arg0: i32) -> (i32, i32, i32) {
    %c0_i32 = arith.constant 0 : i32
    %c0_i32_0 = arith.constant 0 : i32
    %c0_i32_1 = arith.constant 0 : i32
    %c0_i32_2 = arith.constant 0 : i32
    return %c0_i32, %c0_i32_0, %c0_i32_1 : i32, i32, i32
  }
  func.func @transform_2(%arg0: i32) -> (i32, i32) {
    %c0_i32 = arith.constant 0 : i32
    %c0_i32_0 = arith.constant 0 : i32
    %c0_i32_1 = arith.constant 0 : i32
    return %c0_i32, %c0_i32_0 : i32, i32
  }
  func.func @transform_3(%arg0: i32) -> (i32, i32, i32) {
    %c0_i32 = arith.constant 0 : i32
    %c0_i32_0 = arith.constant 0 : i32
    %c0_i32_1 = arith.constant 0 : i32
    return %arg0, %c0_i32, %c0_i32_0 : i32, i32, i32
  }
}

module attributes {stable_mosaic.version = 11 : i64} {
  func.func @_conv1d_kernel(%arg0: i32, %arg1: memref<1x66x64xbf16, #tpu.memory_space<vmem>>, %arg2: memref<3x64x32xbf16, #tpu.memory_space<vmem>>, %arg3: memref<1x32xf32, #tpu.memory_space<vmem>>, %arg4: memref<1x64x32xf32, #tpu.memory_space<vmem>>) attributes {dimension_semantics = [#tpu.dimension_semantics<parallel>], iteration_bounds = array<i64: 2>, scalar_prefetch = 0 : i64, scratch_operands = 0 : i64, tpu.core_type = #tpu.core_type<tc>, window_params = [{transform_indices = @transform_0, window_bounds = array<i64: 1, 66, 64>}, {pipeline_mode = #tpu.pipeline_mode<synchronous>, transform_indices = @transform_1, window_bounds = array<i64: 3, 64, 32>}, {pipeline_mode = #tpu.pipeline_mode<synchronous>, transform_indices = @transform_2, window_bounds = array<i64: 1, 32>}, {transform_indices = @transform_3, window_bounds = array<i64: 1, 64, 32>}]} {
    %c0 = arith.constant 0 : index
    %c0_0 = arith.constant 0 : index
    %c0_1 = arith.constant 0 : index
    %0 = vector.load %arg1[%c0, %c0_0, %c0_1] : memref<1x66x64xbf16, #tpu.memory_space<vmem>>, vector<1x64x64xbf16>
    %1 = vector.shape_cast %0 : vector<1x64x64xbf16> to vector<64x64xbf16>
    %c0_2 = arith.constant 0 : index
    %c0_3 = arith.constant 0 : index
    %c0_4 = arith.constant 0 : index
    %2 = vector.load %arg2[%c0_2, %c0_3, %c0_4] : memref<3x64x32xbf16, #tpu.memory_space<vmem>>, vector<1x64x32xbf16>
    %3 = vector.shape_cast %2 : vector<1x64x32xbf16> to vector<64x32xbf16>
    %cst = arith.constant dense<0.000000e+00> : vector<64x32xf32>
    %4 = tpu.matmul %1, %3, %cst {dimension_numbers = #tpu.dot_dimension_numbers<[1], [0], [0], [1], [0, 0, 1, 1], [], []>} : vector<64x64xbf16>, vector<64x32xbf16>, vector<64x32xf32> -> vector<64x32xf32>
    %c0_5 = arith.constant 0 : index
    %c1 = arith.constant 1 : index
    %c0_6 = arith.constant 0 : index
    %5 = vector.load %arg1[%c0_5, %c1, %c0_6] : memref<1x66x64xbf16, #tpu.memory_space<vmem>>, vector<1x64x64xbf16>
    %6 = vector.shape_cast %5 : vector<1x64x64xbf16> to vector<64x64xbf16>
    %c1_7 = arith.constant 1 : index
    %c0_8 = arith.constant 0 : index
    %c0_9 = arith.constant 0 : index
    %7 = vector.load %arg2[%c1_7, %c0_8, %c0_9] : memref<3x64x32xbf16, #tpu.memory_space<vmem>>, vector<1x64x32xbf16>
    %8 = vector.shape_cast %7 : vector<1x64x32xbf16> to vector<64x32xbf16>
    %cst_10 = arith.constant dense<0.000000e+00> : vector<64x32xf32>
    %9 = tpu.matmul %6, %8, %cst_10 {dimension_numbers = #tpu.dot_dimension_numbers<[1], [0], [0], [1], [0, 0, 1, 1], [], []>} : vector<64x64xbf16>, vector<64x32xbf16>, vector<64x32xf32> -> vector<64x32xf32>
    %10 = arith.addf %4, %9 : vector<64x32xf32>
    %c0_11 = arith.constant 0 : index
    %c2 = arith.constant 2 : index
    %c0_12 = arith.constant 0 : index
    %11 = vector.load %arg1[%c0_11, %c2, %c0_12] : memref<1x66x64xbf16, #tpu.memory_space<vmem>>, vector<1x64x64xbf16>
    %12 = vector.shape_cast %11 : vector<1x64x64xbf16> to vector<64x64xbf16>
    %c2_13 = arith.constant 2 : index
    %c0_14 = arith.constant 0 : index
    %c0_15 = arith.constant 0 : index
    %13 = vector.load %arg2[%c2_13, %c0_14, %c0_15] : memref<3x64x32xbf16, #tpu.memory_space<vmem>>, vector<1x64x32xbf16>
    %14 = vector.shape_cast %13 : vector<1x64x32xbf16> to vector<64x32xbf16>
    %cst_16 = arith.constant dense<0.000000e+00> : vector<64x32xf32>
    %15 = tpu.matmul %12, %14, %cst_16 {dimension_numbers = #tpu.dot_dimension_numbers<[1], [0], [0], [1], [0, 0, 1, 1], [], []>} : vector<64x64xbf16>, vector<64x32xbf16>, vector<64x32xf32> -> vector<64x32xf32>
    %16 = arith.addf %10, %15 : vector<64x32xf32>
    %c0_17 = arith.constant 0 : index
    %c0_18 = arith.constant 0 : index
    %17 = vector.load %arg3[%c0_17, %c0_18] : memref<1x32xf32, #tpu.memory_space<vmem>>, vector<1x32xf32>
    %18 = vector.broadcast %17 : vector<1x32xf32> to vector<64x32xf32>
    %19 = arith.addf %16, %18 : vector<64x32xf32>
    %c0_19 = arith.constant 0 : index
    %c0_20 = arith.constant 0 : index
    %c0_21 = arith.constant 0 : index
    %20 = vector.load %arg4[%c0_19, %c0_20, %c0_21] : memref<1x64x32xf32, #tpu.memory_space<vmem>>, vector<1x64x32xf32>
    %21 = vector.shape_cast %20 : vector<1x64x32xf32> to vector<64x32xf32>
    %22 = vector.shape_cast %19 : vector<64x32xf32> to vector<1x64x32xf32>
    tpu.vector_store %arg4[%c0_19, %c0_20, %c0_21], %22 {strides = array<i32>} : memref<1x64x32xf32, #tpu.memory_space<vmem>>, vector<1x64x32xf32>,
    return
  }
  func.func @transform_0(%arg0: i32) -> (i32, i32, i32) {
    %c0_i32 = arith.constant 0 : i32
    %c0_i32_0 = arith.constant 0 : i32
    %c0_i32_1 = arith.constant 0 : i32
    return %arg0, %c0_i32, %c0_i32_0 : i32, i32, i32
  }
  func.func @transform_1(%arg0: i32) -> (i32, i32, i32) {
    %c0_i32 = arith.constant 0 : i32
    %c0_i32_0 = arith.constant 0 : i32
    %c0_i32_1 = arith.constant 0 : i32
    %c0_i32_2 = arith.constant 0 : i32
    return %c0_i32, %c0_i32_0, %c0_i32_1 : i32, i32, i32
  }
  func.func @transform_2(%arg0: i32) -> (i32, i32) {
    %c0_i32 = arith.constant 0 : i32
    %c0_i32_0 = arith.constant 0 : i32
    %c0_i32_1 = arith.constant 0 : i32
    return %c0_i32, %c0_i32_0 : i32, i32
  }
  func.func @transform_3(%arg0: i32) -> (i32, i32, i32) {
    %c0_i32 = arith.constant 0 : i32
    %c0_i32_0 = arith.constant 0 : i32
    %c0_i32_1 = arith.constant 0 : i32
    return %arg0, %c0_i32, %c0_i32_0 : i32, i32, i32
  }
}

module attributes {stable_mosaic.version = 11 : i64} {
  func.func @_matmul_bias_act_kernel(%arg0: i32, %arg1: memref<2x32xbf16, #tpu.memory_space<vmem>>, %arg2: memref<32x32xbf16, #tpu.memory_space<vmem>>, %arg3: memref<1x32xf32, #tpu.memory_space<vmem>>, %arg4: memref<2x32xf32, #tpu.memory_space<vmem>>) attributes {dimension_semantics = [#tpu.dimension_semantics<parallel>], iteration_bounds = array<i64: 1>, scalar_prefetch = 0 : i64, scratch_operands = 0 : i64, tpu.core_type = #tpu.core_type<tc>, window_params = [{transform_indices = @transform_0, window_bounds = array<i64: 2, 32>}, {pipeline_mode = #tpu.pipeline_mode<synchronous>, transform_indices = @transform_1, window_bounds = array<i64: 32, 32>}, {pipeline_mode = #tpu.pipeline_mode<synchronous>, transform_indices = @transform_2, window_bounds = array<i64: 1, 32>}, {transform_indices = @transform_3, window_bounds = array<i64: 2, 32>}]} {
    %c0 = arith.constant 0 : index
    %c0_0 = arith.constant 0 : index
    %0 = vector.load %arg1[%c0, %c0_0] : memref<2x32xbf16, #tpu.memory_space<vmem>>, vector<2x32xbf16>
    %c0_1 = arith.constant 0 : index
    %c0_2 = arith.constant 0 : index
    %1 = vector.load %arg2[%c0_1, %c0_2] : memref<32x32xbf16, #tpu.memory_space<vmem>>, vector<32x32xbf16>
    %cst = arith.constant dense<0.000000e+00> : vector<2x32xf32>
    %2 = tpu.matmul %0, %1, %cst {dimension_numbers = #tpu.dot_dimension_numbers<[1], [0], [0], [1], [0, 0, 1, 1], [], []>} : vector<2x32xbf16>, vector<32x32xbf16>, vector<2x32xf32> -> vector<2x32xf32>
    %c0_3 = arith.constant 0 : index
    %c0_4 = arith.constant 0 : index
    %3 = vector.load %arg3[%c0_3, %c0_4] : memref<1x32xf32, #tpu.memory_space<vmem>>, vector<1x32xf32>
    %4 = vector.broadcast %3 : vector<1x32xf32> to vector<2x32xf32>
    %5 = arith.addf %2, %4 : vector<2x32xf32>
    %c0_5 = arith.constant 0 : index
    %c0_6 = arith.constant 0 : index
    %6 = vector.load %arg4[%c0_5, %c0_6] : memref<2x32xf32, #tpu.memory_space<vmem>>, vector<2x32xf32>
    tpu.vector_store %arg4[%c0_5, %c0_6], %5 {strides = array<i32>} : memref<2x32xf32, #tpu.memory_space<vmem>>, vector<2x32xf32>,
    return
  }
  func.func @transform_0(%arg0: i32) -> (i32, i32) {
    %c0_i32 = arith.constant 0 : i32
    %c0_i32_0 = arith.constant 0 : i32
    return %arg0, %c0_i32 : i32, i32
  }
  func.func @transform_1(%arg0: i32) -> (i32, i32) {
    %c0_i32 = arith.constant 0 : i32
    %c0_i32_0 = arith.constant 0 : i32
    %c0_i32_1 = arith.constant 0 : i32
    return %c0_i32, %c0_i32_0 : i32, i32
  }
  func.func @transform_2(%arg0: i32) -> (i32, i32) {
    %c0_i32 = arith.constant 0 : i32
    %c0_i32_0 = arith.constant 0 : i32
    %c0_i32_1 = arith.constant 0 : i32
    return %c0_i32, %c0_i32_0 : i32, i32
  }
  func.func @transform_3(%arg0: i32) -> (i32, i32) {
    %c0_i32 = arith.constant 0 : i32
    %c0_i32_0 = arith.constant 0 : i32
    return %arg0, %c0_i32 : i32, i32
  }
}

module attributes {stable_mosaic.version = 11 : i64} {
  func.func @_matmul_bias_act_kernel(%arg0: i32, %arg1: memref<2x32xbf16, #tpu.memory_space<vmem>>, %arg2: memref<32x8xbf16, #tpu.memory_space<vmem>>, %arg3: memref<1x8xf32, #tpu.memory_space<vmem>>, %arg4: memref<2x8xf32, #tpu.memory_space<vmem>>) attributes {dimension_semantics = [#tpu.dimension_semantics<parallel>], iteration_bounds = array<i64: 1>, scalar_prefetch = 0 : i64, scratch_operands = 0 : i64, tpu.core_type = #tpu.core_type<tc>, window_params = [{transform_indices = @transform_0, window_bounds = array<i64: 2, 32>}, {pipeline_mode = #tpu.pipeline_mode<synchronous>, transform_indices = @transform_1, window_bounds = array<i64: 32, 8>}, {pipeline_mode = #tpu.pipeline_mode<synchronous>, transform_indices = @transform_2, window_bounds = array<i64: 1, 8>}, {transform_indices = @transform_3, window_bounds = array<i64: 2, 8>}]} {
    %c0 = arith.constant 0 : index
    %c0_0 = arith.constant 0 : index
    %0 = vector.load %arg1[%c0, %c0_0] : memref<2x32xbf16, #tpu.memory_space<vmem>>, vector<2x32xbf16>
    %c0_1 = arith.constant 0 : index
    %c0_2 = arith.constant 0 : index
    %1 = vector.load %arg2[%c0_1, %c0_2] : memref<32x8xbf16, #tpu.memory_space<vmem>>, vector<32x8xbf16>
    %cst = arith.constant dense<0.000000e+00> : vector<2x8xf32>
    %2 = tpu.matmul %0, %1, %cst {dimension_numbers = #tpu.dot_dimension_numbers<[1], [0], [0], [1], [0, 0, 1, 1], [], []>} : vector<2x32xbf16>, vector<32x8xbf16>, vector<2x8xf32> -> vector<2x8xf32>
    %c0_3 = arith.constant 0 : index
    %c0_4 = arith.constant 0 : index
    %3 = vector.load %arg3[%c0_3, %c0_4] : memref<1x8xf32, #tpu.memory_space<vmem>>, vector<1x8xf32>
    %4 = vector.broadcast %3 : vector<1x8xf32> to vector<2x8xf32>
    %5 = arith.addf %2, %4 : vector<2x8xf32>
    %6 = math.tanh %5 : vector<2x8xf32>
    %c0_5 = arith.constant 0 : index
    %c0_6 = arith.constant 0 : index
    %7 = vector.load %arg4[%c0_5, %c0_6] : memref<2x8xf32, #tpu.memory_space<vmem>>, vector<2x8xf32>
    tpu.vector_store %arg4[%c0_5, %c0_6], %6 {strides = array<i32>} : memref<2x8xf32, #tpu.memory_space<vmem>>, vector<2x8xf32>,
    return
  }
  func.func @transform_0(%arg0: i32) -> (i32, i32) {
    %c0_i32 = arith.constant 0 : i32
    %c0_i32_0 = arith.constant 0 : i32
    return %arg0, %c0_i32 : i32, i32
  }
  func.func @transform_1(%arg0: i32) -> (i32, i32) {
    %c0_i32 = arith.constant 0 : i32
    %c0_i32_0 = arith.constant 0 : i32
    %c0_i32_1 = arith.constant 0 : i32
    return %c0_i32, %c0_i32_0 : i32, i32
  }
  func.func @transform_2(%arg0: i32) -> (i32, i32) {
    %c0_i32 = arith.constant 0 : i32
    %c0_i32_0 = arith.constant 0 : i32
    %c0_i32_1 = arith.constant 0 : i32
    return %c0_i32, %c0_i32_0 : i32, i32
  }
  func.func @transform_3(%arg0: i32) -> (i32, i32) {
    %c0_i32 = arith.constant 0 : i32
    %c0_i32_0 = arith.constant 0 : i32
    return %arg0, %c0_i32 : i32, i32
  }
}

module attributes {stable_mosaic.version = 11 : i64} {
  func.func @_warp_kernel(%arg0: i32, %arg1: memref<8x64x4xf32, #tpu.memory_space<vmem>>, %arg2: memref<8x64x4xi32, #tpu.memory_space<vmem>>, %arg3: memref<8x64x4xbf16, #tpu.memory_space<vmem>>, %arg4: memref<8x64x4xf32, #tpu.memory_space<vmem>>) attributes {dimension_semantics = [#tpu.dimension_semantics<parallel>], iteration_bounds = array<i64: 2>, scalar_prefetch = 0 : i64, scratch_operands = 0 : i64, tpu.core_type = #tpu.core_type<tc>, window_params = [{transform_indices = @transform_0, window_bounds = array<i64: 8, 64, 4>}, {transform_indices = @transform_1, window_bounds = array<i64: 8, 64, 4>}, {transform_indices = @transform_2, window_bounds = array<i64: 8, 64, 4>}, {transform_indices = @transform_3, window_bounds = array<i64: 8, 64, 4>}]} {
    %0 = tpu.iota {dimensions = array<i32: 2>} : vector<8x64x64xi32>
    %cst = arith.constant 0.000000e+00 : f32
    %1 = vector.broadcast %cst : f32 to vector<8x64x64xf32>
    %c0 = arith.constant 0 : index
    %c0_0 = arith.constant 0 : index
    %c0_1 = arith.constant 0 : index
    %2 = vector.load %arg2[%c0, %c0_0, %c0_1] : memref<8x64x4xi32, #tpu.memory_space<vmem>>, vector<8x64x1xi32>
    %3 = vector.broadcast %2 : vector<8x64x1xi32> to vector<8x64x64xi32>
    %4 = arith.cmpi eq, %3, %0 : vector<8x64x64xi32>
    %5 = arith.extui %4 : vector<8x64x64xi1> to vector<8x64x64xi32>
    %6 = arith.sitofp %5 : vector<8x64x64xi32> to vector<8x64x64xf32>
    %c0_2 = arith.constant 0 : index
    %c0_3 = arith.constant 0 : index
    %c0_4 = arith.constant 0 : index
    %7 = vector.load %arg1[%c0_2, %c0_3, %c0_4] : memref<8x64x4xf32, #tpu.memory_space<vmem>>, vector<8x64x1xf32>
    %8 = vector.broadcast %7 : vector<8x64x1xf32> to vector<8x64x64xf32>
    %9 = arith.mulf %6, %8 : vector<8x64x64xf32>
    %10 = arith.addf %1, %9 : vector<8x64x64xf32>
    %c0_5 = arith.constant 0 : index
    %c0_6 = arith.constant 0 : index
    %c1 = arith.constant 1 : index
    %11 = vector.load %arg2[%c0_5, %c0_6, %c1] : memref<8x64x4xi32, #tpu.memory_space<vmem>>, vector<8x64x1xi32>
    %12 = vector.broadcast %11 : vector<8x64x1xi32> to vector<8x64x64xi32>
    %13 = arith.cmpi eq, %12, %0 : vector<8x64x64xi32>
    %14 = arith.extui %13 : vector<8x64x64xi1> to vector<8x64x64xi32>
    %15 = arith.sitofp %14 : vector<8x64x64xi32> to vector<8x64x64xf32>
    %c0_7 = arith.constant 0 : index
    %c0_8 = arith.constant 0 : index
    %c1_9 = arith.constant 1 : index
    %16 = vector.load %arg1[%c0_7, %c0_8, %c1_9] : memref<8x64x4xf32, #tpu.memory_space<vmem>>, vector<8x64x1xf32>
    %17 = vector.broadcast %16 : vector<8x64x1xf32> to vector<8x64x64xf32>
    %18 = arith.mulf %15, %17 : vector<8x64x64xf32>
    %19 = arith.addf %10, %18 : vector<8x64x64xf32>
    %c0_10 = arith.constant 0 : index
    %c0_11 = arith.constant 0 : index
    %c2 = arith.constant 2 : index
    %20 = vector.load %arg2[%c0_10, %c0_11, %c2] : memref<8x64x4xi32, #tpu.memory_space<vmem>>, vector<8x64x1xi32>
    %21 = vector.broadcast %20 : vector<8x64x1xi32> to vector<8x64x64xi32>
    %22 = arith.cmpi eq, %21, %0 : vector<8x64x64xi32>
    %23 = arith.extui %22 : vector<8x64x64xi1> to vector<8x64x64xi32>
    %24 = arith.sitofp %23 : vector<8x64x64xi32> to vector<8x64x64xf32>
    %c0_12 = arith.constant 0 : index
    %c0_13 = arith.constant 0 : index
    %c2_14 = arith.constant 2 : index
    %25 = vector.load %arg1[%c0_12, %c0_13, %c2_14] : memref<8x64x4xf32, #tpu.memory_space<vmem>>, vector<8x64x1xf32>
    %26 = vector.broadcast %25 : vector<8x64x1xf32> to vector<8x64x64xf32>
    %27 = arith.mulf %24, %26 : vector<8x64x64xf32>
    %28 = arith.addf %19, %27 : vector<8x64x64xf32>
    %c0_15 = arith.constant 0 : index
    %c0_16 = arith.constant 0 : index
    %c3 = arith.constant 3 : index
    %29 = vector.load %arg2[%c0_15, %c0_16, %c3] : memref<8x64x4xi32, #tpu.memory_space<vmem>>, vector<8x64x1xi32>
    %30 = vector.broadcast %29 : vector<8x64x1xi32> to vector<8x64x64xi32>
    %31 = arith.cmpi eq, %30, %0 : vector<8x64x64xi32>
    %32 = arith.extui %31 : vector<8x64x64xi1> to vector<8x64x64xi32>
    %33 = arith.sitofp %32 : vector<8x64x64xi32> to vector<8x64x64xf32>
    %c0_17 = arith.constant 0 : index
    %c0_18 = arith.constant 0 : index
    %c3_19 = arith.constant 3 : index
    %34 = vector.load %arg1[%c0_17, %c0_18, %c3_19] : memref<8x64x4xf32, #tpu.memory_space<vmem>>, vector<8x64x1xf32>
    %35 = vector.broadcast %34 : vector<8x64x1xf32> to vector<8x64x64xf32>
    %36 = arith.mulf %33, %35 : vector<8x64x64xf32>
    %37 = arith.addf %28, %36 : vector<8x64x64xf32>
    %38 = arith.truncf %37 : vector<8x64x64xf32> to vector<8x64x64xbf16>
    %c0_20 = arith.constant 0 : index
    %c0_21 = arith.constant 0 : index
    %c0_22 = arith.constant 0 : index
    %39 = vector.load %arg3[%c0_20, %c0_21, %c0_22] : memref<8x64x4xbf16, #tpu.memory_space<vmem>>, vector<8x64x4xbf16>
    "tpu.trace_start"() <{level = 10 : i32, message = "gij,gjc->gic"}> : () -> ()
    %cst_23 = arith.constant dense<0.000000e+00> : vector<8x64x4xf32>
    %40 = tpu.matmul %38, %39, %cst_23 {dimension_numbers = #tpu.dot_dimension_numbers<[2], [1], [1], [2], [0, 0, 0, 1, 1, 2], [0], [0]>} : vector<8x64x64xbf16>, vector<8x64x4xbf16>, vector<8x64x4xf32> -> vector<8x64x4xf32>
    "tpu.trace_stop"() : () -> ()
    %c0_24 = arith.constant 0 : index
    %c0_25 = arith.constant 0 : index
    %c0_26 = arith.constant 0 : index
    %41 = vector.load %arg4[%c0_24, %c0_25, %c0_26] : memref<8x64x4xf32, #tpu.memory_space<vmem>>, vector<8x64x4xf32>
    tpu.vector_store %arg4[%c0_24, %c0_25, %c0_26], %40 {strides = array<i32>} : memref<8x64x4xf32, #tpu.memory_space<vmem>>, vector<8x64x4xf32>,
    return
  }
  func.func @transform_0(%arg0: i32) -> (i32, i32, i32) {
    %c0_i32 = arith.constant 0 : i32
    %c0_i32_0 = arith.constant 0 : i32
    %c0_i32_1 = arith.constant 0 : i32
    return %arg0, %c0_i32, %c0_i32_0 : i32, i32, i32
  }
  func.func @transform_1(%arg0: i32) -> (i32, i32, i32) {
    %c0_i32 = arith.constant 0 : i32
    %c0_i32_0 = arith.constant 0 : i32
    %c0_i32_1 = arith.constant 0 : i32
    return %arg0, %c0_i32, %c0_i32_0 : i32, i32, i32
  }
  func.func @transform_2(%arg0: i32) -> (i32, i32, i32) {
    %c1_i32 = arith.constant 1 : i32
    %c0_i32 = arith.constant 0 : i32
    %0 = arith.cmpi eq, %c1_i32, %c0_i32 : i32
    %c1_i32_0 = arith.constant 1 : i32
    %1 = arith.select %0, %c1_i32_0, %c1_i32 : i32
    %2 = arith.remsi %arg0, %1 : i32
    %c0_i32_1 = arith.constant 0 : i32
    %3 = arith.cmpi ne, %2, %c0_i32_1 : i32
    %c0_i32_2 = arith.constant 0 : i32
    %4 = arith.cmpi slt, %2, %c0_i32_2 : i32
    %c0_i32_3 = arith.constant 0 : i32
    %5 = arith.cmpi slt, %1, %c0_i32_3 : i32
    %6 = arith.xori %4, %5 : i1
    %7 = arith.andi %6, %3 : i1
    %8 = arith.addi %2, %1 : i32
    %9 = arith.select %7, %8, %2 : i32
    %c0_i32_4 = arith.constant 0 : i32
    %c0_i32_5 = arith.constant 0 : i32
    %c0_i32_6 = arith.constant 0 : i32
    return %9, %c0_i32_4, %c0_i32_5 : i32, i32, i32
  }
  func.func @transform_3(%arg0: i32) -> (i32, i32, i32) {
    %c0_i32 = arith.constant 0 : i32
    %c0_i32_0 = arith.constant 0 : i32
    %c0_i32_1 = arith.constant 0 : i32
    return %arg0, %c0_i32, %c0_i32_0 : i32, i32, i32
  }
}

module attributes {stable_mosaic.version = 11 : i64} {
  func.func @_matmul_bias_act_kernel(%arg0: i32, %arg1: memref<2x32xbf16, #tpu.memory_space<vmem>>, %arg2: memref<32x32xbf16, #tpu.memory_space<vmem>>, %arg3: memref<1x32xf32, #tpu.memory_space<vmem>>, %arg4: memref<2x32xf32, #tpu.memory_space<vmem>>) attributes {dimension_semantics = [#tpu.dimension_semantics<parallel>], iteration_bounds = array<i64: 1>, scalar_prefetch = 0 : i64, scratch_operands = 0 : i64, tpu.core_type = #tpu.core_type<tc>, window_params = [{transform_indices = @transform_0, window_bounds = array<i64: 2, 32>}, {pipeline_mode = #tpu.pipeline_mode<synchronous>, transform_indices = @transform_1, window_bounds = array<i64: 32, 32>}, {pipeline_mode = #tpu.pipeline_mode<synchronous>, transform_indices = @transform_2, window_bounds = array<i64: 1, 32>}, {transform_indices = @transform_3, window_bounds = array<i64: 2, 32>}]} {
    %c0 = arith.constant 0 : index
    %c0_0 = arith.constant 0 : index
    %0 = vector.load %arg1[%c0, %c0_0] : memref<2x32xbf16, #tpu.memory_space<vmem>>, vector<2x32xbf16>
    %c0_1 = arith.constant 0 : index
    %c0_2 = arith.constant 0 : index
    %1 = vector.load %arg2[%c0_1, %c0_2] : memref<32x32xbf16, #tpu.memory_space<vmem>>, vector<32x32xbf16>
    %cst = arith.constant dense<0.000000e+00> : vector<2x32xf32>
    %2 = tpu.matmul %0, %1, %cst {dimension_numbers = #tpu.dot_dimension_numbers<[1], [0], [0], [1], [0, 0, 1, 1], [], []>} : vector<2x32xbf16>, vector<32x32xbf16>, vector<2x32xf32> -> vector<2x32xf32>
    %c0_3 = arith.constant 0 : index
    %c0_4 = arith.constant 0 : index
    %3 = vector.load %arg3[%c0_3, %c0_4] : memref<1x32xf32, #tpu.memory_space<vmem>>, vector<1x32xf32>
    %4 = vector.broadcast %3 : vector<1x32xf32> to vector<2x32xf32>
    %5 = arith.addf %2, %4 : vector<2x32xf32>
    %6 = math.tanh %5 : vector<2x32xf32>
    %c0_5 = arith.constant 0 : index
    %c0_6 = arith.constant 0 : index
    %7 = vector.load %arg4[%c0_5, %c0_6] : memref<2x32xf32, #tpu.memory_space<vmem>>, vector<2x32xf32>
    tpu.vector_store %arg4[%c0_5, %c0_6], %6 {strides = array<i32>} : memref<2x32xf32, #tpu.memory_space<vmem>>, vector<2x32xf32>,
    return
  }
  func.func @transform_0(%arg0: i32) -> (i32, i32) {
    %c0_i32 = arith.constant 0 : i32
    %c0_i32_0 = arith.constant 0 : i32
    return %arg0, %c0_i32 : i32, i32
  }
  func.func @transform_1(%arg0: i32) -> (i32, i32) {
    %c0_i32 = arith.constant 0 : i32
    %c0_i32_0 = arith.constant 0 : i32
    %c0_i32_1 = arith.constant 0 : i32
    return %c0_i32, %c0_i32_0 : i32, i32
  }
  func.func @transform_2(%arg0: i32) -> (i32, i32) {
    %c0_i32 = arith.constant 0 : i32
    %c0_i32_0 = arith.constant 0 : i32
    %c0_i32_1 = arith.constant 0 : i32
    return %c0_i32, %c0_i32_0 : i32, i32
  }
  func.func @transform_3(%arg0: i32) -> (i32, i32) {
    %c0_i32 = arith.constant 0 : i32
    %c0_i32_0 = arith.constant 0 : i32
    return %arg0, %c0_i32 : i32, i32
  }
}

module attributes {stable_mosaic.version = 11 : i64} {
  func.func @_dist_kernel(%arg0: i32, %arg1: memref<1x1x256xf32, #tpu.memory_space<vmem>>, %arg2: memref<1x8x256xf32, #tpu.memory_space<vmem>>, %arg3: memref<1x8x4xf32, #tpu.memory_space<vmem>>, %arg4: memref<4x256xf32, #tpu.memory_space<vmem>>, %arg5: memref<1x1x256xf32, #tpu.memory_space<vmem>>, %arg6: memref<1x1x8xf32, #tpu.memory_space<vmem>>) attributes {dimension_semantics = [#tpu.dimension_semantics<parallel>], iteration_bounds = array<i64: 2>, scalar_prefetch = 0 : i64, scratch_operands = 0 : i64, tpu.core_type = #tpu.core_type<tc>, window_params = [{transform_indices = @transform_0, window_bounds = array<i64: 1, 1, 256>}, {transform_indices = @transform_1, window_bounds = array<i64: 1, 8, 256>}, {transform_indices = @transform_2, window_bounds = array<i64: 1, 8, 4>}, {pipeline_mode = #tpu.pipeline_mode<synchronous>, transform_indices = @transform_3, window_bounds = array<i64: 4, 256>}, {transform_indices = @transform_4, window_bounds = array<i64: 1, 1, 256>}, {transform_indices = @transform_5, window_bounds = array<i64: 1, 1, 8>}]} {
    %c0 = arith.constant 0 : index
    %c0_0 = arith.constant 0 : index
    %c0_1 = arith.constant 0 : index
    %0 = vector.load %arg3[%c0, %c0_0, %c0_1] : memref<1x8x4xf32, #tpu.memory_space<vmem>>, vector<1x8x4xf32>
    %1 = vector.shape_cast %0 : vector<1x8x4xf32> to vector<8x4xf32>
    %c0_2 = arith.constant 0 : index
    %c0_3 = arith.constant 0 : index
    %2 = vector.load %arg4[%c0_2, %c0_3] : memref<4x256xf32, #tpu.memory_space<vmem>>, vector<4x256xf32>
    %cst = arith.constant dense<0.000000e+00> : vector<8x256xf32>
    %3 = tpu.matmul %1, %2, %cst {dimension_numbers = #tpu.dot_dimension_numbers<[1], [0], [0], [1], [0, 0, 1, 1], [], []>} : vector<8x4xf32>, vector<4x256xf32>, vector<8x256xf32> -> vector<8x256xf32>
    %c0_4 = arith.constant 0 : index
    %c0_5 = arith.constant 0 : index
    %c0_6 = arith.constant 0 : index
    %4 = vector.load %arg1[%c0_4, %c0_5, %c0_6] : memref<1x1x256xf32, #tpu.memory_space<vmem>>, vector<1x1x256xf32>
    %5 = vector.shape_cast %4 : vector<1x1x256xf32> to vector<1x256xf32>
    %c0_7 = arith.constant 0 : index
    %c0_8 = arith.constant 0 : index
    %c0_9 = arith.constant 0 : index
    %6 = vector.load %arg2[%c0_7, %c0_8, %c0_9] : memref<1x8x256xf32, #tpu.memory_space<vmem>>, vector<1x8x256xf32>
    %7 = vector.shape_cast %6 : vector<1x8x256xf32> to vector<8x256xf32>
    %8 = vector.broadcast %5 : vector<1x256xf32> to vector<8x256xf32>
    %9 = arith.subf %8, %7 : vector<8x256xf32>
    %10 = arith.subf %9, %3 : vector<8x256xf32>
    %11 = arith.mulf %10, %10 : vector<8x256xf32>
    %c0_10 = arith.constant 0 : index
    %c0_11 = arith.constant 0 : index
    %c0_12 = arith.constant 0 : index
    %12 = vector.load %arg5[%c0_10, %c0_11, %c0_12] : memref<1x1x256xf32, #tpu.memory_space<vmem>>, vector<1x1x256xf32>
    %13 = vector.shape_cast %12 : vector<1x1x256xf32> to vector<1x256xf32>
    %14 = vector.broadcast %13 : vector<1x256xf32> to vector<8x256xf32>
    %15 = arith.mulf %11, %14 : vector<8x256xf32>
    %cst_13 = arith.constant dense<0.000000e+00> : vector<8xf32>
    %16 = vector.multi_reduction <add>, %15, %cst_13 [1] : vector<8x256xf32> to vector<8xf32>
    %17 = vector.shape_cast %16 : vector<8xf32> to vector<1x1x8xf32>
    %c0_14 = arith.constant 0 : index
    %c0_15 = arith.constant 0 : index
    %c0_16 = arith.constant 0 : index
    %18 = vector.load %arg6[%c0_14, %c0_15, %c0_16] : memref<1x1x8xf32, #tpu.memory_space<vmem>>, vector<1x1x8xf32>
    tpu.vector_store %arg6[%c0_14, %c0_15, %c0_16], %17 {strides = array<i32>} : memref<1x1x8xf32, #tpu.memory_space<vmem>>, vector<1x1x8xf32>,
    return
  }
  func.func @transform_0(%arg0: i32) -> (i32, i32, i32) {
    %c0_i32 = arith.constant 0 : i32
    %c0_i32_0 = arith.constant 0 : i32
    %c0_i32_1 = arith.constant 0 : i32
    return %arg0, %c0_i32, %c0_i32_0 : i32, i32, i32
  }
  func.func @transform_1(%arg0: i32) -> (i32, i32, i32) {
    %c0_i32 = arith.constant 0 : i32
    %c0_i32_0 = arith.constant 0 : i32
    %c0_i32_1 = arith.constant 0 : i32
    return %arg0, %c0_i32, %c0_i32_0 : i32, i32, i32
  }
  func.func @transform_2(%arg0: i32) -> (i32, i32, i32) {
    %c0_i32 = arith.constant 0 : i32
    %c0_i32_0 = arith.constant 0 : i32
    %c0_i32_1 = arith.constant 0 : i32
    return %arg0, %c0_i32, %c0_i32_0 : i32, i32, i32
  }
  func.func @transform_3(%arg0: i32) -> (i32, i32) {
    %c0_i32 = arith.constant 0 : i32
    %c0_i32_0 = arith.constant 0 : i32
    %c0_i32_1 = arith.constant 0 : i32
    return %c0_i32, %c0_i32_0 : i32, i32
  }
  func.func @transform_4(%arg0: i32) -> (i32, i32, i32) {
    %c0_i32 = arith.constant 0 : i32
    %c0_i32_0 = arith.constant 0 : i32
    %c0_i32_1 = arith.constant 0 : i32
    return %arg0, %c0_i32, %c0_i32_0 : i32, i32, i32
  }
  func.func @transform_5(%arg0: i32) -> (i32, i32, i32) {
    %c0_i32 = arith.constant 0 : i32
    %c0_i32_0 = arith.constant 0 : i32
    %c0_i32_1 = arith.constant 0 : i32
    return %arg0, %c0_i32, %c0_i32_0 : i32, i32, i32
  }
}

</mosaic_0001>

<llo_original>
// kernel: _lambda_.8
$region0: #{_lambda_.8}
  #allocation0 [shape = 'u32[]', space=smem, size = 0x4, offset = 0x4, fixed_abs, tag = 'smem constant byte address 0x4 - core index']
  #allocation1 [shape = 'u32[144,128]{1,0:T(1,128)}', space=vmem, size = 0x12000, scoped, tag = 'internal scratch']
  %s0 = inlined_call_operand.vmem [shape: bf16[2,71,4], index: 0, kind: input, shape index: {}]
  %s1 = inlined_call_operand.vmem [shape: bf16[8,4,32], index: 1, kind: input, shape index: {}]
  %s2 = inlined_call_operand.vmem [shape: f32[1,32], index: 2, kind: input, shape index: {}]
  %s3 = inlined_call_operand.vmem [shape: f32[2,64,32], index: 3, kind: output, shape index: {}]
  %s4 = sld [smem:[#allocation0]]
  $region45: #{_lambda_.8} parent=0
    _
  %s6 = ssub.s32 1, %s4
  %s7 = scalar_select 0, %s6, %s4
  loop: start=0, step=1, limit=4
  $region2: #{_lambda_.8} parent=0 // loop_pre_header
    _
  $region3: #{_lambda_.8} parent=0 // loop_header
    %s9 = sphi 0, %s13
    %p10 = scmp.ge.s32.totalorder %s9, 4
    %s19 = sphi 0, %s21
    %s22 = sphi 0, %s19
    %s23 = sphi 0, %s22
    %s39 = sphi 0, %s23
    %s43 = sphi 0, %s43
    %s45 = sphi 0, %s43
    %s46 = sphi 0, %s45
    %s60 = sphi 0, %s46
    %s64 = sphi 0, %s64
    %s66 = sphi 0, %s64
    %s67 = sphi 0, %s66
    %s81 = sphi 0, %s67
    %s87 = sphi 0, %s89
    %s90 = sphi 0, %s87
    %s91 = sphi 0, %s90
    %s107 = sphi 0, %s91
  $region4: #{_lambda_.8} parent=0 // loop_header_branch
    %12 = sbr.rel (%p10) target = $region8
  $region5: #{_lambda_.8} parent=0 // loop_body
    %s14 = ssub.s32 %s9, 1
    %s15 = ssub.s32 %s9, 2
    %s16 = sadd.s32 %s9, 1
    %s17 = ssub.s32 %s9, %s16
    %p18 = scmp.eq.s32.totalorder %s17, 0
    %s20 = sadd.s32 %s19, 1
    %s21 = scalar_select %p18, %s19, %s20
    %p24 = pneg %p18
    %p25 = scmp.eq.s32.totalorder %s9, 1
    %p26 = por %p24, %p25
    %p27 = scmp.ne.s32.totalorder %s19, %s22
    %p28 = scmp.eq.s32.totalorder %s9, 0
    %p29 = por %p27, %p28
    %p30 = scmp.ne.s32.totalorder %s19, %s22
    %p31 = scmp.eq.s32.totalorder %s14, 1
    %p32 = por %p30, %p31
    %p33 = scmp.ne.s32.totalorder %s22, %s23
    %p34 = scmp.eq.s32.totalorder %s14, 0
    %p35 = por %p33, %p34
    %p36 = scmp.ne.s32.totalorder %s22, %s23
    %p37 = scmp.eq.s32.totalorder %s15, 1
    %p38 = por %p36, %p37
    %p40 = scmp.ne.s32.totalorder %s23, %s39
    %p41 = scmp.eq.s32.totalorder %s15, 0
    %p42 = por %p40, %p41
    %s44 = sadd.s32 %s43, 1
    %p47 = scmp.eq.s32.totalorder %s9, 1
    %p48 = scmp.ne.s32.totalorder %s43, %s45
    %p49 = scmp.eq.s32.totalorder %s9, 0
    %p50 = por %p48, %p49
    %p51 = scmp.ne.s32.totalorder %s43, %s45
    %p52 = scmp.eq.s32.totalorder %s14, 1
    %p53 = por %p51, %p52
    %p54 = scmp.ne.s32.totalorder %s45, %s46
    %p55 = scmp.eq.s32.totalorder %s14, 0
    %p56 = por %p54, %p55
    %p57 = scmp.ne.s32.totalorder %s45, %s46
    %p58 = scmp.eq.s32.totalorder %s15, 1
    %p59 = por %p57, %p58
    %p61 = scmp.ne.s32.totalorder %s46, %s60
    %p62 = scmp.eq.s32.totalorder %s15, 0
    %p63 = por %p61, %p62
    %s65 = sadd.s32 %s64, 1
    %p68 = scmp.eq.s32.totalorder %s9, 1
    %p69 = scmp.ne.s32.totalorder %s64, %s66
    %p70 = scmp.eq.s32.totalorder %s9, 0
    %p71 = por %p69, %p70
    %p72 = scmp.ne.s32.totalorder %s64, %s66
    %p73 = scmp.eq.s32.totalorder %s14, 1
    %p74 = por %p72, %p73
    %p75 = scmp.ne.s32.totalorder %s66, %s67
    %p76 = scmp.eq.s32.totalorder %s14, 0
    %p77 = por %p75, %p76
    %p78 = scmp.ne.s32.totalorder %s66, %s67
    %p79 = scmp.eq.s32.totalorder %s15, 1
    %p80 = por %p78, %p79
    %p82 = scmp.ne.s32.totalorder %s67, %s81
    %p83 = scmp.eq.s32.totalorder %s15, 0
    %p84 = por %p82, %p83
    %s85 = ssub.s32 %s9, %s16
    %p86 = scmp.eq.s32.totalorder %s85, 0
    %s88 = sadd.s32 %s87, 1
    %s89 = scalar_select %p86, %s87, %s88
    %p92 = pneg %p86
    %p93 = scmp.eq.s32.totalorder %s9, 1
    %p94 = por %p92, %p93
    %p95 = scmp.ne.s32.totalorder %s87, %s90
    %p96 = scmp.eq.s32.totalorder %s9, 0
    %p97 = por %p95, %p96
    %p98 = scmp.ne.s32.totalorder %s87, %s90
    %p99 = scmp.eq.s32.totalorder %s14, 1
    %p100 = por %p98, %p99
    %p101 = scmp.ne.s32.totalorder %s90, %s91
    %p102 = scmp.eq.s32.totalorder %s14, 0
    %p103 = por %p101, %p102
    %p104 = scmp.ne.s32.totalorder %s90, %s91
    %p105 = scmp.eq.s32.totalorder %s15, 1
    %p106 = por %p104, %p105
    %p108 = scmp.ne.s32.totalorder %s91, %s107
    %p109 = scmp.eq.s32.totalorder %s15, 0
    %p110 = por %p108, %p109
    %p111 = scmp.le.s32.totalorder 1, %s9
    %p112 = scmp.lt.s32.totalorder %s9, 3
    %p113 = pnand %p111, %p112
    %p114 = pneg %p113
    // Predicated region
    $region9: #{_lambda_.8} parent=5 // pred_check
      _
    $region10: #{_lambda_.8} parent=5 // pred_check_branch
      %116 = sbr.rel (%p113) target = $region12
    $region11: #{_lambda_.8} parent=5 // pred_region
      %s117 = ssub.s32 %s9, 1
      // Predicated region
      $region13: #{_lambda_.8} parent=11 // pred_check
        %p118 = pneg %p56
      $region14: #{_lambda_.8} parent=11 // pred_check_branch
        %120 = sbr.rel (%p118) target = $region16
      $region15: #{_lambda_.8} parent=11 // pred_region
        _
      $region16: #{_lambda_.8} parent=11 // pred_fallthru
        _
      // Predicated region
      $region17: #{_lambda_.8} parent=11 // pred_check
        %p121 = pneg %p77
      $region18: #{_lambda_.8} parent=11 // pred_check_branch
        %123 = sbr.rel (%p121) target = $region20
      $region19: #{_lambda_.8} parent=11 // pred_region
        _
      $region20: #{_lambda_.8} parent=11 // pred_fallthru
        _
    $region12: #{_lambda_.8} parent=5 // pred_fallthru
      _
    %p124 = scmp.lt.s32.totalorder %s9, 2
    // Predicated region
    $region21: #{_lambda_.8} parent=5 // pred_check
      %p125 = pneg %p124
    $region22: #{_lambda_.8} parent=5 // pred_check_branch
      %127 = sbr.rel (%p125) target = $region24
    $region23: #{_lambda_.8} parent=5 // pred_region
      // Predicated region
      $region25: #{_lambda_.8} parent=23 // pred_check
        %p128 = pneg %p29
      $region26: #{_lambda_.8} parent=23 // pred_check_branch
        %130 = sbr.rel (%p128) target = $region28
      $region27: #{_lambda_.8} parent=23 // pred_region
        %p131 = scmp.lt.s32.totalorder %s9, 1
        %s132 = scalar_select %p131, %s9, 1
        %s133 = smul.addr %s132, 9
        %s134 = smul.addr %s133, 4
        %s135 = scalar_lea.vmem %s0, %s134
      $region28: #{_lambda_.8} parent=23 // pred_fallthru
        _
    $region24: #{_lambda_.8} parent=5 // pred_fallthru
      _
    %p136 = scmp.le.s32.totalorder 1, %s9
    %p137 = scmp.lt.s32.totalorder %s9, 3
    %p138 = pnand %p136, %p137
    %p139 = pneg %p138
    // Predicated region
    $region29: #{_lambda_.8} parent=5 // pred_check
      _
    $region30: #{_lambda_.8} parent=5 // pred_check_branch
      %141 = sbr.rel (%p138) target = $region32
    $region31: #{_lambda_.8} parent=5 // pred_region
      %s142 = ssub.s32 %s9, 1
      %p143 = scmp.lt.s32.totalorder %s14, 1
      %s144 = scalar_select %p143, %s14, 1
      %s145 = smul.addr %s144, 9
      %s146 = smul.addr %s145, 4
      %s147 = scalar_lea.vmem %s0, %s146
      %p148 = pneg %p35
      %p149 = pneg %p32
      %p150 = pneg %p56
      %p151 = pneg %p53
      %p152 = pneg %p77
      %p153 = pneg %p74
      %p154 = pneg %p103
      %p155 = pneg %p100
      %p156 = scmp.lt.s32.totalorder %s14, 1
      %s157 = scalar_select %p156, %s14, 1
      %s158 = smul.addr %s157, 8
      %s159 = smul.addr %s158, 8
      %s160 = scalar_lea.vmem %s3, %s159
      %p161 = scmp.lt.s32.totalorder %s14, 1
      %s162 = scalar_select %p161, %s14, 1
      %s163 = smul.addr %s162, 9
      %s164 = smul.addr %s163, 4
      %s165 = scalar_lea.vmem %s0, %s164
      %p166 = scmp.lt.s32.totalorder %s14, 1
      %s167 = scalar_select %p166, %s14, 1
      %s168 = smul.addr %s167, 8
      %s169 = smul.addr %s168, 8
      %s170 = scalar_lea.vmem %s3, %s169
      %v172 = vld [vmem:[%s165] sm:$0xf]
      %v173 = vld [vmem:[%s165 + $0x4] sm:$0xf]
      %v174 = vld [vmem:[%s165 + $0x8] sm:$0xf]
      %v175 = vld [vmem:[%s165 + $0xc] sm:$0xf]
      %v176 = vld [vmem:[%s165 + $0x10] sm:$0xf]
      %v177 = vld [vmem:[%s165 + $0x14] sm:$0xf]
      %v178 = vld [vmem:[%s165 + $0x18] sm:$0xf]
      %v179 = vld [vmem:[%s165 + $0x1c] sm:$0xf]
      %v180 = vld [vmem:[%s1] sm:$0x3]
      %v181 = vld [vmem:[%s165 + $0x20] sm:$0x1]
      %s182 = scalar_lea.vmem %s1, 2
      %v183 = vld [vmem:[%s182] sm:$0x3]
      %v193 = vunpack.c.l.b16 %v172
      %v194 = vunpack.c.l.b16 %v173
      %v195 = vunpack.c.l.b16 %v174
      %v196 = vunpack.c.l.b16 %v175
      %v197 = vunpack.c.l.b16 %v176
      %v198 = vunpack.c.l.b16 %v177
      %v199 = vunpack.c.l.b16 %v178
      %v200 = vunpack.c.l.b16 %v179
      %v201 = vunpack.c.l.b16 %v181
      %v202 = vpack.c.b16 %v194, %v193
      %v203 = vpack.c.b16 %v196, %v195
      %v204 = vpack.c.b16 %v198, %v197
      %v205 = vpack.c.b16 %v200, %v199
      %v206 = vpack.c.b16 %v201, %v201
      %vm207 = vsmask.f32 7424
      %v209 = vshrl.u32 %v202, 16
      %v211 = vshll.u32 %v202, 16
      %v213 = vrot.slane %v211, 1
      %v214 = vor.u32 %v209, %v213
      %v216 = vshll.u32 %v203, 16
      %v218 = vrot.slane %v216, 1
      %v219 = vsel %vm207, %v214, %v218
      %v220 = vshrl.u32 %v203, 16
      %v222 = vor.u32 %v220, %v218
      %v224 = vshll.u32 %v204, 16
      %v226 = vrot.slane %v224, 1
      %v227 = vsel %vm207, %v222, %v226
      %v228 = vshrl.u32 %v204, 16
      %v230 = vor.u32 %v228, %v226
      %v232 = vshll.u32 %v205, 16
      %v234 = vrot.slane %v232, 1
      %v235 = vsel %vm207, %v230, %v234
      %v236 = vshrl.u32 %v205, 16
      %v238 = vor.u32 %v236, %v234
      %v240 = vshll.u32 %v206, 16
      %v242 = vrot.slane %v240, 1
      %v243 = vsel %vm207, %v238, %v242
      %vm244 = vcmask 31744
      %v246 = vsel %vm244, %v219, 0
      %v249 = vsel %vm244, %v227, 0
      %v252 = vsel %vm244, %v235, 0
      %v255 = vsel %vm244, %v243, 0
      %vm257 = vcmask 1041408
      %v259 = vsel %vm257, %v183, 0
      %261 = vmatprep.subr.bf16.mxu0 0
      %262 = vmatpush1.bf16.msra.mxu0 %v259
      %263 = vmatprep.subr.bf16.mxu0 0
      %264 = vmatpush1.bf16.msra.mxu0 0
      %265 = vmatprep.subr.bf16.mxu0 0
      %266 = vmatpush1.bf16.msra.mxu0 0
      %267 = vmatprep.subr.bf16.mxu0 0
      %268 = vmatpush1.bf16.msra.mxu0 0
      %269 = vmatprep.subr.bf16.mxu0 0
      %270 = vmatpush1.bf16.msra.mxu0 0
      %271 = vmatprep.subr.bf16.mxu0 0
      %272 = vmatpush1.bf16.msra.mxu0 0
      %273 = vmatprep.subr.bf16.mxu0 0
      %274 = vmatpush1.bf16.msra.mxu0 0
      %275 = vmatprep.subr.bf16.mxu0 0
      %276 = vmatpush1.bf16.msra.mxu0 0
      %277 = vmatprep.subr.bf16.mxu0 0
      %278 = vmatpush1.bf16.msra.mxu0 0
      %279 = vmatprep.subr.bf16.mxu0 0
      %280 = vmatpush1.bf16.msra.mxu0 0
      %281 = vmatprep.subr.bf16.mxu0 0
      %282 = vmatpush1.bf16.msra.mxu0 0
      %283 = vmatprep.subr.bf16.mxu0 0
      %284 = vmatpush1.bf16.msra.mxu0 0
      %285 = vmatprep.subr.bf16.mxu0 0
      %286 = vmatpush1.bf16.msra.mxu0 0
      %287 = vmatprep.subr.bf16.mxu0 0
      %288 = vmatpush1.bf16.msra.mxu0 0
      %289 = vmatprep.subr.bf16.mxu0 0
      %290 = vmatpush1.bf16.msra.mxu0 0
      %291 = vmatprep.subr.bf16.mxu0 0
      %292 = vmatpush1.bf16.msra.mxu0 0
      %293 = vmatprep.mubr.bf16.mxu0 0
      %294 = vmatmul.mubr.bf16.gmra.mrb[0].mxu0 %v246
      %v295 = vpop.f32.mrb[0].mxu0
      %v296 = vadd.f32 0.0, %v295
      %v297 = vpop.f32.mrb[0].mxu0
      %v298 = vpop.f32.mrb[0].mxu0
      %v299 = vadd.f32 0.0, %v298
      %v300 = vpop.f32.mrb[0].mxu0
      %301 = vmatprep.mubr.bf16.mxu0 0
      %302 = vmatmul.mubr.bf16.gmra.mrb[0].mxu0 %v249
      %v303 = vpop.f32.mrb[0].mxu0
      %v304 = vadd.f32 0.0, %v303
      %v305 = vpop.f32.mrb[0].mxu0
      %v306 = vpop.f32.mrb[0].mxu0
      %v307 = vadd.f32 0.0, %v306
      %v308 = vpop.f32.mrb[0].mxu0
      %309 = vmatprep.mubr.bf16.mxu0 0
      %310 = vmatmul.mubr.bf16.gmra.mrb[0].mxu0 %v252
      %v311 = vpop.f32.mrb[0].mxu0
      %v312 = vadd.f32 0.0, %v311
      %v313 = vpop.f32.mrb[0].mxu0
      %v314 = vpop.f32.mrb[0].mxu0
      %v315 = vadd.f32 0.0, %v314
      %v316 = vpop.f32.mrb[0].mxu0
      %317 = vmatprep.mubr.bf16.mxu0 0
      %318 = vmatmul.mubr.bf16.gmra.mrb[0].mxu0 %v255
      %v319 = vpop.f32.mrb[0].mxu0
      %v320 = vadd.f32 0.0, %v319
      %v321 = vpop.f32.mrb[0].mxu0
      %v322 = vpop.f32.mrb[0].mxu0
      %v323 = vadd.f32 0.0, %v322
      %v324 = vpop.f32.mrb[0].mxu0
      %325 = vdwg.mxu0
      %v326 = vsel %vm244, %v202, 0
      %v328 = vsel %vm244, %v203, 0
      %v330 = vsel %vm244, %v204, 0
      %v332 = vsel %vm244, %v205, 0
      %v335 = vsel %vm257, %v180, 0
      %337 = vmatprep.subr.bf16.mxu0 0
      %338 = vmatpush1.bf16.msra.mxu0 %v335
      %339 = vmatprep.subr.bf16.mxu0 0
      %340 = vmatpush1.bf16.msra.mxu0 0
      %341 = vmatprep.subr.bf16.mxu0 0
      %342 = vmatpush1.bf16.msra.mxu0 0
      %343 = vmatprep.subr.bf16.mxu0 0
      %344 = vmatpush1.bf16.msra.mxu0 0
      %345 = vmatprep.subr.bf16.mxu0 0
      %346 = vmatpush1.bf16.msra.mxu0 0
      %347 = vmatprep.subr.bf16.mxu0 0
      %348 = vmatpush1.bf16.msra.mxu0 0
      %349 = vmatprep.subr.bf16.mxu0 0
      %350 = vmatpush1.bf16.msra.mxu0 0
      %351 = vmatprep.subr.bf16.mxu0 0
      %352 = vmatpush1.bf16.msra.mxu0 0
      %353 = vmatprep.subr.bf16.mxu0 0
      %354 = vmatpush1.bf16.msra.mxu0 0
      %355 = vmatprep.subr.bf16.mxu0 0
      %356 = vmatpush1.bf16.msra.mxu0 0
      %357 = vmatprep.subr.bf16.mxu0 0
      %358 = vmatpush1.bf16.msra.mxu0 0
      %359 = vmatprep.subr.bf16.mxu0 0
      %360 = vmatpush1.bf16.msra.mxu0 0
      %361 = vmatprep.subr.bf16.mxu0 0
      %362 = vmatpush1.bf16.msra.mxu0 0
      %363 = vmatprep.subr.bf16.mxu0 0
      %364 = vmatpush1.bf16.msra.mxu0 0
      %365 = vmatprep.subr.bf16.mxu0 0
      %366 = vmatpush1.bf16.msra.mxu0 0
      %367 = vmatprep.subr.bf16.mxu0 0
      %368 = vmatpush1.bf16.msra.mxu0 0
      %369 = vmatprep.mubr.bf16.mxu0 0
      %370 = vmatmul.mubr.bf16.gmra.mrb[0].mxu0 %v326
      %v371 = vpop.f32.mrb[0].mxu0
      %v372 = vadd.f32 %v296, %v371
      %v373 = vpop.f32.mrb[0].mxu0
      %v374 = vpop.f32.mrb[0].mxu0
      %v375 = vadd.f32 %v299, %v374
      %v376 = vpop.f32.mrb[0].mxu0
      %377 = vmatprep.mubr.bf16.mxu0 0
      %378 = vmatmul.mubr.bf16.gmra.mrb[0].mxu0 %v328
      %v379 = vpop.f32.mrb[0].mxu0
      %v380 = vadd.f32 %v304, %v379
      %v381 = vpop.f32.mrb[0].mxu0
      %v382 = vpop.f32.mrb[0].mxu0
      %v383 = vadd.f32 %v307, %v382
      %v384 = vpop.f32.mrb[0].mxu0
      %385 = vmatprep.mubr.bf16.mxu0 0
      %386 = vmatmul.mubr.bf16.gmra.mrb[0].mxu0 %v330
      %v387 = vpop.f32.mrb[0].mxu0
      %v388 = vadd.f32 %v312, %v387
      %v389 = vpop.f32.mrb[0].mxu0
      %v390 = vpop.f32.mrb[0].mxu0
      %v391 = vadd.f32 %v315, %v390
      %v392 = vpop.f32.mrb[0].mxu0
      %393 = vmatprep.mubr.bf16.mxu0 0
      %394 = vmatmul.mubr.bf16.gmra.mrb[0].mxu0 %v332
      %v395 = vpop.f32.mrb[0].mxu0
      %v396 = vadd.f32 %v320, %v395
      %v397 = vpop.f32.mrb[0].mxu0
      %v398 = vpop.f32.mrb[0].mxu0
      %v399 = vadd.f32 %v323, %v398
      %v400 = vpop.f32.mrb[0].mxu0
      %401 = vdwg.mxu0
      %v402 = vld [vmem:[%s165] sm:$0xe]
      %s403 = scalar_lea.vmem %s1, 4
      %v404 = vld [vmem:[%s403] sm:$0x3]
      %v406 = vunpack.c.l.b16 %v402
      %v407 = vpack.c.b16 %v194, %v406
      %vm408 = vcmask 1046528
      %v409 = vrot.slane %v407, 1
      %v410 = vrot.slane %v203, 1
      %v411 = vsel %vm408, %v409, %v410
      %v412 = vrot.slane %v204, 1
      %v413 = vsel %vm408, %v410, %v412
      %v414 = vrot.slane %v205, 1
      %v415 = vsel %vm408, %v412, %v414
      %v416 = vrot.slane %v206, 1
      %v417 = vsel %vm408, %v414, %v416
      %v419 = vsel %vm244, %v411, 0
      %v422 = vsel %vm244, %v413, 0
      %v425 = vsel %vm244, %v415, 0
      %v428 = vsel %vm244, %v417, 0
      %v431 = vsel %vm257, %v404, 0
      %433 = vmatprep.subr.bf16.mxu0 0
      %434 = vmatpush1.bf16.msra.mxu0 %v431
      %435 = vmatprep.subr.bf16.mxu0 0
      %436 = vmatpush1.bf16.msra.mxu0 0
      %437 = vmatprep.subr.bf16.mxu0 0
      %438 = vmatpush1.bf16.msra.mxu0 0
      %439 = vmatprep.subr.bf16.mxu0 0
      %440 = vmatpush1.bf16.msra.mxu0 0
      %441 = vmatprep.subr.bf16.mxu0 0
      %442 = vmatpush1.bf16.msra.mxu0 0
      %443 = vmatprep.subr.bf16.mxu0 0
      %444 = vmatpush1.bf16.msra.mxu0 0
      %445 = vmatprep.subr.bf16.mxu0 0
      %446 = vmatpush1.bf16.msra.mxu0 0
      %447 = vmatprep.subr.bf16.mxu0 0
      %448 = vmatpush1.bf16.msra.mxu0 0
      %449 = vmatprep.subr.bf16.mxu0 0
      %450 = vmatpush1.bf16.msra.mxu0 0
      %451 = vmatprep.subr.bf16.mxu0 0
      %452 = vmatpush1.bf16.msra.mxu0 0
      %453 = vmatprep.subr.bf16.mxu0 0
      %454 = vmatpush1.bf16.msra.mxu0 0
      %455 = vmatprep.subr.bf16.mxu0 0
      %456 = vmatpush1.bf16.msra.mxu0 0
      %457 = vmatprep.subr.bf16.mxu0 0
      %458 = vmatpush1.bf16.msra.mxu0 0
      %459 = vmatprep.subr.bf16.mxu0 0
      %460 = vmatpush1.bf16.msra.mxu0 0
      %461 = vmatprep.subr.bf16.mxu0 0
      %462 = vmatpush1.bf16.msra.mxu0 0
      %463 = vmatprep.subr.bf16.mxu0 0
      %464 = vmatpush1.bf16.msra.mxu0 0
      %465 = vmatprep.mubr.bf16.mxu0 0
      %466 = vmatmul.mubr.bf16.gmra.mrb[0].mxu0 %v419
      %v467 = vpop.f32.mrb[0].mxu0
      %v468 = vadd.f32 0.0, %v467
      %v469 = vpop.f32.mrb[0].mxu0
      %v470 = vpop.f32.mrb[0].mxu0
      %v471 = vadd.f32 0.0, %v470
      %v472 = vpop.f32.mrb[0].mxu0
      %473 = vmatprep.mubr.bf16.mxu0 0
      %474 = vmatmul.mubr.bf16.gmra.mrb[0].mxu0 %v422
      %v475 = vpop.f32.mrb[0].mxu0
      %v476 = vadd.f32 0.0, %v475
      %v477 = vpop.f32.mrb[0].mxu0
      %v478 = vpop.f32.mrb[0].mxu0
      %v479 = vadd.f32 0.0, %v478
      %v480 = vpop.f32.mrb[0].mxu0
      %481 = vmatprep.mubr.bf16.mxu0 0
      %482 = vmatmul.mubr.bf16.gmra.mrb[0].mxu0 %v425
      %v483 = vpop.f32.mrb[0].mxu0
      %v484 = vadd.f32 0.0, %v483
      %v485 = vpop.f32.mrb[0].mxu0
      %v486 = vpop.f32.mrb[0].mxu0
      %v487 = vadd.f32 0.0, %v486
      %v488 = vpop.f32.mrb[0].mxu0
      %489 = vmatprep.mubr.bf16.mxu0 0
      %490 = vmatmul.mubr.bf16.gmra.mrb[0].mxu0 %v428
      %v491 = vpop.f32.mrb[0].mxu0
      %v492 = vadd.f32 0.0, %v491
      %v493 = vpop.f32.mrb[0].mxu0
      %v494 = vpop.f32.mrb[0].mxu0
      %v495 = vadd.f32 0.0, %v494
      %v496 = vpop.f32.mrb[0].mxu0
      %497 = vdwg.mxu0
      %v498 = vadd.f32 %v372, %v468
      %v499 = vadd.f32 %v375, %v471
      %v500 = vadd.f32 %v380, %v476
      %v501 = vadd.f32 %v383, %v479
      %v502 = vadd.f32 %v388, %v484
      %v503 = vadd.f32 %v391, %v487
      %v504 = vadd.f32 %v396, %v492
      %v505 = vadd.f32 %v399, %v495
      %v506 = vld [vmem:[%s165 + $0x20] sm:$0x3]
      %s507 = scalar_lea.vmem %s1, 6
      %v508 = vld [vmem:[%s507] sm:$0x3]
      %v510 = vunpack.c.l.b16 %v506
      %v511 = vpack.c.b16 %v510, %v510
      %vm512 = vsmask.f32 6400
      %v514 = vshrl.u32 %v407, 16
      %v516 = vrot.slane %v514, 1
      %v517 = vshll.u32 %v407, 16
      %v519 = vrot.slane %v517, 2
      %v520 = vor.u32 %v516, %v519
      %v521 = vrot.slane %v220, 1
      %v522 = vrot.slane %v216, 2
      %v523 = vor.u32 %v521, %v522
      %v524 = vsel %vm512, %v520, %v523
      %v525 = vrot.slane %v228, 1
      %v526 = vrot.slane %v224, 2
      %v527 = vor.u32 %v525, %v526
      %v528 = vsel %vm512, %v523, %v527
      %v529 = vrot.slane %v236, 1
      %v530 = vrot.slane %v232, 2
      %v531 = vor.u32 %v529, %v530
      %v532 = vsel %vm512, %v527, %v531
      %v534 = vshrl.u32 %v511, 16
      %v536 = vrot.slane %v534, 1
      %v537 = vshll.u32 %v511, 16
      %v539 = vrot.slane %v537, 2
      %v540 = vor.u32 %v536, %v539
      %v541 = vsel %vm512, %v531, %v540
      %v543 = vsel %vm244, %v524, 0
      %v546 = vsel %vm244, %v528, 0
      %v549 = vsel %vm244, %v532, 0
      %v552 = vsel %vm244, %v541, 0
      %v555 = vsel %vm257, %v508, 0
      %557 = vmatprep.subr.bf16.mxu0 0
      %558 = vmatpush1.bf16.msra.mxu0 %v555
      %559 = vmatprep.subr.bf16.mxu0 0
      %560 = vmatpush1.bf16.msra.mxu0 0
      %561 = vmatprep.subr.bf16.mxu0 0
      %562 = vmatpush1.bf16.msra.mxu0 0
      %563 = vmatprep.subr.bf16.mxu0 0
      %564 = vmatpush1.bf16.msra.mxu0 0
      %565 = vmatprep.subr.bf16.mxu0 0
      %566 = vmatpush1.bf16.msra.mxu0 0
      %567 = vmatprep.subr.bf16.mxu0 0
      %568 = vmatpush1.bf16.msra.mxu0 0
      %569 = vmatprep.subr.bf16.mxu0 0
      %570 = vmatpush1.bf16.msra.mxu0 0
      %571 = vmatprep.subr.bf16.mxu0 0
      %572 = vmatpush1.bf16.msra.mxu0 0
      %573 = vmatprep.subr.bf16.mxu0 0
      %574 = vmatpush1.bf16.msra.mxu0 0
      %575 = vmatprep.subr.bf16.mxu0 0
      %576 = vmatpush1.bf16.msra.mxu0 0
      %577 = vmatprep.subr.bf16.mxu0 0
      %578 = vmatpush1.bf16.msra.mxu0 0
      %579 = vmatprep.subr.bf16.mxu0 0
      %580 = vmatpush1.bf16.msra.mxu0 0
      %581 = vmatprep.subr.bf16.mxu0 0
      %582 = vmatpush1.bf16.msra.mxu0 0
      %583 = vmatprep.subr.bf16.mxu0 0
      %584 = vmatpush1.bf16.msra.mxu0 0
      %585 = vmatprep.subr.bf16.mxu0 0
      %586 = vmatpush1.bf16.msra.mxu0 0
      %587 = vmatprep.subr.bf16.mxu0 0
      %588 = vmatpush1.bf16.msra.mxu0 0
      %589 = vmatprep.mubr.bf16.mxu0 0
      %590 = vmatmul.mubr.bf16.gmra.mrb[0].mxu0 %v543
      %v591 = vpop.f32.mrb[0].mxu0
      %v592 = vadd.f32 0.0, %v591
      %v593 = vpop.f32.mrb[0].mxu0
      %v594 = vpop.f32.mrb[0].mxu0
      %v595 = vadd.f32 0.0, %v594
      %v596 = vpop.f32.mrb[0].mxu0
      %597 = vmatprep.mubr.bf16.mxu0 0
      %598 = vmatmul.mubr.bf16.gmra.mrb[0].mxu0 %v546
      %v599 = vpop.f32.mrb[0].mxu0
      %v600 = vadd.f32 0.0, %v599
      %v601 = vpop.f32.mrb[0].mxu0
      %v602 = vpop.f32.mrb[0].mxu0
      %v603 = vadd.f32 0.0, %v602
      %v604 = vpop.f32.mrb[0].mxu0
      %605 = vmatprep.mubr.bf16.mxu0 0
      %606 = vmatmul.mubr.bf16.gmra.mrb[0].mxu0 %v549
      %v607 = vpop.f32.mrb[0].mxu0
      %v608 = vadd.f32 0.0, %v607
      %v609 = vpop.f32.mrb[0].mxu0
      %v610 = vpop.f32.mrb[0].mxu0
      %v611 = vadd.f32 0.0, %v610
      %v612 = vpop.f32.mrb[0].mxu0
      %613 = vmatprep.mubr.bf16.mxu0 0
      %614 = vmatmul.mubr.bf16.gmra.mrb[0].mxu0 %v552
      %v615 = vpop.f32.mrb[0].mxu0
      %v616 = vadd.f32 0.0, %v615
      %v617 = vpop.f32.mrb[0].mxu0
      %v618 = vpop.f32.mrb[0].mxu0
      %v619 = vadd.f32 0.0, %v618
      %v620 = vpop.f32.mrb[0].mxu0
      %621 = vdwg.mxu0
      %v622 = vadd.f32 %v498, %v592
      %v623 = vadd.f32 %v499, %v595
      %v624 = vadd.f32 %v500, %v600
      %v625 = vadd.f32 %v501, %v603
      %v626 = vadd.f32 %v502, %v608
      %v627 = vadd.f32 %v503, %v611
      %v628 = vadd.f32 %v504, %v616
      %v629 = vadd.f32 %v505, %v619
      %v630 = vld [vmem:[%s165] sm:$0xc]
      %s631 = scalar_lea.vmem %s1, 8
      %v632 = vld [vmem:[%s631] sm:$0x3]
      %v634 = vunpack.c.l.b16 %v630
      %v635 = vpack.c.b16 %v194, %v634
      %vm636 = vcmask 1045504
      %v637 = vrot.slane %v635, 2
      %v638 = vrot.slane %v203, 2
      %v639 = vsel %vm636, %v637, %v638
      %v640 = vrot.slane %v204, 2
      %v641 = vsel %vm636, %v638, %v640
      %v642 = vrot.slane %v205, 2
      %v643 = vsel %vm636, %v640, %v642
      %v644 = vrot.slane %v511, 2
      %v645 = vsel %vm636, %v642, %v644
      %v647 = vsel %vm244, %v639, 0
      %v650 = vsel %vm244, %v641, 0
      %v653 = vsel %vm244, %v643, 0
      %v656 = vsel %vm244, %v645, 0
      %v659 = vsel %vm257, %v632, 0
      %661 = vmatprep.subr.bf16.mxu0 0
      %662 = vmatpush1.bf16.msra.mxu0 %v659
      %663 = vmatprep.subr.bf16.mxu0 0
      %664 = vmatpush1.bf16.msra.mxu0 0
      %665 = vmatprep.subr.bf16.mxu0 0
      %666 = vmatpush1.bf16.msra.mxu0 0
      %667 = vmatprep.subr.bf16.mxu0 0
      %668 = vmatpush1.bf16.msra.mxu0 0
      %669 = vmatprep.subr.bf16.mxu0 0
      %670 = vmatpush1.bf16.msra.mxu0 0
      %671 = vmatprep.subr.bf16.mxu0 0
      %672 = vmatpush1.bf16.msra.mxu0 0
      %673 = vmatprep.subr.bf16.mxu0 0
      %674 = vmatpush1.bf16.msra.mxu0 0
      %675 = vmatprep.subr.bf16.mxu0 0
      %676 = vmatpush1.bf16.msra.mxu0 0
      %677 = vmatprep.subr.bf16.mxu0 0
      %678 = vmatpush1.bf16.msra.mxu0 0
      %679 = vmatprep.subr.bf16.mxu0 0
      %680 = vmatpush1.bf16.msra.mxu0 0
      %681 = vmatprep.subr.bf16.mxu0 0
      %682 = vmatpush1.bf16.msra.mxu0 0
      %683 = vmatprep.subr.bf16.mxu0 0
      %684 = vmatpush1.bf16.msra.mxu0 0
      %685 = vmatprep.subr.bf16.mxu0 0
      %686 = vmatpush1.bf16.msra.mxu0 0
      %687 = vmatprep.subr.bf16.mxu0 0
      %688 = vmatpush1.bf16.msra.mxu0 0
      %689 = vmatprep.subr.bf16.mxu0 0
      %690 = vmatpush1.bf16.msra.mxu0 0
      %691 = vmatprep.subr.bf16.mxu0 0
      %692 = vmatpush1.bf16.msra.mxu0 0
      %693 = vmatprep.mubr.bf16.mxu0 0
      %694 = vmatmul.mubr.bf16.gmra.mrb[0].mxu0 %v647
      %v695 = vpop.f32.mrb[0].mxu0
      %v696 = vadd.f32 0.0, %v695
      %v697 = vpop.f32.mrb[0].mxu0
      %v698 = vpop.f32.mrb[0].mxu0
      %v699 = vadd.f32 0.0, %v698
      %v700 = vpop.f32.mrb[0].mxu0
      %701 = vmatprep.mubr.bf16.mxu0 0
      %702 = vmatmul.mubr.bf16.gmra.mrb[0].mxu0 %v650
      %v703 = vpop.f32.mrb[0].mxu0
      %v704 = vadd.f32 0.0, %v703
      %v705 = vpop.f32.mrb[0].mxu0
      %v706 = vpop.f32.mrb[0].mxu0
      %v707 = vadd.f32 0.0, %v706
      %v708 = vpop.f32.mrb[0].mxu0
      %709 = vmatprep.mubr.bf16.mxu0 0
      %710 = vmatmul.mubr.bf16.gmra.mrb[0].mxu0 %v653
      %v711 = vpop.f32.mrb[0].mxu0
      %v712 = vadd.f32 0.0, %v711
      %v713 = vpop.f32.mrb[0].mxu0
      %v714 = vpop.f32.mrb[0].mxu0
      %v715 = vadd.f32 0.0, %v714
      %v716 = vpop.f32.mrb[0].mxu0
      %717 = vmatprep.mubr.bf16.mxu0 0
      %718 = vmatmul.mubr.bf16.gmra.mrb[0].mxu0 %v656
      %v719 = vpop.f32.mrb[0].mxu0
      %v720 = vadd.f32 0.0, %v719
      %v721 = vpop.f32.mrb[0].mxu0
      %v722 = vpop.f32.mrb[0].mxu0
      %v723 = vadd.f32 0.0, %v722
      %v724 = vpop.f32.mrb[0].mxu0
      %725 = vdwg.mxu0
      %v726 = vadd.f32 %v622, %v696
      %v727 = vadd.f32 %v623, %v699
      %v728 = vadd.f32 %v624, %v704
      %v729 = vadd.f32 %v625, %v707
      %v730 = vadd.f32 %v626, %v712
      %v731 = vadd.f32 %v627, %v715
      %v732 = vadd.f32 %v628, %v720
      %v733 = vadd.f32 %v629, %v723
      %v734 = vld [vmem:[%s165 + $0x20] sm:$0x7]
      %s735 = scalar_lea.vmem %s1, 10
      %v736 = vld [vmem:[%s735] sm:$0x3]
      %v738 = vunpack.c.l.b16 %v734
      %v739 = vpack.c.b16 %v738, %v738
      %vm740 = vsmask.f32 5376
      %v742 = vshrl.u32 %v635, 16
      %v744 = vrot.slane %v742, 2
      %v745 = vshll.u32 %v635, 16
      %v747 = vrot.slane %v745, 3
      %v748 = vor.u32 %v744, %v747
      %v749 = vrot.slane %v220, 2
      %v750 = vrot.slane %v216, 3
      %v751 = vor.u32 %v749, %v750
      %v752 = vsel %vm740, %v748, %v751
      %v753 = vrot.slane %v228, 2
      %v754 = vrot.slane %v224, 3
      %v755 = vor.u32 %v753, %v754
      %v756 = vsel %vm740, %v751, %v755
      %v757 = vrot.slane %v236, 2
      %v758 = vrot.slane %v232, 3
      %v759 = vor.u32 %v757, %v758
      %v760 = vsel %vm740, %v755, %v759
      %v762 = vshrl.u32 %v739, 16
      %v764 = vrot.slane %v762, 2
      %v765 = vshll.u32 %v739, 16
      %v767 = vrot.slane %v765, 3
      %v768 = vor.u32 %v764, %v767
      %v769 = vsel %vm740, %v759, %v768
      %v771 = vsel %vm244, %v752, 0
      %v774 = vsel %vm244, %v756, 0
      %v777 = vsel %vm244, %v760, 0
      %v780 = vsel %vm244, %v769, 0
      %v783 = vsel %vm257, %v736, 0
      %785 = vmatprep.subr.bf16.mxu0 0
      %786 = vmatpush1.bf16.msra.mxu0 %v783
      %787 = vmatprep.subr.bf16.mxu0 0
      %788 = vmatpush1.bf16.msra.mxu0 0
      %789 = vmatprep.subr.bf16.mxu0 0
      %790 = vmatpush1.bf16.msra.mxu0 0
      %791 = vmatprep.subr.bf16.mxu0 0
      %792 = vmatpush1.bf16.msra.mxu0 0
      %793 = vmatprep.subr.bf16.mxu0 0
      %794 = vmatpush1.bf16.msra.mxu0 0
      %795 = vmatprep.subr.bf16.mxu0 0
      %796 = vmatpush1.bf16.msra.mxu0 0
      %797 = vmatprep.subr.bf16.mxu0 0
      %798 = vmatpush1.bf16.msra.mxu0 0
      %799 = vmatprep.subr.bf16.mxu0 0
      %800 = vmatpush1.bf16.msra.mxu0 0
      %801 = vmatprep.subr.bf16.mxu0 0
      %802 = vmatpush1.bf16.msra.mxu0 0
      %803 = vmatprep.subr.bf16.mxu0 0
      %804 = vmatpush1.bf16.msra.mxu0 0
      %805 = vmatprep.subr.bf16.mxu0 0
      %806 = vmatpush1.bf16.msra.mxu0 0
      %807 = vmatprep.subr.bf16.mxu0 0
      %808 = vmatpush1.bf16.msra.mxu0 0
      %809 = vmatprep.subr.bf16.mxu0 0
      %810 = vmatpush1.bf16.msra.mxu0 0
      %811 = vmatprep.subr.bf16.mxu0 0
      %812 = vmatpush1.bf16.msra.mxu0 0
      %813 = vmatprep.subr.bf16.mxu0 0
      %814 = vmatpush1.bf16.msra.mxu0 0
      %815 = vmatprep.subr.bf16.mxu0 0
      %816 = vmatpush1.bf16.msra.mxu0 0
      %817 = vmatprep.mubr.bf16.mxu0 0
      %818 = vmatmul.mubr.bf16.gmra.mrb[0].mxu0 %v771
      %v819 = vpop.f32.mrb[0].mxu0
      %v820 = vadd.f32 0.0, %v819
      %v821 = vpop.f32.mrb[0].mxu0
      %v822 = vpop.f32.mrb[0].mxu0
      %v823 = vadd.f32 0.0, %v822
      %v824 = vpop.f32.mrb[0].mxu0
      %825 = vmatprep.mubr.bf16.mxu0 0
      %826 = vmatmul.mubr.bf16.gmra.mrb[0].mxu0 %v774
      %v827 = vpop.f32.mrb[0].mxu0
      %v828 = vadd.f32 0.0, %v827
      %v829 = vpop.f32.mrb[0].mxu0
      %v830 = vpop.f32.mrb[0].mxu0
      %v831 = vadd.f32 0.0, %v830
      %v832 = vpop.f32.mrb[0].mxu0
      %833 = vmatprep.mubr.bf16.mxu0 0
      %834 = vmatmul.mubr.bf16.gmra.mrb[0].mxu0 %v777
      %v835 = vpop.f32.mrb[0].mxu0
      %v836 = vadd.f32 0.0, %v835
      %v837 = vpop.f32.mrb[0].mxu0
      %v838 = vpop.f32.mrb[0].mxu0
      %v839 = vadd.f32 0.0, %v838
      %v840 = vpop.f32.mrb[0].mxu0
      %841 = vmatprep.mubr.bf16.mxu0 0
      %842 = vmatmul.mubr.bf16.gmra.mrb[0].mxu0 %v780
      %v843 = vpop.f32.mrb[0].mxu0
      %v844 = vadd.f32 0.0, %v843
      %v845 = vpop.f32.mrb[0].mxu0
      %v846 = vpop.f32.mrb[0].mxu0
      %v847 = vadd.f32 0.0, %v846
      %v848 = vpop.f32.mrb[0].mxu0
      %849 = vdwg.mxu0
      %v850 = vadd.f32 %v726, %v820
      %v851 = vadd.f32 %v727, %v823
      %v852 = vadd.f32 %v728, %v828
      %v853 = vadd.f32 %v729, %v831
      %v854 = vadd.f32 %v730, %v836
      %v855 = vadd.f32 %v731, %v839
      %v856 = vadd.f32 %v732, %v844
      %v857 = vadd.f32 %v733, %v847
      %v858 = vld [vmem:[%s165] sm:$0x8]
      %s859 = scalar_lea.vmem %s1, 12
      %v860 = vld [vmem:[%s859] sm:$0x3]
      %v862 = vunpack.c.l.b16 %v858
      %v863 = vpack.c.b16 %v194, %v862
      %vm864 = vcmask 1044480
      %v865 = vrot.slane %v863, 3
      %v866 = vrot.slane %v203, 3
      %v867 = vsel %vm864, %v865, %v866
      %v868 = vrot.slane %v204, 3
      %v869 = vsel %vm864, %v866, %v868
      %v870 = vrot.slane %v205, 3
      %v871 = vsel %vm864, %v868, %v870
      %v872 = vrot.slane %v739, 3
      %v873 = vsel %vm864, %v870, %v872
      %v875 = vsel %vm244, %v867, 0
      %v878 = vsel %vm244, %v869, 0
      %v881 = vsel %vm244, %v871, 0
      %v884 = vsel %vm244, %v873, 0
      %v887 = vsel %vm257, %v860, 0
      %889 = vmatprep.subr.bf16.mxu0 0
      %890 = vmatpush1.bf16.msra.mxu0 %v887
      %891 = vmatprep.subr.bf16.mxu0 0
      %892 = vmatpush1.bf16.msra.mxu0 0
      %893 = vmatprep.subr.bf16.mxu0 0
      %894 = vmatpush1.bf16.msra.mxu0 0
      %895 = vmatprep.subr.bf16.mxu0 0
      %896 = vmatpush1.bf16.msra.mxu0 0
      %897 = vmatprep.subr.bf16.mxu0 0
      %898 = vmatpush1.bf16.msra.mxu0 0
      %899 = vmatprep.subr.bf16.mxu0 0
      %900 = vmatpush1.bf16.msra.mxu0 0
      %901 = vmatprep.subr.bf16.mxu0 0
      %902 = vmatpush1.bf16.msra.mxu0 0
      %903 = vmatprep.subr.bf16.mxu0 0
      %904 = vmatpush1.bf16.msra.mxu0 0
      %905 = vmatprep.subr.bf16.mxu0 0
      %906 = vmatpush1.bf16.msra.mxu0 0
      %907 = vmatprep.subr.bf16.mxu0 0
      %908 = vmatpush1.bf16.msra.mxu0 0
      %909 = vmatprep.subr.bf16.mxu0 0
      %910 = vmatpush1.bf16.msra.mxu0 0
      %911 = vmatprep.subr.bf16.mxu0 0
      %912 = vmatpush1.bf16.msra.mxu0 0
      %913 = vmatprep.subr.bf16.mxu0 0
      %914 = vmatpush1.bf16.msra.mxu0 0
      %915 = vmatprep.subr.bf16.mxu0 0
      %916 = vmatpush1.bf16.msra.mxu0 0
      %917 = vmatprep.subr.bf16.mxu0 0
      %918 = vmatpush1.bf16.msra.mxu0 0
      %919 = vmatprep.subr.bf16.mxu0 0
      %920 = vmatpush1.bf16.msra.mxu0 0
      %921 = vmatprep.mubr.bf16.mxu0 0
      %922 = vmatmul.mubr.bf16.gmra.mrb[0].mxu0 %v875
      %v923 = vpop.f32.mrb[0].mxu0
      %v924 = vadd.f32 0.0, %v923
      %v925 = vpop.f32.mrb[0].mxu0
      %v926 = vpop.f32.mrb[0].mxu0
      %v927 = vadd.f32 0.0, %v926
      %v928 = vpop.f32.mrb[0].mxu0
      %929 = vmatprep.mubr.bf16.mxu0 0
      %930 = vmatmul.mubr.bf16.gmra.mrb[0].mxu0 %v878
      %v931 = vpop.f32.mrb[0].mxu0
      %v932 = vadd.f32 0.0, %v931
      %v933 = vpop.f32.mrb[0].mxu0
      %v934 = vpop.f32.mrb[0].mxu0
      %v935 = vadd.f32 0.0, %v934
      %v936 = vpop.f32.mrb[0].mxu0
      %937 = vmatprep.mubr.bf16.mxu0 0
      %938 = vmatmul.mubr.bf16.gmra.mrb[0].mxu0 %v881
      %v939 = vpop.f32.mrb[0].mxu0
      %v940 = vadd.f32 0.0, %v939
      %v941 = vpop.f32.mrb[0].mxu0
      %v942 = vpop.f32.mrb[0].mxu0
      %v943 = vadd.f32 0.0, %v942
      %v944 = vpop.f32.mrb[0].mxu0
      %945 = vmatprep.mubr.bf16.mxu0 0
      %946 = vmatmul.mubr.bf16.gmra.mrb[0].mxu0 %v884
      %v947 = vpop.f32.mrb[0].mxu0
      %v948 = vadd.f32 0.0, %v947
      %v949 = vpop.f32.mrb[0].mxu0
      %v950 = vpop.f32.mrb[0].mxu0
      %v951 = vadd.f32 0.0, %v950
      %v952 = vpop.f32.mrb[0].mxu0
      %953 = vdwg.mxu0
      %v954 = vadd.f32 %v850, %v924
      %v955 = vadd.f32 %v851, %v927
      %v956 = vadd.f32 %v852, %v932
      %v957 = vadd.f32 %v853, %v935
      %v958 = vadd.f32 %v854, %v940
      %v959 = vadd.f32 %v855, %v943
      %v960 = vadd.f32 %v856, %v948
      %v961 = vadd.f32 %v857, %v951
      %v962 = vld [vmem:[%s165 + $0x20] sm:$0xf]
      %s963 = scalar_lea.vmem %s1, 14
      %v964 = vld [vmem:[%s963] sm:$0x3]
      %v966 = vunpack.c.l.b16 %v962
      %v967 = vpack.c.b16 %v966, %v966
      %vm968 = vsmask.f32 4352
      %v970 = vshrl.u32 %v863, 16
      %v972 = vrot.slane %v970, 3
      %v973 = vshll.u32 %v863, 16
      %v975 = vrot.slane %v973, 4
      %v976 = vor.u32 %v972, %v975
      %v977 = vrot.slane %v220, 3
      %v978 = vrot.slane %v216, 4
      %v979 = vor.u32 %v977, %v978
      %v980 = vsel %vm968, %v976, %v979
      %v981 = vrot.slane %v228, 3
      %v982 = vrot.slane %v224, 4
      %v983 = vor.u32 %v981, %v982
      %v984 = vsel %vm968, %v979, %v983
      %v985 = vrot.slane %v236, 3
      %v986 = vrot.slane %v232, 4
      %v987 = vor.u32 %v985, %v986
      %v988 = vsel %vm968, %v983, %v987
      %v990 = vshrl.u32 %v967, 16
      %v992 = vrot.slane %v990, 3
      %v993 = vshll.u32 %v967, 16
      %v995 = vrot.slane %v993, 4
      %v996 = vor.u32 %v992, %v995
      %v997 = vsel %vm968, %v987, %v996
      %v999 = vsel %vm244, %v980, 0
      %v1002 = vsel %vm244, %v984, 0
      %v1005 = vsel %vm244, %v988, 0
      %v1008 = vsel %vm244, %v997, 0
      %v1011 = vsel %vm257, %v964, 0
      %1013 = vmatprep.subr.bf16.mxu0 0
      %1014 = vmatpush1.bf16.msra.mxu0 %v1011
      %1015 = vmatprep.subr.bf16.mxu0 0
      %1016 = vmatpush1.bf16.msra.mxu0 0
      %1017 = vmatprep.subr.bf16.mxu0 0
      %1018 = vmatpush1.bf16.msra.mxu0 0
      %1019 = vmatprep.subr.bf16.mxu0 0
      %1020 = vmatpush1.bf16.msra.mxu0 0
      %1021 = vmatprep.subr.bf16.mxu0 0
      %1022 = vmatpush1.bf16.msra.mxu0 0
      %1023 = vmatprep.subr.bf16.mxu0 0
      %1024 = vmatpush1.bf16.msra.mxu0 0
      %1025 = vmatprep.subr.bf16.mxu0 0
      %1026 = vmatpush1.bf16.msra.mxu0 0
      %1027 = vmatprep.subr.bf16.mxu0 0
      %1028 = vmatpush1.bf16.msra.mxu0 0
      %1029 = vmatprep.subr.bf16.mxu0 0
      %1030 = vmatpush1.bf16.msra.mxu0 0
      %1031 = vmatprep.subr.bf16.mxu0 0
      %1032 = vmatpush1.bf16.msra.mxu0 0
      %1033 = vmatprep.subr.bf16.mxu0 0
      %1034 = vmatpush1.bf16.msra.mxu0 0
      %1035 = vmatprep.subr.bf16.mxu0 0
      %1036 = vmatpush1.bf16.msra.mxu0 0
      %1037 = vmatprep.subr.bf16.mxu0 0
      %1038 = vmatpush1.bf16.msra.mxu0 0
      %1039 = vmatprep.subr.bf16.mxu0 0
      %1040 = vmatpush1.bf16.msra.mxu0 0
      %1041 = vmatprep.subr.bf16.mxu0 0
      %1042 = vmatpush1.bf16.msra.mxu0 0
      %1043 = vmatprep.subr.bf16.mxu0 0
      %1044 = vmatpush1.bf16.msra.mxu0 0
      %1045 = vmatprep.mubr.bf16.mxu0 0
      %1046 = vmatmul.mubr.bf16.gmra.mrb[0].mxu0 %v999
      %v1047 = vpop.f32.mrb[0].mxu0
      %v1048 = vadd.f32 0.0, %v1047
      %v1049 = vpop.f32.mrb[0].mxu0
      %v1050 = vpop.f32.mrb[0].mxu0
      %v1051 = vadd.f32 0.0, %v1050
      %v1052 = vpop.f32.mrb[0].mxu0
      %1053 = vmatprep.mubr.bf16.mxu0 0
      %1054 = vmatmul.mubr.bf16.gmra.mrb[0].mxu0 %v1002
      %v1055 = vpop.f32.mrb[0].mxu0
      %v1056 = vadd.f32 0.0, %v1055
      %v1057 = vpop.f32.mrb[0].mxu0
      %v1058 = vpop.f32.mrb[0].mxu0
      %v1059 = vadd.f32 0.0, %v1058
      %v1060 = vpop.f32.mrb[0].mxu0
      %1061 = vmatprep.mubr.bf16.mxu0 0
      %1062 = vmatmul.mubr.bf16.gmra.mrb[0].mxu0 %v1005
      %v1063 = vpop.f32.mrb[0].mxu0
      %v1064 = vadd.f32 0.0, %v1063
      %v1065 = vpop.f32.mrb[0].mxu0
      %v1066 = vpop.f32.mrb[0].mxu0
      %v1067 = vadd.f32 0.0, %v1066
      %v1068 = vpop.f32.mrb[0].mxu0
      %1069 = vmatprep.mubr.bf16.mxu0 0
      %1070 = vmatmul.mubr.bf16.gmra.mrb[0].mxu0 %v1008
      %v1071 = vpop.f32.mrb[0].mxu0
      %v1072 = vadd.f32 0.0, %v1071
      %v1073 = vpop.f32.mrb[0].mxu0
      %v1074 = vpop.f32.mrb[0].mxu0
      %v1075 = vadd.f32 0.0, %v1074
      %v1076 = vpop.f32.mrb[0].mxu0
      %1077 = vdwg.mxu0
      %v1078 = vadd.f32 %v954, %v1048
      %v1079 = vadd.f32 %v955, %v1051
      %v1080 = vadd.f32 %v956, %v1056
      %v1081 = vadd.f32 %v957, %v1059
      %v1082 = vadd.f32 %v958, %v1064
      %v1083 = vadd.f32 %v959, %v1067
      %v1084 = vadd.f32 %v960, %v1072
      %v1085 = vadd.f32 %v961, %v1075
      %v1086 = vld [vmem:[%s2] sm:$0x1]
      %v1088 = vlaneseq
      %v1089 = vshrl.u32 %v1088, 7
      %v1090 = vsub.s32 0, %v1089
      %v1091 = vrot.slane %v1086, %v1090
      %v1093 = vadd.f32 %v1078, %v1091
      %v1094 = vadd.f32 %v1079, %v1091
      %v1095 = vadd.f32 %v1080, %v1091
      %v1096 = vadd.f32 %v1081, %v1091
      %v1097 = vadd.f32 %v1082, %v1091
      %v1098 = vadd.f32 %v1083, %v1091
      %v1099 = vadd.f32 %v1084, %v1091
      %v1100 = vadd.f32 %v1085, %v1091
      %vm1101 = vcmask 261120
      %1102 = vst.msk [vmem:[%s170] sm:$0xff] %vm1101, %v1093
      %1103 = vst.msk [vmem:[%s170 + $0x8] sm:$0xff] %vm1101, %v1094
      %1104 = vst.msk [vmem:[%s170 + $0x10] sm:$0xff] %vm1101, %v1095
      %1105 = vst.msk [vmem:[%s170 + $0x18] sm:$0xff] %vm1101, %v1096
      %1106 = vst.msk [vmem:[%s170 + $0x20] sm:$0xff] %vm1101, %v1097
      %1107 = vst.msk [vmem:[%s170 + $0x28] sm:$0xff] %vm1101, %v1098
      %1108 = vst.msk [vmem:[%s170 + $0x30] sm:$0xff] %vm1101, %v1099
      %1109 = vst.msk [vmem:[%s170 + $0x38] sm:$0xff] %vm1101, %v1100
      %p1110 = scmp.lt.s32.totalorder %s14, 1
      %s1111 = scalar_select %p1110, %s14, 1
      %s1112 = smul.addr %s1111, 8
      %s1113 = smul.addr %s1112, 8
      %s1114 = scalar_lea.vmem %s3, %s1113
      // Predicated region
      $region33: #{_lambda_.8} parent=31 // pred_check
        %p1115 = pneg %p100
      $region34: #{_lambda_.8} parent=31 // pred_check_branch
        %1117 = sbr.rel (%p1115) target = $region36
      $region35: #{_lambda_.8} parent=31 // pred_region
        _
      $region36: #{_lambda_.8} parent=31 // pred_fallthru
        _
    $region32: #{_lambda_.8} parent=5 // pred_fallthru
      _
    %p1118 = scmp.le.s32.totalorder 2, %s9
    // Predicated region
    $region37: #{_lambda_.8} parent=5 // pred_check
      %p1119 = pneg %p1118
    $region38: #{_lambda_.8} parent=5 // pred_check_branch
      %1121 = sbr.rel (%p1119) target = $region40
    $region39: #{_lambda_.8} parent=5 // pred_region
      %s1122 = ssub.s32 %s9, 2
      // Predicated region
      $region41: #{_lambda_.8} parent=39 // pred_check
        %p1123 = pneg %p106
      $region42: #{_lambda_.8} parent=39 // pred_check_branch
        %1125 = sbr.rel (%p1123) target = $region44
      $region43: #{_lambda_.8} parent=39 // pred_region
        %p1126 = scmp.lt.s32.totalorder %s15, 1
        %s1127 = scalar_select %p1126, %s15, 1
        %s1128 = smul.addr %s1127, 8
        %s1129 = smul.addr %s1128, 8
        %s1130 = scalar_lea.vmem %s3, %s1129
      $region44: #{_lambda_.8} parent=39 // pred_fallthru
        _
    $region40: #{_lambda_.8} parent=5 // pred_fallthru
      _
  $region6: #{_lambda_.8} parent=0 // loop_footer
    %s13 = sadd.s32 1, %s9
  $region7: #{_lambda_.8} parent=0 // loop_footer_branch
    %8 = sbr.rel target = $region3
  $region8: #{_lambda_.8} parent=0 // loop_exit
    _

// kernel: _lambda_.9
$region0: #{_lambda_.9}
  #allocation0 [shape = 'u32[]', space=smem, size = 0x4, offset = 0x4, fixed_abs, tag = 'smem constant byte address 0x4 - core index']
  #allocation1 [shape = 'u32[144,128]{1,0:T(1,128)}', space=vmem, size = 0x12000, scoped, tag = 'internal scratch']
  %s0 = inlined_call_operand.vmem [shape: bf16[2,68,32], index: 0, kind: input, shape index: {}]
  %s1 = inlined_call_operand.vmem [shape: bf16[5,32,64], index: 1, kind: input, shape index: {}]
  %s2 = inlined_call_operand.vmem [shape: f32[1,64], index: 2, kind: input, shape index: {}]
  %s3 = inlined_call_operand.vmem [shape: f32[2,64,64], index: 3, kind: output, shape index: {}]
  %s4 = sld [smem:[#allocation0]]
  $region45: #{_lambda_.9} parent=0
    _
  %s6 = ssub.s32 1, %s4
  %s7 = scalar_select 0, %s6, %s4
  loop: start=0, step=1, limit=4
  $region2: #{_lambda_.9} parent=0 // loop_pre_header
    _
  $region3: #{_lambda_.9} parent=0 // loop_header
    %s9 = sphi 0, %s13
    %p10 = scmp.ge.s32.totalorder %s9, 4
    %s19 = sphi 0, %s21
    %s22 = sphi 0, %s19
    %s23 = sphi 0, %s22
    %s39 = sphi 0, %s23
    %s43 = sphi 0, %s43
    %s45 = sphi 0, %s43
    %s46 = sphi 0, %s45
    %s60 = sphi 0, %s46
    %s64 = sphi 0, %s64
    %s66 = sphi 0, %s64
    %s67 = sphi 0, %s66
    %s81 = sphi 0, %s67
    %s87 = sphi 0, %s89
    %s90 = sphi 0, %s87
    %s91 = sphi 0, %s90
    %s107 = sphi 0, %s91
  $region4: #{_lambda_.9} parent=0 // loop_header_branch
    %12 = sbr.rel (%p10) target = $region8
  $region5: #{_lambda_.9} parent=0 // loop_body
    %s14 = ssub.s32 %s9, 1
    %s15 = ssub.s32 %s9, 2
    %s16 = sadd.s32 %s9, 1
    %s17 = ssub.s32 %s9, %s16
    %p18 = scmp.eq.s32.totalorder %s17, 0
    %s20 = sadd.s32 %s19, 1
    %s21 = scalar_select %p18, %s19, %s20
    %p24 = pneg %p18
    %p25 = scmp.eq.s32.totalorder %s9, 1
    %p26 = por %p24, %p25
    %p27 = scmp.ne.s32.totalorder %s19, %s22
    %p28 = scmp.eq.s32.totalorder %s9, 0
    %p29 = por %p27, %p28
    %p30 = scmp.ne.s32.totalorder %s19, %s22
    %p31 = scmp.eq.s32.totalorder %s14, 1
    %p32 = por %p30, %p31
    %p33 = scmp.ne.s32.totalorder %s22, %s23
    %p34 = scmp.eq.s32.totalorder %s14, 0
    %p35 = por %p33, %p34
    %p36 = scmp.ne.s32.totalorder %s22, %s23
    %p37 = scmp.eq.s32.totalorder %s15, 1
    %p38 = por %p36, %p37
    %p40 = scmp.ne.s32.totalorder %s23, %s39
    %p41 = scmp.eq.s32.totalorder %s15, 0
    %p42 = por %p40, %p41
    %s44 = sadd.s32 %s43, 1
    %p47 = scmp.eq.s32.totalorder %s9, 1
    %p48 = scmp.ne.s32.totalorder %s43, %s45
    %p49 = scmp.eq.s32.totalorder %s9, 0
    %p50 = por %p48, %p49
    %p51 = scmp.ne.s32.totalorder %s43, %s45
    %p52 = scmp.eq.s32.totalorder %s14, 1
    %p53 = por %p51, %p52
    %p54 = scmp.ne.s32.totalorder %s45, %s46
    %p55 = scmp.eq.s32.totalorder %s14, 0
    %p56 = por %p54, %p55
    %p57 = scmp.ne.s32.totalorder %s45, %s46
    %p58 = scmp.eq.s32.totalorder %s15, 1
    %p59 = por %p57, %p58
    %p61 = scmp.ne.s32.totalorder %s46, %s60
    %p62 = scmp.eq.s32.totalorder %s15, 0
    %p63 = por %p61, %p62
    %s65 = sadd.s32 %s64, 1
    %p68 = scmp.eq.s32.totalorder %s9, 1
    %p69 = scmp.ne.s32.totalorder %s64, %s66
    %p70 = scmp.eq.s32.totalorder %s9, 0
    %p71 = por %p69, %p70
    %p72 = scmp.ne.s32.totalorder %s64, %s66
    %p73 = scmp.eq.s32.totalorder %s14, 1
    %p74 = por %p72, %p73
    %p75 = scmp.ne.s32.totalorder %s66, %s67
    %p76 = scmp.eq.s32.totalorder %s14, 0
    %p77 = por %p75, %p76
    %p78 = scmp.ne.s32.totalorder %s66, %s67
    %p79 = scmp.eq.s32.totalorder %s15, 1
    %p80 = por %p78, %p79
    %p82 = scmp.ne.s32.totalorder %s67, %s81
    %p83 = scmp.eq.s32.totalorder %s15, 0
    %p84 = por %p82, %p83
    %s85 = ssub.s32 %s9, %s16
    %p86 = scmp.eq.s32.totalorder %s85, 0
    %s88 = sadd.s32 %s87, 1
    %s89 = scalar_select %p86, %s87, %s88
    %p92 = pneg %p86
    %p93 = scmp.eq.s32.totalorder %s9, 1
    %p94 = por %p92, %p93
    %p95 = scmp.ne.s32.totalorder %s87, %s90
    %p96 = scmp.eq.s32.totalorder %s9, 0
    %p97 = por %p95, %p96
    %p98 = scmp.ne.s32.totalorder %s87, %s90
    %p99 = scmp.eq.s32.totalorder %s14, 1
    %p100 = por %p98, %p99
    %p101 = scmp.ne.s32.totalorder %s90, %s91
    %p102 = scmp.eq.s32.totalorder %s14, 0
    %p103 = por %p101, %p102
    %p104 = scmp.ne.s32.totalorder %s90, %s91
    %p105 = scmp.eq.s32.totalorder %s15, 1
    %p106 = por %p104, %p105
    %p108 = scmp.ne.s32.totalorder %s91, %s107
    %p109 = scmp.eq.s32.totalorder %s15, 0
    %p110 = por %p108, %p109
    %p111 = scmp.le.s32.totalorder 1, %s9
    %p112 = scmp.lt.s32.totalorder %s9, 3
    %p113 = pnand %p111, %p112
    %p114 = pneg %p113
    // Predicated region
    $region9: #{_lambda_.9} parent=5 // pred_check
      _
    $region10: #{_lambda_.9} parent=5 // pred_check_branch
      %116 = sbr.rel (%p113) target = $region12
    $region11: #{_lambda_.9} parent=5 // pred_region
      %s117 = ssub.s32 %s9, 1
      // Predicated region
      $region13: #{_lambda_.9} parent=11 // pred_check
        %p118 = pneg %p56
      $region14: #{_lambda_.9} parent=11 // pred_check_branch
        %120 = sbr.rel (%p118) target = $region16
      $region15: #{_lambda_.9} parent=11 // pred_region
        _
      $region16: #{_lambda_.9} parent=11 // pred_fallthru
        _
      // Predicated region
      $region17: #{_lambda_.9} parent=11 // pred_check
        %p121 = pneg %p77
      $region18: #{_lambda_.9} parent=11 // pred_check_branch
        %123 = sbr.rel (%p121) target = $region20
      $region19: #{_lambda_.9} parent=11 // pred_region
        _
      $region20: #{_lambda_.9} parent=11 // pred_fallthru
        _
    $region12: #{_lambda_.9} parent=5 // pred_fallthru
      _
    %p124 = scmp.lt.s32.totalorder %s9, 2
    // Predicated region
    $region21: #{_lambda_.9} parent=5 // pred_check
      %p125 = pneg %p124
    $region22: #{_lambda_.9} parent=5 // pred_check_branch
      %127 = sbr.rel (%p125) target = $region24
    $region23: #{_lambda_.9} parent=5 // pred_region
      // Predicated region
      $region25: #{_lambda_.9} parent=23 // pred_check
        %p128 = pneg %p29
      $region26: #{_lambda_.9} parent=23 // pred_check_branch
        %130 = sbr.rel (%p128) target = $region28
      $region27: #{_lambda_.9} parent=23 // pred_region
        %p131 = scmp.lt.s32.totalorder %s9, 1
        %s132 = scalar_select %p131, %s9, 1
        %s133 = smul.addr %s132, 9
        %s134 = smul.addr %s133, 4
        %s135 = scalar_lea.vmem %s0, %s134
      $region28: #{_lambda_.9} parent=23 // pred_fallthru
        _
    $region24: #{_lambda_.9} parent=5 // pred_fallthru
      _
    %p136 = scmp.le.s32.totalorder 1, %s9
    %p137 = scmp.lt.s32.totalorder %s9, 3
    %p138 = pnand %p136, %p137
    %p139 = pneg %p138
    // Predicated region
    $region29: #{_lambda_.9} parent=5 // pred_check
      _
    $region30: #{_lambda_.9} parent=5 // pred_check_branch
      %141 = sbr.rel (%p138) target = $region32
    $region31: #{_lambda_.9} parent=5 // pred_region
      %s142 = ssub.s32 %s9, 1
      %p143 = scmp.lt.s32.totalorder %s14, 1
      %s144 = scalar_select %p143, %s14, 1
      %s145 = smul.addr %s144, 9
      %s146 = smul.addr %s145, 4
      %s147 = scalar_lea.vmem %s0, %s146
      %p148 = pneg %p35
      %p149 = pneg %p32
      %p150 = pneg %p56
      %p151 = pneg %p53
      %p152 = pneg %p77
      %p153 = pneg %p74
      %p154 = pneg %p103
      %p155 = pneg %p100
      %p156 = scmp.lt.s32.totalorder %s14, 1
      %s157 = scalar_select %p156, %s14, 1
      %s158 = smul.addr %s157, 8
      %s159 = smul.addr %s158, 8
      %s160 = scalar_lea.vmem %s3, %s159
      %p161 = scmp.lt.s32.totalorder %s14, 1
      %s162 = scalar_select %p161, %s14, 1
      %s163 = smul.addr %s162, 9
      %s164 = smul.addr %s163, 4
      %s165 = scalar_lea.vmem %s0, %s164
      %p166 = scmp.lt.s32.totalorder %s14, 1
      %s167 = scalar_select %p166, %s14, 1
      %s168 = smul.addr %s167, 8
      %s169 = smul.addr %s168, 8
      %s170 = scalar_lea.vmem %s3, %s169
      %v172 = vld [vmem:[%s165] sm:$0xf]
      %v173 = vld [vmem:[%s165 + $0x4] sm:$0xf]
      %v174 = vld [vmem:[%s165 + $0x8] sm:$0xf]
      %v175 = vld [vmem:[%s165 + $0xc] sm:$0xf]
      %v176 = vld [vmem:[%s165 + $0x10] sm:$0xf]
      %v177 = vld [vmem:[%s165 + $0x14] sm:$0xf]
      %v178 = vld [vmem:[%s165 + $0x18] sm:$0xf]
      %v179 = vld [vmem:[%s165 + $0x1c] sm:$0xf]
      %v180 = vld [vmem:[%s1] sm:$0xf]
      %v181 = vld [vmem:[%s1 + $0x4] sm:$0xf]
      %v182 = vld [vmem:[%s1 + $0x8] sm:$0xf]
      %v183 = vld [vmem:[%s1 + $0xc] sm:$0xf]
      %v184 = vld [vmem:[%s165 + $0x20] sm:$0x1]
      %s185 = scalar_lea.vmem %s1, 16
      %v186 = vld [vmem:[%s185] sm:$0xf]
      %v187 = vld [vmem:[%s185 + $0x4] sm:$0xf]
      %v188 = vld [vmem:[%s185 + $0x8] sm:$0xf]
      %v189 = vld [vmem:[%s185 + $0xc] sm:$0xf]
      %v199 = vunpack.c.l.b16 %v172
      %v200 = vunpack.c.l.b16 %v173
      %v201 = vunpack.c.l.b16 %v174
      %v202 = vunpack.c.l.b16 %v175
      %v203 = vunpack.c.l.b16 %v176
      %v204 = vunpack.c.l.b16 %v177
      %v205 = vunpack.c.l.b16 %v178
      %v206 = vunpack.c.l.b16 %v179
      %v207 = vunpack.c.l.b16 %v184
      %v208 = vpack.c.b16 %v200, %v199
      %v209 = vpack.c.b16 %v202, %v201
      %v210 = vpack.c.b16 %v204, %v203
      %v211 = vpack.c.b16 %v206, %v205
      %v212 = vpack.c.b16 %v207, %v207
      %vm213 = vsmask.f32 7424
      %v215 = vshrl.u32 %v208, 16
      %v217 = vshll.u32 %v208, 16
      %v219 = vrot.slane %v217, 1
      %v220 = vor.u32 %v215, %v219
      %v222 = vshll.u32 %v209, 16
      %v224 = vrot.slane %v222, 1
      %v225 = vsel %vm213, %v220, %v224
      %v226 = vshrl.u32 %v209, 16
      %v228 = vor.u32 %v226, %v224
      %v230 = vshll.u32 %v210, 16
      %v232 = vrot.slane %v230, 1
      %v233 = vsel %vm213, %v228, %v232
      %v234 = vshrl.u32 %v210, 16
      %v236 = vor.u32 %v234, %v232
      %v238 = vshll.u32 %v211, 16
      %v240 = vrot.slane %v238, 1
      %v241 = vsel %vm213, %v236, %v240
      %v242 = vshrl.u32 %v211, 16
      %v244 = vor.u32 %v242, %v240
      %v246 = vshll.u32 %v212, 16
      %v248 = vrot.slane %v246, 1
      %v249 = vsel %vm213, %v244, %v248
      %v254 = vunpack.c.l.b16 %v186
      %v255 = vunpack.c.l.b16 %v187
      %v256 = vunpack.c.l.b16 %v188
      %v257 = vunpack.c.l.b16 %v189
      %v258 = vpack.c.b16 %v255, %v254
      %v259 = vpack.c.b16 %v257, %v256
      %vm262 = vcmask 261120
      %v264 = vsel %vm262, %v225, 0
      %v267 = vsel %vm262, %v233, 0
      %v270 = vsel %vm262, %v241, 0
      %v273 = vsel %vm262, %v249, 0
      %275 = vmatprep.subr.bf16.mxu0 0
      %276 = vmatpush1.bf16.msra.mxu0 %v258
      %277 = vmatprep.subr.bf16.mxu0 0
      %278 = vmatpush1.bf16.msra.mxu0 %v259
      %279 = vmatprep.subr.bf16.mxu0 0
      %280 = vmatpush1.bf16.msra.mxu0 0
      %281 = vmatprep.subr.bf16.mxu0 0
      %282 = vmatpush1.bf16.msra.mxu0 0
      %283 = vmatprep.subr.bf16.mxu0 0
      %284 = vmatpush1.bf16.msra.mxu0 0
      %285 = vmatprep.subr.bf16.mxu0 0
      %286 = vmatpush1.bf16.msra.mxu0 0
      %287 = vmatprep.subr.bf16.mxu0 0
      %288 = vmatpush1.bf16.msra.mxu0 0
      %289 = vmatprep.subr.bf16.mxu0 0
      %290 = vmatpush1.bf16.msra.mxu0 0
      %291 = vmatprep.subr.bf16.mxu0 0
      %292 = vmatpush1.bf16.msra.mxu0 0
      %293 = vmatprep.subr.bf16.mxu0 0
      %294 = vmatpush1.bf16.msra.mxu0 0
      %295 = vmatprep.subr.bf16.mxu0 0
      %296 = vmatpush1.bf16.msra.mxu0 0
      %297 = vmatprep.subr.bf16.mxu0 0
      %298 = vmatpush1.bf16.msra.mxu0 0
      %299 = vmatprep.subr.bf16.mxu0 0
      %300 = vmatpush1.bf16.msra.mxu0 0
      %301 = vmatprep.subr.bf16.mxu0 0
      %302 = vmatpush1.bf16.msra.mxu0 0
      %303 = vmatprep.subr.bf16.mxu0 0
      %304 = vmatpush1.bf16.msra.mxu0 0
      %305 = vmatprep.subr.bf16.mxu0 0
      %306 = vmatpush1.bf16.msra.mxu0 0
      %307 = vmatprep.mubr.bf16.mxu0 0
      %308 = vmatmul.mubr.bf16.gmra.mrb[0].mxu0 %v264
      %v309 = vpop.f32.mrb[0].mxu0
      %v310 = vadd.f32 0.0, %v309
      %v311 = vpop.f32.mrb[0].mxu0
      %v312 = vpop.f32.mrb[0].mxu0
      %v313 = vadd.f32 0.0, %v312
      %v314 = vpop.f32.mrb[0].mxu0
      %315 = vmatprep.mubr.bf16.mxu0 0
      %316 = vmatmul.mubr.bf16.gmra.mrb[0].mxu0 %v267
      %v317 = vpop.f32.mrb[0].mxu0
      %v318 = vadd.f32 0.0, %v317
      %v319 = vpop.f32.mrb[0].mxu0
      %v320 = vpop.f32.mrb[0].mxu0
      %v321 = vadd.f32 0.0, %v320
      %v322 = vpop.f32.mrb[0].mxu0
      %323 = vmatprep.mubr.bf16.mxu0 0
      %324 = vmatmul.mubr.bf16.gmra.mrb[0].mxu0 %v270
      %v325 = vpop.f32.mrb[0].mxu0
      %v326 = vadd.f32 0.0, %v325
      %v327 = vpop.f32.mrb[0].mxu0
      %v328 = vpop.f32.mrb[0].mxu0
      %v329 = vadd.f32 0.0, %v328
      %v330 = vpop.f32.mrb[0].mxu0
      %331 = vmatprep.mubr.bf16.mxu0 0
      %332 = vmatmul.mubr.bf16.gmra.mrb[0].mxu0 %v273
      %v333 = vpop.f32.mrb[0].mxu0
      %v334 = vadd.f32 0.0, %v333
      %v335 = vpop.f32.mrb[0].mxu0
      %v336 = vpop.f32.mrb[0].mxu0
      %v337 = vadd.f32 0.0, %v336
      %v338 = vpop.f32.mrb[0].mxu0
      %339 = vdwg.mxu0
      %v344 = vunpack.c.l.b16 %v180
      %v345 = vunpack.c.l.b16 %v181
      %v346 = vunpack.c.l.b16 %v182
      %v347 = vunpack.c.l.b16 %v183
      %v348 = vpack.c.b16 %v345, %v344
      %v349 = vpack.c.b16 %v347, %v346
      %v352 = vsel %vm262, %v208, 0
      %v354 = vsel %vm262, %v209, 0
      %v356 = vsel %vm262, %v210, 0
      %v358 = vsel %vm262, %v211, 0
      %360 = vmatprep.subr.bf16.mxu0 0
      %361 = vmatpush1.bf16.msra.mxu0 %v348
      %362 = vmatprep.subr.bf16.mxu0 0
      %363 = vmatpush1.bf16.msra.mxu0 %v349
      %364 = vmatprep.subr.bf16.mxu0 0
      %365 = vmatpush1.bf16.msra.mxu0 0
      %366 = vmatprep.subr.bf16.mxu0 0
      %367 = vmatpush1.bf16.msra.mxu0 0
      %368 = vmatprep.subr.bf16.mxu0 0
      %369 = vmatpush1.bf16.msra.mxu0 0
      %370 = vmatprep.subr.bf16.mxu0 0
      %371 = vmatpush1.bf16.msra.mxu0 0
      %372 = vmatprep.subr.bf16.mxu0 0
      %373 = vmatpush1.bf16.msra.mxu0 0
      %374 = vmatprep.subr.bf16.mxu0 0
      %375 = vmatpush1.bf16.msra.mxu0 0
      %376 = vmatprep.subr.bf16.mxu0 0
      %377 = vmatpush1.bf16.msra.mxu0 0
      %378 = vmatprep.subr.bf16.mxu0 0
      %379 = vmatpush1.bf16.msra.mxu0 0
      %380 = vmatprep.subr.bf16.mxu0 0
      %381 = vmatpush1.bf16.msra.mxu0 0
      %382 = vmatprep.subr.bf16.mxu0 0
      %383 = vmatpush1.bf16.msra.mxu0 0
      %384 = vmatprep.subr.bf16.mxu0 0
      %385 = vmatpush1.bf16.msra.mxu0 0
      %386 = vmatprep.subr.bf16.mxu0 0
      %387 = vmatpush1.bf16.msra.mxu0 0
      %388 = vmatprep.subr.bf16.mxu0 0
      %389 = vmatpush1.bf16.msra.mxu0 0
      %390 = vmatprep.subr.bf16.mxu0 0
      %391 = vmatpush1.bf16.msra.mxu0 0
      %392 = vmatprep.mubr.bf16.mxu0 0
      %393 = vmatmul.mubr.bf16.gmra.mrb[0].mxu0 %v352
      %v394 = vpop.f32.mrb[0].mxu0
      %v395 = vadd.f32 %v310, %v394
      %v396 = vpop.f32.mrb[0].mxu0
      %v397 = vpop.f32.mrb[0].mxu0
      %v398 = vadd.f32 %v313, %v397
      %v399 = vpop.f32.mrb[0].mxu0
      %400 = vmatprep.mubr.bf16.mxu0 0
      %401 = vmatmul.mubr.bf16.gmra.mrb[0].mxu0 %v354
      %v402 = vpop.f32.mrb[0].mxu0
      %v403 = vadd.f32 %v318, %v402
      %v404 = vpop.f32.mrb[0].mxu0
      %v405 = vpop.f32.mrb[0].mxu0
      %v406 = vadd.f32 %v321, %v405
      %v407 = vpop.f32.mrb[0].mxu0
      %408 = vmatprep.mubr.bf16.mxu0 0
      %409 = vmatmul.mubr.bf16.gmra.mrb[0].mxu0 %v356
      %v410 = vpop.f32.mrb[0].mxu0
      %v411 = vadd.f32 %v326, %v410
      %v412 = vpop.f32.mrb[0].mxu0
      %v413 = vpop.f32.mrb[0].mxu0
      %v414 = vadd.f32 %v329, %v413
      %v415 = vpop.f32.mrb[0].mxu0
      %416 = vmatprep.mubr.bf16.mxu0 0
      %417 = vmatmul.mubr.bf16.gmra.mrb[0].mxu0 %v358
      %v418 = vpop.f32.mrb[0].mxu0
      %v419 = vadd.f32 %v334, %v418
      %v420 = vpop.f32.mrb[0].mxu0
      %v421 = vpop.f32.mrb[0].mxu0
      %v422 = vadd.f32 %v337, %v421
      %v423 = vpop.f32.mrb[0].mxu0
      %424 = vdwg.mxu0
      %v425 = vld [vmem:[%s165] sm:$0xe]
      %s426 = scalar_lea.vmem %s1, 32
      %v427 = vld [vmem:[%s426] sm:$0xf]
      %v428 = vld [vmem:[%s426 + $0x4] sm:$0xf]
      %v429 = vld [vmem:[%s426 + $0x8] sm:$0xf]
      %v430 = vld [vmem:[%s426 + $0xc] sm:$0xf]
      %v432 = vunpack.c.l.b16 %v425
      %v433 = vpack.c.b16 %v200, %v432
      %vm434 = vcmask 1046528
      %v435 = vrot.slane %v433, 1
      %v436 = vrot.slane %v209, 1
      %v437 = vsel %vm434, %v435, %v436
      %v438 = vrot.slane %v210, 1
      %v439 = vsel %vm434, %v436, %v438
      %v440 = vrot.slane %v211, 1
      %v441 = vsel %vm434, %v438, %v440
      %v442 = vrot.slane %v212, 1
      %v443 = vsel %vm434, %v440, %v442
      %v448 = vunpack.c.l.b16 %v427
      %v449 = vunpack.c.l.b16 %v428
      %v450 = vunpack.c.l.b16 %v429
      %v451 = vunpack.c.l.b16 %v430
      %v452 = vpack.c.b16 %v449, %v448
      %v453 = vpack.c.b16 %v451, %v450
      %v457 = vsel %vm262, %v437, 0
      %v460 = vsel %vm262, %v439, 0
      %v463 = vsel %vm262, %v441, 0
      %v466 = vsel %vm262, %v443, 0
      %468 = vmatprep.subr.bf16.mxu0 0
      %469 = vmatpush1.bf16.msra.mxu0 %v452
      %470 = vmatprep.subr.bf16.mxu0 0
      %471 = vmatpush1.bf16.msra.mxu0 %v453
      %472 = vmatprep.subr.bf16.mxu0 0
      %473 = vmatpush1.bf16.msra.mxu0 0
      %474 = vmatprep.subr.bf16.mxu0 0
      %475 = vmatpush1.bf16.msra.mxu0 0
      %476 = vmatprep.subr.bf16.mxu0 0
      %477 = vmatpush1.bf16.msra.mxu0 0
      %478 = vmatprep.subr.bf16.mxu0 0
      %479 = vmatpush1.bf16.msra.mxu0 0
      %480 = vmatprep.subr.bf16.mxu0 0
      %481 = vmatpush1.bf16.msra.mxu0 0
      %482 = vmatprep.subr.bf16.mxu0 0
      %483 = vmatpush1.bf16.msra.mxu0 0
      %484 = vmatprep.subr.bf16.mxu0 0
      %485 = vmatpush1.bf16.msra.mxu0 0
      %486 = vmatprep.subr.bf16.mxu0 0
      %487 = vmatpush1.bf16.msra.mxu0 0
      %488 = vmatprep.subr.bf16.mxu0 0
      %489 = vmatpush1.bf16.msra.mxu0 0
      %490 = vmatprep.subr.bf16.mxu0 0
      %491 = vmatpush1.bf16.msra.mxu0 0
      %492 = vmatprep.subr.bf16.mxu0 0
      %493 = vmatpush1.bf16.msra.mxu0 0
      %494 = vmatprep.subr.bf16.mxu0 0
      %495 = vmatpush1.bf16.msra.mxu0 0
      %496 = vmatprep.subr.bf16.mxu0 0
      %497 = vmatpush1.bf16.msra.mxu0 0
      %498 = vmatprep.subr.bf16.mxu0 0
      %499 = vmatpush1.bf16.msra.mxu0 0
      %500 = vmatprep.mubr.bf16.mxu0 0
      %501 = vmatmul.mubr.bf16.gmra.mrb[0].mxu0 %v457
      %v502 = vpop.f32.mrb[0].mxu0
      %v503 = vadd.f32 0.0, %v502
      %v504 = vpop.f32.mrb[0].mxu0
      %v505 = vpop.f32.mrb[0].mxu0
      %v506 = vadd.f32 0.0, %v505
      %v507 = vpop.f32.mrb[0].mxu0
      %508 = vmatprep.mubr.bf16.mxu0 0
      %509 = vmatmul.mubr.bf16.gmra.mrb[0].mxu0 %v460
      %v510 = vpop.f32.mrb[0].mxu0
      %v511 = vadd.f32 0.0, %v510
      %v512 = vpop.f32.mrb[0].mxu0
      %v513 = vpop.f32.mrb[0].mxu0
      %v514 = vadd.f32 0.0, %v513
      %v515 = vpop.f32.mrb[0].mxu0
      %516 = vmatprep.mubr.bf16.mxu0 0
      %517 = vmatmul.mubr.bf16.gmra.mrb[0].mxu0 %v463
      %v518 = vpop.f32.mrb[0].mxu0
      %v519 = vadd.f32 0.0, %v518
      %v520 = vpop.f32.mrb[0].mxu0
      %v521 = vpop.f32.mrb[0].mxu0
      %v522 = vadd.f32 0.0, %v521
      %v523 = vpop.f32.mrb[0].mxu0
      %524 = vmatprep.mubr.bf16.mxu0 0
      %525 = vmatmul.mubr.bf16.gmra.mrb[0].mxu0 %v466
      %v526 = vpop.f32.mrb[0].mxu0
      %v527 = vadd.f32 0.0, %v526
      %v528 = vpop.f32.mrb[0].mxu0
      %v529 = vpop.f32.mrb[0].mxu0
      %v530 = vadd.f32 0.0, %v529
      %v531 = vpop.f32.mrb[0].mxu0
      %532 = vdwg.mxu0
      %v533 = vadd.f32 %v395, %v503
      %v534 = vadd.f32 %v398, %v506
      %v535 = vadd.f32 %v403, %v511
      %v536 = vadd.f32 %v406, %v514
      %v537 = vadd.f32 %v411, %v519
      %v538 = vadd.f32 %v414, %v522
      %v539 = vadd.f32 %v419, %v527
      %v540 = vadd.f32 %v422, %v530
      %v541 = vld [vmem:[%s165 + $0x20] sm:$0x3]
      %s542 = scalar_lea.vmem %s1, 48
      %v543 = vld [vmem:[%s542] sm:$0xf]
      %v544 = vld [vmem:[%s542 + $0x4] sm:$0xf]
      %v545 = vld [vmem:[%s542 + $0x8] sm:$0xf]
      %v546 = vld [vmem:[%s542 + $0xc] sm:$0xf]
      %v548 = vunpack.c.l.b16 %v541
      %v549 = vpack.c.b16 %v548, %v548
      %vm550 = vsmask.f32 6400
      %v552 = vshrl.u32 %v433, 16
      %v554 = vrot.slane %v552, 1
      %v555 = vshll.u32 %v433, 16
      %v557 = vrot.slane %v555, 2
      %v558 = vor.u32 %v554, %v557
      %v559 = vrot.slane %v226, 1
      %v560 = vrot.slane %v222, 2
      %v561 = vor.u32 %v559, %v560
      %v562 = vsel %vm550, %v558, %v561
      %v563 = vrot.slane %v234, 1
      %v564 = vrot.slane %v230, 2
      %v565 = vor.u32 %v563, %v564
      %v566 = vsel %vm550, %v561, %v565
      %v567 = vrot.slane %v242, 1
      %v568 = vrot.slane %v238, 2
      %v569 = vor.u32 %v567, %v568
      %v570 = vsel %vm550, %v565, %v569
      %v572 = vshrl.u32 %v549, 16
      %v574 = vrot.slane %v572, 1
      %v575 = vshll.u32 %v549, 16
      %v577 = vrot.slane %v575, 2
      %v578 = vor.u32 %v574, %v577
      %v579 = vsel %vm550, %v569, %v578
      %v584 = vunpack.c.l.b16 %v543
      %v585 = vunpack.c.l.b16 %v544
      %v586 = vunpack.c.l.b16 %v545
      %v587 = vunpack.c.l.b16 %v546
      %v588 = vpack.c.b16 %v585, %v584
      %v589 = vpack.c.b16 %v587, %v586
      %v593 = vsel %vm262, %v562, 0
      %v596 = vsel %vm262, %v566, 0
      %v599 = vsel %vm262, %v570, 0
      %v602 = vsel %vm262, %v579, 0
      %604 = vmatprep.subr.bf16.mxu0 0
      %605 = vmatpush1.bf16.msra.mxu0 %v588
      %606 = vmatprep.subr.bf16.mxu0 0
      %607 = vmatpush1.bf16.msra.mxu0 %v589
      %608 = vmatprep.subr.bf16.mxu0 0
      %609 = vmatpush1.bf16.msra.mxu0 0
      %610 = vmatprep.subr.bf16.mxu0 0
      %611 = vmatpush1.bf16.msra.mxu0 0
      %612 = vmatprep.subr.bf16.mxu0 0
      %613 = vmatpush1.bf16.msra.mxu0 0
      %614 = vmatprep.subr.bf16.mxu0 0
      %615 = vmatpush1.bf16.msra.mxu0 0
      %616 = vmatprep.subr.bf16.mxu0 0
      %617 = vmatpush1.bf16.msra.mxu0 0
      %618 = vmatprep.subr.bf16.mxu0 0
      %619 = vmatpush1.bf16.msra.mxu0 0
      %620 = vmatprep.subr.bf16.mxu0 0
      %621 = vmatpush1.bf16.msra.mxu0 0
      %622 = vmatprep.subr.bf16.mxu0 0
      %623 = vmatpush1.bf16.msra.mxu0 0
      %624 = vmatprep.subr.bf16.mxu0 0
      %625 = vmatpush1.bf16.msra.mxu0 0
      %626 = vmatprep.subr.bf16.mxu0 0
      %627 = vmatpush1.bf16.msra.mxu0 0
      %628 = vmatprep.subr.bf16.mxu0 0
      %629 = vmatpush1.bf16.msra.mxu0 0
      %630 = vmatprep.subr.bf16.mxu0 0
      %631 = vmatpush1.bf16.msra.mxu0 0
      %632 = vmatprep.subr.bf16.mxu0 0
      %633 = vmatpush1.bf16.msra.mxu0 0
      %634 = vmatprep.subr.bf16.mxu0 0
      %635 = vmatpush1.bf16.msra.mxu0 0
      %636 = vmatprep.mubr.bf16.mxu0 0
      %637 = vmatmul.mubr.bf16.gmra.mrb[0].mxu0 %v593
      %v638 = vpop.f32.mrb[0].mxu0
      %v639 = vadd.f32 0.0, %v638
      %v640 = vpop.f32.mrb[0].mxu0
      %v641 = vpop.f32.mrb[0].mxu0
      %v642 = vadd.f32 0.0, %v641
      %v643 = vpop.f32.mrb[0].mxu0
      %644 = vmatprep.mubr.bf16.mxu0 0
      %645 = vmatmul.mubr.bf16.gmra.mrb[0].mxu0 %v596
      %v646 = vpop.f32.mrb[0].mxu0
      %v647 = vadd.f32 0.0, %v646
      %v648 = vpop.f32.mrb[0].mxu0
      %v649 = vpop.f32.mrb[0].mxu0
      %v650 = vadd.f32 0.0, %v649
      %v651 = vpop.f32.mrb[0].mxu0
      %652 = vmatprep.mubr.bf16.mxu0 0
      %653 = vmatmul.mubr.bf16.gmra.mrb[0].mxu0 %v599
      %v654 = vpop.f32.mrb[0].mxu0
      %v655 = vadd.f32 0.0, %v654
      %v656 = vpop.f32.mrb[0].mxu0
      %v657 = vpop.f32.mrb[0].mxu0
      %v658 = vadd.f32 0.0, %v657
      %v659 = vpop.f32.mrb[0].mxu0
      %660 = vmatprep.mubr.bf16.mxu0 0
      %661 = vmatmul.mubr.bf16.gmra.mrb[0].mxu0 %v602
      %v662 = vpop.f32.mrb[0].mxu0
      %v663 = vadd.f32 0.0, %v662
      %v664 = vpop.f32.mrb[0].mxu0
      %v665 = vpop.f32.mrb[0].mxu0
      %v666 = vadd.f32 0.0, %v665
      %v667 = vpop.f32.mrb[0].mxu0
      %668 = vdwg.mxu0
      %v669 = vadd.f32 %v533, %v639
      %v670 = vadd.f32 %v534, %v642
      %v671 = vadd.f32 %v535, %v647
      %v672 = vadd.f32 %v536, %v650
      %v673 = vadd.f32 %v537, %v655
      %v674 = vadd.f32 %v538, %v658
      %v675 = vadd.f32 %v539, %v663
      %v676 = vadd.f32 %v540, %v666
      %v677 = vld [vmem:[%s165] sm:$0xc]
      %s678 = scalar_lea.vmem %s1, 64
      %v679 = vld [vmem:[%s678] sm:$0xf]
      %v680 = vld [vmem:[%s678 + $0x4] sm:$0xf]
      %v681 = vld [vmem:[%s678 + $0x8] sm:$0xf]
      %v682 = vld [vmem:[%s678 + $0xc] sm:$0xf]
      %v684 = vunpack.c.l.b16 %v677
      %v685 = vpack.c.b16 %v200, %v684
      %vm686 = vcmask 1045504
      %v687 = vrot.slane %v685, 2
      %v688 = vrot.slane %v209, 2
      %v689 = vsel %vm686, %v687, %v688
      %v690 = vrot.slane %v210, 2
      %v691 = vsel %vm686, %v688, %v690
      %v692 = vrot.slane %v211, 2
      %v693 = vsel %vm686, %v690, %v692
      %v694 = vrot.slane %v549, 2
      %v695 = vsel %vm686, %v692, %v694
      %v700 = vunpack.c.l.b16 %v679
      %v701 = vunpack.c.l.b16 %v680
      %v702 = vunpack.c.l.b16 %v681
      %v703 = vunpack.c.l.b16 %v682
      %v704 = vpack.c.b16 %v701, %v700
      %v705 = vpack.c.b16 %v703, %v702
      %v709 = vsel %vm262, %v689, 0
      %v712 = vsel %vm262, %v691, 0
      %v715 = vsel %vm262, %v693, 0
      %v718 = vsel %vm262, %v695, 0
      %720 = vmatprep.subr.bf16.mxu0 0
      %721 = vmatpush1.bf16.msra.mxu0 %v704
      %722 = vmatprep.subr.bf16.mxu0 0
      %723 = vmatpush1.bf16.msra.mxu0 %v705
      %724 = vmatprep.subr.bf16.mxu0 0
      %725 = vmatpush1.bf16.msra.mxu0 0
      %726 = vmatprep.subr.bf16.mxu0 0
      %727 = vmatpush1.bf16.msra.mxu0 0
      %728 = vmatprep.subr.bf16.mxu0 0
      %729 = vmatpush1.bf16.msra.mxu0 0
      %730 = vmatprep.subr.bf16.mxu0 0
      %731 = vmatpush1.bf16.msra.mxu0 0
      %732 = vmatprep.subr.bf16.mxu0 0
      %733 = vmatpush1.bf16.msra.mxu0 0
      %734 = vmatprep.subr.bf16.mxu0 0
      %735 = vmatpush1.bf16.msra.mxu0 0
      %736 = vmatprep.subr.bf16.mxu0 0
      %737 = vmatpush1.bf16.msra.mxu0 0
      %738 = vmatprep.subr.bf16.mxu0 0
      %739 = vmatpush1.bf16.msra.mxu0 0
      %740 = vmatprep.subr.bf16.mxu0 0
      %741 = vmatpush1.bf16.msra.mxu0 0
      %742 = vmatprep.subr.bf16.mxu0 0
      %743 = vmatpush1.bf16.msra.mxu0 0
      %744 = vmatprep.subr.bf16.mxu0 0
      %745 = vmatpush1.bf16.msra.mxu0 0
      %746 = vmatprep.subr.bf16.mxu0 0
      %747 = vmatpush1.bf16.msra.mxu0 0
      %748 = vmatprep.subr.bf16.mxu0 0
      %749 = vmatpush1.bf16.msra.mxu0 0
      %750 = vmatprep.subr.bf16.mxu0 0
      %751 = vmatpush1.bf16.msra.mxu0 0
      %752 = vmatprep.mubr.bf16.mxu0 0
      %753 = vmatmul.mubr.bf16.gmra.mrb[0].mxu0 %v709
      %v754 = vpop.f32.mrb[0].mxu0
      %v755 = vadd.f32 0.0, %v754
      %v756 = vpop.f32.mrb[0].mxu0
      %v757 = vpop.f32.mrb[0].mxu0
      %v758 = vadd.f32 0.0, %v757
      %v759 = vpop.f32.mrb[0].mxu0
      %760 = vmatprep.mubr.bf16.mxu0 0
      %761 = vmatmul.mubr.bf16.gmra.mrb[0].mxu0 %v712
      %v762 = vpop.f32.mrb[0].mxu0
      %v763 = vadd.f32 0.0, %v762
      %v764 = vpop.f32.mrb[0].mxu0
      %v765 = vpop.f32.mrb[0].mxu0
      %v766 = vadd.f32 0.0, %v765
      %v767 = vpop.f32.mrb[0].mxu0
      %768 = vmatprep.mubr.bf16.mxu0 0
      %769 = vmatmul.mubr.bf16.gmra.mrb[0].mxu0 %v715
      %v770 = vpop.f32.mrb[0].mxu0
      %v771 = vadd.f32 0.0, %v770
      %v772 = vpop.f32.mrb[0].mxu0
      %v773 = vpop.f32.mrb[0].mxu0
      %v774 = vadd.f32 0.0, %v773
      %v775 = vpop.f32.mrb[0].mxu0
      %776 = vmatprep.mubr.bf16.mxu0 0
      %777 = vmatmul.mubr.bf16.gmra.mrb[0].mxu0 %v718
      %v778 = vpop.f32.mrb[0].mxu0
      %v779 = vadd.f32 0.0, %v778
      %v780 = vpop.f32.mrb[0].mxu0
      %v781 = vpop.f32.mrb[0].mxu0
      %v782 = vadd.f32 0.0, %v781
      %v783 = vpop.f32.mrb[0].mxu0
      %784 = vdwg.mxu0
      %v785 = vadd.f32 %v669, %v755
      %v786 = vadd.f32 %v670, %v758
      %v787 = vadd.f32 %v671, %v763
      %v788 = vadd.f32 %v672, %v766
      %v789 = vadd.f32 %v673, %v771
      %v790 = vadd.f32 %v674, %v774
      %v791 = vadd.f32 %v675, %v779
      %v792 = vadd.f32 %v676, %v782
      %v793 = vld [vmem:[%s2] sm:$0x1]
      %v795 = vlaneseq
      %v796 = vshrl.u32 %v795, 7
      %v797 = vsub.s32 0, %v796
      %v798 = vrot.slane %v793, %v797
      %v800 = vadd.f32 %v785, %v798
      %v801 = vadd.f32 %v786, %v798
      %v802 = vadd.f32 %v787, %v798
      %v803 = vadd.f32 %v788, %v798
      %v804 = vadd.f32 %v789, %v798
      %v805 = vadd.f32 %v790, %v798
      %v806 = vadd.f32 %v791, %v798
      %v807 = vadd.f32 %v792, %v798
      %vm808 = vcmask 523264
      %809 = vst.msk [vmem:[%s170] sm:$0xff] %vm808, %v800
      %810 = vst.msk [vmem:[%s170 + $0x8] sm:$0xff] %vm808, %v801
      %811 = vst.msk [vmem:[%s170 + $0x10] sm:$0xff] %vm808, %v802
      %812 = vst.msk [vmem:[%s170 + $0x18] sm:$0xff] %vm808, %v803
      %813 = vst.msk [vmem:[%s170 + $0x20] sm:$0xff] %vm808, %v804
      %814 = vst.msk [vmem:[%s170 + $0x28] sm:$0xff] %vm808, %v805
      %815 = vst.msk [vmem:[%s170 + $0x30] sm:$0xff] %vm808, %v806
      %816 = vst.msk [vmem:[%s170 + $0x38] sm:$0xff] %vm808, %v807
      %p817 = scmp.lt.s32.totalorder %s14, 1
      %s818 = scalar_select %p817, %s14, 1
      %s819 = smul.addr %s818, 8
      %s820 = smul.addr %s819, 8
      %s821 = scalar_lea.vmem %s3, %s820
      // Predicated region
      $region33: #{_lambda_.9} parent=31 // pred_check
        %p822 = pneg %p100
      $region34: #{_lambda_.9} parent=31 // pred_check_branch
        %824 = sbr.rel (%p822) target = $region36
      $region35: #{_lambda_.9} parent=31 // pred_region
        _
      $region36: #{_lambda_.9} parent=31 // pred_fallthru
        _
    $region32: #{_lambda_.9} parent=5 // pred_fallthru
      _
    %p825 = scmp.le.s32.totalorder 2, %s9
    // Predicated region
    $region37: #{_lambda_.9} parent=5 // pred_check
      %p826 = pneg %p825
    $region38: #{_lambda_.9} parent=5 // pred_check_branch
      %828 = sbr.rel (%p826) target = $region40
    $region39: #{_lambda_.9} parent=5 // pred_region
      %s829 = ssub.s32 %s9, 2
      // Predicated region
      $region41: #{_lambda_.9} parent=39 // pred_check
        %p830 = pneg %p106
      $region42: #{_lambda_.9} parent=39 // pred_check_branch
        %832 = sbr.rel (%p830) target = $region44
      $region43: #{_lambda_.9} parent=39 // pred_region
        %p833 = scmp.lt.s32.totalorder %s15, 1
        %s834 = scalar_select %p833, %s15, 1
        %s835 = smul.addr %s834, 8
        %s836 = smul.addr %s835, 8
        %s837 = scalar_lea.vmem %s3, %s836
      $region44: #{_lambda_.9} parent=39 // pred_fallthru
        _
    $region40: #{_lambda_.9} parent=5 // pred_fallthru
      _
  $region6: #{_lambda_.9} parent=0 // loop_footer
    %s13 = sadd.s32 1, %s9
  $region7: #{_lambda_.9} parent=0 // loop_footer_branch
    %8 = sbr.rel target = $region3
  $region8: #{_lambda_.9} parent=0 // loop_exit
    _

// kernel: _lambda_.10
$region0: #{_lambda_.10}
  #allocation0 [shape = 'u32[]', space=smem, size = 0x4, offset = 0x4, fixed_abs, tag = 'smem constant byte address 0x4 - core index']
  #allocation1 [shape = 'u32[144,128]{1,0:T(1,128)}', space=vmem, size = 0x12000, scoped, tag = 'internal scratch']
  %s0 = inlined_call_operand.vmem [shape: bf16[2,66,64], index: 0, kind: input, shape index: {}]
  %s1 = inlined_call_operand.vmem [shape: bf16[3,64,32], index: 1, kind: input, shape index: {}]
  %s2 = inlined_call_operand.vmem [shape: f32[1,32], index: 2, kind: input, shape index: {}]
  %s3 = inlined_call_operand.vmem [shape: f32[2,64,32], index: 3, kind: output, shape index: {}]
  %s4 = sld [smem:[#allocation0]]
  $region45: #{_lambda_.10} parent=0
    _
  %s6 = ssub.s32 1, %s4
  %s7 = scalar_select 0, %s6, %s4
  loop: start=0, step=1, limit=4
  $region2: #{_lambda_.10} parent=0 // loop_pre_header
    _
  $region3: #{_lambda_.10} parent=0 // loop_header
    %s9 = sphi 0, %s13
    %p10 = scmp.ge.s32.totalorder %s9, 4
    %s19 = sphi 0, %s21
    %s22 = sphi 0, %s19
    %s23 = sphi 0, %s22
    %s39 = sphi 0, %s23
    %s43 = sphi 0, %s43
    %s45 = sphi 0, %s43
    %s46 = sphi 0, %s45
    %s60 = sphi 0, %s46
    %s64 = sphi 0, %s64
    %s66 = sphi 0, %s64
    %s67 = sphi 0, %s66
    %s81 = sphi 0, %s67
    %s87 = sphi 0, %s89
    %s90 = sphi 0, %s87
    %s91 = sphi 0, %s90
    %s107 = sphi 0, %s91
  $region4: #{_lambda_.10} parent=0 // loop_header_branch
    %12 = sbr.rel (%p10) target = $region8
  $region5: #{_lambda_.10} parent=0 // loop_body
    %s14 = ssub.s32 %s9, 1
    %s15 = ssub.s32 %s9, 2
    %s16 = sadd.s32 %s9, 1
    %s17 = ssub.s32 %s9, %s16
    %p18 = scmp.eq.s32.totalorder %s17, 0
    %s20 = sadd.s32 %s19, 1
    %s21 = scalar_select %p18, %s19, %s20
    %p24 = pneg %p18
    %p25 = scmp.eq.s32.totalorder %s9, 1
    %p26 = por %p24, %p25
    %p27 = scmp.ne.s32.totalorder %s19, %s22
    %p28 = scmp.eq.s32.totalorder %s9, 0
    %p29 = por %p27, %p28
    %p30 = scmp.ne.s32.totalorder %s19, %s22
    %p31 = scmp.eq.s32.totalorder %s14, 1
    %p32 = por %p30, %p31
    %p33 = scmp.ne.s32.totalorder %s22, %s23
    %p34 = scmp.eq.s32.totalorder %s14, 0
    %p35 = por %p33, %p34
    %p36 = scmp.ne.s32.totalorder %s22, %s23
    %p37 = scmp.eq.s32.totalorder %s15, 1
    %p38 = por %p36, %p37
    %p40 = scmp.ne.s32.totalorder %s23, %s39
    %p41 = scmp.eq.s32.totalorder %s15, 0
    %p42 = por %p40, %p41
    %s44 = sadd.s32 %s43, 1
    %p47 = scmp.eq.s32.totalorder %s9, 1
    %p48 = scmp.ne.s32.totalorder %s43, %s45
    %p49 = scmp.eq.s32.totalorder %s9, 0
    %p50 = por %p48, %p49
    %p51 = scmp.ne.s32.totalorder %s43, %s45
    %p52 = scmp.eq.s32.totalorder %s14, 1
    %p53 = por %p51, %p52
    %p54 = scmp.ne.s32.totalorder %s45, %s46
    %p55 = scmp.eq.s32.totalorder %s14, 0
    %p56 = por %p54, %p55
    %p57 = scmp.ne.s32.totalorder %s45, %s46
    %p58 = scmp.eq.s32.totalorder %s15, 1
    %p59 = por %p57, %p58
    %p61 = scmp.ne.s32.totalorder %s46, %s60
    %p62 = scmp.eq.s32.totalorder %s15, 0
    %p63 = por %p61, %p62
    %s65 = sadd.s32 %s64, 1
    %p68 = scmp.eq.s32.totalorder %s9, 1
    %p69 = scmp.ne.s32.totalorder %s64, %s66
    %p70 = scmp.eq.s32.totalorder %s9, 0
    %p71 = por %p69, %p70
    %p72 = scmp.ne.s32.totalorder %s64, %s66
    %p73 = scmp.eq.s32.totalorder %s14, 1
    %p74 = por %p72, %p73
    %p75 = scmp.ne.s32.totalorder %s66, %s67
    %p76 = scmp.eq.s32.totalorder %s14, 0
    %p77 = por %p75, %p76
    %p78 = scmp.ne.s32.totalorder %s66, %s67
    %p79 = scmp.eq.s32.totalorder %s15, 1
    %p80 = por %p78, %p79
    %p82 = scmp.ne.s32.totalorder %s67, %s81
    %p83 = scmp.eq.s32.totalorder %s15, 0
    %p84 = por %p82, %p83
    %s85 = ssub.s32 %s9, %s16
    %p86 = scmp.eq.s32.totalorder %s85, 0
    %s88 = sadd.s32 %s87, 1
    %s89 = scalar_select %p86, %s87, %s88
    %p92 = pneg %p86
    %p93 = scmp.eq.s32.totalorder %s9, 1
    %p94 = por %p92, %p93
    %p95 = scmp.ne.s32.totalorder %s87, %s90
    %p96 = scmp.eq.s32.totalorder %s9, 0
    %p97 = por %p95, %p96
    %p98 = scmp.ne.s32.totalorder %s87, %s90
    %p99 = scmp.eq.s32.totalorder %s14, 1
    %p100 = por %p98, %p99
    %p101 = scmp.ne.s32.totalorder %s90, %s91
    %p102 = scmp.eq.s32.totalorder %s14, 0
    %p103 = por %p101, %p102
    %p104 = scmp.ne.s32.totalorder %s90, %s91
    %p105 = scmp.eq.s32.totalorder %s15, 1
    %p106 = por %p104, %p105
    %p108 = scmp.ne.s32.totalorder %s91, %s107
    %p109 = scmp.eq.s32.totalorder %s15, 0
    %p110 = por %p108, %p109
    %p111 = scmp.le.s32.totalorder 1, %s9
    %p112 = scmp.lt.s32.totalorder %s9, 3
    %p113 = pnand %p111, %p112
    %p114 = pneg %p113
    // Predicated region
    $region9: #{_lambda_.10} parent=5 // pred_check
      _
    $region10: #{_lambda_.10} parent=5 // pred_check_branch
      %116 = sbr.rel (%p113) target = $region12
    $region11: #{_lambda_.10} parent=5 // pred_region
      %s117 = ssub.s32 %s9, 1
      // Predicated region
      $region13: #{_lambda_.10} parent=11 // pred_check
        %p118 = pneg %p56
      $region14: #{_lambda_.10} parent=11 // pred_check_branch
        %120 = sbr.rel (%p118) target = $region16
      $region15: #{_lambda_.10} parent=11 // pred_region
        _
      $region16: #{_lambda_.10} parent=11 // pred_fallthru
        _
      // Predicated region
      $region17: #{_lambda_.10} parent=11 // pred_check
        %p121 = pneg %p77
      $region18: #{_lambda_.10} parent=11 // pred_check_branch
        %123 = sbr.rel (%p121) target = $region20
      $region19: #{_lambda_.10} parent=11 // pred_region
        _
      $region20: #{_lambda_.10} parent=11 // pred_fallthru
        _
    $region12: #{_lambda_.10} parent=5 // pred_fallthru
      _
    %p124 = scmp.lt.s32.totalorder %s9, 2
    // Predicated region
    $region21: #{_lambda_.10} parent=5 // pred_check
      %p125 = pneg %p124
    $region22: #{_lambda_.10} parent=5 // pred_check_branch
      %127 = sbr.rel (%p125) target = $region24
    $region23: #{_lambda_.10} parent=5 // pred_region
      // Predicated region
      $region25: #{_lambda_.10} parent=23 // pred_check
        %p128 = pneg %p29
      $region26: #{_lambda_.10} parent=23 // pred_check_branch
        %130 = sbr.rel (%p128) target = $region28
      $region27: #{_lambda_.10} parent=23 // pred_region
        %p131 = scmp.lt.s32.totalorder %s9, 1
        %s132 = scalar_select %p131, %s9, 1
        %s133 = smul.addr %s132, 9
        %s134 = smul.addr %s133, 4
        %s135 = scalar_lea.vmem %s0, %s134
      $region28: #{_lambda_.10} parent=23 // pred_fallthru
        _
    $region24: #{_lambda_.10} parent=5 // pred_fallthru
      _
    %p136 = scmp.le.s32.totalorder 1, %s9
    %p137 = scmp.lt.s32.totalorder %s9, 3
    %p138 = pnand %p136, %p137
    %p139 = pneg %p138
    // Predicated region
    $region29: #{_lambda_.10} parent=5 // pred_check
      _
    $region30: #{_lambda_.10} parent=5 // pred_check_branch
      %141 = sbr.rel (%p138) target = $region32
    $region31: #{_lambda_.10} parent=5 // pred_region
      %s142 = ssub.s32 %s9, 1
      %p143 = scmp.lt.s32.totalorder %s14, 1
      %s144 = scalar_select %p143, %s14, 1
      %s145 = smul.addr %s144, 9
      %s146 = smul.addr %s145, 4
      %s147 = scalar_lea.vmem %s0, %s146
      %p148 = pneg %p35
      %p149 = pneg %p32
      %p150 = pneg %p56
      %p151 = pneg %p53
      %p152 = pneg %p77
      %p153 = pneg %p74
      %p154 = pneg %p103
      %p155 = pneg %p100
      %p156 = scmp.lt.s32.totalorder %s14, 1
      %s157 = scalar_select %p156, %s14, 1
      %s158 = smul.addr %s157, 8
      %s159 = smul.addr %s158, 8
      %s160 = scalar_lea.vmem %s3, %s159
      %p161 = scmp.lt.s32.totalorder %s14, 1
      %s162 = scalar_select %p161, %s14, 1
      %s163 = smul.addr %s162, 9
      %s164 = smul.addr %s163, 4
      %s165 = scalar_lea.vmem %s0, %s164
      %p166 = scmp.lt.s32.totalorder %s14, 1
      %s167 = scalar_select %p166, %s14, 1
      %s168 = smul.addr %s167, 8
      %s169 = smul.addr %s168, 8
      %s170 = scalar_lea.vmem %s3, %s169
      %v172 = vld [vmem:[%s165] sm:$0xf]
      %v173 = vld [vmem:[%s165 + $0x4] sm:$0xf]
      %v174 = vld [vmem:[%s165 + $0x8] sm:$0xf]
      %v175 = vld [vmem:[%s165 + $0xc] sm:$0xf]
      %v176 = vld [vmem:[%s165 + $0x10] sm:$0xf]
      %v177 = vld [vmem:[%s165 + $0x14] sm:$0xf]
      %v178 = vld [vmem:[%s165 + $0x18] sm:$0xf]
      %v179 = vld [vmem:[%s165 + $0x1c] sm:$0xf]
      %v180 = vld [vmem:[%s1] sm:$0xf]
      %v181 = vld [vmem:[%s1 + $0x4] sm:$0xf]
      %v182 = vld [vmem:[%s1 + $0x8] sm:$0xf]
      %v183 = vld [vmem:[%s1 + $0xc] sm:$0xf]
      %v184 = vld [vmem:[%s1 + $0x10] sm:$0xf]
      %v185 = vld [vmem:[%s1 + $0x14] sm:$0xf]
      %v186 = vld [vmem:[%s1 + $0x18] sm:$0xf]
      %v187 = vld [vmem:[%s1 + $0x1c] sm:$0xf]
      %v188 = vld [vmem:[%s165 + $0x20] sm:$0x1]
      %s189 = scalar_lea.vmem %s1, 32
      %v190 = vld [vmem:[%s189] sm:$0xf]
      %v191 = vld [vmem:[%s189 + $0x4] sm:$0xf]
      %v192 = vld [vmem:[%s189 + $0x8] sm:$0xf]
      %v193 = vld [vmem:[%s189 + $0xc] sm:$0xf]
      %v194 = vld [vmem:[%s189 + $0x10] sm:$0xf]
      %v195 = vld [vmem:[%s189 + $0x14] sm:$0xf]
      %v196 = vld [vmem:[%s189 + $0x18] sm:$0xf]
      %v197 = vld [vmem:[%s189 + $0x1c] sm:$0xf]
      %v207 = vunpack.c.l.b16 %v172
      %v208 = vunpack.c.l.b16 %v173
      %v209 = vunpack.c.l.b16 %v174
      %v210 = vunpack.c.l.b16 %v175
      %v211 = vunpack.c.l.b16 %v176
      %v212 = vunpack.c.l.b16 %v177
      %v213 = vunpack.c.l.b16 %v178
      %v214 = vunpack.c.l.b16 %v179
      %v215 = vunpack.c.l.b16 %v188
      %v216 = vpack.c.b16 %v208, %v207
      %v217 = vpack.c.b16 %v210, %v209
      %v218 = vpack.c.b16 %v212, %v211
      %v219 = vpack.c.b16 %v214, %v213
      %v220 = vpack.c.b16 %v215, %v215
      %vm221 = vsmask.f32 7424
      %v223 = vshrl.u32 %v216, 16
      %v225 = vshll.u32 %v216, 16
      %v227 = vrot.slane %v225, 1
      %v228 = vor.u32 %v223, %v227
      %v230 = vshll.u32 %v217, 16
      %v232 = vrot.slane %v230, 1
      %v233 = vsel %vm221, %v228, %v232
      %v234 = vshrl.u32 %v217, 16
      %v236 = vor.u32 %v234, %v232
      %v238 = vshll.u32 %v218, 16
      %v240 = vrot.slane %v238, 1
      %v241 = vsel %vm221, %v236, %v240
      %v242 = vshrl.u32 %v218, 16
      %v244 = vor.u32 %v242, %v240
      %v246 = vshll.u32 %v219, 16
      %v248 = vrot.slane %v246, 1
      %v249 = vsel %vm221, %v244, %v248
      %v250 = vshrl.u32 %v219, 16
      %v252 = vor.u32 %v250, %v248
      %v254 = vshll.u32 %v220, 16
      %v256 = vrot.slane %v254, 1
      %v257 = vsel %vm221, %v252, %v256
      %v266 = vunpack.c.l.b16 %v190
      %v267 = vunpack.c.l.b16 %v191
      %v268 = vunpack.c.l.b16 %v192
      %v269 = vunpack.c.l.b16 %v193
      %v270 = vunpack.c.l.b16 %v194
      %v271 = vunpack.c.l.b16 %v195
      %v272 = vunpack.c.l.b16 %v196
      %v273 = vunpack.c.l.b16 %v197
      %v274 = vpack.c.b16 %v267, %v266
      %v275 = vpack.c.b16 %v269, %v268
      %v276 = vpack.c.b16 %v271, %v270
      %v277 = vpack.c.b16 %v273, %v272
      %vm282 = vcmask 523264
      %v284 = vsel %vm282, %v233, 0
      %v287 = vsel %vm282, %v241, 0
      %v290 = vsel %vm282, %v249, 0
      %v293 = vsel %vm282, %v257, 0
      %295 = vmatprep.subr.bf16.mxu0 0
      %296 = vmatpush1.bf16.msra.mxu0 %v274
      %297 = vmatprep.subr.bf16.mxu0 0
      %298 = vmatpush1.bf16.msra.mxu0 %v275
      %299 = vmatprep.subr.bf16.mxu0 0
      %300 = vmatpush1.bf16.msra.mxu0 %v276
      %301 = vmatprep.subr.bf16.mxu0 0
      %302 = vmatpush1.bf16.msra.mxu0 %v277
      %303 = vmatprep.subr.bf16.mxu0 0
      %304 = vmatpush1.bf16.msra.mxu0 0
      %305 = vmatprep.subr.bf16.mxu0 0
      %306 = vmatpush1.bf16.msra.mxu0 0
      %307 = vmatprep.subr.bf16.mxu0 0
      %308 = vmatpush1.bf16.msra.mxu0 0
      %309 = vmatprep.subr.bf16.mxu0 0
      %310 = vmatpush1.bf16.msra.mxu0 0
      %311 = vmatprep.subr.bf16.mxu0 0
      %312 = vmatpush1.bf16.msra.mxu0 0
      %313 = vmatprep.subr.bf16.mxu0 0
      %314 = vmatpush1.bf16.msra.mxu0 0
      %315 = vmatprep.subr.bf16.mxu0 0
      %316 = vmatpush1.bf16.msra.mxu0 0
      %317 = vmatprep.subr.bf16.mxu0 0
      %318 = vmatpush1.bf16.msra.mxu0 0
      %319 = vmatprep.subr.bf16.mxu0 0
      %320 = vmatpush1.bf16.msra.mxu0 0
      %321 = vmatprep.subr.bf16.mxu0 0
      %322 = vmatpush1.bf16.msra.mxu0 0
      %323 = vmatprep.subr.bf16.mxu0 0
      %324 = vmatpush1.bf16.msra.mxu0 0
      %325 = vmatprep.subr.bf16.mxu0 0
      %326 = vmatpush1.bf16.msra.mxu0 0
      %327 = vmatprep.mubr.bf16.mxu0 0
      %328 = vmatmul.mubr.bf16.gmra.mrb[0].mxu0 %v284
      %v329 = vpop.f32.mrb[0].mxu0
      %v330 = vadd.f32 0.0, %v329
      %v331 = vpop.f32.mrb[0].mxu0
      %v332 = vpop.f32.mrb[0].mxu0
      %v333 = vadd.f32 0.0, %v332
      %v334 = vpop.f32.mrb[0].mxu0
      %335 = vmatprep.mubr.bf16.mxu0 0
      %336 = vmatmul.mubr.bf16.gmra.mrb[0].mxu0 %v287
      %v337 = vpop.f32.mrb[0].mxu0
      %v338 = vadd.f32 0.0, %v337
      %v339 = vpop.f32.mrb[0].mxu0
      %v340 = vpop.f32.mrb[0].mxu0
      %v341 = vadd.f32 0.0, %v340
      %v342 = vpop.f32.mrb[0].mxu0
      %343 = vmatprep.mubr.bf16.mxu0 0
      %344 = vmatmul.mubr.bf16.gmra.mrb[0].mxu0 %v290
      %v345 = vpop.f32.mrb[0].mxu0
      %v346 = vadd.f32 0.0, %v345
      %v347 = vpop.f32.mrb[0].mxu0
      %v348 = vpop.f32.mrb[0].mxu0
      %v349 = vadd.f32 0.0, %v348
      %v350 = vpop.f32.mrb[0].mxu0
      %351 = vmatprep.mubr.bf16.mxu0 0
      %352 = vmatmul.mubr.bf16.gmra.mrb[0].mxu0 %v293
      %v353 = vpop.f32.mrb[0].mxu0
      %v354 = vadd.f32 0.0, %v353
      %v355 = vpop.f32.mrb[0].mxu0
      %v356 = vpop.f32.mrb[0].mxu0
      %v357 = vadd.f32 0.0, %v356
      %v358 = vpop.f32.mrb[0].mxu0
      %359 = vdwg.mxu0
      %v368 = vunpack.c.l.b16 %v180
      %v369 = vunpack.c.l.b16 %v181
      %v370 = vunpack.c.l.b16 %v182
      %v371 = vunpack.c.l.b16 %v183
      %v372 = vunpack.c.l.b16 %v184
      %v373 = vunpack.c.l.b16 %v185
      %v374 = vunpack.c.l.b16 %v186
      %v375 = vunpack.c.l.b16 %v187
      %v376 = vpack.c.b16 %v369, %v368
      %v377 = vpack.c.b16 %v371, %v370
      %v378 = vpack.c.b16 %v373, %v372
      %v379 = vpack.c.b16 %v375, %v374
      %v384 = vsel %vm282, %v216, 0
      %v386 = vsel %vm282, %v217, 0
      %v388 = vsel %vm282, %v218, 0
      %v390 = vsel %vm282, %v219, 0
      %392 = vmatprep.subr.bf16.mxu0 0
      %393 = vmatpush1.bf16.msra.mxu0 %v376
      %394 = vmatprep.subr.bf16.mxu0 0
      %395 = vmatpush1.bf16.msra.mxu0 %v377
      %396 = vmatprep.subr.bf16.mxu0 0
      %397 = vmatpush1.bf16.msra.mxu0 %v378
      %398 = vmatprep.subr.bf16.mxu0 0
      %399 = vmatpush1.bf16.msra.mxu0 %v379
      %400 = vmatprep.subr.bf16.mxu0 0
      %401 = vmatpush1.bf16.msra.mxu0 0
      %402 = vmatprep.subr.bf16.mxu0 0
      %403 = vmatpush1.bf16.msra.mxu0 0
      %404 = vmatprep.subr.bf16.mxu0 0
      %405 = vmatpush1.bf16.msra.mxu0 0
      %406 = vmatprep.subr.bf16.mxu0 0
      %407 = vmatpush1.bf16.msra.mxu0 0
      %408 = vmatprep.subr.bf16.mxu0 0
      %409 = vmatpush1.bf16.msra.mxu0 0
      %410 = vmatprep.subr.bf16.mxu0 0
      %411 = vmatpush1.bf16.msra.mxu0 0
      %412 = vmatprep.subr.bf16.mxu0 0
      %413 = vmatpush1.bf16.msra.mxu0 0
      %414 = vmatprep.subr.bf16.mxu0 0
      %415 = vmatpush1.bf16.msra.mxu0 0
      %416 = vmatprep.subr.bf16.mxu0 0
      %417 = vmatpush1.bf16.msra.mxu0 0
      %418 = vmatprep.subr.bf16.mxu0 0
      %419 = vmatpush1.bf16.msra.mxu0 0
      %420 = vmatprep.subr.bf16.mxu0 0
      %421 = vmatpush1.bf16.msra.mxu0 0
      %422 = vmatprep.subr.bf16.mxu0 0
      %423 = vmatpush1.bf16.msra.mxu0 0
      %424 = vmatprep.mubr.bf16.mxu0 0
      %425 = vmatmul.mubr.bf16.gmra.mrb[0].mxu0 %v384
      %v426 = vpop.f32.mrb[0].mxu0
      %v427 = vadd.f32 %v330, %v426
      %v428 = vpop.f32.mrb[0].mxu0
      %v429 = vpop.f32.mrb[0].mxu0
      %v430 = vadd.f32 %v333, %v429
      %v431 = vpop.f32.mrb[0].mxu0
      %432 = vmatprep.mubr.bf16.mxu0 0
      %433 = vmatmul.mubr.bf16.gmra.mrb[0].mxu0 %v386
      %v434 = vpop.f32.mrb[0].mxu0
      %v435 = vadd.f32 %v338, %v434
      %v436 = vpop.f32.mrb[0].mxu0
      %v437 = vpop.f32.mrb[0].mxu0
      %v438 = vadd.f32 %v341, %v437
      %v439 = vpop.f32.mrb[0].mxu0
      %440 = vmatprep.mubr.bf16.mxu0 0
      %441 = vmatmul.mubr.bf16.gmra.mrb[0].mxu0 %v388
      %v442 = vpop.f32.mrb[0].mxu0
      %v443 = vadd.f32 %v346, %v442
      %v444 = vpop.f32.mrb[0].mxu0
      %v445 = vpop.f32.mrb[0].mxu0
      %v446 = vadd.f32 %v349, %v445
      %v447 = vpop.f32.mrb[0].mxu0
      %448 = vmatprep.mubr.bf16.mxu0 0
      %449 = vmatmul.mubr.bf16.gmra.mrb[0].mxu0 %v390
      %v450 = vpop.f32.mrb[0].mxu0
      %v451 = vadd.f32 %v354, %v450
      %v452 = vpop.f32.mrb[0].mxu0
      %v453 = vpop.f32.mrb[0].mxu0
      %v454 = vadd.f32 %v357, %v453
      %v455 = vpop.f32.mrb[0].mxu0
      %456 = vdwg.mxu0
      %v457 = vld [vmem:[%s165] sm:$0xe]
      %s458 = scalar_lea.vmem %s1, 64
      %v459 = vld [vmem:[%s458] sm:$0xf]
      %v460 = vld [vmem:[%s458 + $0x4] sm:$0xf]
      %v461 = vld [vmem:[%s458 + $0x8] sm:$0xf]
      %v462 = vld [vmem:[%s458 + $0xc] sm:$0xf]
      %v463 = vld [vmem:[%s458 + $0x10] sm:$0xf]
      %v464 = vld [vmem:[%s458 + $0x14] sm:$0xf]
      %v465 = vld [vmem:[%s458 + $0x18] sm:$0xf]
      %v466 = vld [vmem:[%s458 + $0x1c] sm:$0xf]
      %v468 = vunpack.c.l.b16 %v457
      %v469 = vpack.c.b16 %v208, %v468
      %vm470 = vcmask 1046528
      %v471 = vrot.slane %v469, 1
      %v472 = vrot.slane %v217, 1
      %v473 = vsel %vm470, %v471, %v472
      %v474 = vrot.slane %v218, 1
      %v475 = vsel %vm470, %v472, %v474
      %v476 = vrot.slane %v219, 1
      %v477 = vsel %vm470, %v474, %v476
      %v478 = vrot.slane %v220, 1
      %v479 = vsel %vm470, %v476, %v478
      %v488 = vunpack.c.l.b16 %v459
      %v489 = vunpack.c.l.b16 %v460
      %v490 = vunpack.c.l.b16 %v461
      %v491 = vunpack.c.l.b16 %v462
      %v492 = vunpack.c.l.b16 %v463
      %v493 = vunpack.c.l.b16 %v464
      %v494 = vunpack.c.l.b16 %v465
      %v495 = vunpack.c.l.b16 %v466
      %v496 = vpack.c.b16 %v489, %v488
      %v497 = vpack.c.b16 %v491, %v490
      %v498 = vpack.c.b16 %v493, %v492
      %v499 = vpack.c.b16 %v495, %v494
      %v505 = vsel %vm282, %v473, 0
      %v508 = vsel %vm282, %v475, 0
      %v511 = vsel %vm282, %v477, 0
      %v514 = vsel %vm282, %v479, 0
      %516 = vmatprep.subr.bf16.mxu0 0
      %517 = vmatpush1.bf16.msra.mxu0 %v496
      %518 = vmatprep.subr.bf16.mxu0 0
      %519 = vmatpush1.bf16.msra.mxu0 %v497
      %520 = vmatprep.subr.bf16.mxu0 0
      %521 = vmatpush1.bf16.msra.mxu0 %v498
      %522 = vmatprep.subr.bf16.mxu0 0
      %523 = vmatpush1.bf16.msra.mxu0 %v499
      %524 = vmatprep.subr.bf16.mxu0 0
      %525 = vmatpush1.bf16.msra.mxu0 0
      %526 = vmatprep.subr.bf16.mxu0 0
      %527 = vmatpush1.bf16.msra.mxu0 0
      %528 = vmatprep.subr.bf16.mxu0 0
      %529 = vmatpush1.bf16.msra.mxu0 0
      %530 = vmatprep.subr.bf16.mxu0 0
      %531 = vmatpush1.bf16.msra.mxu0 0
      %532 = vmatprep.subr.bf16.mxu0 0
      %533 = vmatpush1.bf16.msra.mxu0 0
      %534 = vmatprep.subr.bf16.mxu0 0
      %535 = vmatpush1.bf16.msra.mxu0 0
      %536 = vmatprep.subr.bf16.mxu0 0
      %537 = vmatpush1.bf16.msra.mxu0 0
      %538 = vmatprep.subr.bf16.mxu0 0
      %539 = vmatpush1.bf16.msra.mxu0 0
      %540 = vmatprep.subr.bf16.mxu0 0
      %541 = vmatpush1.bf16.msra.mxu0 0
      %542 = vmatprep.subr.bf16.mxu0 0
      %543 = vmatpush1.bf16.msra.mxu0 0
      %544 = vmatprep.subr.bf16.mxu0 0
      %545 = vmatpush1.bf16.msra.mxu0 0
      %546 = vmatprep.subr.bf16.mxu0 0
      %547 = vmatpush1.bf16.msra.mxu0 0
      %548 = vmatprep.mubr.bf16.mxu0 0
      %549 = vmatmul.mubr.bf16.gmra.mrb[0].mxu0 %v505
      %v550 = vpop.f32.mrb[0].mxu0
      %v551 = vadd.f32 0.0, %v550
      %v552 = vpop.f32.mrb[0].mxu0
      %v553 = vpop.f32.mrb[0].mxu0
      %v554 = vadd.f32 0.0, %v553
      %v555 = vpop.f32.mrb[0].mxu0
      %556 = vmatprep.mubr.bf16.mxu0 0
      %557 = vmatmul.mubr.bf16.gmra.mrb[0].mxu0 %v508
      %v558 = vpop.f32.mrb[0].mxu0
      %v559 = vadd.f32 0.0, %v558
      %v560 = vpop.f32.mrb[0].mxu0
      %v561 = vpop.f32.mrb[0].mxu0
      %v562 = vadd.f32 0.0, %v561
      %v563 = vpop.f32.mrb[0].mxu0
      %564 = vmatprep.mubr.bf16.mxu0 0
      %565 = vmatmul.mubr.bf16.gmra.mrb[0].mxu0 %v511
      %v566 = vpop.f32.mrb[0].mxu0
      %v567 = vadd.f32 0.0, %v566
      %v568 = vpop.f32.mrb[0].mxu0
      %v569 = vpop.f32.mrb[0].mxu0
      %v570 = vadd.f32 0.0, %v569
      %v571 = vpop.f32.mrb[0].mxu0
      %572 = vmatprep.mubr.bf16.mxu0 0
      %573 = vmatmul.mubr.bf16.gmra.mrb[0].mxu0 %v514
      %v574 = vpop.f32.mrb[0].mxu0
      %v575 = vadd.f32 0.0, %v574
      %v576 = vpop.f32.mrb[0].mxu0
      %v577 = vpop.f32.mrb[0].mxu0
      %v578 = vadd.f32 0.0, %v577
      %v579 = vpop.f32.mrb[0].mxu0
      %580 = vdwg.mxu0
      %v581 = vadd.f32 %v427, %v551
      %v582 = vadd.f32 %v430, %v554
      %v583 = vadd.f32 %v435, %v559
      %v584 = vadd.f32 %v438, %v562
      %v585 = vadd.f32 %v443, %v567
      %v586 = vadd.f32 %v446, %v570
      %v587 = vadd.f32 %v451, %v575
      %v588 = vadd.f32 %v454, %v578
      %v589 = vld [vmem:[%s2] sm:$0x1]
      %v591 = vlaneseq
      %v592 = vshrl.u32 %v591, 7
      %v593 = vsub.s32 0, %v592
      %v594 = vrot.slane %v589, %v593
      %v596 = vadd.f32 %v581, %v594
      %v597 = vadd.f32 %v582, %v594
      %v598 = vadd.f32 %v583, %v594
      %v599 = vadd.f32 %v584, %v594
      %v600 = vadd.f32 %v585, %v594
      %v601 = vadd.f32 %v586, %v594
      %v602 = vadd.f32 %v587, %v594
      %v603 = vadd.f32 %v588, %v594
      %vm604 = vcmask 261120
      %605 = vst.msk [vmem:[%s170] sm:$0xff] %vm604, %v596
      %606 = vst.msk [vmem:[%s170 + $0x8] sm:$0xff] %vm604, %v597
      %607 = vst.msk [vmem:[%s170 + $0x10] sm:$0xff] %vm604, %v598
      %608 = vst.msk [vmem:[%s170 + $0x18] sm:$0xff] %vm604, %v599
      %609 = vst.msk [vmem:[%s170 + $0x20] sm:$0xff] %vm604, %v600
      %610 = vst.msk [vmem:[%s170 + $0x28] sm:$0xff] %vm604, %v601
      %611 = vst.msk [vmem:[%s170 + $0x30] sm:$0xff] %vm604, %v602
      %612 = vst.msk [vmem:[%s170 + $0x38] sm:$0xff] %vm604, %v603
      %p613 = scmp.lt.s32.totalorder %s14, 1
      %s614 = scalar_select %p613, %s14, 1
      %s615 = smul.addr %s614, 8
      %s616 = smul.addr %s615, 8
      %s617 = scalar_lea.vmem %s3, %s616
      // Predicated region
      $region33: #{_lambda_.10} parent=31 // pred_check
        %p618 = pneg %p100
      $region34: #{_lambda_.10} parent=31 // pred_check_branch
        %620 = sbr.rel (%p618) target = $region36
      $region35: #{_lambda_.10} parent=31 // pred_region
        _
      $region36: #{_lambda_.10} parent=31 // pred_fallthru
        _
    $region32: #{_lambda_.10} parent=5 // pred_fallthru
      _
    %p621 = scmp.le.s32.totalorder 2, %s9
    // Predicated region
    $region37: #{_lambda_.10} parent=5 // pred_check
      %p622 = pneg %p621
    $region38: #{_lambda_.10} parent=5 // pred_check_branch
      %624 = sbr.rel (%p622) target = $region40
    $region39: #{_lambda_.10} parent=5 // pred_region
      %s625 = ssub.s32 %s9, 2
      // Predicated region
      $region41: #{_lambda_.10} parent=39 // pred_check
        %p626 = pneg %p106
      $region42: #{_lambda_.10} parent=39 // pred_check_branch
        %628 = sbr.rel (%p626) target = $region44
      $region43: #{_lambda_.10} parent=39 // pred_region
        %p629 = scmp.lt.s32.totalorder %s15, 1
        %s630 = scalar_select %p629, %s15, 1
        %s631 = smul.addr %s630, 8
        %s632 = smul.addr %s631, 8
        %s633 = scalar_lea.vmem %s3, %s632
      $region44: #{_lambda_.10} parent=39 // pred_fallthru
        _
    $region40: #{_lambda_.10} parent=5 // pred_fallthru
      _
  $region6: #{_lambda_.10} parent=0 // loop_footer
    %s13 = sadd.s32 1, %s9
  $region7: #{_lambda_.10} parent=0 // loop_footer_branch
    %8 = sbr.rel target = $region3
  $region8: #{_lambda_.10} parent=0 // loop_exit
    _

// kernel: _lambda_.11
$region0: #{_lambda_.11}
  #allocation0 [shape = 'u32[]', space=smem, size = 0x4, offset = 0x4, fixed_abs, tag = 'smem constant byte address 0x4 - core index']
  #allocation1 [shape = 'u32[144,128]{1,0:T(1,128)}', space=vmem, size = 0x12000, scoped, tag = 'internal scratch']
  %s0 = inlined_call_operand.vmem [shape: bf16[2,32], index: 0, kind: input, shape index: {}]
  %s1 = inlined_call_operand.vmem [shape: bf16[32,32], index: 1, kind: input, shape index: {}]
  %s2 = inlined_call_operand.vmem [shape: f32[1,32], index: 2, kind: input, shape index: {}]
  %s3 = inlined_call_operand.vmem [shape: f32[2,32], index: 3, kind: output, shape index: {}]
  %s4 = sld [smem:[#allocation0]]
  $region22: #{_lambda_.11} parent=0
    _
  %s6 = ssub.s32 1, %s4
  %s7 = scalar_select 0, %s6, %s4
  // Predicated region
  $region2: #{_lambda_.11} parent=0 // pred_check
    _
  $region3: #{_lambda_.11} parent=0 // pred_check_branch
    %9 = sbr.rel (0) target = $region5
  $region4: #{_lambda_.11} parent=0 // pred_region
    _
  $region5: #{_lambda_.11} parent=0 // pred_fallthru
    _
  // Predicated region
  $region6: #{_lambda_.11} parent=0 // pred_check
    _
  $region7: #{_lambda_.11} parent=0 // pred_check_branch
    %11 = sbr.rel (0) target = $region9
  $region8: #{_lambda_.11} parent=0 // pred_region
    _
  $region9: #{_lambda_.11} parent=0 // pred_fallthru
    _
  // Predicated region
  $region10: #{_lambda_.11} parent=0 // pred_check
    _
  $region11: #{_lambda_.11} parent=0 // pred_check_branch
    %13 = sbr.rel (0) target = $region13
  $region12: #{_lambda_.11} parent=0 // pred_region
    _
  $region13: #{_lambda_.11} parent=0 // pred_fallthru
    _
  %v15 = vld [vmem:[%s0] sm:$0x1]
  %v16 = vld [vmem:[%s1] sm:$0xf]
  %v17 = vld [vmem:[%s1 + $0x4] sm:$0xf]
  %v18 = vld [vmem:[%s1 + $0x8] sm:$0xf]
  %v19 = vld [vmem:[%s1 + $0xc] sm:$0xf]
  %v20 = vld [vmem:[%s2] sm:$0x1]
  %v22 = vlaneseq
  %v23 = vshrl.u32 %v22, 7
  %v24 = vsub.s32 0, %v23
  %v25 = vrot.slane %v20, %v24
  %v31 = vunpack.c.l.b16 %v16
  %v32 = vunpack.c.l.b16 %v17
  %v33 = vunpack.c.l.b16 %v18
  %v34 = vunpack.c.l.b16 %v19
  %v35 = vpack.c.b16 %v32, %v31
  %v36 = vpack.c.b16 %v34, %v33
  %vm39 = vcmask 261120
  %v41 = vsel %vm39, %v15, 0
  %43 = vmatprep.subr.bf16.mxu0 0
  %44 = vmatpush1.bf16.msra.mxu0 %v35
  %45 = vmatprep.subr.bf16.mxu0 0
  %46 = vmatpush1.bf16.msra.mxu0 %v36
  %47 = vmatprep.subr.bf16.mxu0 0
  %48 = vmatpush1.bf16.msra.mxu0 0
  %49 = vmatprep.subr.bf16.mxu0 0
  %50 = vmatpush1.bf16.msra.mxu0 0
  %51 = vmatprep.subr.bf16.mxu0 0
  %52 = vmatpush1.bf16.msra.mxu0 0
  %53 = vmatprep.subr.bf16.mxu0 0
  %54 = vmatpush1.bf16.msra.mxu0 0
  %55 = vmatprep.subr.bf16.mxu0 0
  %56 = vmatpush1.bf16.msra.mxu0 0
  %57 = vmatprep.subr.bf16.mxu0 0
  %58 = vmatpush1.bf16.msra.mxu0 0
  %59 = vmatprep.subr.bf16.mxu0 0
  %60 = vmatpush1.bf16.msra.mxu0 0
  %61 = vmatprep.subr.bf16.mxu0 0
  %62 = vmatpush1.bf16.msra.mxu0 0
  %63 = vmatprep.subr.bf16.mxu0 0
  %64 = vmatpush1.bf16.msra.mxu0 0
  %65 = vmatprep.subr.bf16.mxu0 0
  %66 = vmatpush1.bf16.msra.mxu0 0
  %67 = vmatprep.subr.bf16.mxu0 0
  %68 = vmatpush1.bf16.msra.mxu0 0
  %69 = vmatprep.subr.bf16.mxu0 0
  %70 = vmatpush1.bf16.msra.mxu0 0
  %71 = vmatprep.subr.bf16.mxu0 0
  %72 = vmatpush1.bf16.msra.mxu0 0
  %73 = vmatprep.subr.bf16.mxu0 0
  %74 = vmatpush1.bf16.msra.mxu0 0
  %75 = vmatprep.mubr.bf16.mxu0 0
  %76 = vmatmul.mubr.bf16.gmra.mrb[0].mxu0 %v41
  %v77 = vpop.f32.mrb[0].mxu0
  %v78 = vadd.f32 %v25, %v77
  %v79 = vpop.f32.mrb[0].mxu0
  %v80 = vpop.f32.mrb[0].mxu0
  %v81 = vpop.f32.mrb[0].mxu0
  %82 = vdwg.mxu0
  %vm83 = vcmask 254976
  %84 = vst.msk [vmem:[%s3] sm:$0x3] %vm83, %v78
  // Predicated region
  $region14: #{_lambda_.11} parent=0 // pred_check
    _
  $region15: #{_lambda_.11} parent=0 // pred_check_branch
    %86 = sbr.rel (0) target = $region17
  $region16: #{_lambda_.11} parent=0 // pred_region
    _
  $region17: #{_lambda_.11} parent=0 // pred_fallthru
    _
  // Predicated region
  $region18: #{_lambda_.11} parent=0 // pred_check
    _
  $region19: #{_lambda_.11} parent=0 // pred_check_branch
    %88 = sbr.rel (0) target = $region21
  $region20: #{_lambda_.11} parent=0 // pred_region
    _
  $region21: #{_lambda_.11} parent=0 // pred_fallthru
    _

// kernel: _lambda_.12
$region0: #{_lambda_.12}
  #allocation0 [shape = 'u32[]', space=smem, size = 0x4, offset = 0x4, fixed_abs, tag = 'smem constant byte address 0x4 - core index']
  #allocation1 [shape = 'u32[144,128]{1,0:T(1,128)}', space=vmem, size = 0x12000, scoped, tag = 'internal scratch']
  %s0 = inlined_call_operand.vmem [shape: bf16[2,32], index: 0, kind: input, shape index: {}]
  %s1 = inlined_call_operand.vmem [shape: bf16[32,8], index: 1, kind: input, shape index: {}]
  %s2 = inlined_call_operand.vmem [shape: f32[1,8], index: 2, kind: input, shape index: {}]
  %s3 = inlined_call_operand.vmem [shape: f32[2,8], index: 3, kind: output, shape index: {}]
  %s4 = sld [smem:[#allocation0]]
  $region22: #{_lambda_.12} parent=0
    _
  %s6 = ssub.s32 1, %s4
  %s7 = scalar_select 0, %s6, %s4
  // Predicated region
  $region2: #{_lambda_.12} parent=0 // pred_check
    _
  $region3: #{_lambda_.12} parent=0 // pred_check_branch
    %9 = sbr.rel (0) target = $region5
  $region4: #{_lambda_.12} parent=0 // pred_region
    _
  $region5: #{_lambda_.12} parent=0 // pred_fallthru
    _
  // Predicated region
  $region6: #{_lambda_.12} parent=0 // pred_check
    _
  $region7: #{_lambda_.12} parent=0 // pred_check_branch
    %11 = sbr.rel (0) target = $region9
  $region8: #{_lambda_.12} parent=0 // pred_region
    _
  $region9: #{_lambda_.12} parent=0 // pred_fallthru
    _
  // Predicated region
  $region10: #{_lambda_.12} parent=0 // pred_check
    _
  $region11: #{_lambda_.12} parent=0 // pred_check_branch
    %13 = sbr.rel (0) target = $region13
  $region12: #{_lambda_.12} parent=0 // pred_region
    _
  $region13: #{_lambda_.12} parent=0 // pred_fallthru
    _
  %v15 = vld [vmem:[%s0] sm:$0x1]
  %v16 = vld [vmem:[%s1] sm:$0xf]
  %v17 = vld [vmem:[%s1 + $0x4] sm:$0xf]
  %v18 = vld [vmem:[%s1 + $0x8] sm:$0xf]
  %v19 = vld [vmem:[%s1 + $0xc] sm:$0xf]
  %v20 = vld [vmem:[%s2] sm:$0x1]
  %v22 = vlaneseq
  %v23 = vshrl.u32 %v22, 7
  %v24 = vsub.s32 0, %v23
  %v25 = vrot.slane %v20, %v24
  %v31 = vunpack.c.l.b16 %v16
  %v32 = vunpack.c.l.b16 %v17
  %v33 = vunpack.c.l.b16 %v18
  %v34 = vunpack.c.l.b16 %v19
  %v35 = vpack.c.b16 %v32, %v31
  %v36 = vpack.c.b16 %v34, %v33
  %vm39 = vcmask 261120
  %v41 = vsel %vm39, %v15, 0
  %43 = vmatprep.subr.bf16.mxu0 0
  %44 = vmatpush1.bf16.msra.mxu0 %v35
  %45 = vmatprep.subr.bf16.mxu0 0
  %46 = vmatpush1.bf16.msra.mxu0 %v36
  %47 = vmatprep.subr.bf16.mxu0 0
  %48 = vmatpush1.bf16.msra.mxu0 0
  %49 = vmatprep.subr.bf16.mxu0 0
  %50 = vmatpush1.bf16.msra.mxu0 0
  %51 = vmatprep.subr.bf16.mxu0 0
  %52 = vmatpush1.bf16.msra.mxu0 0
  %53 = vmatprep.subr.bf16.mxu0 0
  %54 = vmatpush1.bf16.msra.mxu0 0
  %55 = vmatprep.subr.bf16.mxu0 0
  %56 = vmatpush1.bf16.msra.mxu0 0
  %57 = vmatprep.subr.bf16.mxu0 0
  %58 = vmatpush1.bf16.msra.mxu0 0
  %59 = vmatprep.subr.bf16.mxu0 0
  %60 = vmatpush1.bf16.msra.mxu0 0
  %61 = vmatprep.subr.bf16.mxu0 0
  %62 = vmatpush1.bf16.msra.mxu0 0
  %63 = vmatprep.subr.bf16.mxu0 0
  %64 = vmatpush1.bf16.msra.mxu0 0
  %65 = vmatprep.subr.bf16.mxu0 0
  %66 = vmatpush1.bf16.msra.mxu0 0
  %67 = vmatprep.subr.bf16.mxu0 0
  %68 = vmatpush1.bf16.msra.mxu0 0
  %69 = vmatprep.subr.bf16.mxu0 0
  %70 = vmatpush1.bf16.msra.mxu0 0
  %71 = vmatprep.subr.bf16.mxu0 0
  %72 = vmatpush1.bf16.msra.mxu0 0
  %73 = vmatprep.subr.bf16.mxu0 0
  %74 = vmatpush1.bf16.msra.mxu0 0
  %75 = vmatprep.mubr.bf16.mxu0 0
  %76 = vmatmul.mubr.bf16.gmra.mrb[0].mxu0 %v41
  %v77 = vpop.f32.mrb[0].mxu0
  %v78 = vadd.f32 %v25, %v77
  %v79 = vpop.f32.mrb[0].mxu0
  %v80 = vpop.f32.mrb[0].mxu0
  %v81 = vpop.f32.mrb[0].mxu0
  %82 = vdwg.mxu0
  %v83 = vtanh.pop %v78
  %vm84 = vcmask 58368
  %85 = vst.msk [vmem:[%s3] sm:$0x3] %vm84, %v83
  // Predicated region
  $region14: #{_lambda_.12} parent=0 // pred_check
    _
  $region15: #{_lambda_.12} parent=0 // pred_check_branch
    %87 = sbr.rel (0) target = $region17
  $region16: #{_lambda_.12} parent=0 // pred_region
    _
  $region17: #{_lambda_.12} parent=0 // pred_fallthru
    _
  // Predicated region
  $region18: #{_lambda_.12} parent=0 // pred_check
    _
  $region19: #{_lambda_.12} parent=0 // pred_check_branch
    %89 = sbr.rel (0) target = $region21
  $region20: #{_lambda_.12} parent=0 // pred_region
    _
  $region21: #{_lambda_.12} parent=0 // pred_fallthru
    _

// kernel: tile.9
$region0: #{tile.9}
  %s0 = inlined_call_operand.vmem [shape: f32[4,64,4], index: 0, kind: input, shape index: {}]
  %s1 = inlined_call_operand.vmem [shape: f32[4,256], index: 1, kind: output, shape index: {}]
  $region1: #{tile.9} parent=0
    #allocation0 [shape = 'u8[8192]{0}', space=vmem, size = 0x2000, scoped, tag = 'scoped mem for output reshape']
    %v2 = vld [vmem:[%s0] sm:$0x1]
    %s3 = scalar_lea.vmem %s0, 31
    %v4 = vld [vmem:[%s3] sm:$0x2]
    %vm5 = vcmask 1041409
    %v6 = vsel %vm5, %v4, %v2
    %s7 = scalar_lea.vmem %s0, 62
    %v8 = vld [vmem:[%s7] sm:$0x4]
    %vm9 = vcmask 1042434
    %v10 = vsel %vm9, %v8, %v6
    %s11 = scalar_lea.vmem %s0, 93
    %v12 = vld [vmem:[%s11] sm:$0x8]
    %vm13 = vcmask 1043459
    %v14 = vsel %vm13, %v12, %v10
    %s15 = scalar_lea.vmem %s0, 124
    %v16 = vld [vmem:[%s15] sm:$0x10]
    %vm17 = vcmask 1044484
    %v18 = vsel %vm17, %v16, %v14
    %s19 = scalar_lea.vmem %s0, 155
    %v20 = vld [vmem:[%s19] sm:$0x20]
    %vm21 = vcmask 1045509
    %v22 = vsel %vm21, %v20, %v18
    %s23 = scalar_lea.vmem %s0, 186
    %v24 = vld [vmem:[%s23] sm:$0x40]
    %vm25 = vcmask 1046534
    %v26 = vsel %vm25, %v24, %v22
    %s27 = scalar_lea.vmem %s0, 217
    %v28 = vld [vmem:[%s27] sm:$0x80]
    %vm29 = vcmask 1047559
    %v30 = vsel %vm29, %v28, %v26
    %vm31 = vcmask 31744
    %32 = vst.msk [vmem:[#allocation0] ss:$8 sm:$0x3] %vm31, %v30
    %s33 = scalar_lea.vmem [#allocation0], 4294967281
    %34 = vst.msk [vmem:[%s33] ss:$8 sm:$0xc] %vm31, %v30
    %s35 = scalar_lea.vmem [#allocation0], 4294967266
    %36 = vst.msk [vmem:[%s35] ss:$8 sm:$0x30] %vm31, %v30
    %s37 = scalar_lea.vmem [#allocation0], 4294967251
    %38 = vst.msk [vmem:[%s37] ss:$8 sm:$0xc0] %vm31, %v30
    %s39 = scalar_lea.vmem %s0, 31
    %v40 = vld [vmem:[%s39] sm:$0x1]
    %s41 = scalar_lea.vmem %s0, 94
    %v42 = vld [vmem:[%s41] sm:$0x2]
    %vm43 = vcmask 1041409
    %v44 = vsel %vm43, %v42, %v40
    %s45 = scalar_lea.vmem %s0, 157
    %v46 = vld [vmem:[%s45] sm:$0x4]
    %vm47 = vcmask 1042434
    %v48 = vsel %vm47, %v46, %v44
    %s49 = scalar_lea.vmem %s0, 220
    %v50 = vld [vmem:[%s49] sm:$0x8]
    %vm51 = vcmask 1043459
    %v52 = vsel %vm51, %v50, %v48
    %s53 = scalar_lea.vmem %s0, 59
    %v54 = vld [vmem:[%s53] sm:$0x10]
    %vm55 = vcmask 1044484
    %v56 = vsel %vm55, %v54, %v52
    %s57 = scalar_lea.vmem %s0, 122
    %v58 = vld [vmem:[%s57] sm:$0x20]
    %vm59 = vcmask 1045509
    %v60 = vsel %vm59, %v58, %v56
    %s61 = scalar_lea.vmem %s0, 185
    %v62 = vld [vmem:[%s61] sm:$0x40]
    %vm63 = vcmask 1046534
    %v64 = vsel %vm63, %v62, %v60
    %s65 = scalar_lea.vmem %s0, 248
    %v66 = vld [vmem:[%s65] sm:$0x80]
    %vm67 = vcmask 1047559
    %v68 = vsel %vm67, %v66, %v64
    %69 = vrot.lane.b32.xlu0 %v68, 124
    %v70 = vpop.permute.xlu0 %69
    %vm71 = vcmask 1048544
    %72 = vst.msk [vmem:[#allocation0] sm:$0xf] %vm71, %v70
    %s73 = scalar_lea.vmem [#allocation0], 4
    %74 = vst.msk [vmem:[%s73] sm:$0xf0] %vm71, %v70
    %s75 = scalar_lea.vmem %s0, 30
    %v76 = vld [vmem:[%s75] sm:$0x1]
    %s77 = scalar_lea.vmem %s0, 93
    %v78 = vld [vmem:[%s77] sm:$0x2]
    %vm79 = vcmask 1041409
    %v80 = vsel %vm79, %v78, %v76
    %s81 = scalar_lea.vmem %s0, 156
    %v82 = vld [vmem:[%s81] sm:$0x4]
    %vm83 = vcmask 1042434
    %v84 = vsel %vm83, %v82, %v80
    %s85 = scalar_lea.vmem %s0, 219
    %v86 = vld [vmem:[%s85] sm:$0x8]
    %vm87 = vcmask 1043459
    %v88 = vsel %vm87, %v86, %v84
    %s89 = scalar_lea.vmem %s0, 58
    %v90 = vld [vmem:[%s89] sm:$0x10]
    %vm91 = vcmask 1044484
    %v92 = vsel %vm91, %v90, %v88
    %s93 = scalar_lea.vmem %s0, 121
    %v94 = vld [vmem:[%s93] sm:$0x20]
    %vm95 = vcmask 1045509
    %v96 = vsel %vm95, %v94, %v92
    %s97 = scalar_lea.vmem %s0, 184
    %v98 = vld [vmem:[%s97] sm:$0x40]
    %vm99 = vcmask 1046534
    %v100 = vsel %vm99, %v98, %v96
    %s101 = scalar_lea.vmem %s0, 247
    %v102 = vld [vmem:[%s101] sm:$0x80]
    %vm103 = vcmask 1047559
    %v104 = vsel %vm103, %v102, %v100
    %105 = vrot.lane.b32.xlu0 %v104, 120
    %v106 = vpop.permute.xlu0 %105
    %vm107 = vcmask 1015744
    %108 = vst.msk [vmem:[#allocation0] sm:$0xf] %vm107, %v106
    %s109 = scalar_lea.vmem [#allocation0], 4
    %110 = vst.msk [vmem:[%s109] sm:$0xf0] %vm107, %v106
    %s111 = scalar_lea.vmem %s0, 29
    %v112 = vld [vmem:[%s111] sm:$0x1]
    %s113 = scalar_lea.vmem %s0, 92
    %v114 = vld [vmem:[%s113] sm:$0x2]
    %vm115 = vcmask 1041409
    %v116 = vsel %vm115, %v114, %v112
    %s117 = scalar_lea.vmem %s0, 155
    %v118 = vld [vmem:[%s117] sm:$0x4]
    %vm119 = vcmask 1042434
    %v120 = vsel %vm119, %v118, %v116
    %s121 = scalar_lea.vmem %s0, 218
    %v122 = vld [vmem:[%s121] sm:$0x8]
    %vm123 = vcmask 1043459
    %v124 = vsel %vm123, %v122, %v120
    %s125 = scalar_lea.vmem %s0, 57
    %v126 = vld [vmem:[%s125] sm:$0x10]
    %vm127 = vcmask 1044484
    %v128 = vsel %vm127, %v126, %v124
    %s129 = scalar_lea.vmem %s0, 120
    %v130 = vld [vmem:[%s129] sm:$0x20]
    %vm131 = vcmask 1045509
    %v132 = vsel %vm131, %v130, %v128
    %s133 = scalar_lea.vmem %s0, 183
    %v134 = vld [vmem:[%s133] sm:$0x40]
    %vm135 = vcmask 1046534
    %v136 = vsel %vm135, %v134, %v132
    %s137 = scalar_lea.vmem %s0, 246
    %v138 = vld [vmem:[%s137] sm:$0x80]
    %vm139 = vcmask 1047559
    %v140 = vsel %vm139, %v138, %v136
    %141 = vrot.lane.b32.xlu0 %v140, 116
    %v142 = vpop.permute.xlu0 %141
    %vm143 = vcmask 982944
    %144 = vst.msk [vmem:[#allocation0] sm:$0xf] %vm143, %v142
    %s145 = scalar_lea.vmem [#allocation0], 4
    %146 = vst.msk [vmem:[%s145] sm:$0xf0] %vm143, %v142
    %s147 = scalar_lea.vmem %s0, 28
    %v148 = vld [vmem:[%s147] sm:$0x1]
    %s149 = scalar_lea.vmem %s0, 91
    %v150 = vld [vmem:[%s149] sm:$0x2]
    %vm151 = vcmask 1041409
    %v152 = vsel %vm151, %v150, %v148
    %s153 = scalar_lea.vmem %s0, 154
    %v154 = vld [vmem:[%s153] sm:$0x4]
    %vm155 = vcmask 1042434
    %v156 = vsel %vm155, %v154, %v152
    %s157 = scalar_lea.vmem %s0, 217
    %v158 = vld [vmem:[%s157] sm:$0x8]
    %vm159 = vcmask 1043459
    %v160 = vsel %vm159, %v158, %v156
    %s161 = scalar_lea.vmem %s0, 56
    %v162 = vld [vmem:[%s161] sm:$0x10]
    %vm163 = vcmask 1044484
    %v164 = vsel %vm163, %v162, %v160
    %s165 = scalar_lea.vmem %s0, 119
    %v166 = vld [vmem:[%s165] sm:$0x20]
    %vm167 = vcmask 1045509
    %v168 = vsel %vm167, %v166, %v164
    %s169 = scalar_lea.vmem %s0, 182
    %v170 = vld [vmem:[%s169] sm:$0x40]
    %vm171 = vcmask 1046534
    %v172 = vsel %vm171, %v170, %v168
    %s173 = scalar_lea.vmem %s0, 245
    %v174 = vld [vmem:[%s173] sm:$0x80]
    %vm175 = vcmask 1047559
    %v176 = vsel %vm175, %v174, %v172
    %177 = vrot.lane.b32.xlu0 %v176, 112
    %v178 = vpop.permute.xlu0 %177
    %vm179 = vcmask 950144
    %180 = vst.msk [vmem:[#allocation0] sm:$0xf] %vm179, %v178
    %s181 = scalar_lea.vmem [#allocation0], 4
    %182 = vst.msk [vmem:[%s181] sm:$0xf0] %vm179, %v178
    %s183 = scalar_lea.vmem %s0, 27
    %v184 = vld [vmem:[%s183] sm:$0x1]
    %s185 = scalar_lea.vmem %s0, 90
    %v186 = vld [vmem:[%s185] sm:$0x2]
    %vm187 = vcmask 1041409
    %v188 = vsel %vm187, %v186, %v184
    %s189 = scalar_lea.vmem %s0, 153
    %v190 = vld [vmem:[%s189] sm:$0x4]
    %vm191 = vcmask 1042434
    %v192 = vsel %vm191, %v190, %v188
    %s193 = scalar_lea.vmem %s0, 216
    %v194 = vld [vmem:[%s193] sm:$0x8]
    %vm195 = vcmask 1043459
    %v196 = vsel %vm195, %v194, %v192
    %s197 = scalar_lea.vmem %s0, 55
    %v198 = vld [vmem:[%s197] sm:$0x10]
    %vm199 = vcmask 1044484
    %v200 = vsel %vm199, %v198, %v196
    %s201 = scalar_lea.vmem %s0, 118
    %v202 = vld [vmem:[%s201] sm:$0x20]
    %vm203 = vcmask 1045509
    %v204 = vsel %vm203, %v202, %v200
    %s205 = scalar_lea.vmem %s0, 181
    %v206 = vld [vmem:[%s205] sm:$0x40]
    %vm207 = vcmask 1046534
    %v208 = vsel %vm207, %v206, %v204
    %s209 = scalar_lea.vmem %s0, 244
    %v210 = vld [vmem:[%s209] sm:$0x80]
    %vm211 = vcmask 1047559
    %v212 = vsel %vm211, %v210, %v208
    %213 = vrot.lane.b32.xlu0 %v212, 108
    %v214 = vpop.permute.xlu0 %213
    %vm215 = vcmask 917344
    %216 = vst.msk [vmem:[#allocation0] sm:$0xf] %vm215, %v214
    %s217 = scalar_lea.vmem [#allocation0], 4
    %218 = vst.msk [vmem:[%s217] sm:$0xf0] %vm215, %v214
    %s219 = scalar_lea.vmem %s0, 26
    %v220 = vld [vmem:[%s219] sm:$0x1]
    %s221 = scalar_lea.vmem %s0, 89
    %v222 = vld [vmem:[%s221] sm:$0x2]
    %vm223 = vcmask 1041409
    %v224 = vsel %vm223, %v222, %v220
    %s225 = scalar_lea.vmem %s0, 152
    %v226 = vld [vmem:[%s225] sm:$0x4]
    %vm227 = vcmask 1042434
    %v228 = vsel %vm227, %v226, %v224
    %s229 = scalar_lea.vmem %s0, 215
    %v230 = vld [vmem:[%s229] sm:$0x8]
    %vm231 = vcmask 1043459
    %v232 = vsel %vm231, %v230, %v228
    %s233 = scalar_lea.vmem %s0, 54
    %v234 = vld [vmem:[%s233] sm:$0x10]
    %vm235 = vcmask 1044484
    %v236 = vsel %vm235, %v234, %v232
    %s237 = scalar_lea.vmem %s0, 117
    %v238 = vld [vmem:[%s237] sm:$0x20]
    %vm239 = vcmask 1045509
    %v240 = vsel %vm239, %v238, %v236
    %s241 = scalar_lea.vmem %s0, 180
    %v242 = vld [vmem:[%s241] sm:$0x40]
    %vm243 = vcmask 1046534
    %v244 = vsel %vm243, %v242, %v240
    %s245 = scalar_lea.vmem %s0, 243
    %v246 = vld [vmem:[%s245] sm:$0x80]
    %vm247 = vcmask 1047559
    %v248 = vsel %vm247, %v246, %v244
    %249 = vrot.lane.b32.xlu0 %v248, 104
    %v250 = vpop.permute.xlu0 %249
    %vm251 = vcmask 884544
    %252 = vst.msk [vmem:[#allocation0] sm:$0xf] %vm251, %v250
    %s253 = scalar_lea.vmem [#allocation0], 4
    %254 = vst.msk [vmem:[%s253] sm:$0xf0] %vm251, %v250
    %s255 = scalar_lea.vmem %s0, 25
    %v256 = vld [vmem:[%s255] sm:$0x1]
    %s257 = scalar_lea.vmem %s0, 88
    %v258 = vld [vmem:[%s257] sm:$0x2]
    %vm259 = vcmask 1041409
    %v260 = vsel %vm259, %v258, %v256
    %s261 = scalar_lea.vmem %s0, 151
    %v262 = vld [vmem:[%s261] sm:$0x4]
    %vm263 = vcmask 1042434
    %v264 = vsel %vm263, %v262, %v260
    %s265 = scalar_lea.vmem %s0, 214
    %v266 = vld [vmem:[%s265] sm:$0x8]
    %vm267 = vcmask 1043459
    %v268 = vsel %vm267, %v266, %v264
    %s269 = scalar_lea.vmem %s0, 53
    %v270 = vld [vmem:[%s269] sm:$0x10]
    %vm271 = vcmask 1044484
    %v272 = vsel %vm271, %v270, %v268
    %s273 = scalar_lea.vmem %s0, 116
    %v274 = vld [vmem:[%s273] sm:$0x20]
    %vm275 = vcmask 1045509
    %v276 = vsel %vm275, %v274, %v272
    %s277 = scalar_lea.vmem %s0, 179
    %v278 = vld [vmem:[%s277] sm:$0x40]
    %vm279 = vcmask 1046534
    %v280 = vsel %vm279, %v278, %v276
    %s281 = scalar_lea.vmem %s0, 242
    %v282 = vld [vmem:[%s281] sm:$0x80]
    %vm283 = vcmask 1047559
    %v284 = vsel %vm283, %v282, %v280
    %285 = vrot.lane.b32.xlu0 %v284, 100
    %v286 = vpop.permute.xlu0 %285
    %vm287 = vcmask 851744
    %288 = vst.msk [vmem:[#allocation0] sm:$0xf] %vm287, %v286
    %s289 = scalar_lea.vmem [#allocation0], 4
    %290 = vst.msk [vmem:[%s289] sm:$0xf0] %vm287, %v286
    %s291 = scalar_lea.vmem %s0, 24
    %v292 = vld [vmem:[%s291] sm:$0x1]
    %s293 = scalar_lea.vmem %s0, 87
    %v294 = vld [vmem:[%s293] sm:$0x2]
    %vm295 = vcmask 1041409
    %v296 = vsel %vm295, %v294, %v292
    %s297 = scalar_lea.vmem %s0, 150
    %v298 = vld [vmem:[%s297] sm:$0x4]
    %vm299 = vcmask 1042434
    %v300 = vsel %vm299, %v298, %v296
    %s301 = scalar_lea.vmem %s0, 213
    %v302 = vld [vmem:[%s301] sm:$0x8]
    %vm303 = vcmask 1043459
    %v304 = vsel %vm303, %v302, %v300
    %s305 = scalar_lea.vmem %s0, 52
    %v306 = vld [vmem:[%s305] sm:$0x10]
    %vm307 = vcmask 1044484
    %v308 = vsel %vm307, %v306, %v304
    %s309 = scalar_lea.vmem %s0, 115
    %v310 = vld [vmem:[%s309] sm:$0x20]
    %vm311 = vcmask 1045509
    %v312 = vsel %vm311, %v310, %v308
    %s313 = scalar_lea.vmem %s0, 178
    %v314 = vld [vmem:[%s313] sm:$0x40]
    %vm315 = vcmask 1046534
    %v316 = vsel %vm315, %v314, %v312
    %s317 = scalar_lea.vmem %s0, 241
    %v318 = vld [vmem:[%s317] sm:$0x80]
    %vm319 = vcmask 1047559
    %v320 = vsel %vm319, %v318, %v316
    %321 = vrot.lane.b32.xlu0 %v320, 96
    %v322 = vpop.permute.xlu0 %321
    %vm323 = vcmask 818944
    %324 = vst.msk [vmem:[#allocation0] sm:$0xf] %vm323, %v322
    %s325 = scalar_lea.vmem [#allocation0], 4
    %326 = vst.msk [vmem:[%s325] sm:$0xf0] %vm323, %v322
    %s327 = scalar_lea.vmem %s0, 23
    %v328 = vld [vmem:[%s327] sm:$0x1]
    %s329 = scalar_lea.vmem %s0, 86
    %v330 = vld [vmem:[%s329] sm:$0x2]
    %vm331 = vcmask 1041409
    %v332 = vsel %vm331, %v330, %v328
    %s333 = scalar_lea.vmem %s0, 149
    %v334 = vld [vmem:[%s333] sm:$0x4]
    %vm335 = vcmask 1042434
    %v336 = vsel %vm335, %v334, %v332
    %s337 = scalar_lea.vmem %s0, 212
    %v338 = vld [vmem:[%s337] sm:$0x8]
    %vm339 = vcmask 1043459
    %v340 = vsel %vm339, %v338, %v336
    %s341 = scalar_lea.vmem %s0, 51
    %v342 = vld [vmem:[%s341] sm:$0x10]
    %vm343 = vcmask 1044484
    %v344 = vsel %vm343, %v342, %v340
    %s345 = scalar_lea.vmem %s0, 114
    %v346 = vld [vmem:[%s345] sm:$0x20]
    %vm347 = vcmask 1045509
    %v348 = vsel %vm347, %v346, %v344
    %s349 = scalar_lea.vmem %s0, 177
    %v350 = vld [vmem:[%s349] sm:$0x40]
    %vm351 = vcmask 1046534
    %v352 = vsel %vm351, %v350, %v348
    %s353 = scalar_lea.vmem %s0, 240
    %v354 = vld [vmem:[%s353] sm:$0x80]
    %vm355 = vcmask 1047559
    %v356 = vsel %vm355, %v354, %v352
    %357 = vrot.lane.b32.xlu0 %v356, 92
    %v358 = vpop.permute.xlu0 %357
    %vm359 = vcmask 786144
    %360 = vst.msk [vmem:[#allocation0] sm:$0xf] %vm359, %v358
    %s361 = scalar_lea.vmem [#allocation0], 4
    %362 = vst.msk [vmem:[%s361] sm:$0xf0] %vm359, %v358
    %s363 = scalar_lea.vmem %s0, 22
    %v364 = vld [vmem:[%s363] sm:$0x1]
    %s365 = scalar_lea.vmem %s0, 85
    %v366 = vld [vmem:[%s365] sm:$0x2]
    %vm367 = vcmask 1041409
    %v368 = vsel %vm367, %v366, %v364
    %s369 = scalar_lea.vmem %s0, 148
    %v370 = vld [vmem:[%s369] sm:$0x4]
    %vm371 = vcmask 1042434
    %v372 = vsel %vm371, %v370, %v368
    %s373 = scalar_lea.vmem %s0, 211
    %v374 = vld [vmem:[%s373] sm:$0x8]
    %vm375 = vcmask 1043459
    %v376 = vsel %vm375, %v374, %v372
    %s377 = scalar_lea.vmem %s0, 50
    %v378 = vld [vmem:[%s377] sm:$0x10]
    %vm379 = vcmask 1044484
    %v380 = vsel %vm379, %v378, %v376
    %s381 = scalar_lea.vmem %s0, 113
    %v382 = vld [vmem:[%s381] sm:$0x20]
    %vm383 = vcmask 1045509
    %v384 = vsel %vm383, %v382, %v380
    %s385 = scalar_lea.vmem %s0, 176
    %v386 = vld [vmem:[%s385] sm:$0x40]
    %vm387 = vcmask 1046534
    %v388 = vsel %vm387, %v386, %v384
    %s389 = scalar_lea.vmem %s0, 239
    %v390 = vld [vmem:[%s389] sm:$0x80]
    %vm391 = vcmask 1047559
    %v392 = vsel %vm391, %v390, %v388
    %393 = vrot.lane.b32.xlu0 %v392, 88
    %v394 = vpop.permute.xlu0 %393
    %vm395 = vcmask 753344
    %396 = vst.msk [vmem:[#allocation0] sm:$0xf] %vm395, %v394
    %s397 = scalar_lea.vmem [#allocation0], 4
    %398 = vst.msk [vmem:[%s397] sm:$0xf0] %vm395, %v394
    %s399 = scalar_lea.vmem %s0, 21
    %v400 = vld [vmem:[%s399] sm:$0x1]
    %s401 = scalar_lea.vmem %s0, 84
    %v402 = vld [vmem:[%s401] sm:$0x2]
    %vm403 = vcmask 1041409
    %v404 = vsel %vm403, %v402, %v400
    %s405 = scalar_lea.vmem %s0, 147
    %v406 = vld [vmem:[%s405] sm:$0x4]
    %vm407 = vcmask 1042434
    %v408 = vsel %vm407, %v406, %v404
    %s409 = scalar_lea.vmem %s0, 210
    %v410 = vld [vmem:[%s409] sm:$0x8]
    %vm411 = vcmask 1043459
    %v412 = vsel %vm411, %v410, %v408
    %s413 = scalar_lea.vmem %s0, 49
    %v414 = vld [vmem:[%s413] sm:$0x10]
    %vm415 = vcmask 1044484
    %v416 = vsel %vm415, %v414, %v412
    %s417 = scalar_lea.vmem %s0, 112
    %v418 = vld [vmem:[%s417] sm:$0x20]
    %vm419 = vcmask 1045509
    %v420 = vsel %vm419, %v418, %v416
    %s421 = scalar_lea.vmem %s0, 175
    %v422 = vld [vmem:[%s421] sm:$0x40]
    %vm423 = vcmask 1046534
    %v424 = vsel %vm423, %v422, %v420
    %s425 = scalar_lea.vmem %s0, 238
    %v426 = vld [vmem:[%s425] sm:$0x80]
    %vm427 = vcmask 1047559
    %v428 = vsel %vm427, %v426, %v424
    %429 = vrot.lane.b32.xlu0 %v428, 84
    %v430 = vpop.permute.xlu0 %429
    %vm431 = vcmask 720544
    %432 = vst.msk [vmem:[#allocation0] sm:$0xf] %vm431, %v430
    %s433 = scalar_lea.vmem [#allocation0], 4
    %434 = vst.msk [vmem:[%s433] sm:$0xf0] %vm431, %v430
    %s435 = scalar_lea.vmem %s0, 20
    %v436 = vld [vmem:[%s435] sm:$0x1]
    %s437 = scalar_lea.vmem %s0, 83
    %v438 = vld [vmem:[%s437] sm:$0x2]
    %vm439 = vcmask 1041409
    %v440 = vsel %vm439, %v438, %v436
    %s441 = scalar_lea.vmem %s0, 146
    %v442 = vld [vmem:[%s441] sm:$0x4]
    %vm443 = vcmask 1042434
    %v444 = vsel %vm443, %v442, %v440
    %s445 = scalar_lea.vmem %s0, 209
    %v446 = vld [vmem:[%s445] sm:$0x8]
    %vm447 = vcmask 1043459
    %v448 = vsel %vm447, %v446, %v444
    %s449 = scalar_lea.vmem %s0, 48
    %v450 = vld [vmem:[%s449] sm:$0x10]
    %vm451 = vcmask 1044484
    %v452 = vsel %vm451, %v450, %v448
    %s453 = scalar_lea.vmem %s0, 111
    %v454 = vld [vmem:[%s453] sm:$0x20]
    %vm455 = vcmask 1045509
    %v456 = vsel %vm455, %v454, %v452
    %s457 = scalar_lea.vmem %s0, 174
    %v458 = vld [vmem:[%s457] sm:$0x40]
    %vm459 = vcmask 1046534
    %v460 = vsel %vm459, %v458, %v456
    %s461 = scalar_lea.vmem %s0, 237
    %v462 = vld [vmem:[%s461] sm:$0x80]
    %vm463 = vcmask 1047559
    %v464 = vsel %vm463, %v462, %v460
    %465 = vrot.lane.b32.xlu0 %v464, 80
    %v466 = vpop.permute.xlu0 %465
    %vm467 = vcmask 687744
    %468 = vst.msk [vmem:[#allocation0] sm:$0xf] %vm467, %v466
    %s469 = scalar_lea.vmem [#allocation0], 4
    %470 = vst.msk [vmem:[%s469] sm:$0xf0] %vm467, %v466
    %s471 = scalar_lea.vmem %s0, 19
    %v472 = vld [vmem:[%s471] sm:$0x1]
    %s473 = scalar_lea.vmem %s0, 82
    %v474 = vld [vmem:[%s473] sm:$0x2]
    %vm475 = vcmask 1041409
    %v476 = vsel %vm475, %v474, %v472
    %s477 = scalar_lea.vmem %s0, 145
    %v478 = vld [vmem:[%s477] sm:$0x4]
    %vm479 = vcmask 1042434
    %v480 = vsel %vm479, %v478, %v476
    %s481 = scalar_lea.vmem %s0, 208
    %v482 = vld [vmem:[%s481] sm:$0x8]
    %vm483 = vcmask 1043459
    %v484 = vsel %vm483, %v482, %v480
    %s485 = scalar_lea.vmem %s0, 47
    %v486 = vld [vmem:[%s485] sm:$0x10]
    %vm487 = vcmask 1044484
    %v488 = vsel %vm487, %v486, %v484
    %s489 = scalar_lea.vmem %s0, 110
    %v490 = vld [vmem:[%s489] sm:$0x20]
    %vm491 = vcmask 1045509
    %v492 = vsel %vm491, %v490, %v488
    %s493 = scalar_lea.vmem %s0, 173
    %v494 = vld [vmem:[%s493] sm:$0x40]
    %vm495 = vcmask 1046534
    %v496 = vsel %vm495, %v494, %v492
    %s497 = scalar_lea.vmem %s0, 236
    %v498 = vld [vmem:[%s497] sm:$0x80]
    %vm499 = vcmask 1047559
    %v500 = vsel %vm499, %v498, %v496
    %501 = vrot.lane.b32.xlu0 %v500, 76
    %v502 = vpop.permute.xlu0 %501
    %vm503 = vcmask 654944
    %504 = vst.msk [vmem:[#allocation0] sm:$0xf] %vm503, %v502
    %s505 = scalar_lea.vmem [#allocation0], 4
    %506 = vst.msk [vmem:[%s505] sm:$0xf0] %vm503, %v502
    %s507 = scalar_lea.vmem %s0, 18
    %v508 = vld [vmem:[%s507] sm:$0x1]
    %s509 = scalar_lea.vmem %s0, 81
    %v510 = vld [vmem:[%s509] sm:$0x2]
    %vm511 = vcmask 1041409
    %v512 = vsel %vm511, %v510, %v508
    %s513 = scalar_lea.vmem %s0, 144
    %v514 = vld [vmem:[%s513] sm:$0x4]
    %vm515 = vcmask 1042434
    %v516 = vsel %vm515, %v514, %v512
    %s517 = scalar_lea.vmem %s0, 207
    %v518 = vld [vmem:[%s517] sm:$0x8]
    %vm519 = vcmask 1043459
    %v520 = vsel %vm519, %v518, %v516
    %s521 = scalar_lea.vmem %s0, 46
    %v522 = vld [vmem:[%s521] sm:$0x10]
    %vm523 = vcmask 1044484
    %v524 = vsel %vm523, %v522, %v520
    %s525 = scalar_lea.vmem %s0, 109
    %v526 = vld [vmem:[%s525] sm:$0x20]
    %vm527 = vcmask 1045509
    %v528 = vsel %vm527, %v526, %v524
    %s529 = scalar_lea.vmem %s0, 172
    %v530 = vld [vmem:[%s529] sm:$0x40]
    %vm531 = vcmask 1046534
    %v532 = vsel %vm531, %v530, %v528
    %s533 = scalar_lea.vmem %s0, 235
    %v534 = vld [vmem:[%s533] sm:$0x80]
    %vm535 = vcmask 1047559
    %v536 = vsel %vm535, %v534, %v532
    %537 = vrot.lane.b32.xlu0 %v536, 72
    %v538 = vpop.permute.xlu0 %537
    %vm539 = vcmask 622144
    %540 = vst.msk [vmem:[#allocation0] sm:$0xf] %vm539, %v538
    %s541 = scalar_lea.vmem [#allocation0], 4
    %542 = vst.msk [vmem:[%s541] sm:$0xf0] %vm539, %v538
    %s543 = scalar_lea.vmem %s0, 17
    %v544 = vld [vmem:[%s543] sm:$0x1]
    %s545 = scalar_lea.vmem %s0, 80
    %v546 = vld [vmem:[%s545] sm:$0x2]
    %vm547 = vcmask 1041409
    %v548 = vsel %vm547, %v546, %v544
    %s549 = scalar_lea.vmem %s0, 143
    %v550 = vld [vmem:[%s549] sm:$0x4]
    %vm551 = vcmask 1042434
    %v552 = vsel %vm551, %v550, %v548
    %s553 = scalar_lea.vmem %s0, 206
    %v554 = vld [vmem:[%s553] sm:$0x8]
    %vm555 = vcmask 1043459
    %v556 = vsel %vm555, %v554, %v552
    %s557 = scalar_lea.vmem %s0, 45
    %v558 = vld [vmem:[%s557] sm:$0x10]
    %vm559 = vcmask 1044484
    %v560 = vsel %vm559, %v558, %v556
    %s561 = scalar_lea.vmem %s0, 108
    %v562 = vld [vmem:[%s561] sm:$0x20]
    %vm563 = vcmask 1045509
    %v564 = vsel %vm563, %v562, %v560
    %s565 = scalar_lea.vmem %s0, 171
    %v566 = vld [vmem:[%s565] sm:$0x40]
    %vm567 = vcmask 1046534
    %v568 = vsel %vm567, %v566, %v564
    %s569 = scalar_lea.vmem %s0, 234
    %v570 = vld [vmem:[%s569] sm:$0x80]
    %vm571 = vcmask 1047559
    %v572 = vsel %vm571, %v570, %v568
    %573 = vrot.lane.b32.xlu0 %v572, 68
    %v574 = vpop.permute.xlu0 %573
    %vm575 = vcmask 589344
    %576 = vst.msk [vmem:[#allocation0] sm:$0xf] %vm575, %v574
    %s577 = scalar_lea.vmem [#allocation0], 4
    %578 = vst.msk [vmem:[%s577] sm:$0xf0] %vm575, %v574
    %s579 = scalar_lea.vmem %s0, 16
    %v580 = vld [vmem:[%s579] sm:$0x1]
    %s581 = scalar_lea.vmem %s0, 79
    %v582 = vld [vmem:[%s581] sm:$0x2]
    %vm583 = vcmask 1041409
    %v584 = vsel %vm583, %v582, %v580
    %s585 = scalar_lea.vmem %s0, 142
    %v586 = vld [vmem:[%s585] sm:$0x4]
    %vm587 = vcmask 1042434
    %v588 = vsel %vm587, %v586, %v584
    %s589 = scalar_lea.vmem %s0, 205
    %v590 = vld [vmem:[%s589] sm:$0x8]
    %vm591 = vcmask 1043459
    %v592 = vsel %vm591, %v590, %v588
    %s593 = scalar_lea.vmem %s0, 44
    %v594 = vld [vmem:[%s593] sm:$0x10]
    %vm595 = vcmask 1044484
    %v596 = vsel %vm595, %v594, %v592
    %s597 = scalar_lea.vmem %s0, 107
    %v598 = vld [vmem:[%s597] sm:$0x20]
    %vm599 = vcmask 1045509
    %v600 = vsel %vm599, %v598, %v596
    %s601 = scalar_lea.vmem %s0, 170
    %v602 = vld [vmem:[%s601] sm:$0x40]
    %vm603 = vcmask 1046534
    %v604 = vsel %vm603, %v602, %v600
    %s605 = scalar_lea.vmem %s0, 233
    %v606 = vld [vmem:[%s605] sm:$0x80]
    %vm607 = vcmask 1047559
    %v608 = vsel %vm607, %v606, %v604
    %609 = vrot.lane.b32.xlu0 %v608, 64
    %v610 = vpop.permute.xlu0 %609
    %vm611 = vcmask 556544
    %612 = vst.msk [vmem:[#allocation0] sm:$0xf] %vm611, %v610
    %s613 = scalar_lea.vmem [#allocation0], 4
    %614 = vst.msk [vmem:[%s613] sm:$0xf0] %vm611, %v610
    %s615 = scalar_lea.vmem %s0, 15
    %v616 = vld [vmem:[%s615] sm:$0x1]
    %s617 = scalar_lea.vmem %s0, 78
    %v618 = vld [vmem:[%s617] sm:$0x2]
    %vm619 = vcmask 1041409
    %v620 = vsel %vm619, %v618, %v616
    %s621 = scalar_lea.vmem %s0, 141
    %v622 = vld [vmem:[%s621] sm:$0x4]
    %vm623 = vcmask 1042434
    %v624 = vsel %vm623, %v622, %v620
    %s625 = scalar_lea.vmem %s0, 204
    %v626 = vld [vmem:[%s625] sm:$0x8]
    %vm627 = vcmask 1043459
    %v628 = vsel %vm627, %v626, %v624
    %s629 = scalar_lea.vmem %s0, 43
    %v630 = vld [vmem:[%s629] sm:$0x10]
    %vm631 = vcmask 1044484
    %v632 = vsel %vm631, %v630, %v628
    %s633 = scalar_lea.vmem %s0, 106
    %v634 = vld [vmem:[%s633] sm:$0x20]
    %vm635 = vcmask 1045509
    %v636 = vsel %vm635, %v634, %v632
    %s637 = scalar_lea.vmem %s0, 169
    %v638 = vld [vmem:[%s637] sm:$0x40]
    %vm639 = vcmask 1046534
    %v640 = vsel %vm639, %v638, %v636
    %s641 = scalar_lea.vmem %s0, 232
    %v642 = vld [vmem:[%s641] sm:$0x80]
    %vm643 = vcmask 1047559
    %v644 = vsel %vm643, %v642, %v640
    %645 = vrot.lane.b32.xlu0 %v644, 60
    %v646 = vpop.permute.xlu0 %645
    %vm647 = vcmask 523744
    %648 = vst.msk [vmem:[#allocation0] sm:$0xf] %vm647, %v646
    %s649 = scalar_lea.vmem [#allocation0], 4
    %650 = vst.msk [vmem:[%s649] sm:$0xf0] %vm647, %v646
    %s651 = scalar_lea.vmem %s0, 14
    %v652 = vld [vmem:[%s651] sm:$0x1]
    %s653 = scalar_lea.vmem %s0, 77
    %v654 = vld [vmem:[%s653] sm:$0x2]
    %vm655 = vcmask 1041409
    %v656 = vsel %vm655, %v654, %v652
    %s657 = scalar_lea.vmem %s0, 140
    %v658 = vld [vmem:[%s657] sm:$0x4]
    %vm659 = vcmask 1042434
    %v660 = vsel %vm659, %v658, %v656
    %s661 = scalar_lea.vmem %s0, 203
    %v662 = vld [vmem:[%s661] sm:$0x8]
    %vm663 = vcmask 1043459
    %v664 = vsel %vm663, %v662, %v660
    %s665 = scalar_lea.vmem %s0, 42
    %v666 = vld [vmem:[%s665] sm:$0x10]
    %vm667 = vcmask 1044484
    %v668 = vsel %vm667, %v666, %v664
    %s669 = scalar_lea.vmem %s0, 105
    %v670 = vld [vmem:[%s669] sm:$0x20]
    %vm671 = vcmask 1045509
    %v672 = vsel %vm671, %v670, %v668
    %s673 = scalar_lea.vmem %s0, 168
    %v674 = vld [vmem:[%s673] sm:$0x40]
    %vm675 = vcmask 1046534
    %v676 = vsel %vm675, %v674, %v672
    %s677 = scalar_lea.vmem %s0, 231
    %v678 = vld [vmem:[%s677] sm:$0x80]
    %vm679 = vcmask 1047559
    %v680 = vsel %vm679, %v678, %v676
    %681 = vrot.lane.b32.xlu0 %v680, 56
    %v682 = vpop.permute.xlu0 %681
    %vm683 = vcmask 490944
    %684 = vst.msk [vmem:[#allocation0] sm:$0xf] %vm683, %v682
    %s685 = scalar_lea.vmem [#allocation0], 4
    %686 = vst.msk [vmem:[%s685] sm:$0xf0] %vm683, %v682
    %s687 = scalar_lea.vmem %s0, 13
    %v688 = vld [vmem:[%s687] sm:$0x1]
    %s689 = scalar_lea.vmem %s0, 76
    %v690 = vld [vmem:[%s689] sm:$0x2]
    %vm691 = vcmask 1041409
    %v692 = vsel %vm691, %v690, %v688
    %s693 = scalar_lea.vmem %s0, 139
    %v694 = vld [vmem:[%s693] sm:$0x4]
    %vm695 = vcmask 1042434
    %v696 = vsel %vm695, %v694, %v692
    %s697 = scalar_lea.vmem %s0, 202
    %v698 = vld [vmem:[%s697] sm:$0x8]
    %vm699 = vcmask 1043459
    %v700 = vsel %vm699, %v698, %v696
    %s701 = scalar_lea.vmem %s0, 41
    %v702 = vld [vmem:[%s701] sm:$0x10]
    %vm703 = vcmask 1044484
    %v704 = vsel %vm703, %v702, %v700
    %s705 = scalar_lea.vmem %s0, 104
    %v706 = vld [vmem:[%s705] sm:$0x20]
    %vm707 = vcmask 1045509
    %v708 = vsel %vm707, %v706, %v704
    %s709 = scalar_lea.vmem %s0, 167
    %v710 = vld [vmem:[%s709] sm:$0x40]
    %vm711 = vcmask 1046534
    %v712 = vsel %vm711, %v710, %v708
    %s713 = scalar_lea.vmem %s0, 230
    %v714 = vld [vmem:[%s713] sm:$0x80]
    %vm715 = vcmask 1047559
    %v716 = vsel %vm715, %v714, %v712
    %717 = vrot.lane.b32.xlu0 %v716, 52
    %v718 = vpop.permute.xlu0 %717
    %vm719 = vcmask 458144
    %720 = vst.msk [vmem:[#allocation0] sm:$0xf] %vm719, %v718
    %s721 = scalar_lea.vmem [#allocation0], 4
    %722 = vst.msk [vmem:[%s721] sm:$0xf0] %vm719, %v718
    %s723 = scalar_lea.vmem %s0, 12
    %v724 = vld [vmem:[%s723] sm:$0x1]
    %s725 = scalar_lea.vmem %s0, 75
    %v726 = vld [vmem:[%s725] sm:$0x2]
    %vm727 = vcmask 1041409
    %v728 = vsel %vm727, %v726, %v724
    %s729 = scalar_lea.vmem %s0, 138
    %v730 = vld [vmem:[%s729] sm:$0x4]
    %vm731 = vcmask 1042434
    %v732 = vsel %vm731, %v730, %v728
    %s733 = scalar_lea.vmem %s0, 201
    %v734 = vld [vmem:[%s733] sm:$0x8]
    %vm735 = vcmask 1043459
    %v736 = vsel %vm735, %v734, %v732
    %s737 = scalar_lea.vmem %s0, 40
    %v738 = vld [vmem:[%s737] sm:$0x10]
    %vm739 = vcmask 1044484
    %v740 = vsel %vm739, %v738, %v736
    %s741 = scalar_lea.vmem %s0, 103
    %v742 = vld [vmem:[%s741] sm:$0x20]
    %vm743 = vcmask 1045509
    %v744 = vsel %vm743, %v742, %v740
    %s745 = scalar_lea.vmem %s0, 166
    %v746 = vld [vmem:[%s745] sm:$0x40]
    %vm747 = vcmask 1046534
    %v748 = vsel %vm747, %v746, %v744
    %s749 = scalar_lea.vmem %s0, 229
    %v750 = vld [vmem:[%s749] sm:$0x80]
    %vm751 = vcmask 1047559
    %v752 = vsel %vm751, %v750, %v748
    %753 = vrot.lane.b32.xlu0 %v752, 48
    %v754 = vpop.permute.xlu0 %753
    %vm755 = vcmask 425344
    %756 = vst.msk [vmem:[#allocation0] sm:$0xf] %vm755, %v754
    %s757 = scalar_lea.vmem [#allocation0], 4
    %758 = vst.msk [vmem:[%s757] sm:$0xf0] %vm755, %v754
    %s759 = scalar_lea.vmem %s0, 11
    %v760 = vld [vmem:[%s759] sm:$0x1]
    %s761 = scalar_lea.vmem %s0, 74
    %v762 = vld [vmem:[%s761] sm:$0x2]
    %vm763 = vcmask 1041409
    %v764 = vsel %vm763, %v762, %v760
    %s765 = scalar_lea.vmem %s0, 137
    %v766 = vld [vmem:[%s765] sm:$0x4]
    %vm767 = vcmask 1042434
    %v768 = vsel %vm767, %v766, %v764
    %s769 = scalar_lea.vmem %s0, 200
    %v770 = vld [vmem:[%s769] sm:$0x8]
    %vm771 = vcmask 1043459
    %v772 = vsel %vm771, %v770, %v768
    %s773 = scalar_lea.vmem %s0, 39
    %v774 = vld [vmem:[%s773] sm:$0x10]
    %vm775 = vcmask 1044484
    %v776 = vsel %vm775, %v774, %v772
    %s777 = scalar_lea.vmem %s0, 102
    %v778 = vld [vmem:[%s777] sm:$0x20]
    %vm779 = vcmask 1045509
    %v780 = vsel %vm779, %v778, %v776
    %s781 = scalar_lea.vmem %s0, 165
    %v782 = vld [vmem:[%s781] sm:$0x40]
    %vm783 = vcmask 1046534
    %v784 = vsel %vm783, %v782, %v780
    %s785 = scalar_lea.vmem %s0, 228
    %v786 = vld [vmem:[%s785] sm:$0x80]
    %vm787 = vcmask 1047559
    %v788 = vsel %vm787, %v786, %v784
    %789 = vrot.lane.b32.xlu0 %v788, 44
    %v790 = vpop.permute.xlu0 %789
    %vm791 = vcmask 392544
    %792 = vst.msk [vmem:[#allocation0] sm:$0xf] %vm791, %v790
    %s793 = scalar_lea.vmem [#allocation0], 4
    %794 = vst.msk [vmem:[%s793] sm:$0xf0] %vm791, %v790
    %s795 = scalar_lea.vmem %s0, 10
    %v796 = vld [vmem:[%s795] sm:$0x1]
    %s797 = scalar_lea.vmem %s0, 73
    %v798 = vld [vmem:[%s797] sm:$0x2]
    %vm799 = vcmask 1041409
    %v800 = vsel %vm799, %v798, %v796
    %s801 = scalar_lea.vmem %s0, 136
    %v802 = vld [vmem:[%s801] sm:$0x4]
    %vm803 = vcmask 1042434
    %v804 = vsel %vm803, %v802, %v800
    %s805 = scalar_lea.vmem %s0, 199
    %v806 = vld [vmem:[%s805] sm:$0x8]
    %vm807 = vcmask 1043459
    %v808 = vsel %vm807, %v806, %v804
    %s809 = scalar_lea.vmem %s0, 38
    %v810 = vld [vmem:[%s809] sm:$0x10]
    %vm811 = vcmask 1044484
    %v812 = vsel %vm811, %v810, %v808
    %s813 = scalar_lea.vmem %s0, 101
    %v814 = vld [vmem:[%s813] sm:$0x20]
    %vm815 = vcmask 1045509
    %v816 = vsel %vm815, %v814, %v812
    %s817 = scalar_lea.vmem %s0, 164
    %v818 = vld [vmem:[%s817] sm:$0x40]
    %vm819 = vcmask 1046534
    %v820 = vsel %vm819, %v818, %v816
    %s821 = scalar_lea.vmem %s0, 227
    %v822 = vld [vmem:[%s821] sm:$0x80]
    %vm823 = vcmask 1047559
    %v824 = vsel %vm823, %v822, %v820
    %825 = vrot.lane.b32.xlu0 %v824, 40
    %v826 = vpop.permute.xlu0 %825
    %vm827 = vcmask 359744
    %828 = vst.msk [vmem:[#allocation0] sm:$0xf] %vm827, %v826
    %s829 = scalar_lea.vmem [#allocation0], 4
    %830 = vst.msk [vmem:[%s829] sm:$0xf0] %vm827, %v826
    %s831 = scalar_lea.vmem %s0, 9
    %v832 = vld [vmem:[%s831] sm:$0x1]
    %s833 = scalar_lea.vmem %s0, 72
    %v834 = vld [vmem:[%s833] sm:$0x2]
    %vm835 = vcmask 1041409
    %v836 = vsel %vm835, %v834, %v832
    %s837 = scalar_lea.vmem %s0, 135
    %v838 = vld [vmem:[%s837] sm:$0x4]
    %vm839 = vcmask 1042434
    %v840 = vsel %vm839, %v838, %v836
    %s841 = scalar_lea.vmem %s0, 198
    %v842 = vld [vmem:[%s841] sm:$0x8]
    %vm843 = vcmask 1043459
    %v844 = vsel %vm843, %v842, %v840
    %s845 = scalar_lea.vmem %s0, 37
    %v846 = vld [vmem:[%s845] sm:$0x10]
    %vm847 = vcmask 1044484
    %v848 = vsel %vm847, %v846, %v844
    %s849 = scalar_lea.vmem %s0, 100
    %v850 = vld [vmem:[%s849] sm:$0x20]
    %vm851 = vcmask 1045509
    %v852 = vsel %vm851, %v850, %v848
    %s853 = scalar_lea.vmem %s0, 163
    %v854 = vld [vmem:[%s853] sm:$0x40]
    %vm855 = vcmask 1046534
    %v856 = vsel %vm855, %v854, %v852
    %s857 = scalar_lea.vmem %s0, 226
    %v858 = vld [vmem:[%s857] sm:$0x80]
    %vm859 = vcmask 1047559
    %v860 = vsel %vm859, %v858, %v856
    %861 = vrot.lane.b32.xlu0 %v860, 36
    %v862 = vpop.permute.xlu0 %861
    %vm863 = vcmask 326944
    %864 = vst.msk [vmem:[#allocation0] sm:$0xf] %vm863, %v862
    %s865 = scalar_lea.vmem [#allocation0], 4
    %866 = vst.msk [vmem:[%s865] sm:$0xf0] %vm863, %v862
    %s867 = scalar_lea.vmem %s0, 8
    %v868 = vld [vmem:[%s867] sm:$0x1]
    %s869 = scalar_lea.vmem %s0, 71
    %v870 = vld [vmem:[%s869] sm:$0x2]
    %vm871 = vcmask 1041409
    %v872 = vsel %vm871, %v870, %v868
    %s873 = scalar_lea.vmem %s0, 134
    %v874 = vld [vmem:[%s873] sm:$0x4]
    %vm875 = vcmask 1042434
    %v876 = vsel %vm875, %v874, %v872
    %s877 = scalar_lea.vmem %s0, 197
    %v878 = vld [vmem:[%s877] sm:$0x8]
    %vm879 = vcmask 1043459
    %v880 = vsel %vm879, %v878, %v876
    %s881 = scalar_lea.vmem %s0, 36
    %v882 = vld [vmem:[%s881] sm:$0x10]
    %vm883 = vcmask 1044484
    %v884 = vsel %vm883, %v882, %v880
    %s885 = scalar_lea.vmem %s0, 99
    %v886 = vld [vmem:[%s885] sm:$0x20]
    %vm887 = vcmask 1045509
    %v888 = vsel %vm887, %v886, %v884
    %s889 = scalar_lea.vmem %s0, 162
    %v890 = vld [vmem:[%s889] sm:$0x40]
    %vm891 = vcmask 1046534
    %v892 = vsel %vm891, %v890, %v888
    %s893 = scalar_lea.vmem %s0, 225
    %v894 = vld [vmem:[%s893] sm:$0x80]
    %vm895 = vcmask 1047559
    %v896 = vsel %vm895, %v894, %v892
    %897 = vrot.lane.b32.xlu0 %v896, 32
    %v898 = vpop.permute.xlu0 %897
    %vm899 = vcmask 294144
    %900 = vst.msk [vmem:[#allocation0] sm:$0xf] %vm899, %v898
    %s901 = scalar_lea.vmem [#allocation0], 4
    %902 = vst.msk [vmem:[%s901] sm:$0xf0] %vm899, %v898
    %s903 = scalar_lea.vmem %s0, 7
    %v904 = vld [vmem:[%s903] sm:$0x1]
    %s905 = scalar_lea.vmem %s0, 70
    %v906 = vld [vmem:[%s905] sm:$0x2]
    %vm907 = vcmask 1041409
    %v908 = vsel %vm907, %v906, %v904
    %s909 = scalar_lea.vmem %s0, 133
    %v910 = vld [vmem:[%s909] sm:$0x4]
    %vm911 = vcmask 1042434
    %v912 = vsel %vm911, %v910, %v908
    %s913 = scalar_lea.vmem %s0, 196
    %v914 = vld [vmem:[%s913] sm:$0x8]
    %vm915 = vcmask 1043459
    %v916 = vsel %vm915, %v914, %v912
    %s917 = scalar_lea.vmem %s0, 35
    %v918 = vld [vmem:[%s917] sm:$0x10]
    %vm919 = vcmask 1044484
    %v920 = vsel %vm919, %v918, %v916
    %s921 = scalar_lea.vmem %s0, 98
    %v922 = vld [vmem:[%s921] sm:$0x20]
    %vm923 = vcmask 1045509
    %v924 = vsel %vm923, %v922, %v920
    %s925 = scalar_lea.vmem %s0, 161
    %v926 = vld [vmem:[%s925] sm:$0x40]
    %vm927 = vcmask 1046534
    %v928 = vsel %vm927, %v926, %v924
    %s929 = scalar_lea.vmem %s0, 224
    %v930 = vld [vmem:[%s929] sm:$0x80]
    %vm931 = vcmask 1047559
    %v932 = vsel %vm931, %v930, %v928
    %933 = vrot.lane.b32.xlu0 %v932, 28
    %v934 = vpop.permute.xlu0 %933
    %vm935 = vcmask 261344
    %936 = vst.msk [vmem:[#allocation0] sm:$0xf] %vm935, %v934
    %s937 = scalar_lea.vmem [#allocation0], 4
    %938 = vst.msk [vmem:[%s937] sm:$0xf0] %vm935, %v934
    %s939 = scalar_lea.vmem %s0, 6
    %v940 = vld [vmem:[%s939] sm:$0x1]
    %s941 = scalar_lea.vmem %s0, 69
    %v942 = vld [vmem:[%s941] sm:$0x2]
    %vm943 = vcmask 1041409
    %v944 = vsel %vm943, %v942, %v940
    %s945 = scalar_lea.vmem %s0, 132
    %v946 = vld [vmem:[%s945] sm:$0x4]
    %vm947 = vcmask 1042434
    %v948 = vsel %vm947, %v946, %v944
    %s949 = scalar_lea.vmem %s0, 195
    %v950 = vld [vmem:[%s949] sm:$0x8]
    %vm951 = vcmask 1043459
    %v952 = vsel %vm951, %v950, %v948
    %s953 = scalar_lea.vmem %s0, 34
    %v954 = vld [vmem:[%s953] sm:$0x10]
    %vm955 = vcmask 1044484
    %v956 = vsel %vm955, %v954, %v952
    %s957 = scalar_lea.vmem %s0, 97
    %v958 = vld [vmem:[%s957] sm:$0x20]
    %vm959 = vcmask 1045509
    %v960 = vsel %vm959, %v958, %v956
    %s961 = scalar_lea.vmem %s0, 160
    %v962 = vld [vmem:[%s961] sm:$0x40]
    %vm963 = vcmask 1046534
    %v964 = vsel %vm963, %v962, %v960
    %s965 = scalar_lea.vmem %s0, 223
    %v966 = vld [vmem:[%s965] sm:$0x80]
    %vm967 = vcmask 1047559
    %v968 = vsel %vm967, %v966, %v964
    %969 = vrot.lane.b32.xlu0 %v968, 24
    %v970 = vpop.permute.xlu0 %969
    %vm971 = vcmask 228544
    %972 = vst.msk [vmem:[#allocation0] sm:$0xf] %vm971, %v970
    %s973 = scalar_lea.vmem [#allocation0], 4
    %974 = vst.msk [vmem:[%s973] sm:$0xf0] %vm971, %v970
    %s975 = scalar_lea.vmem %s0, 5
    %v976 = vld [vmem:[%s975] sm:$0x1]
    %s977 = scalar_lea.vmem %s0, 68
    %v978 = vld [vmem:[%s977] sm:$0x2]
    %vm979 = vcmask 1041409
    %v980 = vsel %vm979, %v978, %v976
    %s981 = scalar_lea.vmem %s0, 131
    %v982 = vld [vmem:[%s981] sm:$0x4]
    %vm983 = vcmask 1042434
    %v984 = vsel %vm983, %v982, %v980
    %s985 = scalar_lea.vmem %s0, 194
    %v986 = vld [vmem:[%s985] sm:$0x8]
    %vm987 = vcmask 1043459
    %v988 = vsel %vm987, %v986, %v984
    %s989 = scalar_lea.vmem %s0, 33
    %v990 = vld [vmem:[%s989] sm:$0x10]
    %vm991 = vcmask 1044484
    %v992 = vsel %vm991, %v990, %v988
    %s993 = scalar_lea.vmem %s0, 96
    %v994 = vld [vmem:[%s993] sm:$0x20]
    %vm995 = vcmask 1045509
    %v996 = vsel %vm995, %v994, %v992
    %s997 = scalar_lea.vmem %s0, 159
    %v998 = vld [vmem:[%s997] sm:$0x40]
    %vm999 = vcmask 1046534
    %v1000 = vsel %vm999, %v998, %v996
    %s1001 = scalar_lea.vmem %s0, 222
    %v1002 = vld [vmem:[%s1001] sm:$0x80]
    %vm1003 = vcmask 1047559
    %v1004 = vsel %vm1003, %v1002, %v1000
    %1005 = vrot.lane.b32.xlu0 %v1004, 20
    %v1006 = vpop.permute.xlu0 %1005
    %vm1007 = vcmask 195744
    %1008 = vst.msk [vmem:[#allocation0] sm:$0xf] %vm1007, %v1006
    %s1009 = scalar_lea.vmem [#allocation0], 4
    %1010 = vst.msk [vmem:[%s1009] sm:$0xf0] %vm1007, %v1006
    %s1011 = scalar_lea.vmem %s0, 4
    %v1012 = vld [vmem:[%s1011] sm:$0x1]
    %s1013 = scalar_lea.vmem %s0, 67
    %v1014 = vld [vmem:[%s1013] sm:$0x2]
    %vm1015 = vcmask 1041409
    %v1016 = vsel %vm1015, %v1014, %v1012
    %s1017 = scalar_lea.vmem %s0, 130
    %v1018 = vld [vmem:[%s1017] sm:$0x4]
    %vm1019 = vcmask 1042434
    %v1020 = vsel %vm1019, %v1018, %v1016
    %s1021 = scalar_lea.vmem %s0, 193
    %v1022 = vld [vmem:[%s1021] sm:$0x8]
    %vm1023 = vcmask 1043459
    %v1024 = vsel %vm1023, %v1022, %v1020
    %s1025 = scalar_lea.vmem %s0, 32
    %v1026 = vld [vmem:[%s1025] sm:$0x10]
    %vm1027 = vcmask 1044484
    %v1028 = vsel %vm1027, %v1026, %v1024
    %s1029 = scalar_lea.vmem %s0, 95
    %v1030 = vld [vmem:[%s1029] sm:$0x20]
    %vm1031 = vcmask 1045509
    %v1032 = vsel %vm1031, %v1030, %v1028
    %s1033 = scalar_lea.vmem %s0, 158
    %v1034 = vld [vmem:[%s1033] sm:$0x40]
    %vm1035 = vcmask 1046534
    %v1036 = vsel %vm1035, %v1034, %v1032
    %s1037 = scalar_lea.vmem %s0, 221
    %v1038 = vld [vmem:[%s1037] sm:$0x80]
    %vm1039 = vcmask 1047559
    %v1040 = vsel %vm1039, %v1038, %v1036
    %1041 = vrot.lane.b32.xlu0 %v1040, 16
    %v1042 = vpop.permute.xlu0 %1041
    %vm1043 = vcmask 162944
    %1044 = vst.msk [vmem:[#allocation0] sm:$0xf] %vm1043, %v1042
    %s1045 = scalar_lea.vmem [#allocation0], 4
    %1046 = vst.msk [vmem:[%s1045] sm:$0xf0] %vm1043, %v1042
    %s1047 = scalar_lea.vmem %s0, 3
    %v1048 = vld [vmem:[%s1047] sm:$0x1]
    %s1049 = scalar_lea.vmem %s0, 66
    %v1050 = vld [vmem:[%s1049] sm:$0x2]
    %vm1051 = vcmask 1041409
    %v1052 = vsel %vm1051, %v1050, %v1048
    %s1053 = scalar_lea.vmem %s0, 129
    %v1054 = vld [vmem:[%s1053] sm:$0x4]
    %vm1055 = vcmask 1042434
    %v1056 = vsel %vm1055, %v1054, %v1052
    %s1057 = scalar_lea.vmem %s0, 192
    %v1058 = vld [vmem:[%s1057] sm:$0x8]
    %vm1059 = vcmask 1043459
    %v1060 = vsel %vm1059, %v1058, %v1056
    %s1061 = scalar_lea.vmem %s0, 31
    %v1062 = vld [vmem:[%s1061] sm:$0x10]
    %vm1063 = vcmask 1044484
    %v1064 = vsel %vm1063, %v1062, %v1060
    %s1065 = scalar_lea.vmem %s0, 94
    %v1066 = vld [vmem:[%s1065] sm:$0x20]
    %vm1067 = vcmask 1045509
    %v1068 = vsel %vm1067, %v1066, %v1064
    %s1069 = scalar_lea.vmem %s0, 157
    %v1070 = vld [vmem:[%s1069] sm:$0x40]
    %vm1071 = vcmask 1046534
    %v1072 = vsel %vm1071, %v1070, %v1068
    %s1073 = scalar_lea.vmem %s0, 220
    %v1074 = vld [vmem:[%s1073] sm:$0x80]
    %vm1075 = vcmask 1047559
    %v1076 = vsel %vm1075, %v1074, %v1072
    %1077 = vrot.lane.b32.xlu0 %v1076, 12
    %v1078 = vpop.permute.xlu0 %1077
    %vm1079 = vcmask 130144
    %1080 = vst.msk [vmem:[#allocation0] sm:$0xf] %vm1079, %v1078
    %s1081 = scalar_lea.vmem [#allocation0], 4
    %1082 = vst.msk [vmem:[%s1081] sm:$0xf0] %vm1079, %v1078
    %s1083 = scalar_lea.vmem %s0, 2
    %v1084 = vld [vmem:[%s1083] sm:$0x1]
    %s1085 = scalar_lea.vmem %s0, 65
    %v1086 = vld [vmem:[%s1085] sm:$0x2]
    %vm1087 = vcmask 1041409
    %v1088 = vsel %vm1087, %v1086, %v1084
    %s1089 = scalar_lea.vmem %s0, 128
    %v1090 = vld [vmem:[%s1089] sm:$0x4]
    %vm1091 = vcmask 1042434
    %v1092 = vsel %vm1091, %v1090, %v1088
    %s1093 = scalar_lea.vmem %s0, 191
    %v1094 = vld [vmem:[%s1093] sm:$0x8]
    %vm1095 = vcmask 1043459
    %v1096 = vsel %vm1095, %v1094, %v1092
    %s1097 = scalar_lea.vmem %s0, 30
    %v1098 = vld [vmem:[%s1097] sm:$0x10]
    %vm1099 = vcmask 1044484
    %v1100 = vsel %vm1099, %v1098, %v1096
    %s1101 = scalar_lea.vmem %s0, 93
    %v1102 = vld [vmem:[%s1101] sm:$0x20]
    %vm1103 = vcmask 1045509
    %v1104 = vsel %vm1103, %v1102, %v1100
    %s1105 = scalar_lea.vmem %s0, 156
    %v1106 = vld [vmem:[%s1105] sm:$0x40]
    %vm1107 = vcmask 1046534
    %v1108 = vsel %vm1107, %v1106, %v1104
    %s1109 = scalar_lea.vmem %s0, 219
    %v1110 = vld [vmem:[%s1109] sm:$0x80]
    %vm1111 = vcmask 1047559
    %v1112 = vsel %vm1111, %v1110, %v1108
    %1113 = vrot.lane.b32.xlu0 %v1112, 8
    %v1114 = vpop.permute.xlu0 %1113
    %vm1115 = vcmask 97344
    %1116 = vst.msk [vmem:[#allocation0] sm:$0xf] %vm1115, %v1114
    %s1117 = scalar_lea.vmem [#allocation0], 4
    %1118 = vst.msk [vmem:[%s1117] sm:$0xf0] %vm1115, %v1114
    %s1119 = scalar_lea.vmem %s0, 1
    %v1120 = vld [vmem:[%s1119] sm:$0x1]
    %s1121 = scalar_lea.vmem %s0, 64
    %v1122 = vld [vmem:[%s1121] sm:$0x2]
    %vm1123 = vcmask 1041409
    %v1124 = vsel %vm1123, %v1122, %v1120
    %s1125 = scalar_lea.vmem %s0, 127
    %v1126 = vld [vmem:[%s1125] sm:$0x4]
    %vm1127 = vcmask 1042434
    %v1128 = vsel %vm1127, %v1126, %v1124
    %s1129 = scalar_lea.vmem %s0, 190
    %v1130 = vld [vmem:[%s1129] sm:$0x8]
    %vm1131 = vcmask 1043459
    %v1132 = vsel %vm1131, %v1130, %v1128
    %s1133 = scalar_lea.vmem %s0, 29
    %v1134 = vld [vmem:[%s1133] sm:$0x10]
    %vm1135 = vcmask 1044484
    %v1136 = vsel %vm1135, %v1134, %v1132
    %s1137 = scalar_lea.vmem %s0, 92
    %v1138 = vld [vmem:[%s1137] sm:$0x20]
    %vm1139 = vcmask 1045509
    %v1140 = vsel %vm1139, %v1138, %v1136
    %s1141 = scalar_lea.vmem %s0, 155
    %v1142 = vld [vmem:[%s1141] sm:$0x40]
    %vm1143 = vcmask 1046534
    %v1144 = vsel %vm1143, %v1142, %v1140
    %s1145 = scalar_lea.vmem %s0, 218
    %v1146 = vld [vmem:[%s1145] sm:$0x80]
    %vm1147 = vcmask 1047559
    %v1148 = vsel %vm1147, %v1146, %v1144
    %1149 = vrot.lane.b32.xlu0 %v1148, 4
    %v1150 = vpop.permute.xlu0 %1149
    %vm1151 = vcmask 64544
    %1152 = vst.msk [vmem:[#allocation0] sm:$0xf] %vm1151, %v1150
    %s1153 = scalar_lea.vmem [#allocation0], 4
    %1154 = vst.msk [vmem:[%s1153] sm:$0xf0] %vm1151, %v1150
    %s1156 = sshllo.u32 0, 4
    %v1158 = vld [vmem:[#allocation0] sm:%s1156]
    %s1159 = sshllo.u32 0, 4
    %1160 = vst [vmem:[%s1] sm:%s1159] %v1158
    %s1161 = scalar_lea.vmem [#allocation0], 8
    %v1162 = vld [vmem:[%s1161] sm:%s1156]
    %s1163 = sshllo.u32 0, 4
    %s1164 = scalar_lea.vmem %s1, 4
    %1165 = vst [vmem:[%s1164] sm:%s1163] %v1162

// kernel: _lambda_.14
$region0: #{_lambda_.14}
  #allocation0 [shape = 'u32[]', space=smem, size = 0x4, offset = 0x4, fixed_abs, tag = 'smem constant byte address 0x4 - core index']
  #allocation1 [shape = 'u32[144,128]{1,0:T(1,128)}', space=vmem, size = 0x12000, scoped, tag = 'internal scratch']
  %s0 = inlined_call_operand.vmem [shape: bf16[2,32], index: 0, kind: input, shape index: {}]
  %s1 = inlined_call_operand.vmem [shape: bf16[32,32], index: 1, kind: input, shape index: {}]
  %s2 = inlined_call_operand.vmem [shape: f32[1,32], index: 2, kind: input, shape index: {}]
  %s3 = inlined_call_operand.vmem [shape: f32[2,32], index: 3, kind: output, shape index: {}]
  %s4 = sld [smem:[#allocation0]]
  $region22: #{_lambda_.14} parent=0
    _
  %s6 = ssub.s32 1, %s4
  %s7 = scalar_select 0, %s6, %s4
  // Predicated region
  $region2: #{_lambda_.14} parent=0 // pred_check
    _
  $region3: #{_lambda_.14} parent=0 // pred_check_branch
    %9 = sbr.rel (0) target = $region5
  $region4: #{_lambda_.14} parent=0 // pred_region
    _
  $region5: #{_lambda_.14} parent=0 // pred_fallthru
    _
  // Predicated region
  $region6: #{_lambda_.14} parent=0 // pred_check
    _
  $region7: #{_lambda_.14} parent=0 // pred_check_branch
    %11 = sbr.rel (0) target = $region9
  $region8: #{_lambda_.14} parent=0 // pred_region
    _
  $region9: #{_lambda_.14} parent=0 // pred_fallthru
    _
  // Predicated region
  $region10: #{_lambda_.14} parent=0 // pred_check
    _
  $region11: #{_lambda_.14} parent=0 // pred_check_branch
    %13 = sbr.rel (0) target = $region13
  $region12: #{_lambda_.14} parent=0 // pred_region
    _
  $region13: #{_lambda_.14} parent=0 // pred_fallthru
    _
  %v15 = vld [vmem:[%s0] sm:$0x1]
  %v16 = vld [vmem:[%s1] sm:$0xf]
  %v17 = vld [vmem:[%s1 + $0x4] sm:$0xf]
  %v18 = vld [vmem:[%s1 + $0x8] sm:$0xf]
  %v19 = vld [vmem:[%s1 + $0xc] sm:$0xf]
  %v20 = vld [vmem:[%s2] sm:$0x1]
  %v22 = vlaneseq
  %v23 = vshrl.u32 %v22, 7
  %v24 = vsub.s32 0, %v23
  %v25 = vrot.slane %v20, %v24
  %v31 = vunpack.c.l.b16 %v16
  %v32 = vunpack.c.l.b16 %v17
  %v33 = vunpack.c.l.b16 %v18
  %v34 = vunpack.c.l.b16 %v19
  %v35 = vpack.c.b16 %v32, %v31
  %v36 = vpack.c.b16 %v34, %v33
  %vm39 = vcmask 261120
  %v41 = vsel %vm39, %v15, 0
  %43 = vmatprep.subr.bf16.mxu0 0
  %44 = vmatpush1.bf16.msra.mxu0 %v35
  %45 = vmatprep.subr.bf16.mxu0 0
  %46 = vmatpush1.bf16.msra.mxu0 %v36
  %47 = vmatprep.subr.bf16.mxu0 0
  %48 = vmatpush1.bf16.msra.mxu0 0
  %49 = vmatprep.subr.bf16.mxu0 0
  %50 = vmatpush1.bf16.msra.mxu0 0
  %51 = vmatprep.subr.bf16.mxu0 0
  %52 = vmatpush1.bf16.msra.mxu0 0
  %53 = vmatprep.subr.bf16.mxu0 0
  %54 = vmatpush1.bf16.msra.mxu0 0
  %55 = vmatprep.subr.bf16.mxu0 0
  %56 = vmatpush1.bf16.msra.mxu0 0
  %57 = vmatprep.subr.bf16.mxu0 0
  %58 = vmatpush1.bf16.msra.mxu0 0
  %59 = vmatprep.subr.bf16.mxu0 0
  %60 = vmatpush1.bf16.msra.mxu0 0
  %61 = vmatprep.subr.bf16.mxu0 0
  %62 = vmatpush1.bf16.msra.mxu0 0
  %63 = vmatprep.subr.bf16.mxu0 0
  %64 = vmatpush1.bf16.msra.mxu0 0
  %65 = vmatprep.subr.bf16.mxu0 0
  %66 = vmatpush1.bf16.msra.mxu0 0
  %67 = vmatprep.subr.bf16.mxu0 0
  %68 = vmatpush1.bf16.msra.mxu0 0
  %69 = vmatprep.subr.bf16.mxu0 0
  %70 = vmatpush1.bf16.msra.mxu0 0
  %71 = vmatprep.subr.bf16.mxu0 0
  %72 = vmatpush1.bf16.msra.mxu0 0
  %73 = vmatprep.subr.bf16.mxu0 0
  %74 = vmatpush1.bf16.msra.mxu0 0
  %75 = vmatprep.mubr.bf16.mxu0 0
  %76 = vmatmul.mubr.bf16.gmra.mrb[0].mxu0 %v41
  %v77 = vpop.f32.mrb[0].mxu0
  %v78 = vadd.f32 %v25, %v77
  %v79 = vpop.f32.mrb[0].mxu0
  %v80 = vpop.f32.mrb[0].mxu0
  %v81 = vpop.f32.mrb[0].mxu0
  %82 = vdwg.mxu0
  %v83 = vtanh.pop %v78
  %vm84 = vcmask 254976
  %85 = vst.msk [vmem:[%s3] sm:$0x3] %vm84, %v83
  // Predicated region
  $region14: #{_lambda_.14} parent=0 // pred_check
    _
  $region15: #{_lambda_.14} parent=0 // pred_check_branch
    %87 = sbr.rel (0) target = $region17
  $region16: #{_lambda_.14} parent=0 // pred_region
    _
  $region17: #{_lambda_.14} parent=0 // pred_fallthru
    _
  // Predicated region
  $region18: #{_lambda_.14} parent=0 // pred_check
    _
  $region19: #{_lambda_.14} parent=0 // pred_check_branch
    %89 = sbr.rel (0) target = $region21
  $region20: #{_lambda_.14} parent=0 // pred_region
    _
  $region21: #{_lambda_.14} parent=0 // pred_fallthru
    _

// kernel: _lambda_.15
$region0: #{_lambda_.15}
  #allocation0 [shape = 'u32[]', space=smem, size = 0x4, offset = 0x4, fixed_abs, tag = 'smem constant byte address 0x4 - core index']
  #allocation1 [shape = 'u32[144,128]{1,0:T(1,128)}', space=vmem, size = 0x12000, scoped, tag = 'internal scratch']
  %s0 = inlined_call_operand.vmem [shape: f32[2,1,256], index: 0, kind: input, shape index: {}]
  %s1 = inlined_call_operand.vmem [shape: f32[2,8,256], index: 1, kind: input, shape index: {}]
  %s2 = inlined_call_operand.vmem [shape: f32[2,8,4], index: 2, kind: input, shape index: {}]
  %s3 = inlined_call_operand.vmem [shape: f32[4,256], index: 3, kind: input, shape index: {}]
  %s4 = inlined_call_operand.vmem [shape: f32[2,1,256], index: 4, kind: input, shape index: {}]
  %s5 = inlined_call_operand.vmem [shape: f32[2,1,8], index: 5, kind: output, shape index: {}]
  %s6 = sld [smem:[#allocation0]]
  $region53: #{_lambda_.15} parent=0
    _
  %s8 = ssub.s32 1, %s6
  %s9 = scalar_select 0, %s8, %s6
  loop: start=0, step=1, limit=4
  $region2: #{_lambda_.15} parent=0 // loop_pre_header
    _
  $region3: #{_lambda_.15} parent=0 // loop_header
    %s11 = sphi 0, %s15
    %p12 = scmp.ge.s32.totalorder %s11, 4
    %s21 = sphi 0, %s23
    %s24 = sphi 0, %s21
    %s25 = sphi 0, %s24
    %s41 = sphi 0, %s25
    %s47 = sphi 0, %s49
    %s50 = sphi 0, %s47
    %s51 = sphi 0, %s50
    %s67 = sphi 0, %s51
    %s73 = sphi 0, %s75
    %s76 = sphi 0, %s73
    %s77 = sphi 0, %s76
    %s93 = sphi 0, %s77
    %s97 = sphi 0, %s97
    %s99 = sphi 0, %s97
    %s100 = sphi 0, %s99
    %s114 = sphi 0, %s100
    %s120 = sphi 0, %s122
    %s123 = sphi 0, %s120
    %s124 = sphi 0, %s123
    %s140 = sphi 0, %s124
    %s146 = sphi 0, %s148
    %s149 = sphi 0, %s146
    %s150 = sphi 0, %s149
    %s166 = sphi 0, %s150
  $region4: #{_lambda_.15} parent=0 // loop_header_branch
    %14 = sbr.rel (%p12) target = $region8
  $region5: #{_lambda_.15} parent=0 // loop_body
    %s16 = ssub.s32 %s11, 1
    %s17 = ssub.s32 %s11, 2
    %s18 = sadd.s32 %s11, 1
    %s19 = ssub.s32 %s11, %s18
    %p20 = scmp.eq.s32.totalorder %s19, 0
    %s22 = sadd.s32 %s21, 1
    %s23 = scalar_select %p20, %s21, %s22
    %p26 = pneg %p20
    %p27 = scmp.eq.s32.totalorder %s11, 1
    %p28 = por %p26, %p27
    %p29 = scmp.ne.s32.totalorder %s21, %s24
    %p30 = scmp.eq.s32.totalorder %s11, 0
    %p31 = por %p29, %p30
    %p32 = scmp.ne.s32.totalorder %s21, %s24
    %p33 = scmp.eq.s32.totalorder %s16, 1
    %p34 = por %p32, %p33
    %p35 = scmp.ne.s32.totalorder %s24, %s25
    %p36 = scmp.eq.s32.totalorder %s16, 0
    %p37 = por %p35, %p36
    %p38 = scmp.ne.s32.totalorder %s24, %s25
    %p39 = scmp.eq.s32.totalorder %s17, 1
    %p40 = por %p38, %p39
    %p42 = scmp.ne.s32.totalorder %s25, %s41
    %p43 = scmp.eq.s32.totalorder %s17, 0
    %p44 = por %p42, %p43
    %s45 = ssub.s32 %s11, %s18
    %p46 = scmp.eq.s32.totalorder %s45, 0
    %s48 = sadd.s32 %s47, 1
    %s49 = scalar_select %p46, %s47, %s48
    %p52 = pneg %p46
    %p53 = scmp.eq.s32.totalorder %s11, 1
    %p54 = por %p52, %p53
    %p55 = scmp.ne.s32.totalorder %s47, %s50
    %p56 = scmp.eq.s32.totalorder %s11, 0
    %p57 = por %p55, %p56
    %p58 = scmp.ne.s32.totalorder %s47, %s50
    %p59 = scmp.eq.s32.totalorder %s16, 1
    %p60 = por %p58, %p59
    %p61 = scmp.ne.s32.totalorder %s50, %s51
    %p62 = scmp.eq.s32.totalorder %s16, 0
    %p63 = por %p61, %p62
    %p64 = scmp.ne.s32.totalorder %s50, %s51
    %p65 = scmp.eq.s32.totalorder %s17, 1
    %p66 = por %p64, %p65
    %p68 = scmp.ne.s32.totalorder %s51, %s67
    %p69 = scmp.eq.s32.totalorder %s17, 0
    %p70 = por %p68, %p69
    %s71 = ssub.s32 %s11, %s18
    %p72 = scmp.eq.s32.totalorder %s71, 0
    %s74 = sadd.s32 %s73, 1
    %s75 = scalar_select %p72, %s73, %s74
    %p78 = pneg %p72
    %p79 = scmp.eq.s32.totalorder %s11, 1
    %p80 = por %p78, %p79
    %p81 = scmp.ne.s32.totalorder %s73, %s76
    %p82 = scmp.eq.s32.totalorder %s11, 0
    %p83 = por %p81, %p82
    %p84 = scmp.ne.s32.totalorder %s73, %s76
    %p85 = scmp.eq.s32.totalorder %s16, 1
    %p86 = por %p84, %p85
    %p87 = scmp.ne.s32.totalorder %s76, %s77
    %p88 = scmp.eq.s32.totalorder %s16, 0
    %p89 = por %p87, %p88
    %p90 = scmp.ne.s32.totalorder %s76, %s77
    %p91 = scmp.eq.s32.totalorder %s17, 1
    %p92 = por %p90, %p91
    %p94 = scmp.ne.s32.totalorder %s77, %s93
    %p95 = scmp.eq.s32.totalorder %s17, 0
    %p96 = por %p94, %p95
    %s98 = sadd.s32 %s97, 1
    %p101 = scmp.eq.s32.totalorder %s11, 1
    %p102 = scmp.ne.s32.totalorder %s97, %s99
    %p103 = scmp.eq.s32.totalorder %s11, 0
    %p104 = por %p102, %p103
    %p105 = scmp.ne.s32.totalorder %s97, %s99
    %p106 = scmp.eq.s32.totalorder %s16, 1
    %p107 = por %p105, %p106
    %p108 = scmp.ne.s32.totalorder %s99, %s100
    %p109 = scmp.eq.s32.totalorder %s16, 0
    %p110 = por %p108, %p109
    %p111 = scmp.ne.s32.totalorder %s99, %s100
    %p112 = scmp.eq.s32.totalorder %s17, 1
    %p113 = por %p111, %p112
    %p115 = scmp.ne.s32.totalorder %s100, %s114
    %p116 = scmp.eq.s32.totalorder %s17, 0
    %p117 = por %p115, %p116
    %s118 = ssub.s32 %s11, %s18
    %p119 = scmp.eq.s32.totalorder %s118, 0
    %s121 = sadd.s32 %s120, 1
    %s122 = scalar_select %p119, %s120, %s121
    %p125 = pneg %p119
    %p126 = scmp.eq.s32.totalorder %s11, 1
    %p127 = por %p125, %p126
    %p128 = scmp.ne.s32.totalorder %s120, %s123
    %p129 = scmp.eq.s32.totalorder %s11, 0
    %p130 = por %p128, %p129
    %p131 = scmp.ne.s32.totalorder %s120, %s123
    %p132 = scmp.eq.s32.totalorder %s16, 1
    %p133 = por %p131, %p132
    %p134 = scmp.ne.s32.totalorder %s123, %s124
    %p135 = scmp.eq.s32.totalorder %s16, 0
    %p136 = por %p134, %p135
    %p137 = scmp.ne.s32.totalorder %s123, %s124
    %p138 = scmp.eq.s32.totalorder %s17, 1
    %p139 = por %p137, %p138
    %p141 = scmp.ne.s32.totalorder %s124, %s140
    %p142 = scmp.eq.s32.totalorder %s17, 0
    %p143 = por %p141, %p142
    %s144 = ssub.s32 %s11, %s18
    %p145 = scmp.eq.s32.totalorder %s144, 0
    %s147 = sadd.s32 %s146, 1
    %s148 = scalar_select %p145, %s146, %s147
    %p151 = pneg %p145
    %p152 = scmp.eq.s32.totalorder %s11, 1
    %p153 = por %p151, %p152
    %p154 = scmp.ne.s32.totalorder %s146, %s149
    %p155 = scmp.eq.s32.totalorder %s11, 0
    %p156 = por %p154, %p155
    %p157 = scmp.ne.s32.totalorder %s146, %s149
    %p158 = scmp.eq.s32.totalorder %s16, 1
    %p159 = por %p157, %p158
    %p160 = scmp.ne.s32.totalorder %s149, %s150
    %p161 = scmp.eq.s32.totalorder %s16, 0
    %p162 = por %p160, %p161
    %p163 = scmp.ne.s32.totalorder %s149, %s150
    %p164 = scmp.eq.s32.totalorder %s17, 1
    %p165 = por %p163, %p164
    %p167 = scmp.ne.s32.totalorder %s150, %s166
    %p168 = scmp.eq.s32.totalorder %s17, 0
    %p169 = por %p167, %p168
    %p170 = scmp.le.s32.totalorder 1, %s11
    %p171 = scmp.lt.s32.totalorder %s11, 3
    %p172 = pnand %p170, %p171
    %p173 = pneg %p172
    // Predicated region
    $region9: #{_lambda_.15} parent=5 // pred_check
      _
    $region10: #{_lambda_.15} parent=5 // pred_check_branch
      %175 = sbr.rel (%p172) target = $region12
    $region11: #{_lambda_.15} parent=5 // pred_region
      %s176 = ssub.s32 %s11, 1
      // Predicated region
      $region13: #{_lambda_.15} parent=11 // pred_check
        %p177 = pneg %p110
      $region14: #{_lambda_.15} parent=11 // pred_check_branch
        %179 = sbr.rel (%p177) target = $region16
      $region15: #{_lambda_.15} parent=11 // pred_region
        _
      $region16: #{_lambda_.15} parent=11 // pred_fallthru
        _
    $region12: #{_lambda_.15} parent=5 // pred_fallthru
      _
    %p180 = scmp.lt.s32.totalorder %s11, 2
    // Predicated region
    $region17: #{_lambda_.15} parent=5 // pred_check
      %p181 = pneg %p180
    $region18: #{_lambda_.15} parent=5 // pred_check_branch
      %183 = sbr.rel (%p181) target = $region20
    $region19: #{_lambda_.15} parent=5 // pred_region
      // Predicated region
      $region21: #{_lambda_.15} parent=19 // pred_check
        %p184 = pneg %p31
      $region22: #{_lambda_.15} parent=19 // pred_check_branch
        %186 = sbr.rel (%p184) target = $region24
      $region23: #{_lambda_.15} parent=19 // pred_region
        %p187 = scmp.lt.s32.totalorder %s11, 1
        %s188 = scalar_select %p187, %s11, 1
        %s189 = smul.addr %s188, 2
        %s190 = scalar_lea.vmem %s0, %s189
      $region24: #{_lambda_.15} parent=19 // pred_fallthru
        _
      // Predicated region
      $region25: #{_lambda_.15} parent=19 // pred_check
        %p191 = pneg %p57
      $region26: #{_lambda_.15} parent=19 // pred_check_branch
        %193 = sbr.rel (%p191) target = $region28
      $region27: #{_lambda_.15} parent=19 // pred_region
        %p194 = scmp.lt.s32.totalorder %s11, 1
        %s195 = scalar_select %p194, %s11, 1
        %s196 = smul.addr %s195, 2
        %s197 = smul.addr %s196, 8
        %s198 = scalar_lea.vmem %s1, %s197
      $region28: #{_lambda_.15} parent=19 // pred_fallthru
        _
      // Predicated region
      $region29: #{_lambda_.15} parent=19 // pred_check
        %p199 = pneg %p83
      $region30: #{_lambda_.15} parent=19 // pred_check_branch
        %201 = sbr.rel (%p199) target = $region32
      $region31: #{_lambda_.15} parent=19 // pred_region
        %p202 = scmp.lt.s32.totalorder %s11, 1
        %s203 = scalar_select %p202, %s11, 1
        %s204 = smul.addr %s203, 8
        %s205 = scalar_lea.vmem %s2, %s204
      $region32: #{_lambda_.15} parent=19 // pred_fallthru
        _
      // Predicated region
      $region33: #{_lambda_.15} parent=19 // pred_check
        %p206 = pneg %p130
      $region34: #{_lambda_.15} parent=19 // pred_check_branch
        %208 = sbr.rel (%p206) target = $region36
      $region35: #{_lambda_.15} parent=19 // pred_region
        %p209 = scmp.lt.s32.totalorder %s11, 1
        %s210 = scalar_select %p209, %s11, 1
        %s211 = smul.addr %s210, 2
        %s212 = scalar_lea.vmem %s4, %s211
      $region36: #{_lambda_.15} parent=19 // pred_fallthru
        _
    $region20: #{_lambda_.15} parent=5 // pred_fallthru
      _
    %p213 = scmp.le.s32.totalorder 1, %s11
    %p214 = scmp.lt.s32.totalorder %s11, 3
    %p215 = pnand %p213, %p214
    %p216 = pneg %p215
    // Predicated region
    $region37: #{_lambda_.15} parent=5 // pred_check
      _
    $region38: #{_lambda_.15} parent=5 // pred_check_branch
      %218 = sbr.rel (%p215) target = $region40
    $region39: #{_lambda_.15} parent=5 // pred_region
      %s219 = ssub.s32 %s11, 1
      %p220 = scmp.lt.s32.totalorder %s16, 1
      %s221 = scalar_select %p220, %s16, 1
      %s222 = smul.addr %s221, 2
      %s223 = scalar_lea.vmem %s0, %s222
      %p224 = pneg %p37
      %p225 = pneg %p34
      %p226 = scmp.lt.s32.totalorder %s16, 1
      %s227 = scalar_select %p226, %s16, 1
      %s228 = smul.addr %s227, 2
      %s229 = smul.addr %s228, 8
      %s230 = scalar_lea.vmem %s1, %s229
      %p231 = pneg %p63
      %p232 = pneg %p60
      %p233 = scmp.lt.s32.totalorder %s16, 1
      %s234 = scalar_select %p233, %s16, 1
      %s235 = smul.addr %s234, 8
      %s236 = scalar_lea.vmem %s2, %s235
      %p237 = pneg %p89
      %p238 = pneg %p86
      %p239 = pneg %p110
      %p240 = pneg %p107
      %p241 = scmp.lt.s32.totalorder %s16, 1
      %s242 = scalar_select %p241, %s16, 1
      %s243 = smul.addr %s242, 2
      %s244 = scalar_lea.vmem %s4, %s243
      %p245 = pneg %p136
      %p246 = pneg %p133
      %p247 = pneg %p162
      %p248 = pneg %p159
      %p249 = scmp.lt.s32.totalorder %s16, 1
      %s250 = scalar_select %p249, %s16, 1
      %s251 = scalar_lea.vmem %s5, %s250
      %p252 = scmp.lt.s32.totalorder %s16, 1
      %s253 = scalar_select %p252, %s16, 1
      %s254 = smul.addr %s253, 2
      %s255 = scalar_lea.vmem %s0, %s254
      %p256 = scmp.lt.s32.totalorder %s16, 1
      %s257 = scalar_select %p256, %s16, 1
      %s258 = smul.addr %s257, 2
      %s259 = smul.addr %s258, 8
      %s260 = scalar_lea.vmem %s1, %s259
      %p261 = scmp.lt.s32.totalorder %s16, 1
      %s262 = scalar_select %p261, %s16, 1
      %s263 = smul.addr %s262, 8
      %s264 = scalar_lea.vmem %s2, %s263
      %p265 = scmp.lt.s32.totalorder %s16, 1
      %s266 = scalar_select %p265, %s16, 1
      %s267 = smul.addr %s266, 2
      %s268 = scalar_lea.vmem %s4, %s267
      %p269 = scmp.lt.s32.totalorder %s16, 1
      %s270 = scalar_select %p269, %s16, 1
      %s271 = scalar_lea.vmem %s5, %s270
      %v272 = vld [vmem:[%s264] sm:$0xff]
      %v273 = vld [vmem:[%s3] sm:$0xff]
      %v275 = vcombine.high %v273, %v273
      %vm276 = vcmask 31744
      %v278 = vsel %vm276, %v272, 0
      %vm280 = vcmask 1043456
      %v281 = vsel %vm280, %v273, 0
      %v283 = vsel %vm280, %v275, 0
      %285 = vmatprep.subr.mxu0 %v283
      %286 = vmatpush1.msra.mxu0 %v281
      %287 = vmatprep.subr.mxu0 0.0
      %288 = vmatpush1.msra.mxu0 0.0
      %289 = vmatprep.subr.mxu0 0.0
      %290 = vmatpush1.msra.mxu0 0.0
      %291 = vmatprep.subr.mxu0 0.0
      %292 = vmatpush1.msra.mxu0 0.0
      %293 = vmatprep.subr.mxu0 0.0
      %294 = vmatpush1.msra.mxu0 0.0
      %295 = vmatprep.subr.mxu0 0.0
      %296 = vmatpush1.msra.mxu0 0.0
      %297 = vmatprep.subr.mxu0 0.0
      %298 = vmatpush1.msra.mxu0 0.0
      %299 = vmatprep.subr.mxu0 0.0
      %300 = vmatpush1.msra.mxu0 0.0
      %301 = vmatprep.subr.mxu0 0.0
      %302 = vmatpush1.msra.mxu0 0.0
      %303 = vmatprep.subr.mxu0 0.0
      %304 = vmatpush1.msra.mxu0 0.0
      %305 = vmatprep.subr.mxu0 0.0
      %306 = vmatpush1.msra.mxu0 0.0
      %307 = vmatprep.subr.mxu0 0.0
      %308 = vmatpush1.msra.mxu0 0.0
      %309 = vmatprep.subr.mxu0 0.0
      %310 = vmatpush1.msra.mxu0 0.0
      %311 = vmatprep.subr.mxu0 0.0
      %312 = vmatpush1.msra.mxu0 0.0
      %313 = vmatprep.subr.mxu0 0.0
      %314 = vmatpush1.msra.mxu0 0.0
      %315 = vmatprep.subr.mxu0 0.0
      %316 = vmatpush1.msra.mxu0 0.0
      %317 = vmatprep.subr.mxu0 0.0
      %318 = vmatpush1.msra.mxu0 0.0
      %319 = vmatprep.subr.mxu0 0.0
      %320 = vmatpush1.msra.mxu0 0.0
      %321 = vmatprep.subr.mxu0 0.0
      %322 = vmatpush1.msra.mxu0 0.0
      %323 = vmatprep.subr.mxu0 0.0
      %324 = vmatpush1.msra.mxu0 0.0
      %325 = vmatprep.subr.mxu0 0.0
      %326 = vmatpush1.msra.mxu0 0.0
      %327 = vmatprep.subr.mxu0 0.0
      %328 = vmatpush1.msra.mxu0 0.0
      %329 = vmatprep.subr.mxu0 0.0
      %330 = vmatpush1.msra.mxu0 0.0
      %331 = vmatprep.subr.mxu0 0.0
      %332 = vmatpush1.msra.mxu0 0.0
      %333 = vmatprep.subr.mxu0 0.0
      %334 = vmatpush1.msra.mxu0 0.0
      %335 = vmatprep.subr.mxu0 0.0
      %336 = vmatpush1.msra.mxu0 0.0
      %337 = vmatprep.subr.mxu0 0.0
      %338 = vmatpush1.msra.mxu0 0.0
      %339 = vmatprep.subr.mxu0 0.0
      %340 = vmatpush1.msra.mxu0 0.0
      %341 = vmatprep.subr.mxu0 0.0
      %342 = vmatpush1.msra.mxu0 0.0
      %343 = vmatprep.subr.mxu0 0.0
      %344 = vmatpush1.msra.mxu0 0.0
      %345 = vmatprep.subr.mxu0 0.0
      %346 = vmatpush1.msra.mxu0 0.0
      %347 = vmatprep.subr.mxu0 0.0
      %348 = vmatpush1.msra.mxu0 0.0
      %349 = vmatprep.mubr.f32.mxu0 0.0
      %350 = vmatmul.mubr.f32.gmra.mrb[0].mxu0 %v278
      %v351 = vpop.f32.mrb[0].mxu0
      %v352 = vadd.f32 0.0, %v351
      %v353 = vpop.f32.mrb[0].mxu0
      %v354 = vadd.f32 0.0, %v353
      %355 = vdwg.mxu0
      %v356 = vld [vmem:[%s255] sm:$0x3]
      %v357 = vld [vmem:[%s260] sm:$0xff]
      %v358 = vld [vmem:[%s260 + $0x8] sm:$0xff]
      %v360 = vlaneseq
      %v361 = vshrl.u32 %v360, 7
      %v362 = vsub.s32 0, %v361
      %v363 = vrot.slane %v356, %v362
      %v364 = vlaneseq
      %v365 = vshrl.u32 %v364, 7
      %v366 = vsub.s32 1, %v365
      %v367 = vrot.slane %v356, %v366
      %v370 = vsub.f32 %v363, %v357
      %v371 = vsub.f32 %v367, %v358
      %v372 = vsub.f32 %v370, %v352
      %v373 = vsub.f32 %v371, %v354
      %v374 = vmul.f32 %v372, %v372
      %v375 = vmul.f32 %v373, %v373
      %v376 = vld [vmem:[%s268] sm:$0x3]
      %v378 = vlaneseq
      %v379 = vshrl.u32 %v378, 7
      %v380 = vsub.s32 0, %v379
      %v381 = vrot.slane %v376, %v380
      %v382 = vlaneseq
      %v383 = vshrl.u32 %v382, 7
      %v384 = vsub.s32 1, %v383
      %v385 = vrot.slane %v376, %v384
      %v388 = vmul.f32 %v374, %v381
      %v389 = vmul.f32 %v375, %v385
      %v390 = vadd.f32 %v388, %v389
      %391 = vadd.xlane.f32.xlu0 %v390
      %v392 = vpop.xlane.xlu0 %391
      %v394 = vlaneseq
      %v395 = vand.u32 %v394, 127
      %v396 = vlaneseq
      %v397 = vshrl.u32 %v396, 7
      %v398 = vsub.s32 %v395, %v397
      %v399 = vrot.slane %v392, %v398
      %vm401 = vcmask 57344
      %402 = vst.msk [vmem:[%s271] sm:$0x1] %vm401, %v399
      %p403 = scmp.lt.s32.totalorder %s16, 1
      %s404 = scalar_select %p403, %s16, 1
      %s405 = scalar_lea.vmem %s5, %s404
      // Predicated region
      $region41: #{_lambda_.15} parent=39 // pred_check
        %p406 = pneg %p159
      $region42: #{_lambda_.15} parent=39 // pred_check_branch
        %408 = sbr.rel (%p406) target = $region44
      $region43: #{_lambda_.15} parent=39 // pred_region
        _
      $region44: #{_lambda_.15} parent=39 // pred_fallthru
        _
    $region40: #{_lambda_.15} parent=5 // pred_fallthru
      _
    %p409 = scmp.le.s32.totalorder 2, %s11
    // Predicated region
    $region45: #{_lambda_.15} parent=5 // pred_check
      %p410 = pneg %p409
    $region46: #{_lambda_.15} parent=5 // pred_check_branch
      %412 = sbr.rel (%p410) target = $region48
    $region47: #{_lambda_.15} parent=5 // pred_region
      %s413 = ssub.s32 %s11, 2
      // Predicated region
      $region49: #{_lambda_.15} parent=47 // pred_check
        %p414 = pneg %p165
      $region50: #{_lambda_.15} parent=47 // pred_check_branch
        %416 = sbr.rel (%p414) target = $region52
      $region51: #{_lambda_.15} parent=47 // pred_region
        %p417 = scmp.lt.s32.totalorder %s17, 1
        %s418 = scalar_select %p417, %s17, 1
        %s419 = scalar_lea.vmem %s5, %s418
      $region52: #{_lambda_.15} parent=47 // pred_fallthru
        _
    $region48: #{_lambda_.15} parent=5 // pred_fallthru
      _
  $region6: #{_lambda_.15} parent=0 // loop_footer
    %s15 = sadd.s32 1, %s11
  $region7: #{_lambda_.15} parent=0 // loop_footer_branch
    %10 = sbr.rel target = $region3
  $region8: #{_lambda_.15} parent=0 // loop_exit
    _

// kernel: _lambda_.13
$region0: #{_lambda_.13}
  #allocation0 [shape = 'u32[]', space=smem, size = 0x4, offset = 0x4, fixed_abs, tag = 'smem constant byte address 0x4 - core index']
  #allocation1 [shape = 'u32[144,128]{1,0:T(1,128)}', space=vmem, size = 0x12000, scoped, tag = 'internal scratch']
  %s0 = inlined_call_operand.vmem [shape: f32[16,64,4], index: 0, kind: input, shape index: {}]
  %s1 = inlined_call_operand.vmem [shape: s32[16,64,4], index: 1, kind: input, shape index: {}]
  %s2 = inlined_call_operand.vmem [shape: bf16[8,64,4], index: 2, kind: input, shape index: {}]
  %s3 = inlined_call_operand.vmem [shape: f32[16,64,4], index: 3, kind: output, shape index: {}]
  %s4 = sld [smem:[#allocation0]]
  $region45: #{_lambda_.13} parent=0
    _
  %s6 = ssub.s32 1, %s4
  %s7 = scalar_select 0, %s6, %s4
  loop: start=0, step=1, limit=4
  $region2: #{_lambda_.13} parent=0 // loop_pre_header
    _
  $region3: #{_lambda_.13} parent=0 // loop_header
    %s9 = sphi 0, %s13
    %p10 = scmp.ge.s32.totalorder %s9, 4
    %s19 = sphi 0, %s21
    %s22 = sphi 0, %s19
    %s23 = sphi 0, %s22
    %s39 = sphi 0, %s23
    %s45 = sphi 0, %s47
    %s48 = sphi 0, %s45
    %s49 = sphi 0, %s48
    %s65 = sphi 0, %s49
    %s69 = sphi 0, %s69
    %s71 = sphi 0, %s69
    %s72 = sphi 0, %s71
    %s86 = sphi 0, %s72
    %s92 = sphi 0, %s94
    %s95 = sphi 0, %s92
    %s96 = sphi 0, %s95
    %s112 = sphi 0, %s96
  $region4: #{_lambda_.13} parent=0 // loop_header_branch
    %12 = sbr.rel (%p10) target = $region8
  $region5: #{_lambda_.13} parent=0 // loop_body
    %s14 = ssub.s32 %s9, 1
    %s15 = ssub.s32 %s9, 2
    %s16 = sadd.s32 %s9, 1
    %s17 = ssub.s32 %s9, %s16
    %p18 = scmp.eq.s32.totalorder %s17, 0
    %s20 = sadd.s32 %s19, 1
    %s21 = scalar_select %p18, %s19, %s20
    %p24 = pneg %p18
    %p25 = scmp.eq.s32.totalorder %s9, 1
    %p26 = por %p24, %p25
    %p27 = scmp.ne.s32.totalorder %s19, %s22
    %p28 = scmp.eq.s32.totalorder %s9, 0
    %p29 = por %p27, %p28
    %p30 = scmp.ne.s32.totalorder %s19, %s22
    %p31 = scmp.eq.s32.totalorder %s14, 1
    %p32 = por %p30, %p31
    %p33 = scmp.ne.s32.totalorder %s22, %s23
    %p34 = scmp.eq.s32.totalorder %s14, 0
    %p35 = por %p33, %p34
    %p36 = scmp.ne.s32.totalorder %s22, %s23
    %p37 = scmp.eq.s32.totalorder %s15, 1
    %p38 = por %p36, %p37
    %p40 = scmp.ne.s32.totalorder %s23, %s39
    %p41 = scmp.eq.s32.totalorder %s15, 0
    %p42 = por %p40, %p41
    %s43 = ssub.s32 %s9, %s16
    %p44 = scmp.eq.s32.totalorder %s43, 0
    %s46 = sadd.s32 %s45, 1
    %s47 = scalar_select %p44, %s45, %s46
    %p50 = pneg %p44
    %p51 = scmp.eq.s32.totalorder %s9, 1
    %p52 = por %p50, %p51
    %p53 = scmp.ne.s32.totalorder %s45, %s48
    %p54 = scmp.eq.s32.totalorder %s9, 0
    %p55 = por %p53, %p54
    %p56 = scmp.ne.s32.totalorder %s45, %s48
    %p57 = scmp.eq.s32.totalorder %s14, 1
    %p58 = por %p56, %p57
    %p59 = scmp.ne.s32.totalorder %s48, %s49
    %p60 = scmp.eq.s32.totalorder %s14, 0
    %p61 = por %p59, %p60
    %p62 = scmp.ne.s32.totalorder %s48, %s49
    %p63 = scmp.eq.s32.totalorder %s15, 1
    %p64 = por %p62, %p63
    %p66 = scmp.ne.s32.totalorder %s49, %s65
    %p67 = scmp.eq.s32.totalorder %s15, 0
    %p68 = por %p66, %p67
    %s70 = sadd.s32 %s69, 1
    %p73 = scmp.eq.s32.totalorder %s9, 1
    %p74 = scmp.ne.s32.totalorder %s69, %s71
    %p75 = scmp.eq.s32.totalorder %s9, 0
    %p76 = por %p74, %p75
    %p77 = scmp.ne.s32.totalorder %s69, %s71
    %p78 = scmp.eq.s32.totalorder %s14, 1
    %p79 = por %p77, %p78
    %p80 = scmp.ne.s32.totalorder %s71, %s72
    %p81 = scmp.eq.s32.totalorder %s14, 0
    %p82 = por %p80, %p81
    %p83 = scmp.ne.s32.totalorder %s71, %s72
    %p84 = scmp.eq.s32.totalorder %s15, 1
    %p85 = por %p83, %p84
    %p87 = scmp.ne.s32.totalorder %s72, %s86
    %p88 = scmp.eq.s32.totalorder %s15, 0
    %p89 = por %p87, %p88
    %s90 = ssub.s32 %s9, %s16
    %p91 = scmp.eq.s32.totalorder %s90, 0
    %s93 = sadd.s32 %s92, 1
    %s94 = scalar_select %p91, %s92, %s93
    %p97 = pneg %p91
    %p98 = scmp.eq.s32.totalorder %s9, 1
    %p99 = por %p97, %p98
    %p100 = scmp.ne.s32.totalorder %s92, %s95
    %p101 = scmp.eq.s32.totalorder %s9, 0
    %p102 = por %p100, %p101
    %p103 = scmp.ne.s32.totalorder %s92, %s95
    %p104 = scmp.eq.s32.totalorder %s14, 1
    %p105 = por %p103, %p104
    %p106 = scmp.ne.s32.totalorder %s95, %s96
    %p107 = scmp.eq.s32.totalorder %s14, 0
    %p108 = por %p106, %p107
    %p109 = scmp.ne.s32.totalorder %s95, %s96
    %p110 = scmp.eq.s32.totalorder %s15, 1
    %p111 = por %p109, %p110
    %p113 = scmp.ne.s32.totalorder %s96, %s112
    %p114 = scmp.eq.s32.totalorder %s15, 0
    %p115 = por %p113, %p114
    %p116 = scmp.le.s32.totalorder 1, %s9
    %p117 = scmp.lt.s32.totalorder %s9, 3
    %p118 = pnand %p116, %p117
    %p119 = pneg %p118
    // Predicated region
    $region9: #{_lambda_.13} parent=5 // pred_check
      _
    $region10: #{_lambda_.13} parent=5 // pred_check_branch
      %121 = sbr.rel (%p118) target = $region12
    $region11: #{_lambda_.13} parent=5 // pred_region
      %s122 = ssub.s32 %s9, 1
      // Predicated region
      $region13: #{_lambda_.13} parent=11 // pred_check
        %p123 = pneg %p82
      $region14: #{_lambda_.13} parent=11 // pred_check_branch
        %125 = sbr.rel (%p123) target = $region16
      $region15: #{_lambda_.13} parent=11 // pred_region
        _
      $region16: #{_lambda_.13} parent=11 // pred_fallthru
        _
    $region12: #{_lambda_.13} parent=5 // pred_fallthru
      _
    %p126 = scmp.lt.s32.totalorder %s9, 2
    // Predicated region
    $region17: #{_lambda_.13} parent=5 // pred_check
      %p127 = pneg %p126
    $region18: #{_lambda_.13} parent=5 // pred_check_branch
      %129 = sbr.rel (%p127) target = $region20
    $region19: #{_lambda_.13} parent=5 // pred_region
      // Predicated region
      $region21: #{_lambda_.13} parent=19 // pred_check
        %p130 = pneg %p29
      $region22: #{_lambda_.13} parent=19 // pred_check_branch
        %132 = sbr.rel (%p130) target = $region24
      $region23: #{_lambda_.13} parent=19 // pred_region
        %s133 = smul.u32 8, %s9
        %p134 = scmp.lt.s32.totalorder %s133, 15
        %s135 = scalar_select %p134, %s133, 15
        %s136 = smul.addr %s135, 8
        %s137 = smul.addr %s136, 8
        %s138 = scalar_lea.vmem %s0, %s137
        %s139 = smul.u32 8, %s9
      $region24: #{_lambda_.13} parent=19 // pred_fallthru
        _
      // Predicated region
      $region25: #{_lambda_.13} parent=19 // pred_check
        %p140 = pneg %p55
      $region26: #{_lambda_.13} parent=19 // pred_check_branch
        %142 = sbr.rel (%p140) target = $region28
      $region27: #{_lambda_.13} parent=19 // pred_region
        %s143 = smul.u32 8, %s9
        %p144 = scmp.lt.s32.totalorder %s143, 15
        %s145 = scalar_select %p144, %s143, 15
        %s146 = smul.addr %s145, 8
        %s147 = smul.addr %s146, 8
        %s148 = scalar_lea.vmem %s1, %s147
        %s149 = smul.u32 8, %s9
      $region28: #{_lambda_.13} parent=19 // pred_fallthru
        _
    $region20: #{_lambda_.13} parent=5 // pred_fallthru
      _
    %p150 = scmp.le.s32.totalorder 1, %s9
    %p151 = scmp.lt.s32.totalorder %s9, 3
    %p152 = pnand %p150, %p151
    %p153 = pneg %p152
    // Predicated region
    $region29: #{_lambda_.13} parent=5 // pred_check
      _
    $region30: #{_lambda_.13} parent=5 // pred_check_branch
      %155 = sbr.rel (%p152) target = $region32
    $region31: #{_lambda_.13} parent=5 // pred_region
      %s156 = ssub.s32 %s9, 1
      %s157 = smul.u32 8, %s14
      %p158 = scmp.lt.s32.totalorder %s157, 15
      %s159 = scalar_select %p158, %s157, 15
      %s160 = smul.addr %s159, 8
      %s161 = smul.addr %s160, 8
      %s162 = scalar_lea.vmem %s0, %s161
      %p163 = pneg %p35
      %p164 = pneg %p32
      %s165 = smul.u32 8, %s14
      %p166 = scmp.lt.s32.totalorder %s165, 15
      %s167 = scalar_select %p166, %s165, 15
      %s168 = smul.addr %s167, 8
      %s169 = smul.addr %s168, 8
      %s170 = scalar_lea.vmem %s1, %s169
      %p171 = pneg %p61
      %p172 = pneg %p58
      %p173 = pneg %p82
      %p174 = pneg %p79
      %p175 = pneg %p108
      %p176 = pneg %p105
      %s177 = smul.u32 8, %s14
      %p178 = scmp.lt.s32.totalorder %s177, 15
      %s179 = scalar_select %p178, %s177, 15
      %s180 = smul.addr %s179, 8
      %s181 = smul.addr %s180, 8
      %s182 = scalar_lea.vmem %s3, %s181
      %s183 = smul.u32 8, %s14
      %p184 = scmp.lt.s32.totalorder %s183, 15
      %s185 = scalar_select %p184, %s183, 15
      %s186 = smul.addr %s185, 8
      %s187 = smul.addr %s186, 8
      %s188 = scalar_lea.vmem %s0, %s187
      %s189 = smul.u32 8, %s14
      %s190 = smul.u32 8, %s14
      %p191 = scmp.lt.s32.totalorder %s190, 15
      %s192 = scalar_select %p191, %s190, 15
      %s193 = smul.addr %s192, 8
      %s194 = smul.addr %s193, 8
      %s195 = scalar_lea.vmem %s1, %s194
      %s196 = smul.u32 8, %s14
      %s197 = smul.u32 8, %s14
      %p198 = scmp.lt.s32.totalorder %s197, 15
      %s199 = scalar_select %p198, %s197, 15
      %s200 = smul.addr %s199, 8
      %s201 = smul.addr %s200, 8
      %s202 = scalar_lea.vmem %s3, %s201
      %s203 = smul.u32 8, %s14
      %v205 = vlaneseq
      %v206 = vand.u32 %v205, 127
      %v207 = vld [vmem:[%s195] sm:$0xff]
      %v208 = vld [vmem:[%s195 + $0x8] sm:$0xff]
      %v209 = vld [vmem:[%s195 + $0x10] sm:$0xff]
      %v210 = vld [vmem:[%s195 + $0x18] sm:$0xff]
      %v211 = vld [vmem:[%s195 + $0x20] sm:$0xff]
      %v212 = vld [vmem:[%s195 + $0x28] sm:$0xff]
      %v213 = vld [vmem:[%s195 + $0x30] sm:$0xff]
      %v214 = vld [vmem:[%s195 + $0x38] sm:$0xff]
      %v215 = vld [vmem:[%s195 + $0x40] sm:$0xff]
      %v216 = vld [vmem:[%s195 + $0x48] sm:$0xff]
      %v217 = vld [vmem:[%s195 + $0x50] sm:$0xff]
      %v218 = vld [vmem:[%s195 + $0x58] sm:$0xff]
      %v219 = vld [vmem:[%s195 + $0x60] sm:$0xff]
      %v220 = vld [vmem:[%s195 + $0x68] sm:$0xff]
      %v221 = vld [vmem:[%s195 + $0x70] sm:$0xff]
      %v222 = vld [vmem:[%s195 + $0x78] sm:$0xff]
      %v223 = vld [vmem:[%s195 + $0x80] sm:$0xff]
      %v224 = vld [vmem:[%s195 + $0x88] sm:$0xff]
      %v225 = vld [vmem:[%s195 + $0x90] sm:$0xff]
      %v226 = vld [vmem:[%s195 + $0x98] sm:$0xff]
      %v227 = vld [vmem:[%s195 + $0xa0] sm:$0xff]
      %v228 = vld [vmem:[%s195 + $0xa8] sm:$0xff]
      %v229 = vld [vmem:[%s195 + $0xb0] sm:$0xff]
      %v230 = vld [vmem:[%s195 + $0xb8] sm:$0xff]
      %v231 = vld [vmem:[%s195 + $0xc0] sm:$0xff]
      %v232 = vld [vmem:[%s195 + $0xc8] sm:$0xff]
      %v233 = vld [vmem:[%s195 + $0xd0] sm:$0xff]
      %v234 = vld [vmem:[%s195 + $0xd8] sm:$0xff]
      %v235 = vld [vmem:[%s195 + $0xe0] sm:$0xff]
      %v236 = vld [vmem:[%s195 + $0xe8] sm:$0xff]
      %v237 = vld [vmem:[%s195 + $0xf0] sm:$0xff]
      %v238 = vld [vmem:[%s195 + $0xf8] sm:$0xff]
      %v239 = vld [vmem:[%s195 + $0x100] sm:$0xff]
      %v240 = vld [vmem:[%s195 + $0x108] sm:$0xff]
      %v241 = vld [vmem:[%s195 + $0x110] sm:$0xff]
      %v242 = vld [vmem:[%s195 + $0x118] sm:$0xff]
      %v243 = vld [vmem:[%s195 + $0x120] sm:$0xff]
      %v244 = vld [vmem:[%s195 + $0x128] sm:$0xff]
      %v245 = vld [vmem:[%s195 + $0x130] sm:$0xff]
      %v246 = vld [vmem:[%s195 + $0x138] sm:$0xff]
      %v247 = vld [vmem:[%s195 + $0x140] sm:$0xff]
      %v248 = vld [vmem:[%s195 + $0x148] sm:$0xff]
      %v249 = vld [vmem:[%s195 + $0x150] sm:$0xff]
      %v250 = vld [vmem:[%s195 + $0x158] sm:$0xff]
      %v251 = vld [vmem:[%s195 + $0x160] sm:$0xff]
      %v252 = vld [vmem:[%s195 + $0x168] sm:$0xff]
      %v253 = vld [vmem:[%s195 + $0x170] sm:$0xff]
      %v254 = vld [vmem:[%s195 + $0x178] sm:$0xff]
      %v255 = vld [vmem:[%s195 + $0x180] sm:$0xff]
      %v256 = vld [vmem:[%s195 + $0x188] sm:$0xff]
      %v257 = vld [vmem:[%s195 + $0x190] sm:$0xff]
      %v258 = vld [vmem:[%s195 + $0x198] sm:$0xff]
      %v259 = vld [vmem:[%s195 + $0x1a0] sm:$0xff]
      %v260 = vld [vmem:[%s195 + $0x1a8] sm:$0xff]
      %v261 = vld [vmem:[%s195 + $0x1b0] sm:$0xff]
      %v262 = vld [vmem:[%s195 + $0x1b8] sm:$0xff]
      %v263 = vld [vmem:[%s195 + $0x1c0] sm:$0xff]
      %v264 = vld [vmem:[%s195 + $0x1c8] sm:$0xff]
      %v265 = vld [vmem:[%s195 + $0x1d0] sm:$0xff]
      %v266 = vld [vmem:[%s195 + $0x1d8] sm:$0xff]
      %v267 = vld [vmem:[%s195 + $0x1e0] sm:$0xff]
      %v268 = vld [vmem:[%s195 + $0x1e8] sm:$0xff]
      %v269 = vld [vmem:[%s195 + $0x1f0] sm:$0xff]
      %v270 = vld [vmem:[%s195 + $0x1f8] sm:$0xff]
      %271 = vset.pattern.permute.xlu0 0
      %272 = vperm.xlu0 %271, %v207
      %v273 = vpop.permute.xlu0 %272
      %274 = vset.pattern.permute.xlu0 0
      %275 = vperm.xlu0 %274, %v208
      %v276 = vpop.permute.xlu0 %275
      %277 = vset.pattern.permute.xlu0 0
      %278 = vperm.xlu0 %277, %v209
      %v279 = vpop.permute.xlu0 %278
      %280 = vset.pattern.permute.xlu0 0
      %281 = vperm.xlu0 %280, %v210
      %v282 = vpop.permute.xlu0 %281
      %283 = vset.pattern.permute.xlu0 0
      %284 = vperm.xlu0 %283, %v211
      %v285 = vpop.permute.xlu0 %284
      %286 = vset.pattern.permute.xlu0 0
      %287 = vperm.xlu0 %286, %v212
      %v288 = vpop.permute.xlu0 %287
      %289 = vset.pattern.permute.xlu0 0
      %290 = vperm.xlu0 %289, %v213
      %v291 = vpop.permute.xlu0 %290
      %292 = vset.pattern.permute.xlu0 0
      %293 = vperm.xlu0 %292, %v214
      %v294 = vpop.permute.xlu0 %293
      %295 = vset.pattern.permute.xlu0 0
      %296 = vperm.xlu0 %295, %v215
      %v297 = vpop.permute.xlu0 %296
      %298 = vset.pattern.permute.xlu0 0
      %299 = vperm.xlu0 %298, %v216
      %v300 = vpop.permute.xlu0 %299
      %301 = vset.pattern.permute.xlu0 0
      %302 = vperm.xlu0 %301, %v217
      %v303 = vpop.permute.xlu0 %302
      %304 = vset.pattern.permute.xlu0 0
      %305 = vperm.xlu0 %304, %v218
      %v306 = vpop.permute.xlu0 %305
      %307 = vset.pattern.permute.xlu0 0
      %308 = vperm.xlu0 %307, %v219
      %v309 = vpop.permute.xlu0 %308
      %310 = vset.pattern.permute.xlu0 0
      %311 = vperm.xlu0 %310, %v220
      %v312 = vpop.permute.xlu0 %311
      %313 = vset.pattern.permute.xlu0 0
      %314 = vperm.xlu0 %313, %v221
      %v315 = vpop.permute.xlu0 %314
      %316 = vset.pattern.permute.xlu0 0
      %317 = vperm.xlu0 %316, %v222
      %v318 = vpop.permute.xlu0 %317
      %319 = vset.pattern.permute.xlu0 0
      %320 = vperm.xlu0 %319, %v223
      %v321 = vpop.permute.xlu0 %320
      %322 = vset.pattern.permute.xlu0 0
      %323 = vperm.xlu0 %322, %v224
      %v324 = vpop.permute.xlu0 %323
      %325 = vset.pattern.permute.xlu0 0
      %326 = vperm.xlu0 %325, %v225
      %v327 = vpop.permute.xlu0 %326
      %328 = vset.pattern.permute.xlu0 0
      %329 = vperm.xlu0 %328, %v226
      %v330 = vpop.permute.xlu0 %329
      %331 = vset.pattern.permute.xlu0 0
      %332 = vperm.xlu0 %331, %v227
      %v333 = vpop.permute.xlu0 %332
      %334 = vset.pattern.permute.xlu0 0
      %335 = vperm.xlu0 %334, %v228
      %v336 = vpop.permute.xlu0 %335
      %337 = vset.pattern.permute.xlu0 0
      %338 = vperm.xlu0 %337, %v229
      %v339 = vpop.permute.xlu0 %338
      %340 = vset.pattern.permute.xlu0 0
      %341 = vperm.xlu0 %340, %v230
      %v342 = vpop.permute.xlu0 %341
      %343 = vset.pattern.permute.xlu0 0
      %344 = vperm.xlu0 %343, %v231
      %v345 = vpop.permute.xlu0 %344
      %346 = vset.pattern.permute.xlu0 0
      %347 = vperm.xlu0 %346, %v232
      %v348 = vpop.permute.xlu0 %347
      %349 = vset.pattern.permute.xlu0 0
      %350 = vperm.xlu0 %349, %v233
      %v351 = vpop.permute.xlu0 %350
      %352 = vset.pattern.permute.xlu0 0
      %353 = vperm.xlu0 %352, %v234
      %v354 = vpop.permute.xlu0 %353
      %355 = vset.pattern.permute.xlu0 0
      %356 = vperm.xlu0 %355, %v235
      %v357 = vpop.permute.xlu0 %356
      %358 = vset.pattern.permute.xlu0 0
      %359 = vperm.xlu0 %358, %v236
      %v360 = vpop.permute.xlu0 %359
      %361 = vset.pattern.permute.xlu0 0
      %362 = vperm.xlu0 %361, %v237
      %v363 = vpop.permute.xlu0 %362
      %364 = vset.pattern.permute.xlu0 0
      %365 = vperm.xlu0 %364, %v238
      %v366 = vpop.permute.xlu0 %365
      %367 = vset.pattern.permute.xlu0 0
      %368 = vperm.xlu0 %367, %v239
      %v369 = vpop.permute.xlu0 %368
      %370 = vset.pattern.permute.xlu0 0
      %371 = vperm.xlu0 %370, %v240
      %v372 = vpop.permute.xlu0 %371
      %373 = vset.pattern.permute.xlu0 0
      %374 = vperm.xlu0 %373, %v241
      %v375 = vpop.permute.xlu0 %374
      %376 = vset.pattern.permute.xlu0 0
      %377 = vperm.xlu0 %376, %v242
      %v378 = vpop.permute.xlu0 %377
      %379 = vset.pattern.permute.xlu0 0
      %380 = vperm.xlu0 %379, %v243
      %v381 = vpop.permute.xlu0 %380
      %382 = vset.pattern.permute.xlu0 0
      %383 = vperm.xlu0 %382, %v244
      %v384 = vpop.permute.xlu0 %383
      %385 = vset.pattern.permute.xlu0 0
      %386 = vperm.xlu0 %385, %v245
      %v387 = vpop.permute.xlu0 %386
      %388 = vset.pattern.permute.xlu0 0
      %389 = vperm.xlu0 %388, %v246
      %v390 = vpop.permute.xlu0 %389
      %391 = vset.pattern.permute.xlu0 0
      %392 = vperm.xlu0 %391, %v247
      %v393 = vpop.permute.xlu0 %392
      %394 = vset.pattern.permute.xlu0 0
      %395 = vperm.xlu0 %394, %v248
      %v396 = vpop.permute.xlu0 %395
      %397 = vset.pattern.permute.xlu0 0
      %398 = vperm.xlu0 %397, %v249
      %v399 = vpop.permute.xlu0 %398
      %400 = vset.pattern.permute.xlu0 0
      %401 = vperm.xlu0 %400, %v250
      %v402 = vpop.permute.xlu0 %401
      %403 = vset.pattern.permute.xlu0 0
      %404 = vperm.xlu0 %403, %v251
      %v405 = vpop.permute.xlu0 %404
      %406 = vset.pattern.permute.xlu0 0
      %407 = vperm.xlu0 %406, %v252
      %v408 = vpop.permute.xlu0 %407
      %409 = vset.pattern.permute.xlu0 0
      %410 = vperm.xlu0 %409, %v253
      %v411 = vpop.permute.xlu0 %410
      %412 = vset.pattern.permute.xlu0 0
      %413 = vperm.xlu0 %412, %v254
      %v414 = vpop.permute.xlu0 %413
      %415 = vset.pattern.permute.xlu0 0
      %416 = vperm.xlu0 %415, %v255
      %v417 = vpop.permute.xlu0 %416
      %418 = vset.pattern.permute.xlu0 0
      %419 = vperm.xlu0 %418, %v256
      %v420 = vpop.permute.xlu0 %419
      %421 = vset.pattern.permute.xlu0 0
      %422 = vperm.xlu0 %421, %v257
      %v423 = vpop.permute.xlu0 %422
      %424 = vset.pattern.permute.xlu0 0
      %425 = vperm.xlu0 %424, %v258
      %v426 = vpop.permute.xlu0 %425
      %427 = vset.pattern.permute.xlu0 0
      %428 = vperm.xlu0 %427, %v259
      %v429 = vpop.permute.xlu0 %428
      %430 = vset.pattern.permute.xlu0 0
      %431 = vperm.xlu0 %430, %v260
      %v432 = vpop.permute.xlu0 %431
      %433 = vset.pattern.permute.xlu0 0
      %434 = vperm.xlu0 %433, %v261
      %v435 = vpop.permute.xlu0 %434
      %436 = vset.pattern.permute.xlu0 0
      %437 = vperm.xlu0 %436, %v262
      %v438 = vpop.permute.xlu0 %437
      %439 = vset.pattern.permute.xlu0 0
      %440 = vperm.xlu0 %439, %v263
      %v441 = vpop.permute.xlu0 %440
      %442 = vset.pattern.permute.xlu0 0
      %443 = vperm.xlu0 %442, %v264
      %v444 = vpop.permute.xlu0 %443
      %445 = vset.pattern.permute.xlu0 0
      %446 = vperm.xlu0 %445, %v265
      %v447 = vpop.permute.xlu0 %446
      %448 = vset.pattern.permute.xlu0 0
      %449 = vperm.xlu0 %448, %v266
      %v450 = vpop.permute.xlu0 %449
      %451 = vset.pattern.permute.xlu0 0
      %452 = vperm.xlu0 %451, %v267
      %v453 = vpop.permute.xlu0 %452
      %454 = vset.pattern.permute.xlu0 0
      %455 = vperm.xlu0 %454, %v268
      %v456 = vpop.permute.xlu0 %455
      %457 = vset.pattern.permute.xlu0 0
      %458 = vperm.xlu0 %457, %v269
      %v459 = vpop.permute.xlu0 %458
      %460 = vset.pattern.permute.xlu0 0
      %461 = vperm.xlu0 %460, %v270
      %v462 = vpop.permute.xlu0 %461
      %vm463 = vcmp.eq.s32.totalorder %v273, %v206
      %vm464 = vcmp.eq.s32.totalorder %v276, %v206
      %vm465 = vcmp.eq.s32.totalorder %v279, %v206
      %vm466 = vcmp.eq.s32.totalorder %v282, %v206
      %vm467 = vcmp.eq.s32.totalorder %v285, %v206
      %vm468 = vcmp.eq.s32.totalorder %v288, %v206
      %vm469 = vcmp.eq.s32.totalorder %v291, %v206
      %vm470 = vcmp.eq.s32.totalorder %v294, %v206
      %vm471 = vcmp.eq.s32.totalorder %v297, %v206
      %vm472 = vcmp.eq.s32.totalorder %v300, %v206
      %vm473 = vcmp.eq.s32.totalorder %v303, %v206
      %vm474 = vcmp.eq.s32.totalorder %v306, %v206
      %vm475 = vcmp.eq.s32.totalorder %v309, %v206
      %vm476 = vcmp.eq.s32.totalorder %v312, %v206
      %vm477 = vcmp.eq.s32.totalorder %v315, %v206
      %vm478 = vcmp.eq.s32.totalorder %v318, %v206
      %vm479 = vcmp.eq.s32.totalorder %v321, %v206
      %vm480 = vcmp.eq.s32.totalorder %v324, %v206
      %vm481 = vcmp.eq.s32.totalorder %v327, %v206
      %vm482 = vcmp.eq.s32.totalorder %v330, %v206
      %vm483 = vcmp.eq.s32.totalorder %v333, %v206
      %vm484 = vcmp.eq.s32.totalorder %v336, %v206
      %vm485 = vcmp.eq.s32.totalorder %v339, %v206
      %vm486 = vcmp.eq.s32.totalorder %v342, %v206
      %vm487 = vcmp.eq.s32.totalorder %v345, %v206
      %vm488 = vcmp.eq.s32.totalorder %v348, %v206
      %vm489 = vcmp.eq.s32.totalorder %v351, %v206
      %vm490 = vcmp.eq.s32.totalorder %v354, %v206
      %vm491 = vcmp.eq.s32.totalorder %v357, %v206
      %vm492 = vcmp.eq.s32.totalorder %v360, %v206
      %vm493 = vcmp.eq.s32.totalorder %v363, %v206
      %vm494 = vcmp.eq.s32.totalorder %v366, %v206
      %vm495 = vcmp.eq.s32.totalorder %v369, %v206
      %vm496 = vcmp.eq.s32.totalorder %v372, %v206
      %vm497 = vcmp.eq.s32.totalorder %v375, %v206
      %vm498 = vcmp.eq.s32.totalorder %v378, %v206
      %vm499 = vcmp.eq.s32.totalorder %v381, %v206
      %vm500 = vcmp.eq.s32.totalorder %v384, %v206
      %vm501 = vcmp.eq.s32.totalorder %v387, %v206
      %vm502 = vcmp.eq.s32.totalorder %v390, %v206
      %vm503 = vcmp.eq.s32.totalorder %v393, %v206
      %vm504 = vcmp.eq.s32.totalorder %v396, %v206
      %vm505 = vcmp.eq.s32.totalorder %v399, %v206
      %vm506 = vcmp.eq.s32.totalorder %v402, %v206
      %vm507 = vcmp.eq.s32.totalorder %v405, %v206
      %vm508 = vcmp.eq.s32.totalorder %v408, %v206
      %vm509 = vcmp.eq.s32.totalorder %v411, %v206
      %vm510 = vcmp.eq.s32.totalorder %v414, %v206
      %vm511 = vcmp.eq.s32.totalorder %v417, %v206
      %vm512 = vcmp.eq.s32.totalorder %v420, %v206
      %vm513 = vcmp.eq.s32.totalorder %v423, %v206
      %vm514 = vcmp.eq.s32.totalorder %v426, %v206
      %vm515 = vcmp.eq.s32.totalorder %v429, %v206
      %vm516 = vcmp.eq.s32.totalorder %v432, %v206
      %vm517 = vcmp.eq.s32.totalorder %v435, %v206
      %vm518 = vcmp.eq.s32.totalorder %v438, %v206
      %vm519 = vcmp.eq.s32.totalorder %v441, %v206
      %vm520 = vcmp.eq.s32.totalorder %v444, %v206
      %vm521 = vcmp.eq.s32.totalorder %v447, %v206
      %vm522 = vcmp.eq.s32.totalorder %v450, %v206
      %vm523 = vcmp.eq.s32.totalorder %v453, %v206
      %vm524 = vcmp.eq.s32.totalorder %v456, %v206
      %vm525 = vcmp.eq.s32.totalorder %v459, %v206
      %vm526 = vcmp.eq.s32.totalorder %v462, %v206
      %v527 = vsel %vm463, 1, 0
      %v528 = vsel %vm464, 1, 0
      %v529 = vsel %vm465, 1, 0
      %v530 = vsel %vm466, 1, 0
      %v531 = vsel %vm467, 1, 0
      %v532 = vsel %vm468, 1, 0
      %v533 = vsel %vm469, 1, 0
      %v534 = vsel %vm470, 1, 0
      %v535 = vsel %vm471, 1, 0
      %v536 = vsel %vm472, 1, 0
      %v537 = vsel %vm473, 1, 0
      %v538 = vsel %vm474, 1, 0
      %v539 = vsel %vm475, 1, 0
      %v540 = vsel %vm476, 1, 0
      %v541 = vsel %vm477, 1, 0
      %v542 = vsel %vm478, 1, 0
      %v543 = vsel %vm479, 1, 0
      %v544 = vsel %vm480, 1, 0
      %v545 = vsel %vm481, 1, 0
      %v546 = vsel %vm482, 1, 0
      %v547 = vsel %vm483, 1, 0
      %v548 = vsel %vm484, 1, 0
      %v549 = vsel %vm485, 1, 0
      %v550 = vsel %vm486, 1, 0
      %v551 = vsel %vm487, 1, 0
      %v552 = vsel %vm488, 1, 0
      %v553 = vsel %vm489, 1, 0
      %v554 = vsel %vm490, 1, 0
      %v555 = vsel %vm491, 1, 0
      %v556 = vsel %vm492, 1, 0
      %v557 = vsel %vm493, 1, 0
      %v558 = vsel %vm494, 1, 0
      %v559 = vsel %vm495, 1, 0
      %v560 = vsel %vm496, 1, 0
      %v561 = vsel %vm497, 1, 0
      %v562 = vsel %vm498, 1, 0
      %v563 = vsel %vm499, 1, 0
      %v564 = vsel %vm500, 1, 0
      %v565 = vsel %vm501, 1, 0
      %v566 = vsel %vm502, 1, 0
      %v567 = vsel %vm503, 1, 0
      %v568 = vsel %vm504, 1, 0
      %v569 = vsel %vm505, 1, 0
      %v570 = vsel %vm506, 1, 0
      %v571 = vsel %vm507, 1, 0
      %v572 = vsel %vm508, 1, 0
      %v573 = vsel %vm509, 1, 0
      %v574 = vsel %vm510, 1, 0
      %v575 = vsel %vm511, 1, 0
      %v576 = vsel %vm512, 1, 0
      %v577 = vsel %vm513, 1, 0
      %v578 = vsel %vm514, 1, 0
      %v579 = vsel %vm515, 1, 0
      %v580 = vsel %vm516, 1, 0
      %v581 = vsel %vm517, 1, 0
      %v582 = vsel %vm518, 1, 0
      %v583 = vsel %vm519, 1, 0
      %v584 = vsel %vm520, 1, 0
      %v585 = vsel %vm521, 1, 0
      %v586 = vsel %vm522, 1, 0
      %v587 = vsel %vm523, 1, 0
      %v588 = vsel %vm524, 1, 0
      %v589 = vsel %vm525, 1, 0
      %v590 = vsel %vm526, 1, 0
      %v591 = vcvt.s32.f32 %v527
      %v592 = vcvt.s32.f32 %v528
      %v593 = vcvt.s32.f32 %v529
      %v594 = vcvt.s32.f32 %v530
      %v595 = vcvt.s32.f32 %v531
      %v596 = vcvt.s32.f32 %v532
      %v597 = vcvt.s32.f32 %v533
      %v598 = vcvt.s32.f32 %v534
      %v599 = vcvt.s32.f32 %v535
      %v600 = vcvt.s32.f32 %v536
      %v601 = vcvt.s32.f32 %v537
      %v602 = vcvt.s32.f32 %v538
      %v603 = vcvt.s32.f32 %v539
      %v604 = vcvt.s32.f32 %v540
      %v605 = vcvt.s32.f32 %v541
      %v606 = vcvt.s32.f32 %v542
      %v607 = vcvt.s32.f32 %v543
      %v608 = vcvt.s32.f32 %v544
      %v609 = vcvt.s32.f32 %v545
      %v610 = vcvt.s32.f32 %v546
      %v611 = vcvt.s32.f32 %v547
      %v612 = vcvt.s32.f32 %v548
      %v613 = vcvt.s32.f32 %v549
      %v614 = vcvt.s32.f32 %v550
      %v615 = vcvt.s32.f32 %v551
      %v616 = vcvt.s32.f32 %v552
      %v617 = vcvt.s32.f32 %v553
      %v618 = vcvt.s32.f32 %v554
      %v619 = vcvt.s32.f32 %v555
      %v620 = vcvt.s32.f32 %v556
      %v621 = vcvt.s32.f32 %v557
      %v622 = vcvt.s32.f32 %v558
      %v623 = vcvt.s32.f32 %v559
      %v624 = vcvt.s32.f32 %v560
      %v625 = vcvt.s32.f32 %v561
      %v626 = vcvt.s32.f32 %v562
      %v627 = vcvt.s32.f32 %v563
      %v628 = vcvt.s32.f32 %v564
      %v629 = vcvt.s32.f32 %v565
      %v630 = vcvt.s32.f32 %v566
      %v631 = vcvt.s32.f32 %v567
      %v632 = vcvt.s32.f32 %v568
      %v633 = vcvt.s32.f32 %v569
      %v634 = vcvt.s32.f32 %v570
      %v635 = vcvt.s32.f32 %v571
      %v636 = vcvt.s32.f32 %v572
      %v637 = vcvt.s32.f32 %v573
      %v638 = vcvt.s32.f32 %v574
      %v639 = vcvt.s32.f32 %v575
      %v640 = vcvt.s32.f32 %v576
      %v641 = vcvt.s32.f32 %v577
      %v642 = vcvt.s32.f32 %v578
      %v643 = vcvt.s32.f32 %v579
      %v644 = vcvt.s32.f32 %v580
      %v645 = vcvt.s32.f32 %v581
      %v646 = vcvt.s32.f32 %v582
      %v647 = vcvt.s32.f32 %v583
      %v648 = vcvt.s32.f32 %v584
      %v649 = vcvt.s32.f32 %v585
      %v650 = vcvt.s32.f32 %v586
      %v651 = vcvt.s32.f32 %v587
      %v652 = vcvt.s32.f32 %v588
      %v653 = vcvt.s32.f32 %v589
      %v654 = vcvt.s32.f32 %v590
      %v655 = vld [vmem:[%s188] sm:$0xff]
      %v656 = vld [vmem:[%s188 + $0x8] sm:$0xff]
      %v657 = vld [vmem:[%s188 + $0x10] sm:$0xff]
      %v658 = vld [vmem:[%s188 + $0x18] sm:$0xff]
      %v659 = vld [vmem:[%s188 + $0x20] sm:$0xff]
      %v660 = vld [vmem:[%s188 + $0x28] sm:$0xff]
      %v661 = vld [vmem:[%s188 + $0x30] sm:$0xff]
      %v662 = vld [vmem:[%s188 + $0x38] sm:$0xff]
      %v663 = vld [vmem:[%s188 + $0x40] sm:$0xff]
      %v664 = vld [vmem:[%s188 + $0x48] sm:$0xff]
      %v665 = vld [vmem:[%s188 + $0x50] sm:$0xff]
      %v666 = vld [vmem:[%s188 + $0x58] sm:$0xff]
      %v667 = vld [vmem:[%s188 + $0x60] sm:$0xff]
      %v668 = vld [vmem:[%s188 + $0x68] sm:$0xff]
      %v669 = vld [vmem:[%s188 + $0x70] sm:$0xff]
      %v670 = vld [vmem:[%s188 + $0x78] sm:$0xff]
      %v671 = vld [vmem:[%s188 + $0x80] sm:$0xff]
      %v672 = vld [vmem:[%s188 + $0x88] sm:$0xff]
      %v673 = vld [vmem:[%s188 + $0x90] sm:$0xff]
      %v674 = vld [vmem:[%s188 + $0x98] sm:$0xff]
      %v675 = vld [vmem:[%s188 + $0xa0] sm:$0xff]
      %v676 = vld [vmem:[%s188 + $0xa8] sm:$0xff]
      %v677 = vld [vmem:[%s188 + $0xb0] sm:$0xff]
      %v678 = vld [vmem:[%s188 + $0xb8] sm:$0xff]
      %v679 = vld [vmem:[%s188 + $0xc0] sm:$0xff]
      %v680 = vld [vmem:[%s188 + $0xc8] sm:$0xff]
      %v681 = vld [vmem:[%s188 + $0xd0] sm:$0xff]
      %v682 = vld [vmem:[%s188 + $0xd8] sm:$0xff]
      %v683 = vld [vmem:[%s188 + $0xe0] sm:$0xff]
      %v684 = vld [vmem:[%s188 + $0xe8] sm:$0xff]
      %v685 = vld [vmem:[%s188 + $0xf0] sm:$0xff]
      %v686 = vld [vmem:[%s188 + $0xf8] sm:$0xff]
      %v687 = vld [vmem:[%s188 + $0x100] sm:$0xff]
      %v688 = vld [vmem:[%s188 + $0x108] sm:$0xff]
      %v689 = vld [vmem:[%s188 + $0x110] sm:$0xff]
      %v690 = vld [vmem:[%s188 + $0x118] sm:$0xff]
      %v691 = vld [vmem:[%s188 + $0x120] sm:$0xff]
      %v692 = vld [vmem:[%s188 + $0x128] sm:$0xff]
      %v693 = vld [vmem:[%s188 + $0x130] sm:$0xff]
      %v694 = vld [vmem:[%s188 + $0x138] sm:$0xff]
      %v695 = vld [vmem:[%s188 + $0x140] sm:$0xff]
      %v696 = vld [vmem:[%s188 + $0x148] sm:$0xff]
      %v697 = vld [vmem:[%s188 + $0x150] sm:$0xff]
      %v698 = vld [vmem:[%s188 + $0x158] sm:$0xff]
      %v699 = vld [vmem:[%s188 + $0x160] sm:$0xff]
      %v700 = vld [vmem:[%s188 + $0x168] sm:$0xff]
      %v701 = vld [vmem:[%s188 + $0x170] sm:$0xff]
      %v702 = vld [vmem:[%s188 + $0x178] sm:$0xff]
      %v703 = vld [vmem:[%s188 + $0x180] sm:$0xff]
      %v704 = vld [vmem:[%s188 + $0x188] sm:$0xff]
      %v705 = vld [vmem:[%s188 + $0x190] sm:$0xff]
      %v706 = vld [vmem:[%s188 + $0x198] sm:$0xff]
      %v707 = vld [vmem:[%s188 + $0x1a0] sm:$0xff]
      %v708 = vld [vmem:[%s188 + $0x1a8] sm:$0xff]
      %v709 = vld [vmem:[%s188 + $0x1b0] sm:$0xff]
      %v710 = vld [vmem:[%s188 + $0x1b8] sm:$0xff]
      %v711 = vld [vmem:[%s188 + $0x1c0] sm:$0xff]
      %v712 = vld [vmem:[%s188 + $0x1c8] sm:$0xff]
      %v713 = vld [vmem:[%s188 + $0x1d0] sm:$0xff]
      %v714 = vld [vmem:[%s188 + $0x1d8] sm:$0xff]
      %v715 = vld [vmem:[%s188 + $0x1e0] sm:$0xff]
      %v716 = vld [vmem:[%s188 + $0x1e8] sm:$0xff]
      %v717 = vld [vmem:[%s188 + $0x1f0] sm:$0xff]
      %v718 = vld [vmem:[%s188 + $0x1f8] sm:$0xff]
      %720 = vset.pattern.permute.xlu0 0
      %721 = vperm.xlu0 %720, %v655
      %v722 = vpop.permute.xlu0 %721
      %725 = vset.pattern.permute.xlu0 0
      %726 = vperm.xlu0 %725, %v656
      %v727 = vpop.permute.xlu0 %726
      %730 = vset.pattern.permute.xlu0 0
      %731 = vperm.xlu0 %730, %v657
      %v732 = vpop.permute.xlu0 %731
      %735 = vset.pattern.permute.xlu0 0
      %736 = vperm.xlu0 %735, %v658
      %v737 = vpop.permute.xlu0 %736
      %740 = vset.pattern.permute.xlu0 0
      %741 = vperm.xlu0 %740, %v659
      %v742 = vpop.permute.xlu0 %741
      %745 = vset.pattern.permute.xlu0 0
      %746 = vperm.xlu0 %745, %v660
      %v747 = vpop.permute.xlu0 %746
      %750 = vset.pattern.permute.xlu0 0
      %751 = vperm.xlu0 %750, %v661
      %v752 = vpop.permute.xlu0 %751
      %755 = vset.pattern.permute.xlu0 0
      %756 = vperm.xlu0 %755, %v662
      %v757 = vpop.permute.xlu0 %756
      %760 = vset.pattern.permute.xlu0 0
      %761 = vperm.xlu0 %760, %v663
      %v762 = vpop.permute.xlu0 %761
      %765 = vset.pattern.permute.xlu0 0
      %766 = vperm.xlu0 %765, %v664
      %v767 = vpop.permute.xlu0 %766
      %770 = vset.pattern.permute.xlu0 0
      %771 = vperm.xlu0 %770, %v665
      %v772 = vpop.permute.xlu0 %771
      %775 = vset.pattern.permute.xlu0 0
      %776 = vperm.xlu0 %775, %v666
      %v777 = vpop.permute.xlu0 %776
      %780 = vset.pattern.permute.xlu0 0
      %781 = vperm.xlu0 %780, %v667
      %v782 = vpop.permute.xlu0 %781
      %785 = vset.pattern.permute.xlu0 0
      %786 = vperm.xlu0 %785, %v668
      %v787 = vpop.permute.xlu0 %786
      %790 = vset.pattern.permute.xlu0 0
      %791 = vperm.xlu0 %790, %v669
      %v792 = vpop.permute.xlu0 %791
      %795 = vset.pattern.permute.xlu0 0
      %796 = vperm.xlu0 %795, %v670
      %v797 = vpop.permute.xlu0 %796
      %800 = vset.pattern.permute.xlu0 0
      %801 = vperm.xlu0 %800, %v671
      %v802 = vpop.permute.xlu0 %801
      %805 = vset.pattern.permute.xlu0 0
      %806 = vperm.xlu0 %805, %v672
      %v807 = vpop.permute.xlu0 %806
      %810 = vset.pattern.permute.xlu0 0
      %811 = vperm.xlu0 %810, %v673
      %v812 = vpop.permute.xlu0 %811
      %815 = vset.pattern.permute.xlu0 0
      %816 = vperm.xlu0 %815, %v674
      %v817 = vpop.permute.xlu0 %816
      %820 = vset.pattern.permute.xlu0 0
      %821 = vperm.xlu0 %820, %v675
      %v822 = vpop.permute.xlu0 %821
      %825 = vset.pattern.permute.xlu0 0
      %826 = vperm.xlu0 %825, %v676
      %v827 = vpop.permute.xlu0 %826
      %830 = vset.pattern.permute.xlu0 0
      %831 = vperm.xlu0 %830, %v677
      %v832 = vpop.permute.xlu0 %831
      %835 = vset.pattern.permute.xlu0 0
      %836 = vperm.xlu0 %835, %v678
      %v837 = vpop.permute.xlu0 %836
      %840 = vset.pattern.permute.xlu0 0
      %841 = vperm.xlu0 %840, %v679
      %v842 = vpop.permute.xlu0 %841
      %845 = vset.pattern.permute.xlu0 0
      %846 = vperm.xlu0 %845, %v680
      %v847 = vpop.permute.xlu0 %846
      %850 = vset.pattern.permute.xlu0 0
      %851 = vperm.xlu0 %850, %v681
      %v852 = vpop.permute.xlu0 %851
      %855 = vset.pattern.permute.xlu0 0
      %856 = vperm.xlu0 %855, %v682
      %v857 = vpop.permute.xlu0 %856
      %860 = vset.pattern.permute.xlu0 0
      %861 = vperm.xlu0 %860, %v683
      %v862 = vpop.permute.xlu0 %861
      %865 = vset.pattern.permute.xlu0 0
      %866 = vperm.xlu0 %865, %v684
      %v867 = vpop.permute.xlu0 %866
      %870 = vset.pattern.permute.xlu0 0
      %871 = vperm.xlu0 %870, %v685
      %v872 = vpop.permute.xlu0 %871
      %875 = vset.pattern.permute.xlu0 0
      %876 = vperm.xlu0 %875, %v686
      %v877 = vpop.permute.xlu0 %876
      %880 = vset.pattern.permute.xlu0 0
      %881 = vperm.xlu0 %880, %v687
      %v882 = vpop.permute.xlu0 %881
      %885 = vset.pattern.permute.xlu0 0
      %886 = vperm.xlu0 %885, %v688
      %v887 = vpop.permute.xlu0 %886
      %890 = vset.pattern.permute.xlu0 0
      %891 = vperm.xlu0 %890, %v689
      %v892 = vpop.permute.xlu0 %891
      %895 = vset.pattern.permute.xlu0 0
      %896 = vperm.xlu0 %895, %v690
      %v897 = vpop.permute.xlu0 %896
      %900 = vset.pattern.permute.xlu0 0
      %901 = vperm.xlu0 %900, %v691
      %v902 = vpop.permute.xlu0 %901
      %905 = vset.pattern.permute.xlu0 0
      %906 = vperm.xlu0 %905, %v692
      %v907 = vpop.permute.xlu0 %906
      %910 = vset.pattern.permute.xlu0 0
      %911 = vperm.xlu0 %910, %v693
      %v912 = vpop.permute.xlu0 %911
      %915 = vset.pattern.permute.xlu0 0
      %916 = vperm.xlu0 %915, %v694
      %v917 = vpop.permute.xlu0 %916
      %920 = vset.pattern.permute.xlu0 0
      %921 = vperm.xlu0 %920, %v695
      %v922 = vpop.permute.xlu0 %921
      %925 = vset.pattern.permute.xlu0 0
      %926 = vperm.xlu0 %925, %v696
      %v927 = vpop.permute.xlu0 %926
      %930 = vset.pattern.permute.xlu0 0
      %931 = vperm.xlu0 %930, %v697
      %v932 = vpop.permute.xlu0 %931
      %935 = vset.pattern.permute.xlu0 0
      %936 = vperm.xlu0 %935, %v698
      %v937 = vpop.permute.xlu0 %936
      %940 = vset.pattern.permute.xlu0 0
      %941 = vperm.xlu0 %940, %v699
      %v942 = vpop.permute.xlu0 %941
      %945 = vset.pattern.permute.xlu0 0
      %946 = vperm.xlu0 %945, %v700
      %v947 = vpop.permute.xlu0 %946
      %950 = vset.pattern.permute.xlu0 0
      %951 = vperm.xlu0 %950, %v701
      %v952 = vpop.permute.xlu0 %951
      %955 = vset.pattern.permute.xlu0 0
      %956 = vperm.xlu0 %955, %v702
      %v957 = vpop.permute.xlu0 %956
      %960 = vset.pattern.permute.xlu0 0
      %961 = vperm.xlu0 %960, %v703
      %v962 = vpop.permute.xlu0 %961
      %965 = vset.pattern.permute.xlu0 0
      %966 = vperm.xlu0 %965, %v704
      %v967 = vpop.permute.xlu0 %966
      %970 = vset.pattern.permute.xlu0 0
      %971 = vperm.xlu0 %970, %v705
      %v972 = vpop.permute.xlu0 %971
      %975 = vset.pattern.permute.xlu0 0
      %976 = vperm.xlu0 %975, %v706
      %v977 = vpop.permute.xlu0 %976
      %980 = vset.pattern.permute.xlu0 0
      %981 = vperm.xlu0 %980, %v707
      %v982 = vpop.permute.xlu0 %981
      %985 = vset.pattern.permute.xlu0 0
      %986 = vperm.xlu0 %985, %v708
      %v987 = vpop.permute.xlu0 %986
      %990 = vset.pattern.permute.xlu0 0
      %991 = vperm.xlu0 %990, %v709
      %v992 = vpop.permute.xlu0 %991
      %995 = vset.pattern.permute.xlu0 0
      %996 = vperm.xlu0 %995, %v710
      %v997 = vpop.permute.xlu0 %996
      %1000 = vset.pattern.permute.xlu0 0
      %1001 = vperm.xlu0 %1000, %v711
      %v1002 = vpop.permute.xlu0 %1001
      %1005 = vset.pattern.permute.xlu0 0
      %1006 = vperm.xlu0 %1005, %v712
      %v1007 = vpop.permute.xlu0 %1006
      %1010 = vset.pattern.permute.xlu0 0
      %1011 = vperm.xlu0 %1010, %v713
      %v1012 = vpop.permute.xlu0 %1011
      %1015 = vset.pattern.permute.xlu0 0
      %1016 = vperm.xlu0 %1015, %v714
      %v1017 = vpop.permute.xlu0 %1016
      %1020 = vset.pattern.permute.xlu0 0
      %1021 = vperm.xlu0 %1020, %v715
      %v1022 = vpop.permute.xlu0 %1021
      %1025 = vset.pattern.permute.xlu0 0
      %1026 = vperm.xlu0 %1025, %v716
      %v1027 = vpop.permute.xlu0 %1026
      %1030 = vset.pattern.permute.xlu0 0
      %1031 = vperm.xlu0 %1030, %v717
      %v1032 = vpop.permute.xlu0 %1031
      %1035 = vset.pattern.permute.xlu0 0
      %1036 = vperm.xlu0 %1035, %v718
      %v1037 = vpop.permute.xlu0 %1036
      %v1039 = vmul.f32 %v591, %v722
      %v1040 = vmul.f32 %v592, %v727
      %v1041 = vmul.f32 %v593, %v732
      %v1042 = vmul.f32 %v594, %v737
      %v1043 = vmul.f32 %v595, %v742
      %v1044 = vmul.f32 %v596, %v747
      %v1045 = vmul.f32 %v597, %v752
      %v1046 = vmul.f32 %v598, %v757
      %v1047 = vmul.f32 %v599, %v762
      %v1048 = vmul.f32 %v600, %v767
      %v1049 = vmul.f32 %v601, %v772
      %v1050 = vmul.f32 %v602, %v777
      %v1051 = vmul.f32 %v603, %v782
      %v1052 = vmul.f32 %v604, %v787
      %v1053 = vmul.f32 %v605, %v792
      %v1054 = vmul.f32 %v606, %v797
      %v1055 = vmul.f32 %v607, %v802
      %v1056 = vmul.f32 %v608, %v807
      %v1057 = vmul.f32 %v609, %v812
      %v1058 = vmul.f32 %v610, %v817
      %v1059 = vmul.f32 %v611, %v822
      %v1060 = vmul.f32 %v612, %v827
      %v1061 = vmul.f32 %v613, %v832
      %v1062 = vmul.f32 %v614, %v837
      %v1063 = vmul.f32 %v615, %v842
      %v1064 = vmul.f32 %v616, %v847
      %v1065 = vmul.f32 %v617, %v852
      %v1066 = vmul.f32 %v618, %v857
      %v1067 = vmul.f32 %v619, %v862
      %v1068 = vmul.f32 %v620, %v867
      %v1069 = vmul.f32 %v621, %v872
      %v1070 = vmul.f32 %v622, %v877
      %v1071 = vmul.f32 %v623, %v882
      %v1072 = vmul.f32 %v624, %v887
      %v1073 = vmul.f32 %v625, %v892
      %v1074 = vmul.f32 %v626, %v897
      %v1075 = vmul.f32 %v627, %v902
      %v1076 = vmul.f32 %v628, %v907
      %v1077 = vmul.f32 %v629, %v912
      %v1078 = vmul.f32 %v630, %v917
      %v1079 = vmul.f32 %v631, %v922
      %v1080 = vmul.f32 %v632, %v927
      %v1081 = vmul.f32 %v633, %v932
      %v1082 = vmul.f32 %v634, %v937
      %v1083 = vmul.f32 %v635, %v942
      %v1084 = vmul.f32 %v636, %v947
      %v1085 = vmul.f32 %v637, %v952
      %v1086 = vmul.f32 %v638, %v957
      %v1087 = vmul.f32 %v639, %v962
      %v1088 = vmul.f32 %v640, %v967
      %v1089 = vmul.f32 %v641, %v972
      %v1090 = vmul.f32 %v642, %v977
      %v1091 = vmul.f32 %v643, %v982
      %v1092 = vmul.f32 %v644, %v987
      %v1093 = vmul.f32 %v645, %v992
      %v1094 = vmul.f32 %v646, %v997
      %v1095 = vmul.f32 %v647, %v1002
      %v1096 = vmul.f32 %v648, %v1007
      %v1097 = vmul.f32 %v649, %v1012
      %v1098 = vmul.f32 %v650, %v1017
      %v1099 = vmul.f32 %v651, %v1022
      %v1100 = vmul.f32 %v652, %v1027
      %v1101 = vmul.f32 %v653, %v1032
      %v1102 = vmul.f32 %v654, %v1037
      %v1103 = vadd.f32 %v1039, 0.0
      %v1104 = vadd.f32 %v1040, 0.0
      %v1105 = vadd.f32 %v1041, 0.0
      %v1106 = vadd.f32 %v1042, 0.0
      %v1107 = vadd.f32 %v1043, 0.0
      %v1108 = vadd.f32 %v1044, 0.0
      %v1109 = vadd.f32 %v1045, 0.0
      %v1110 = vadd.f32 %v1046, 0.0
      %v1111 = vadd.f32 %v1047, 0.0
      %v1112 = vadd.f32 %v1048, 0.0
      %v1113 = vadd.f32 %v1049, 0.0
      %v1114 = vadd.f32 %v1050, 0.0
      %v1115 = vadd.f32 %v1051, 0.0
      %v1116 = vadd.f32 %v1052, 0.0
      %v1117 = vadd.f32 %v1053, 0.0
      %v1118 = vadd.f32 %v1054, 0.0
      %v1119 = vadd.f32 %v1055, 0.0
      %v1120 = vadd.f32 %v1056, 0.0
      %v1121 = vadd.f32 %v1057, 0.0
      %v1122 = vadd.f32 %v1058, 0.0
      %v1123 = vadd.f32 %v1059, 0.0
      %v1124 = vadd.f32 %v1060, 0.0
      %v1125 = vadd.f32 %v1061, 0.0
      %v1126 = vadd.f32 %v1062, 0.0
      %v1127 = vadd.f32 %v1063, 0.0
      %v1128 = vadd.f32 %v1064, 0.0
      %v1129 = vadd.f32 %v1065, 0.0
      %v1130 = vadd.f32 %v1066, 0.0
      %v1131 = vadd.f32 %v1067, 0.0
      %v1132 = vadd.f32 %v1068, 0.0
      %v1133 = vadd.f32 %v1069, 0.0
      %v1134 = vadd.f32 %v1070, 0.0
      %v1135 = vadd.f32 %v1071, 0.0
      %v1136 = vadd.f32 %v1072, 0.0
      %v1137 = vadd.f32 %v1073, 0.0
      %v1138 = vadd.f32 %v1074, 0.0
      %v1139 = vadd.f32 %v1075, 0.0
      %v1140 = vadd.f32 %v1076, 0.0
      %v1141 = vadd.f32 %v1077, 0.0
      %v1142 = vadd.f32 %v1078, 0.0
      %v1143 = vadd.f32 %v1079, 0.0
      %v1144 = vadd.f32 %v1080, 0.0
      %v1145 = vadd.f32 %v1081, 0.0
      %v1146 = vadd.f32 %v1082, 0.0
      %v1147 = vadd.f32 %v1083, 0.0
      %v1148 = vadd.f32 %v1084, 0.0
      %v1149 = vadd.f32 %v1085, 0.0
      %v1150 = vadd.f32 %v1086, 0.0
      %v1151 = vadd.f32 %v1087, 0.0
      %v1152 = vadd.f32 %v1088, 0.0
      %v1153 = vadd.f32 %v1089, 0.0
      %v1154 = vadd.f32 %v1090, 0.0
      %v1155 = vadd.f32 %v1091, 0.0
      %v1156 = vadd.f32 %v1092, 0.0
      %v1157 = vadd.f32 %v1093, 0.0
      %v1158 = vadd.f32 %v1094, 0.0
      %v1159 = vadd.f32 %v1095, 0.0
      %v1160 = vadd.f32 %v1096, 0.0
      %v1161 = vadd.f32 %v1097, 0.0
      %v1162 = vadd.f32 %v1098, 0.0
      %v1163 = vadd.f32 %v1099, 0.0
      %v1164 = vadd.f32 %v1100, 0.0
      %v1165 = vadd.f32 %v1101, 0.0
      %v1166 = vadd.f32 %v1102, 0.0
      %1167 = vset.pattern.permute.xlu0 1
      %1168 = vperm.xlu0 %1167, %v207
      %v1169 = vpop.permute.xlu0 %1168
      %1170 = vset.pattern.permute.xlu0 1
      %1171 = vperm.xlu0 %1170, %v208
      %v1172 = vpop.permute.xlu0 %1171
      %1173 = vset.pattern.permute.xlu0 1
      %1174 = vperm.xlu0 %1173, %v209
      %v1175 = vpop.permute.xlu0 %1174
      %1176 = vset.pattern.permute.xlu0 1
      %1177 = vperm.xlu0 %1176, %v210
      %v1178 = vpop.permute.xlu0 %1177
      %1179 = vset.pattern.permute.xlu0 1
      %1180 = vperm.xlu0 %1179, %v211
      %v1181 = vpop.permute.xlu0 %1180
      %1182 = vset.pattern.permute.xlu0 1
      %1183 = vperm.xlu0 %1182, %v212
      %v1184 = vpop.permute.xlu0 %1183
      %1185 = vset.pattern.permute.xlu0 1
      %1186 = vperm.xlu0 %1185, %v213
      %v1187 = vpop.permute.xlu0 %1186
      %1188 = vset.pattern.permute.xlu0 1
      %1189 = vperm.xlu0 %1188, %v214
      %v1190 = vpop.permute.xlu0 %1189
      %1191 = vset.pattern.permute.xlu0 1
      %1192 = vperm.xlu0 %1191, %v215
      %v1193 = vpop.permute.xlu0 %1192
      %1194 = vset.pattern.permute.xlu0 1
      %1195 = vperm.xlu0 %1194, %v216
      %v1196 = vpop.permute.xlu0 %1195
      %1197 = vset.pattern.permute.xlu0 1
      %1198 = vperm.xlu0 %1197, %v217
      %v1199 = vpop.permute.xlu0 %1198
      %1200 = vset.pattern.permute.xlu0 1
      %1201 = vperm.xlu0 %1200, %v218
      %v1202 = vpop.permute.xlu0 %1201
      %1203 = vset.pattern.permute.xlu0 1
      %1204 = vperm.xlu0 %1203, %v219
      %v1205 = vpop.permute.xlu0 %1204
      %1206 = vset.pattern.permute.xlu0 1
      %1207 = vperm.xlu0 %1206, %v220
      %v1208 = vpop.permute.xlu0 %1207
      %1209 = vset.pattern.permute.xlu0 1
      %1210 = vperm.xlu0 %1209, %v221
      %v1211 = vpop.permute.xlu0 %1210
      %1212 = vset.pattern.permute.xlu0 1
      %1213 = vperm.xlu0 %1212, %v222
      %v1214 = vpop.permute.xlu0 %1213
      %1215 = vset.pattern.permute.xlu0 1
      %1216 = vperm.xlu0 %1215, %v223
      %v1217 = vpop.permute.xlu0 %1216
      %1218 = vset.pattern.permute.xlu0 1
      %1219 = vperm.xlu0 %1218, %v224
      %v1220 = vpop.permute.xlu0 %1219
      %1221 = vset.pattern.permute.xlu0 1
      %1222 = vperm.xlu0 %1221, %v225
      %v1223 = vpop.permute.xlu0 %1222
      %1224 = vset.pattern.permute.xlu0 1
      %1225 = vperm.xlu0 %1224, %v226
      %v1226 = vpop.permute.xlu0 %1225
      %1227 = vset.pattern.permute.xlu0 1
      %1228 = vperm.xlu0 %1227, %v227
      %v1229 = vpop.permute.xlu0 %1228
      %1230 = vset.pattern.permute.xlu0 1
      %1231 = vperm.xlu0 %1230, %v228
      %v1232 = vpop.permute.xlu0 %1231
      %1233 = vset.pattern.permute.xlu0 1
      %1234 = vperm.xlu0 %1233, %v229
      %v1235 = vpop.permute.xlu0 %1234
      %1236 = vset.pattern.permute.xlu0 1
      %1237 = vperm.xlu0 %1236, %v230
      %v1238 = vpop.permute.xlu0 %1237
      %1239 = vset.pattern.permute.xlu0 1
      %1240 = vperm.xlu0 %1239, %v231
      %v1241 = vpop.permute.xlu0 %1240
      %1242 = vset.pattern.permute.xlu0 1
      %1243 = vperm.xlu0 %1242, %v232
      %v1244 = vpop.permute.xlu0 %1243
      %1245 = vset.pattern.permute.xlu0 1
      %1246 = vperm.xlu0 %1245, %v233
      %v1247 = vpop.permute.xlu0 %1246
      %1248 = vset.pattern.permute.xlu0 1
      %1249 = vperm.xlu0 %1248, %v234
      %v1250 = vpop.permute.xlu0 %1249
      %1251 = vset.pattern.permute.xlu0 1
      %1252 = vperm.xlu0 %1251, %v235
      %v1253 = vpop.permute.xlu0 %1252
      %1254 = vset.pattern.permute.xlu0 1
      %1255 = vperm.xlu0 %1254, %v236
      %v1256 = vpop.permute.xlu0 %1255
      %1257 = vset.pattern.permute.xlu0 1
      %1258 = vperm.xlu0 %1257, %v237
      %v1259 = vpop.permute.xlu0 %1258
      %1260 = vset.pattern.permute.xlu0 1
      %1261 = vperm.xlu0 %1260, %v238
      %v1262 = vpop.permute.xlu0 %1261
      %1263 = vset.pattern.permute.xlu0 1
      %1264 = vperm.xlu0 %1263, %v239
      %v1265 = vpop.permute.xlu0 %1264
      %1266 = vset.pattern.permute.xlu0 1
      %1267 = vperm.xlu0 %1266, %v240
      %v1268 = vpop.permute.xlu0 %1267
      %1269 = vset.pattern.permute.xlu0 1
      %1270 = vperm.xlu0 %1269, %v241
      %v1271 = vpop.permute.xlu0 %1270
      %1272 = vset.pattern.permute.xlu0 1
      %1273 = vperm.xlu0 %1272, %v242
      %v1274 = vpop.permute.xlu0 %1273
      %1275 = vset.pattern.permute.xlu0 1
      %1276 = vperm.xlu0 %1275, %v243
      %v1277 = vpop.permute.xlu0 %1276
      %1278 = vset.pattern.permute.xlu0 1
      %1279 = vperm.xlu0 %1278, %v244
      %v1280 = vpop.permute.xlu0 %1279
      %1281 = vset.pattern.permute.xlu0 1
      %1282 = vperm.xlu0 %1281, %v245
      %v1283 = vpop.permute.xlu0 %1282
      %1284 = vset.pattern.permute.xlu0 1
      %1285 = vperm.xlu0 %1284, %v246
      %v1286 = vpop.permute.xlu0 %1285
      %1287 = vset.pattern.permute.xlu0 1
      %1288 = vperm.xlu0 %1287, %v247
      %v1289 = vpop.permute.xlu0 %1288
      %1290 = vset.pattern.permute.xlu0 1
      %1291 = vperm.xlu0 %1290, %v248
      %v1292 = vpop.permute.xlu0 %1291
      %1293 = vset.pattern.permute.xlu0 1
      %1294 = vperm.xlu0 %1293, %v249
      %v1295 = vpop.permute.xlu0 %1294
      %1296 = vset.pattern.permute.xlu0 1
      %1297 = vperm.xlu0 %1296, %v250
      %v1298 = vpop.permute.xlu0 %1297
      %1299 = vset.pattern.permute.xlu0 1
      %1300 = vperm.xlu0 %1299, %v251
      %v1301 = vpop.permute.xlu0 %1300
      %1302 = vset.pattern.permute.xlu0 1
      %1303 = vperm.xlu0 %1302, %v252
      %v1304 = vpop.permute.xlu0 %1303
      %1305 = vset.pattern.permute.xlu0 1
      %1306 = vperm.xlu0 %1305, %v253
      %v1307 = vpop.permute.xlu0 %1306
      %1308 = vset.pattern.permute.xlu0 1
      %1309 = vperm.xlu0 %1308, %v254
      %v1310 = vpop.permute.xlu0 %1309
      %1311 = vset.pattern.permute.xlu0 1
      %1312 = vperm.xlu0 %1311, %v255
      %v1313 = vpop.permute.xlu0 %1312
      %1314 = vset.pattern.permute.xlu0 1
      %1315 = vperm.xlu0 %1314, %v256
      %v1316 = vpop.permute.xlu0 %1315
      %1317 = vset.pattern.permute.xlu0 1
      %1318 = vperm.xlu0 %1317, %v257
      %v1319 = vpop.permute.xlu0 %1318
      %1320 = vset.pattern.permute.xlu0 1
      %1321 = vperm.xlu0 %1320, %v258
      %v1322 = vpop.permute.xlu0 %1321
      %1323 = vset.pattern.permute.xlu0 1
      %1324 = vperm.xlu0 %1323, %v259
      %v1325 = vpop.permute.xlu0 %1324
      %1326 = vset.pattern.permute.xlu0 1
      %1327 = vperm.xlu0 %1326, %v260
      %v1328 = vpop.permute.xlu0 %1327
      %1329 = vset.pattern.permute.xlu0 1
      %1330 = vperm.xlu0 %1329, %v261
      %v1331 = vpop.permute.xlu0 %1330
      %1332 = vset.pattern.permute.xlu0 1
      %1333 = vperm.xlu0 %1332, %v262
      %v1334 = vpop.permute.xlu0 %1333
      %1335 = vset.pattern.permute.xlu0 1
      %1336 = vperm.xlu0 %1335, %v263
      %v1337 = vpop.permute.xlu0 %1336
      %1338 = vset.pattern.permute.xlu0 1
      %1339 = vperm.xlu0 %1338, %v264
      %v1340 = vpop.permute.xlu0 %1339
      %1341 = vset.pattern.permute.xlu0 1
      %1342 = vperm.xlu0 %1341, %v265
      %v1343 = vpop.permute.xlu0 %1342
      %1344 = vset.pattern.permute.xlu0 1
      %1345 = vperm.xlu0 %1344, %v266
      %v1346 = vpop.permute.xlu0 %1345
      %1347 = vset.pattern.permute.xlu0 1
      %1348 = vperm.xlu0 %1347, %v267
      %v1349 = vpop.permute.xlu0 %1348
      %1350 = vset.pattern.permute.xlu0 1
      %1351 = vperm.xlu0 %1350, %v268
      %v1352 = vpop.permute.xlu0 %1351
      %1353 = vset.pattern.permute.xlu0 1
      %1354 = vperm.xlu0 %1353, %v269
      %v1355 = vpop.permute.xlu0 %1354
      %1356 = vset.pattern.permute.xlu0 1
      %1357 = vperm.xlu0 %1356, %v270
      %v1358 = vpop.permute.xlu0 %1357
      %vm1359 = vcmp.eq.s32.totalorder %v1169, %v206
      %vm1360 = vcmp.eq.s32.totalorder %v1172, %v206
      %vm1361 = vcmp.eq.s32.totalorder %v1175, %v206
      %vm1362 = vcmp.eq.s32.totalorder %v1178, %v206
      %vm1363 = vcmp.eq.s32.totalorder %v1181, %v206
      %vm1364 = vcmp.eq.s32.totalorder %v1184, %v206
      %vm1365 = vcmp.eq.s32.totalorder %v1187, %v206
      %vm1366 = vcmp.eq.s32.totalorder %v1190, %v206
      %vm1367 = vcmp.eq.s32.totalorder %v1193, %v206
      %vm1368 = vcmp.eq.s32.totalorder %v1196, %v206
      %vm1369 = vcmp.eq.s32.totalorder %v1199, %v206
      %vm1370 = vcmp.eq.s32.totalorder %v1202, %v206
      %vm1371 = vcmp.eq.s32.totalorder %v1205, %v206
      %vm1372 = vcmp.eq.s32.totalorder %v1208, %v206
      %vm1373 = vcmp.eq.s32.totalorder %v1211, %v206
      %vm1374 = vcmp.eq.s32.totalorder %v1214, %v206
      %vm1375 = vcmp.eq.s32.totalorder %v1217, %v206
      %vm1376 = vcmp.eq.s32.totalorder %v1220, %v206
      %vm1377 = vcmp.eq.s32.totalorder %v1223, %v206
      %vm1378 = vcmp.eq.s32.totalorder %v1226, %v206
      %vm1379 = vcmp.eq.s32.totalorder %v1229, %v206
      %vm1380 = vcmp.eq.s32.totalorder %v1232, %v206
      %vm1381 = vcmp.eq.s32.totalorder %v1235, %v206
      %vm1382 = vcmp.eq.s32.totalorder %v1238, %v206
      %vm1383 = vcmp.eq.s32.totalorder %v1241, %v206
      %vm1384 = vcmp.eq.s32.totalorder %v1244, %v206
      %vm1385 = vcmp.eq.s32.totalorder %v1247, %v206
      %vm1386 = vcmp.eq.s32.totalorder %v1250, %v206
      %vm1387 = vcmp.eq.s32.totalorder %v1253, %v206
      %vm1388 = vcmp.eq.s32.totalorder %v1256, %v206
      %vm1389 = vcmp.eq.s32.totalorder %v1259, %v206
      %vm1390 = vcmp.eq.s32.totalorder %v1262, %v206
      %vm1391 = vcmp.eq.s32.totalorder %v1265, %v206
      %vm1392 = vcmp.eq.s32.totalorder %v1268, %v206
      %vm1393 = vcmp.eq.s32.totalorder %v1271, %v206
      %vm1394 = vcmp.eq.s32.totalorder %v1274, %v206
      %vm1395 = vcmp.eq.s32.totalorder %v1277, %v206
      %vm1396 = vcmp.eq.s32.totalorder %v1280, %v206
      %vm1397 = vcmp.eq.s32.totalorder %v1283, %v206
      %vm1398 = vcmp.eq.s32.totalorder %v1286, %v206
      %vm1399 = vcmp.eq.s32.totalorder %v1289, %v206
      %vm1400 = vcmp.eq.s32.totalorder %v1292, %v206
      %vm1401 = vcmp.eq.s32.totalorder %v1295, %v206
      %vm1402 = vcmp.eq.s32.totalorder %v1298, %v206
      %vm1403 = vcmp.eq.s32.totalorder %v1301, %v206
      %vm1404 = vcmp.eq.s32.totalorder %v1304, %v206
      %vm1405 = vcmp.eq.s32.totalorder %v1307, %v206
      %vm1406 = vcmp.eq.s32.totalorder %v1310, %v206
      %vm1407 = vcmp.eq.s32.totalorder %v1313, %v206
      %vm1408 = vcmp.eq.s32.totalorder %v1316, %v206
      %vm1409 = vcmp.eq.s32.totalorder %v1319, %v206
      %vm1410 = vcmp.eq.s32.totalorder %v1322, %v206
      %vm1411 = vcmp.eq.s32.totalorder %v1325, %v206
      %vm1412 = vcmp.eq.s32.totalorder %v1328, %v206
      %vm1413 = vcmp.eq.s32.totalorder %v1331, %v206
      %vm1414 = vcmp.eq.s32.totalorder %v1334, %v206
      %vm1415 = vcmp.eq.s32.totalorder %v1337, %v206
      %vm1416 = vcmp.eq.s32.totalorder %v1340, %v206
      %vm1417 = vcmp.eq.s32.totalorder %v1343, %v206
      %vm1418 = vcmp.eq.s32.totalorder %v1346, %v206
      %vm1419 = vcmp.eq.s32.totalorder %v1349, %v206
      %vm1420 = vcmp.eq.s32.totalorder %v1352, %v206
      %vm1421 = vcmp.eq.s32.totalorder %v1355, %v206
      %vm1422 = vcmp.eq.s32.totalorder %v1358, %v206
      %v1423 = vsel %vm1359, 1, 0
      %v1424 = vsel %vm1360, 1, 0
      %v1425 = vsel %vm1361, 1, 0
      %v1426 = vsel %vm1362, 1, 0
      %v1427 = vsel %vm1363, 1, 0
      %v1428 = vsel %vm1364, 1, 0
      %v1429 = vsel %vm1365, 1, 0
      %v1430 = vsel %vm1366, 1, 0
      %v1431 = vsel %vm1367, 1, 0
      %v1432 = vsel %vm1368, 1, 0
      %v1433 = vsel %vm1369, 1, 0
      %v1434 = vsel %vm1370, 1, 0
      %v1435 = vsel %vm1371, 1, 0
      %v1436 = vsel %vm1372, 1, 0
      %v1437 = vsel %vm1373, 1, 0
      %v1438 = vsel %vm1374, 1, 0
      %v1439 = vsel %vm1375, 1, 0
      %v1440 = vsel %vm1376, 1, 0
      %v1441 = vsel %vm1377, 1, 0
      %v1442 = vsel %vm1378, 1, 0
      %v1443 = vsel %vm1379, 1, 0
      %v1444 = vsel %vm1380, 1, 0
      %v1445 = vsel %vm1381, 1, 0
      %v1446 = vsel %vm1382, 1, 0
      %v1447 = vsel %vm1383, 1, 0
      %v1448 = vsel %vm1384, 1, 0
      %v1449 = vsel %vm1385, 1, 0
      %v1450 = vsel %vm1386, 1, 0
      %v1451 = vsel %vm1387, 1, 0
      %v1452 = vsel %vm1388, 1, 0
      %v1453 = vsel %vm1389, 1, 0
      %v1454 = vsel %vm1390, 1, 0
      %v1455 = vsel %vm1391, 1, 0
      %v1456 = vsel %vm1392, 1, 0
      %v1457 = vsel %vm1393, 1, 0
      %v1458 = vsel %vm1394, 1, 0
      %v1459 = vsel %vm1395, 1, 0
      %v1460 = vsel %vm1396, 1, 0
      %v1461 = vsel %vm1397, 1, 0
      %v1462 = vsel %vm1398, 1, 0
      %v1463 = vsel %vm1399, 1, 0
      %v1464 = vsel %vm1400, 1, 0
      %v1465 = vsel %vm1401, 1, 0
      %v1466 = vsel %vm1402, 1, 0
      %v1467 = vsel %vm1403, 1, 0
      %v1468 = vsel %vm1404, 1, 0
      %v1469 = vsel %vm1405, 1, 0
      %v1470 = vsel %vm1406, 1, 0
      %v1471 = vsel %vm1407, 1, 0
      %v1472 = vsel %vm1408, 1, 0
      %v1473 = vsel %vm1409, 1, 0
      %v1474 = vsel %vm1410, 1, 0
      %v1475 = vsel %vm1411, 1, 0
      %v1476 = vsel %vm1412, 1, 0
      %v1477 = vsel %vm1413, 1, 0
      %v1478 = vsel %vm1414, 1, 0
      %v1479 = vsel %vm1415, 1, 0
      %v1480 = vsel %vm1416, 1, 0
      %v1481 = vsel %vm1417, 1, 0
      %v1482 = vsel %vm1418, 1, 0
      %v1483 = vsel %vm1419, 1, 0
      %v1484 = vsel %vm1420, 1, 0
      %v1485 = vsel %vm1421, 1, 0
      %v1486 = vsel %vm1422, 1, 0
      %v1487 = vcvt.s32.f32 %v1423
      %v1488 = vcvt.s32.f32 %v1424
      %v1489 = vcvt.s32.f32 %v1425
      %v1490 = vcvt.s32.f32 %v1426
      %v1491 = vcvt.s32.f32 %v1427
      %v1492 = vcvt.s32.f32 %v1428
      %v1493 = vcvt.s32.f32 %v1429
      %v1494 = vcvt.s32.f32 %v1430
      %v1495 = vcvt.s32.f32 %v1431
      %v1496 = vcvt.s32.f32 %v1432
      %v1497 = vcvt.s32.f32 %v1433
      %v1498 = vcvt.s32.f32 %v1434
      %v1499 = vcvt.s32.f32 %v1435
      %v1500 = vcvt.s32.f32 %v1436
      %v1501 = vcvt.s32.f32 %v1437
      %v1502 = vcvt.s32.f32 %v1438
      %v1503 = vcvt.s32.f32 %v1439
      %v1504 = vcvt.s32.f32 %v1440
      %v1505 = vcvt.s32.f32 %v1441
      %v1506 = vcvt.s32.f32 %v1442
      %v1507 = vcvt.s32.f32 %v1443
      %v1508 = vcvt.s32.f32 %v1444
      %v1509 = vcvt.s32.f32 %v1445
      %v1510 = vcvt.s32.f32 %v1446
      %v1511 = vcvt.s32.f32 %v1447
      %v1512 = vcvt.s32.f32 %v1448
      %v1513 = vcvt.s32.f32 %v1449
      %v1514 = vcvt.s32.f32 %v1450
      %v1515 = vcvt.s32.f32 %v1451
      %v1516 = vcvt.s32.f32 %v1452
      %v1517 = vcvt.s32.f32 %v1453
      %v1518 = vcvt.s32.f32 %v1454
      %v1519 = vcvt.s32.f32 %v1455
      %v1520 = vcvt.s32.f32 %v1456
      %v1521 = vcvt.s32.f32 %v1457
      %v1522 = vcvt.s32.f32 %v1458
      %v1523 = vcvt.s32.f32 %v1459
      %v1524 = vcvt.s32.f32 %v1460
      %v1525 = vcvt.s32.f32 %v1461
      %v1526 = vcvt.s32.f32 %v1462
      %v1527 = vcvt.s32.f32 %v1463
      %v1528 = vcvt.s32.f32 %v1464
      %v1529 = vcvt.s32.f32 %v1465
      %v1530 = vcvt.s32.f32 %v1466
      %v1531 = vcvt.s32.f32 %v1467
      %v1532 = vcvt.s32.f32 %v1468
      %v1533 = vcvt.s32.f32 %v1469
      %v1534 = vcvt.s32.f32 %v1470
      %v1535 = vcvt.s32.f32 %v1471
      %v1536 = vcvt.s32.f32 %v1472
      %v1537 = vcvt.s32.f32 %v1473
      %v1538 = vcvt.s32.f32 %v1474
      %v1539 = vcvt.s32.f32 %v1475
      %v1540 = vcvt.s32.f32 %v1476
      %v1541 = vcvt.s32.f32 %v1477
      %v1542 = vcvt.s32.f32 %v1478
      %v1543 = vcvt.s32.f32 %v1479
      %v1544 = vcvt.s32.f32 %v1480
      %v1545 = vcvt.s32.f32 %v1481
      %v1546 = vcvt.s32.f32 %v1482
      %v1547 = vcvt.s32.f32 %v1483
      %v1548 = vcvt.s32.f32 %v1484
      %v1549 = vcvt.s32.f32 %v1485
      %v1550 = vcvt.s32.f32 %v1486
      %1551 = vset.pattern.permute.xlu0 1
      %1552 = vperm.xlu0 %1551, %v655
      %v1553 = vpop.permute.xlu0 %1552
      %1555 = vset.pattern.permute.xlu0 1
      %1556 = vperm.xlu0 %1555, %v656
      %v1557 = vpop.permute.xlu0 %1556
      %1559 = vset.pattern.permute.xlu0 1
      %1560 = vperm.xlu0 %1559, %v657
      %v1561 = vpop.permute.xlu0 %1560
      %1563 = vset.pattern.permute.xlu0 1
      %1564 = vperm.xlu0 %1563, %v658
      %v1565 = vpop.permute.xlu0 %1564
      %1567 = vset.pattern.permute.xlu0 1
      %1568 = vperm.xlu0 %1567, %v659
      %v1569 = vpop.permute.xlu0 %1568
      %1571 = vset.pattern.permute.xlu0 1
      %1572 = vperm.xlu0 %1571, %v660
      %v1573 = vpop.permute.xlu0 %1572
      %1575 = vset.pattern.permute.xlu0 1
      %1576 = vperm.xlu0 %1575, %v661
      %v1577 = vpop.permute.xlu0 %1576
      %1579 = vset.pattern.permute.xlu0 1
      %1580 = vperm.xlu0 %1579, %v662
      %v1581 = vpop.permute.xlu0 %1580
      %1583 = vset.pattern.permute.xlu0 1
      %1584 = vperm.xlu0 %1583, %v663
      %v1585 = vpop.permute.xlu0 %1584
      %1587 = vset.pattern.permute.xlu0 1
      %1588 = vperm.xlu0 %1587, %v664
      %v1589 = vpop.permute.xlu0 %1588
      %1591 = vset.pattern.permute.xlu0 1
      %1592 = vperm.xlu0 %1591, %v665
      %v1593 = vpop.permute.xlu0 %1592
      %1595 = vset.pattern.permute.xlu0 1
      %1596 = vperm.xlu0 %1595, %v666
      %v1597 = vpop.permute.xlu0 %1596
      %1599 = vset.pattern.permute.xlu0 1
      %1600 = vperm.xlu0 %1599, %v667
      %v1601 = vpop.permute.xlu0 %1600
      %1603 = vset.pattern.permute.xlu0 1
      %1604 = vperm.xlu0 %1603, %v668
      %v1605 = vpop.permute.xlu0 %1604
      %1607 = vset.pattern.permute.xlu0 1
      %1608 = vperm.xlu0 %1607, %v669
      %v1609 = vpop.permute.xlu0 %1608
      %1611 = vset.pattern.permute.xlu0 1
      %1612 = vperm.xlu0 %1611, %v670
      %v1613 = vpop.permute.xlu0 %1612
      %1615 = vset.pattern.permute.xlu0 1
      %1616 = vperm.xlu0 %1615, %v671
      %v1617 = vpop.permute.xlu0 %1616
      %1619 = vset.pattern.permute.xlu0 1
      %1620 = vperm.xlu0 %1619, %v672
      %v1621 = vpop.permute.xlu0 %1620
      %1623 = vset.pattern.permute.xlu0 1
      %1624 = vperm.xlu0 %1623, %v673
      %v1625 = vpop.permute.xlu0 %1624
      %1627 = vset.pattern.permute.xlu0 1
      %1628 = vperm.xlu0 %1627, %v674
      %v1629 = vpop.permute.xlu0 %1628
      %1631 = vset.pattern.permute.xlu0 1
      %1632 = vperm.xlu0 %1631, %v675
      %v1633 = vpop.permute.xlu0 %1632
      %1635 = vset.pattern.permute.xlu0 1
      %1636 = vperm.xlu0 %1635, %v676
      %v1637 = vpop.permute.xlu0 %1636
      %1639 = vset.pattern.permute.xlu0 1
      %1640 = vperm.xlu0 %1639, %v677
      %v1641 = vpop.permute.xlu0 %1640
      %1643 = vset.pattern.permute.xlu0 1
      %1644 = vperm.xlu0 %1643, %v678
      %v1645 = vpop.permute.xlu0 %1644
      %1647 = vset.pattern.permute.xlu0 1
      %1648 = vperm.xlu0 %1647, %v679
      %v1649 = vpop.permute.xlu0 %1648
      %1651 = vset.pattern.permute.xlu0 1
      %1652 = vperm.xlu0 %1651, %v680
      %v1653 = vpop.permute.xlu0 %1652
      %1655 = vset.pattern.permute.xlu0 1
      %1656 = vperm.xlu0 %1655, %v681
      %v1657 = vpop.permute.xlu0 %1656
      %1659 = vset.pattern.permute.xlu0 1
      %1660 = vperm.xlu0 %1659, %v682
      %v1661 = vpop.permute.xlu0 %1660
      %1663 = vset.pattern.permute.xlu0 1
      %1664 = vperm.xlu0 %1663, %v683
      %v1665 = vpop.permute.xlu0 %1664
      %1667 = vset.pattern.permute.xlu0 1
      %1668 = vperm.xlu0 %1667, %v684
      %v1669 = vpop.permute.xlu0 %1668
      %1671 = vset.pattern.permute.xlu0 1
      %1672 = vperm.xlu0 %1671, %v685
      %v1673 = vpop.permute.xlu0 %1672
      %1675 = vset.pattern.permute.xlu0 1
      %1676 = vperm.xlu0 %1675, %v686
      %v1677 = vpop.permute.xlu0 %1676
      %1679 = vset.pattern.permute.xlu0 1
      %1680 = vperm.xlu0 %1679, %v687
      %v1681 = vpop.permute.xlu0 %1680
      %1683 = vset.pattern.permute.xlu0 1
      %1684 = vperm.xlu0 %1683, %v688
      %v1685 = vpop.permute.xlu0 %1684
      %1687 = vset.pattern.permute.xlu0 1
      %1688 = vperm.xlu0 %1687, %v689
      %v1689 = vpop.permute.xlu0 %1688
      %1691 = vset.pattern.permute.xlu0 1
      %1692 = vperm.xlu0 %1691, %v690
      %v1693 = vpop.permute.xlu0 %1692
      %1695 = vset.pattern.permute.xlu0 1
      %1696 = vperm.xlu0 %1695, %v691
      %v1697 = vpop.permute.xlu0 %1696
      %1699 = vset.pattern.permute.xlu0 1
      %1700 = vperm.xlu0 %1699, %v692
      %v1701 = vpop.permute.xlu0 %1700
      %1703 = vset.pattern.permute.xlu0 1
      %1704 = vperm.xlu0 %1703, %v693
      %v1705 = vpop.permute.xlu0 %1704
      %1707 = vset.pattern.permute.xlu0 1
      %1708 = vperm.xlu0 %1707, %v694
      %v1709 = vpop.permute.xlu0 %1708
      %1711 = vset.pattern.permute.xlu0 1
      %1712 = vperm.xlu0 %1711, %v695
      %v1713 = vpop.permute.xlu0 %1712
      %1715 = vset.pattern.permute.xlu0 1
      %1716 = vperm.xlu0 %1715, %v696
      %v1717 = vpop.permute.xlu0 %1716
      %1719 = vset.pattern.permute.xlu0 1
      %1720 = vperm.xlu0 %1719, %v697
      %v1721 = vpop.permute.xlu0 %1720
      %1723 = vset.pattern.permute.xlu0 1
      %1724 = vperm.xlu0 %1723, %v698
      %v1725 = vpop.permute.xlu0 %1724
      %1727 = vset.pattern.permute.xlu0 1
      %1728 = vperm.xlu0 %1727, %v699
      %v1729 = vpop.permute.xlu0 %1728
      %1731 = vset.pattern.permute.xlu0 1
      %1732 = vperm.xlu0 %1731, %v700
      %v1733 = vpop.permute.xlu0 %1732
      %1735 = vset.pattern.permute.xlu0 1
      %1736 = vperm.xlu0 %1735, %v701
      %v1737 = vpop.permute.xlu0 %1736
      %1739 = vset.pattern.permute.xlu0 1
      %1740 = vperm.xlu0 %1739, %v702
      %v1741 = vpop.permute.xlu0 %1740
      %1743 = vset.pattern.permute.xlu0 1
      %1744 = vperm.xlu0 %1743, %v703
      %v1745 = vpop.permute.xlu0 %1744
      %1747 = vset.pattern.permute.xlu0 1
      %1748 = vperm.xlu0 %1747, %v704
      %v1749 = vpop.permute.xlu0 %1748
      %1751 = vset.pattern.permute.xlu0 1
      %1752 = vperm.xlu0 %1751, %v705
      %v1753 = vpop.permute.xlu0 %1752
      %1755 = vset.pattern.permute.xlu0 1
      %1756 = vperm.xlu0 %1755, %v706
      %v1757 = vpop.permute.xlu0 %1756
      %1759 = vset.pattern.permute.xlu0 1
      %1760 = vperm.xlu0 %1759, %v707
      %v1761 = vpop.permute.xlu0 %1760
      %1763 = vset.pattern.permute.xlu0 1
      %1764 = vperm.xlu0 %1763, %v708
      %v1765 = vpop.permute.xlu0 %1764
      %1767 = vset.pattern.permute.xlu0 1
      %1768 = vperm.xlu0 %1767, %v709
      %v1769 = vpop.permute.xlu0 %1768
      %1771 = vset.pattern.permute.xlu0 1
      %1772 = vperm.xlu0 %1771, %v710
      %v1773 = vpop.permute.xlu0 %1772
      %1775 = vset.pattern.permute.xlu0 1
      %1776 = vperm.xlu0 %1775, %v711
      %v1777 = vpop.permute.xlu0 %1776
      %1779 = vset.pattern.permute.xlu0 1
      %1780 = vperm.xlu0 %1779, %v712
      %v1781 = vpop.permute.xlu0 %1780
      %1783 = vset.pattern.permute.xlu0 1
      %1784 = vperm.xlu0 %1783, %v713
      %v1785 = vpop.permute.xlu0 %1784
      %1787 = vset.pattern.permute.xlu0 1
      %1788 = vperm.xlu0 %1787, %v714
      %v1789 = vpop.permute.xlu0 %1788
      %1791 = vset.pattern.permute.xlu0 1
      %1792 = vperm.xlu0 %1791, %v715
      %v1793 = vpop.permute.xlu0 %1792
      %1795 = vset.pattern.permute.xlu0 1
      %1796 = vperm.xlu0 %1795, %v716
      %v1797 = vpop.permute.xlu0 %1796
      %1799 = vset.pattern.permute.xlu0 1
      %1800 = vperm.xlu0 %1799, %v717
      %v1801 = vpop.permute.xlu0 %1800
      %1803 = vset.pattern.permute.xlu0 1
      %1804 = vperm.xlu0 %1803, %v718
      %v1805 = vpop.permute.xlu0 %1804
      %v1807 = vmul.f32 %v1487, %v1553
      %v1808 = vmul.f32 %v1488, %v1557
      %v1809 = vmul.f32 %v1489, %v1561
      %v1810 = vmul.f32 %v1490, %v1565
      %v1811 = vmul.f32 %v1491, %v1569
      %v1812 = vmul.f32 %v1492, %v1573
      %v1813 = vmul.f32 %v1493, %v1577
      %v1814 = vmul.f32 %v1494, %v1581
      %v1815 = vmul.f32 %v1495, %v1585
      %v1816 = vmul.f32 %v1496, %v1589
      %v1817 = vmul.f32 %v1497, %v1593
      %v1818 = vmul.f32 %v1498, %v1597
      %v1819 = vmul.f32 %v1499, %v1601
      %v1820 = vmul.f32 %v1500, %v1605
      %v1821 = vmul.f32 %v1501, %v1609
      %v1822 = vmul.f32 %v1502, %v1613
      %v1823 = vmul.f32 %v1503, %v1617
      %v1824 = vmul.f32 %v1504, %v1621
      %v1825 = vmul.f32 %v1505, %v1625
      %v1826 = vmul.f32 %v1506, %v1629
      %v1827 = vmul.f32 %v1507, %v1633
      %v1828 = vmul.f32 %v1508, %v1637
      %v1829 = vmul.f32 %v1509, %v1641
      %v1830 = vmul.f32 %v1510, %v1645
      %v1831 = vmul.f32 %v1511, %v1649
      %v1832 = vmul.f32 %v1512, %v1653
      %v1833 = vmul.f32 %v1513, %v1657
      %v1834 = vmul.f32 %v1514, %v1661
      %v1835 = vmul.f32 %v1515, %v1665
      %v1836 = vmul.f32 %v1516, %v1669
      %v1837 = vmul.f32 %v1517, %v1673
      %v1838 = vmul.f32 %v1518, %v1677
      %v1839 = vmul.f32 %v1519, %v1681
      %v1840 = vmul.f32 %v1520, %v1685
      %v1841 = vmul.f32 %v1521, %v1689
      %v1842 = vmul.f32 %v1522, %v1693
      %v1843 = vmul.f32 %v1523, %v1697
      %v1844 = vmul.f32 %v1524, %v1701
      %v1845 = vmul.f32 %v1525, %v1705
      %v1846 = vmul.f32 %v1526, %v1709
      %v1847 = vmul.f32 %v1527, %v1713
      %v1848 = vmul.f32 %v1528, %v1717
      %v1849 = vmul.f32 %v1529, %v1721
      %v1850 = vmul.f32 %v1530, %v1725
      %v1851 = vmul.f32 %v1531, %v1729
      %v1852 = vmul.f32 %v1532, %v1733
      %v1853 = vmul.f32 %v1533, %v1737
      %v1854 = vmul.f32 %v1534, %v1741
      %v1855 = vmul.f32 %v1535, %v1745
      %v1856 = vmul.f32 %v1536, %v1749
      %v1857 = vmul.f32 %v1537, %v1753
      %v1858 = vmul.f32 %v1538, %v1757
      %v1859 = vmul.f32 %v1539, %v1761
      %v1860 = vmul.f32 %v1540, %v1765
      %v1861 = vmul.f32 %v1541, %v1769
      %v1862 = vmul.f32 %v1542, %v1773
      %v1863 = vmul.f32 %v1543, %v1777
      %v1864 = vmul.f32 %v1544, %v1781
      %v1865 = vmul.f32 %v1545, %v1785
      %v1866 = vmul.f32 %v1546, %v1789
      %v1867 = vmul.f32 %v1547, %v1793
      %v1868 = vmul.f32 %v1548, %v1797
      %v1869 = vmul.f32 %v1549, %v1801
      %v1870 = vmul.f32 %v1550, %v1805
      %v1871 = vadd.f32 %v1103, %v1807
      %v1872 = vadd.f32 %v1104, %v1808
      %v1873 = vadd.f32 %v1105, %v1809
      %v1874 = vadd.f32 %v1106, %v1810
      %v1875 = vadd.f32 %v1107, %v1811
      %v1876 = vadd.f32 %v1108, %v1812
      %v1877 = vadd.f32 %v1109, %v1813
      %v1878 = vadd.f32 %v1110, %v1814
      %v1879 = vadd.f32 %v1111, %v1815
      %v1880 = vadd.f32 %v1112, %v1816
      %v1881 = vadd.f32 %v1113, %v1817
      %v1882 = vadd.f32 %v1114, %v1818
      %v1883 = vadd.f32 %v1115, %v1819
      %v1884 = vadd.f32 %v1116, %v1820
      %v1885 = vadd.f32 %v1117, %v1821
      %v1886 = vadd.f32 %v1118, %v1822
      %v1887 = vadd.f32 %v1119, %v1823
      %v1888 = vadd.f32 %v1120, %v1824
      %v1889 = vadd.f32 %v1121, %v1825
      %v1890 = vadd.f32 %v1122, %v1826
      %v1891 = vadd.f32 %v1123, %v1827
      %v1892 = vadd.f32 %v1124, %v1828
      %v1893 = vadd.f32 %v1125, %v1829
      %v1894 = vadd.f32 %v1126, %v1830
      %v1895 = vadd.f32 %v1127, %v1831
      %v1896 = vadd.f32 %v1128, %v1832
      %v1897 = vadd.f32 %v1129, %v1833
      %v1898 = vadd.f32 %v1130, %v1834
      %v1899 = vadd.f32 %v1131, %v1835
      %v1900 = vadd.f32 %v1132, %v1836
      %v1901 = vadd.f32 %v1133, %v1837
      %v1902 = vadd.f32 %v1134, %v1838
      %v1903 = vadd.f32 %v1135, %v1839
      %v1904 = vadd.f32 %v1136, %v1840
      %v1905 = vadd.f32 %v1137, %v1841
      %v1906 = vadd.f32 %v1138, %v1842
      %v1907 = vadd.f32 %v1139, %v1843
      %v1908 = vadd.f32 %v1140, %v1844
      %v1909 = vadd.f32 %v1141, %v1845
      %v1910 = vadd.f32 %v1142, %v1846
      %v1911 = vadd.f32 %v1143, %v1847
      %v1912 = vadd.f32 %v1144, %v1848
      %v1913 = vadd.f32 %v1145, %v1849
      %v1914 = vadd.f32 %v1146, %v1850
      %v1915 = vadd.f32 %v1147, %v1851
      %v1916 = vadd.f32 %v1148, %v1852
      %v1917 = vadd.f32 %v1149, %v1853
      %v1918 = vadd.f32 %v1150, %v1854
      %v1919 = vadd.f32 %v1151, %v1855
      %v1920 = vadd.f32 %v1152, %v1856
      %v1921 = vadd.f32 %v1153, %v1857
      %v1922 = vadd.f32 %v1154, %v1858
      %v1923 = vadd.f32 %v1155, %v1859
      %v1924 = vadd.f32 %v1156, %v1860
      %v1925 = vadd.f32 %v1157, %v1861
      %v1926 = vadd.f32 %v1158, %v1862
      %v1927 = vadd.f32 %v1159, %v1863
      %v1928 = vadd.f32 %v1160, %v1864
      %v1929 = vadd.f32 %v1161, %v1865
      %v1930 = vadd.f32 %v1162, %v1866
      %v1931 = vadd.f32 %v1163, %v1867
      %v1932 = vadd.f32 %v1164, %v1868
      %v1933 = vadd.f32 %v1165, %v1869
      %v1934 = vadd.f32 %v1166, %v1870
      %1935 = vset.pattern.permute.xlu0 2
      %1936 = vperm.xlu0 %1935, %v207
      %v1937 = vpop.permute.xlu0 %1936
      %1938 = vset.pattern.permute.xlu0 2
      %1939 = vperm.xlu0 %1938, %v208
      %v1940 = vpop.permute.xlu0 %1939
      %1941 = vset.pattern.permute.xlu0 2
      %1942 = vperm.xlu0 %1941, %v209
      %v1943 = vpop.permute.xlu0 %1942
      %1944 = vset.pattern.permute.xlu0 2
      %1945 = vperm.xlu0 %1944, %v210
      %v1946 = vpop.permute.xlu0 %1945
      %1947 = vset.pattern.permute.xlu0 2
      %1948 = vperm.xlu0 %1947, %v211
      %v1949 = vpop.permute.xlu0 %1948
      %1950 = vset.pattern.permute.xlu0 2
      %1951 = vperm.xlu0 %1950, %v212
      %v1952 = vpop.permute.xlu0 %1951
      %1953 = vset.pattern.permute.xlu0 2
      %1954 = vperm.xlu0 %1953, %v213
      %v1955 = vpop.permute.xlu0 %1954
      %1956 = vset.pattern.permute.xlu0 2
      %1957 = vperm.xlu0 %1956, %v214
      %v1958 = vpop.permute.xlu0 %1957
      %1959 = vset.pattern.permute.xlu0 2
      %1960 = vperm.xlu0 %1959, %v215
      %v1961 = vpop.permute.xlu0 %1960
      %1962 = vset.pattern.permute.xlu0 2
      %1963 = vperm.xlu0 %1962, %v216
      %v1964 = vpop.permute.xlu0 %1963
      %1965 = vset.pattern.permute.xlu0 2
      %1966 = vperm.xlu0 %1965, %v217
      %v1967 = vpop.permute.xlu0 %1966
      %1968 = vset.pattern.permute.xlu0 2
      %1969 = vperm.xlu0 %1968, %v218
      %v1970 = vpop.permute.xlu0 %1969
      %1971 = vset.pattern.permute.xlu0 2
      %1972 = vperm.xlu0 %1971, %v219
      %v1973 = vpop.permute.xlu0 %1972
      %1974 = vset.pattern.permute.xlu0 2
      %1975 = vperm.xlu0 %1974, %v220
      %v1976 = vpop.permute.xlu0 %1975
      %1977 = vset.pattern.permute.xlu0 2
      %1978 = vperm.xlu0 %1977, %v221
      %v1979 = vpop.permute.xlu0 %1978
      %1980 = vset.pattern.permute.xlu0 2
      %1981 = vperm.xlu0 %1980, %v222
      %v1982 = vpop.permute.xlu0 %1981
      %1983 = vset.pattern.permute.xlu0 2
      %1984 = vperm.xlu0 %1983, %v223
      %v1985 = vpop.permute.xlu0 %1984
      %1986 = vset.pattern.permute.xlu0 2
      %1987 = vperm.xlu0 %1986, %v224
      %v1988 = vpop.permute.xlu0 %1987
      %1989 = vset.pattern.permute.xlu0 2
      %1990 = vperm.xlu0 %1989, %v225
      %v1991 = vpop.permute.xlu0 %1990
      %1992 = vset.pattern.permute.xlu0 2
      %1993 = vperm.xlu0 %1992, %v226
      %v1994 = vpop.permute.xlu0 %1993
      %1995 = vset.pattern.permute.xlu0 2
      %1996 = vperm.xlu0 %1995, %v227
      %v1997 = vpop.permute.xlu0 %1996
      %1998 = vset.pattern.permute.xlu0 2
      %1999 = vperm.xlu0 %1998, %v228
      %v2000 = vpop.permute.xlu0 %1999
      %2001 = vset.pattern.permute.xlu0 2
      %2002 = vperm.xlu0 %2001, %v229
      %v2003 = vpop.permute.xlu0 %2002
      %2004 = vset.pattern.permute.xlu0 2
      %2005 = vperm.xlu0 %2004, %v230
      %v2006 = vpop.permute.xlu0 %2005
      %2007 = vset.pattern.permute.xlu0 2
      %2008 = vperm.xlu0 %2007, %v231
      %v2009 = vpop.permute.xlu0 %2008
      %2010 = vset.pattern.permute.xlu0 2
      %2011 = vperm.xlu0 %2010, %v232
      %v2012 = vpop.permute.xlu0 %2011
      %2013 = vset.pattern.permute.xlu0 2
      %2014 = vperm.xlu0 %2013, %v233
      %v2015 = vpop.permute.xlu0 %2014
      %2016 = vset.pattern.permute.xlu0 2
      %2017 = vperm.xlu0 %2016, %v234
      %v2018 = vpop.permute.xlu0 %2017
      %2019 = vset.pattern.permute.xlu0 2
      %2020 = vperm.xlu0 %2019, %v235
      %v2021 = vpop.permute.xlu0 %2020
      %2022 = vset.pattern.permute.xlu0 2
      %2023 = vperm.xlu0 %2022, %v236
      %v2024 = vpop.permute.xlu0 %2023
      %2025 = vset.pattern.permute.xlu0 2
      %2026 = vperm.xlu0 %2025, %v237
      %v2027 = vpop.permute.xlu0 %2026
      %2028 = vset.pattern.permute.xlu0 2
      %2029 = vperm.xlu0 %2028, %v238
      %v2030 = vpop.permute.xlu0 %2029
      %2031 = vset.pattern.permute.xlu0 2
      %2032 = vperm.xlu0 %2031, %v239
      %v2033 = vpop.permute.xlu0 %2032
      %2034 = vset.pattern.permute.xlu0 2
      %2035 = vperm.xlu0 %2034, %v240
      %v2036 = vpop.permute.xlu0 %2035
      %2037 = vset.pattern.permute.xlu0 2
      %2038 = vperm.xlu0 %2037, %v241
      %v2039 = vpop.permute.xlu0 %2038
      %2040 = vset.pattern.permute.xlu0 2
      %2041 = vperm.xlu0 %2040, %v242
      %v2042 = vpop.permute.xlu0 %2041
      %2043 = vset.pattern.permute.xlu0 2
      %2044 = vperm.xlu0 %2043, %v243
      %v2045 = vpop.permute.xlu0 %2044
      %2046 = vset.pattern.permute.xlu0 2
      %2047 = vperm.xlu0 %2046, %v244
      %v2048 = vpop.permute.xlu0 %2047
      %2049 = vset.pattern.permute.xlu0 2
      %2050 = vperm.xlu0 %2049, %v245
      %v2051 = vpop.permute.xlu0 %2050
      %2052 = vset.pattern.permute.xlu0 2
      %2053 = vperm.xlu0 %2052, %v246
      %v2054 = vpop.permute.xlu0 %2053
      %2055 = vset.pattern.permute.xlu0 2
      %2056 = vperm.xlu0 %2055, %v247
      %v2057 = vpop.permute.xlu0 %2056
      %2058 = vset.pattern.permute.xlu0 2
      %2059 = vperm.xlu0 %2058, %v248
      %v2060 = vpop.permute.xlu0 %2059
      %2061 = vset.pattern.permute.xlu0 2
      %2062 = vperm.xlu0 %2061, %v249
      %v2063 = vpop.permute.xlu0 %2062
      %2064 = vset.pattern.permute.xlu0 2
      %2065 = vperm.xlu0 %2064, %v250
      %v2066 = vpop.permute.xlu0 %2065
      %2067 = vset.pattern.permute.xlu0 2
      %2068 = vperm.xlu0 %2067, %v251
      %v2069 = vpop.permute.xlu0 %2068
      %2070 = vset.pattern.permute.xlu0 2
      %2071 = vperm.xlu0 %2070, %v252
      %v2072 = vpop.permute.xlu0 %2071
      %2073 = vset.pattern.permute.xlu0 2
      %2074 = vperm.xlu0 %2073, %v253
      %v2075 = vpop.permute.xlu0 %2074
      %2076 = vset.pattern.permute.xlu0 2
      %2077 = vperm.xlu0 %2076, %v254
      %v2078 = vpop.permute.xlu0 %2077
      %2079 = vset.pattern.permute.xlu0 2
      %2080 = vperm.xlu0 %2079, %v255
      %v2081 = vpop.permute.xlu0 %2080
      %2082 = vset.pattern.permute.xlu0 2
      %2083 = vperm.xlu0 %2082, %v256
      %v2084 = vpop.permute.xlu0 %2083
      %2085 = vset.pattern.permute.xlu0 2
      %2086 = vperm.xlu0 %2085, %v257
      %v2087 = vpop.permute.xlu0 %2086
      %2088 = vset.pattern.permute.xlu0 2
      %2089 = vperm.xlu0 %2088, %v258
      %v2090 = vpop.permute.xlu0 %2089
      %2091 = vset.pattern.permute.xlu0 2
      %2092 = vperm.xlu0 %2091, %v259
      %v2093 = vpop.permute.xlu0 %2092
      %2094 = vset.pattern.permute.xlu0 2
      %2095 = vperm.xlu0 %2094, %v260
      %v2096 = vpop.permute.xlu0 %2095
      %2097 = vset.pattern.permute.xlu0 2
      %2098 = vperm.xlu0 %2097, %v261
      %v2099 = vpop.permute.xlu0 %2098
      %2100 = vset.pattern.permute.xlu0 2
      %2101 = vperm.xlu0 %2100, %v262
      %v2102 = vpop.permute.xlu0 %2101
      %2103 = vset.pattern.permute.xlu0 2
      %2104 = vperm.xlu0 %2103, %v263
      %v2105 = vpop.permute.xlu0 %2104
      %2106 = vset.pattern.permute.xlu0 2
      %2107 = vperm.xlu0 %2106, %v264
      %v2108 = vpop.permute.xlu0 %2107
      %2109 = vset.pattern.permute.xlu0 2
      %2110 = vperm.xlu0 %2109, %v265
      %v2111 = vpop.permute.xlu0 %2110
      %2112 = vset.pattern.permute.xlu0 2
      %2113 = vperm.xlu0 %2112, %v266
      %v2114 = vpop.permute.xlu0 %2113
      %2115 = vset.pattern.permute.xlu0 2
      %2116 = vperm.xlu0 %2115, %v267
      %v2117 = vpop.permute.xlu0 %2116
      %2118 = vset.pattern.permute.xlu0 2
      %2119 = vperm.xlu0 %2118, %v268
      %v2120 = vpop.permute.xlu0 %2119
      %2121 = vset.pattern.permute.xlu0 2
      %2122 = vperm.xlu0 %2121, %v269
      %v2123 = vpop.permute.xlu0 %2122
      %2124 = vset.pattern.permute.xlu0 2
      %2125 = vperm.xlu0 %2124, %v270
      %v2126 = vpop.permute.xlu0 %2125
      %vm2127 = vcmp.eq.s32.totalorder %v1937, %v206
      %vm2128 = vcmp.eq.s32.totalorder %v1940, %v206
      %vm2129 = vcmp.eq.s32.totalorder %v1943, %v206
      %vm2130 = vcmp.eq.s32.totalorder %v1946, %v206
      %vm2131 = vcmp.eq.s32.totalorder %v1949, %v206
      %vm2132 = vcmp.eq.s32.totalorder %v1952, %v206
      %vm2133 = vcmp.eq.s32.totalorder %v1955, %v206
      %vm2134 = vcmp.eq.s32.totalorder %v1958, %v206
      %vm2135 = vcmp.eq.s32.totalorder %v1961, %v206
      %vm2136 = vcmp.eq.s32.totalorder %v1964, %v206
      %vm2137 = vcmp.eq.s32.totalorder %v1967, %v206
      %vm2138 = vcmp.eq.s32.totalorder %v1970, %v206
      %vm2139 = vcmp.eq.s32.totalorder %v1973, %v206
      %vm2140 = vcmp.eq.s32.totalorder %v1976, %v206
      %vm2141 = vcmp.eq.s32.totalorder %v1979, %v206
      %vm2142 = vcmp.eq.s32.totalorder %v1982, %v206
      %vm2143 = vcmp.eq.s32.totalorder %v1985, %v206
      %vm2144 = vcmp.eq.s32.totalorder %v1988, %v206
      %vm2145 = vcmp.eq.s32.totalorder %v1991, %v206
      %vm2146 = vcmp.eq.s32.totalorder %v1994, %v206
      %vm2147 = vcmp.eq.s32.totalorder %v1997, %v206
      %vm2148 = vcmp.eq.s32.totalorder %v2000, %v206
      %vm2149 = vcmp.eq.s32.totalorder %v2003, %v206
      %vm2150 = vcmp.eq.s32.totalorder %v2006, %v206
      %vm2151 = vcmp.eq.s32.totalorder %v2009, %v206
      %vm2152 = vcmp.eq.s32.totalorder %v2012, %v206
      %vm2153 = vcmp.eq.s32.totalorder %v2015, %v206
      %vm2154 = vcmp.eq.s32.totalorder %v2018, %v206
      %vm2155 = vcmp.eq.s32.totalorder %v2021, %v206
      %vm2156 = vcmp.eq.s32.totalorder %v2024, %v206
      %vm2157 = vcmp.eq.s32.totalorder %v2027, %v206
      %vm2158 = vcmp.eq.s32.totalorder %v2030, %v206
      %vm2159 = vcmp.eq.s32.totalorder %v2033, %v206
      %vm2160 = vcmp.eq.s32.totalorder %v2036, %v206
      %vm2161 = vcmp.eq.s32.totalorder %v2039, %v206
      %vm2162 = vcmp.eq.s32.totalorder %v2042, %v206
      %vm2163 = vcmp.eq.s32.totalorder %v2045, %v206
      %vm2164 = vcmp.eq.s32.totalorder %v2048, %v206
      %vm2165 = vcmp.eq.s32.totalorder %v2051, %v206
      %vm2166 = vcmp.eq.s32.totalorder %v2054, %v206
      %vm2167 = vcmp.eq.s32.totalorder %v2057, %v206
      %vm2168 = vcmp.eq.s32.totalorder %v2060, %v206
      %vm2169 = vcmp.eq.s32.totalorder %v2063, %v206
      %vm2170 = vcmp.eq.s32.totalorder %v2066, %v206
      %vm2171 = vcmp.eq.s32.totalorder %v2069, %v206
      %vm2172 = vcmp.eq.s32.totalorder %v2072, %v206
      %vm2173 = vcmp.eq.s32.totalorder %v2075, %v206
      %vm2174 = vcmp.eq.s32.totalorder %v2078, %v206
      %vm2175 = vcmp.eq.s32.totalorder %v2081, %v206
      %vm2176 = vcmp.eq.s32.totalorder %v2084, %v206
      %vm2177 = vcmp.eq.s32.totalorder %v2087, %v206
      %vm2178 = vcmp.eq.s32.totalorder %v2090, %v206
      %vm2179 = vcmp.eq.s32.totalorder %v2093, %v206
      %vm2180 = vcmp.eq.s32.totalorder %v2096, %v206
      %vm2181 = vcmp.eq.s32.totalorder %v2099, %v206
      %vm2182 = vcmp.eq.s32.totalorder %v2102, %v206
      %vm2183 = vcmp.eq.s32.totalorder %v2105, %v206
      %vm2184 = vcmp.eq.s32.totalorder %v2108, %v206
      %vm2185 = vcmp.eq.s32.totalorder %v2111, %v206
      %vm2186 = vcmp.eq.s32.totalorder %v2114, %v206
      %vm2187 = vcmp.eq.s32.totalorder %v2117, %v206
      %vm2188 = vcmp.eq.s32.totalorder %v2120, %v206
      %vm2189 = vcmp.eq.s32.totalorder %v2123, %v206
      %vm2190 = vcmp.eq.s32.totalorder %v2126, %v206
      %v2191 = vsel %vm2127, 1, 0
      %v2192 = vsel %vm2128, 1, 0
      %v2193 = vsel %vm2129, 1, 0
      %v2194 = vsel %vm2130, 1, 0
      %v2195 = vsel %vm2131, 1, 0
      %v2196 = vsel %vm2132, 1, 0
      %v2197 = vsel %vm2133, 1, 0
      %v2198 = vsel %vm2134, 1, 0
      %v2199 = vsel %vm2135, 1, 0
      %v2200 = vsel %vm2136, 1, 0
      %v2201 = vsel %vm2137, 1, 0
      %v2202 = vsel %vm2138, 1, 0
      %v2203 = vsel %vm2139, 1, 0
      %v2204 = vsel %vm2140, 1, 0
      %v2205 = vsel %vm2141, 1, 0
      %v2206 = vsel %vm2142, 1, 0
      %v2207 = vsel %vm2143, 1, 0
      %v2208 = vsel %vm2144, 1, 0
      %v2209 = vsel %vm2145, 1, 0
      %v2210 = vsel %vm2146, 1, 0
      %v2211 = vsel %vm2147, 1, 0
      %v2212 = vsel %vm2148, 1, 0
      %v2213 = vsel %vm2149, 1, 0
      %v2214 = vsel %vm2150, 1, 0
      %v2215 = vsel %vm2151, 1, 0
      %v2216 = vsel %vm2152, 1, 0
      %v2217 = vsel %vm2153, 1, 0
      %v2218 = vsel %vm2154, 1, 0
      %v2219 = vsel %vm2155, 1, 0
      %v2220 = vsel %vm2156, 1, 0
      %v2221 = vsel %vm2157, 1, 0
      %v2222 = vsel %vm2158, 1, 0
      %v2223 = vsel %vm2159, 1, 0
      %v2224 = vsel %vm2160, 1, 0
      %v2225 = vsel %vm2161, 1, 0
      %v2226 = vsel %vm2162, 1, 0
      %v2227 = vsel %vm2163, 1, 0
      %v2228 = vsel %vm2164, 1, 0
      %v2229 = vsel %vm2165, 1, 0
      %v2230 = vsel %vm2166, 1, 0
      %v2231 = vsel %vm2167, 1, 0
      %v2232 = vsel %vm2168, 1, 0
      %v2233 = vsel %vm2169, 1, 0
      %v2234 = vsel %vm2170, 1, 0
      %v2235 = vsel %vm2171, 1, 0
      %v2236 = vsel %vm2172, 1, 0
      %v2237 = vsel %vm2173, 1, 0
      %v2238 = vsel %vm2174, 1, 0
      %v2239 = vsel %vm2175, 1, 0
      %v2240 = vsel %vm2176, 1, 0
      %v2241 = vsel %vm2177, 1, 0
      %v2242 = vsel %vm2178, 1, 0
      %v2243 = vsel %vm2179, 1, 0
      %v2244 = vsel %vm2180, 1, 0
      %v2245 = vsel %vm2181, 1, 0
      %v2246 = vsel %vm2182, 1, 0
      %v2247 = vsel %vm2183, 1, 0
      %v2248 = vsel %vm2184, 1, 0
      %v2249 = vsel %vm2185, 1, 0
      %v2250 = vsel %vm2186, 1, 0
      %v2251 = vsel %vm2187, 1, 0
      %v2252 = vsel %vm2188, 1, 0
      %v2253 = vsel %vm2189, 1, 0
      %v2254 = vsel %vm2190, 1, 0
      %v2255 = vcvt.s32.f32 %v2191
      %v2256 = vcvt.s32.f32 %v2192
      %v2257 = vcvt.s32.f32 %v2193
      %v2258 = vcvt.s32.f32 %v2194
      %v2259 = vcvt.s32.f32 %v2195
      %v2260 = vcvt.s32.f32 %v2196
      %v2261 = vcvt.s32.f32 %v2197
      %v2262 = vcvt.s32.f32 %v2198
      %v2263 = vcvt.s32.f32 %v2199
      %v2264 = vcvt.s32.f32 %v2200
      %v2265 = vcvt.s32.f32 %v2201
      %v2266 = vcvt.s32.f32 %v2202
      %v2267 = vcvt.s32.f32 %v2203
      %v2268 = vcvt.s32.f32 %v2204
      %v2269 = vcvt.s32.f32 %v2205
      %v2270 = vcvt.s32.f32 %v2206
      %v2271 = vcvt.s32.f32 %v2207
      %v2272 = vcvt.s32.f32 %v2208
      %v2273 = vcvt.s32.f32 %v2209
      %v2274 = vcvt.s32.f32 %v2210
      %v2275 = vcvt.s32.f32 %v2211
      %v2276 = vcvt.s32.f32 %v2212
      %v2277 = vcvt.s32.f32 %v2213
      %v2278 = vcvt.s32.f32 %v2214
      %v2279 = vcvt.s32.f32 %v2215
      %v2280 = vcvt.s32.f32 %v2216
      %v2281 = vcvt.s32.f32 %v2217
      %v2282 = vcvt.s32.f32 %v2218
      %v2283 = vcvt.s32.f32 %v2219
      %v2284 = vcvt.s32.f32 %v2220
      %v2285 = vcvt.s32.f32 %v2221
      %v2286 = vcvt.s32.f32 %v2222
      %v2287 = vcvt.s32.f32 %v2223
      %v2288 = vcvt.s32.f32 %v2224
      %v2289 = vcvt.s32.f32 %v2225
      %v2290 = vcvt.s32.f32 %v2226
      %v2291 = vcvt.s32.f32 %v2227
      %v2292 = vcvt.s32.f32 %v2228
      %v2293 = vcvt.s32.f32 %v2229
      %v2294 = vcvt.s32.f32 %v2230
      %v2295 = vcvt.s32.f32 %v2231
      %v2296 = vcvt.s32.f32 %v2232
      %v2297 = vcvt.s32.f32 %v2233
      %v2298 = vcvt.s32.f32 %v2234
      %v2299 = vcvt.s32.f32 %v2235
      %v2300 = vcvt.s32.f32 %v2236
      %v2301 = vcvt.s32.f32 %v2237
      %v2302 = vcvt.s32.f32 %v2238
      %v2303 = vcvt.s32.f32 %v2239
      %v2304 = vcvt.s32.f32 %v2240
      %v2305 = vcvt.s32.f32 %v2241
      %v2306 = vcvt.s32.f32 %v2242
      %v2307 = vcvt.s32.f32 %v2243
      %v2308 = vcvt.s32.f32 %v2244
      %v2309 = vcvt.s32.f32 %v2245
      %v2310 = vcvt.s32.f32 %v2246
      %v2311 = vcvt.s32.f32 %v2247
      %v2312 = vcvt.s32.f32 %v2248
      %v2313 = vcvt.s32.f32 %v2249
      %v2314 = vcvt.s32.f32 %v2250
      %v2315 = vcvt.s32.f32 %v2251
      %v2316 = vcvt.s32.f32 %v2252
      %v2317 = vcvt.s32.f32 %v2253
      %v2318 = vcvt.s32.f32 %v2254
      %2319 = vset.pattern.permute.xlu0 2
      %2320 = vperm.xlu0 %2319, %v655
      %v2321 = vpop.permute.xlu0 %2320
      %2323 = vset.pattern.permute.xlu0 2
      %2324 = vperm.xlu0 %2323, %v656
      %v2325 = vpop.permute.xlu0 %2324
      %2327 = vset.pattern.permute.xlu0 2
      %2328 = vperm.xlu0 %2327, %v657
      %v2329 = vpop.permute.xlu0 %2328
      %2331 = vset.pattern.permute.xlu0 2
      %2332 = vperm.xlu0 %2331, %v658
      %v2333 = vpop.permute.xlu0 %2332
      %2335 = vset.pattern.permute.xlu0 2
      %2336 = vperm.xlu0 %2335, %v659
      %v2337 = vpop.permute.xlu0 %2336
      %2339 = vset.pattern.permute.xlu0 2
      %2340 = vperm.xlu0 %2339, %v660
      %v2341 = vpop.permute.xlu0 %2340
      %2343 = vset.pattern.permute.xlu0 2
      %2344 = vperm.xlu0 %2343, %v661
      %v2345 = vpop.permute.xlu0 %2344
      %2347 = vset.pattern.permute.xlu0 2
      %2348 = vperm.xlu0 %2347, %v662
      %v2349 = vpop.permute.xlu0 %2348
      %2351 = vset.pattern.permute.xlu0 2
      %2352 = vperm.xlu0 %2351, %v663
      %v2353 = vpop.permute.xlu0 %2352
      %2355 = vset.pattern.permute.xlu0 2
      %2356 = vperm.xlu0 %2355, %v664
      %v2357 = vpop.permute.xlu0 %2356
      %2359 = vset.pattern.permute.xlu0 2
      %2360 = vperm.xlu0 %2359, %v665
      %v2361 = vpop.permute.xlu0 %2360
      %2363 = vset.pattern.permute.xlu0 2
      %2364 = vperm.xlu0 %2363, %v666
      %v2365 = vpop.permute.xlu0 %2364
      %2367 = vset.pattern.permute.xlu0 2
      %2368 = vperm.xlu0 %2367, %v667
      %v2369 = vpop.permute.xlu0 %2368
      %2371 = vset.pattern.permute.xlu0 2
      %2372 = vperm.xlu0 %2371, %v668
      %v2373 = vpop.permute.xlu0 %2372
      %2375 = vset.pattern.permute.xlu0 2
      %2376 = vperm.xlu0 %2375, %v669
      %v2377 = vpop.permute.xlu0 %2376
      %2379 = vset.pattern.permute.xlu0 2
      %2380 = vperm.xlu0 %2379, %v670
      %v2381 = vpop.permute.xlu0 %2380
      %2383 = vset.pattern.permute.xlu0 2
      %2384 = vperm.xlu0 %2383, %v671
      %v2385 = vpop.permute.xlu0 %2384
      %2387 = vset.pattern.permute.xlu0 2
      %2388 = vperm.xlu0 %2387, %v672
      %v2389 = vpop.permute.xlu0 %2388
      %2391 = vset.pattern.permute.xlu0 2
      %2392 = vperm.xlu0 %2391, %v673
      %v2393 = vpop.permute.xlu0 %2392
      %2395 = vset.pattern.permute.xlu0 2
      %2396 = vperm.xlu0 %2395, %v674
      %v2397 = vpop.permute.xlu0 %2396
      %2399 = vset.pattern.permute.xlu0 2
      %2400 = vperm.xlu0 %2399, %v675
      %v2401 = vpop.permute.xlu0 %2400
      %2403 = vset.pattern.permute.xlu0 2
      %2404 = vperm.xlu0 %2403, %v676
      %v2405 = vpop.permute.xlu0 %2404
      %2407 = vset.pattern.permute.xlu0 2
      %2408 = vperm.xlu0 %2407, %v677
      %v2409 = vpop.permute.xlu0 %2408
      %2411 = vset.pattern.permute.xlu0 2
      %2412 = vperm.xlu0 %2411, %v678
      %v2413 = vpop.permute.xlu0 %2412
      %2415 = vset.pattern.permute.xlu0 2
      %2416 = vperm.xlu0 %2415, %v679
      %v2417 = vpop.permute.xlu0 %2416
      %2419 = vset.pattern.permute.xlu0 2
      %2420 = vperm.xlu0 %2419, %v680
      %v2421 = vpop.permute.xlu0 %2420
      %2423 = vset.pattern.permute.xlu0 2
      %2424 = vperm.xlu0 %2423, %v681
      %v2425 = vpop.permute.xlu0 %2424
      %2427 = vset.pattern.permute.xlu0 2
      %2428 = vperm.xlu0 %2427, %v682
      %v2429 = vpop.permute.xlu0 %2428
      %2431 = vset.pattern.permute.xlu0 2
      %2432 = vperm.xlu0 %2431, %v683
      %v2433 = vpop.permute.xlu0 %2432
      %2435 = vset.pattern.permute.xlu0 2
      %2436 = vperm.xlu0 %2435, %v684
      %v2437 = vpop.permute.xlu0 %2436
      %2439 = vset.pattern.permute.xlu0 2
      %2440 = vperm.xlu0 %2439, %v685
      %v2441 = vpop.permute.xlu0 %2440
      %2443 = vset.pattern.permute.xlu0 2
      %2444 = vperm.xlu0 %2443, %v686
      %v2445 = vpop.permute.xlu0 %2444
      %2447 = vset.pattern.permute.xlu0 2
      %2448 = vperm.xlu0 %2447, %v687
      %v2449 = vpop.permute.xlu0 %2448
      %2451 = vset.pattern.permute.xlu0 2
      %2452 = vperm.xlu0 %2451, %v688
      %v2453 = vpop.permute.xlu0 %2452
      %2455 = vset.pattern.permute.xlu0 2
      %2456 = vperm.xlu0 %2455, %v689
      %v2457 = vpop.permute.xlu0 %2456
      %2459 = vset.pattern.permute.xlu0 2
      %2460 = vperm.xlu0 %2459, %v690
      %v2461 = vpop.permute.xlu0 %2460
      %2463 = vset.pattern.permute.xlu0 2
      %2464 = vperm.xlu0 %2463, %v691
      %v2465 = vpop.permute.xlu0 %2464
      %2467 = vset.pattern.permute.xlu0 2
      %2468 = vperm.xlu0 %2467, %v692
      %v2469 = vpop.permute.xlu0 %2468
      %2471 = vset.pattern.permute.xlu0 2
      %2472 = vperm.xlu0 %2471, %v693
      %v2473 = vpop.permute.xlu0 %2472
      %2475 = vset.pattern.permute.xlu0 2
      %2476 = vperm.xlu0 %2475, %v694
      %v2477 = vpop.permute.xlu0 %2476
      %2479 = vset.pattern.permute.xlu0 2
      %2480 = vperm.xlu0 %2479, %v695
      %v2481 = vpop.permute.xlu0 %2480
      %2483 = vset.pattern.permute.xlu0 2
      %2484 = vperm.xlu0 %2483, %v696
      %v2485 = vpop.permute.xlu0 %2484
      %2487 = vset.pattern.permute.xlu0 2
      %2488 = vperm.xlu0 %2487, %v697
      %v2489 = vpop.permute.xlu0 %2488
      %2491 = vset.pattern.permute.xlu0 2
      %2492 = vperm.xlu0 %2491, %v698
      %v2493 = vpop.permute.xlu0 %2492
      %2495 = vset.pattern.permute.xlu0 2
      %2496 = vperm.xlu0 %2495, %v699
      %v2497 = vpop.permute.xlu0 %2496
      %2499 = vset.pattern.permute.xlu0 2
      %2500 = vperm.xlu0 %2499, %v700
      %v2501 = vpop.permute.xlu0 %2500
      %2503 = vset.pattern.permute.xlu0 2
      %2504 = vperm.xlu0 %2503, %v701
      %v2505 = vpop.permute.xlu0 %2504
      %2507 = vset.pattern.permute.xlu0 2
      %2508 = vperm.xlu0 %2507, %v702
      %v2509 = vpop.permute.xlu0 %2508
      %2511 = vset.pattern.permute.xlu0 2
      %2512 = vperm.xlu0 %2511, %v703
      %v2513 = vpop.permute.xlu0 %2512
      %2515 = vset.pattern.permute.xlu0 2
      %2516 = vperm.xlu0 %2515, %v704
      %v2517 = vpop.permute.xlu0 %2516
      %2519 = vset.pattern.permute.xlu0 2
      %2520 = vperm.xlu0 %2519, %v705
      %v2521 = vpop.permute.xlu0 %2520
      %2523 = vset.pattern.permute.xlu0 2
      %2524 = vperm.xlu0 %2523, %v706
      %v2525 = vpop.permute.xlu0 %2524
      %2527 = vset.pattern.permute.xlu0 2
      %2528 = vperm.xlu0 %2527, %v707
      %v2529 = vpop.permute.xlu0 %2528
      %2531 = vset.pattern.permute.xlu0 2
      %2532 = vperm.xlu0 %2531, %v708
      %v2533 = vpop.permute.xlu0 %2532
      %2535 = vset.pattern.permute.xlu0 2
      %2536 = vperm.xlu0 %2535, %v709
      %v2537 = vpop.permute.xlu0 %2536
      %2539 = vset.pattern.permute.xlu0 2
      %2540 = vperm.xlu0 %2539, %v710
      %v2541 = vpop.permute.xlu0 %2540
      %2543 = vset.pattern.permute.xlu0 2
      %2544 = vperm.xlu0 %2543, %v711
      %v2545 = vpop.permute.xlu0 %2544
      %2547 = vset.pattern.permute.xlu0 2
      %2548 = vperm.xlu0 %2547, %v712
      %v2549 = vpop.permute.xlu0 %2548
      %2551 = vset.pattern.permute.xlu0 2
      %2552 = vperm.xlu0 %2551, %v713
      %v2553 = vpop.permute.xlu0 %2552
      %2555 = vset.pattern.permute.xlu0 2
      %2556 = vperm.xlu0 %2555, %v714
      %v2557 = vpop.permute.xlu0 %2556
      %2559 = vset.pattern.permute.xlu0 2
      %2560 = vperm.xlu0 %2559, %v715
      %v2561 = vpop.permute.xlu0 %2560
      %2563 = vset.pattern.permute.xlu0 2
      %2564 = vperm.xlu0 %2563, %v716
      %v2565 = vpop.permute.xlu0 %2564
      %2567 = vset.pattern.permute.xlu0 2
      %2568 = vperm.xlu0 %2567, %v717
      %v2569 = vpop.permute.xlu0 %2568
      %2571 = vset.pattern.permute.xlu0 2
      %2572 = vperm.xlu0 %2571, %v718
      %v2573 = vpop.permute.xlu0 %2572
      %v2575 = vmul.f32 %v2255, %v2321
      %v2576 = vmul.f32 %v2256, %v2325
      %v2577 = vmul.f32 %v2257, %v2329
      %v2578 = vmul.f32 %v2258, %v2333
      %v2579 = vmul.f32 %v2259, %v2337
      %v2580 = vmul.f32 %v2260, %v2341
      %v2581 = vmul.f32 %v2261, %v2345
      %v2582 = vmul.f32 %v2262, %v2349
      %v2583 = vmul.f32 %v2263, %v2353
      %v2584 = vmul.f32 %v2264, %v2357
      %v2585 = vmul.f32 %v2265, %v2361
      %v2586 = vmul.f32 %v2266, %v2365
      %v2587 = vmul.f32 %v2267, %v2369
      %v2588 = vmul.f32 %v2268, %v2373
      %v2589 = vmul.f32 %v2269, %v2377
      %v2590 = vmul.f32 %v2270, %v2381
      %v2591 = vmul.f32 %v2271, %v2385
      %v2592 = vmul.f32 %v2272, %v2389
      %v2593 = vmul.f32 %v2273, %v2393
      %v2594 = vmul.f32 %v2274, %v2397
      %v2595 = vmul.f32 %v2275, %v2401
      %v2596 = vmul.f32 %v2276, %v2405
      %v2597 = vmul.f32 %v2277, %v2409
      %v2598 = vmul.f32 %v2278, %v2413
      %v2599 = vmul.f32 %v2279, %v2417
      %v2600 = vmul.f32 %v2280, %v2421
      %v2601 = vmul.f32 %v2281, %v2425
      %v2602 = vmul.f32 %v2282, %v2429
      %v2603 = vmul.f32 %v2283, %v2433
      %v2604 = vmul.f32 %v2284, %v2437
      %v2605 = vmul.f32 %v2285, %v2441
      %v2606 = vmul.f32 %v2286, %v2445
      %v2607 = vmul.f32 %v2287, %v2449
      %v2608 = vmul.f32 %v2288, %v2453
      %v2609 = vmul.f32 %v2289, %v2457
      %v2610 = vmul.f32 %v2290, %v2461
      %v2611 = vmul.f32 %v2291, %v2465
      %v2612 = vmul.f32 %v2292, %v2469
      %v2613 = vmul.f32 %v2293, %v2473
      %v2614 = vmul.f32 %v2294, %v2477
      %v2615 = vmul.f32 %v2295, %v2481
      %v2616 = vmul.f32 %v2296, %v2485
      %v2617 = vmul.f32 %v2297, %v2489
      %v2618 = vmul.f32 %v2298, %v2493
      %v2619 = vmul.f32 %v2299, %v2497
      %v2620 = vmul.f32 %v2300, %v2501
      %v2621 = vmul.f32 %v2301, %v2505
      %v2622 = vmul.f32 %v2302, %v2509
      %v2623 = vmul.f32 %v2303, %v2513
      %v2624 = vmul.f32 %v2304, %v2517
      %v2625 = vmul.f32 %v2305, %v2521
      %v2626 = vmul.f32 %v2306, %v2525
      %v2627 = vmul.f32 %v2307, %v2529
      %v2628 = vmul.f32 %v2308, %v2533
      %v2629 = vmul.f32 %v2309, %v2537
      %v2630 = vmul.f32 %v2310, %v2541
      %v2631 = vmul.f32 %v2311, %v2545
      %v2632 = vmul.f32 %v2312, %v2549
      %v2633 = vmul.f32 %v2313, %v2553
      %v2634 = vmul.f32 %v2314, %v2557
      %v2635 = vmul.f32 %v2315, %v2561
      %v2636 = vmul.f32 %v2316, %v2565
      %v2637 = vmul.f32 %v2317, %v2569
      %v2638 = vmul.f32 %v2318, %v2573
      %v2639 = vadd.f32 %v1871, %v2575
      %v2640 = vadd.f32 %v1872, %v2576
      %v2641 = vadd.f32 %v1873, %v2577
      %v2642 = vadd.f32 %v1874, %v2578
      %v2643 = vadd.f32 %v1875, %v2579
      %v2644 = vadd.f32 %v1876, %v2580
      %v2645 = vadd.f32 %v1877, %v2581
      %v2646 = vadd.f32 %v1878, %v2582
      %v2647 = vadd.f32 %v1879, %v2583
      %v2648 = vadd.f32 %v1880, %v2584
      %v2649 = vadd.f32 %v1881, %v2585
      %v2650 = vadd.f32 %v1882, %v2586
      %v2651 = vadd.f32 %v1883, %v2587
      %v2652 = vadd.f32 %v1884, %v2588
      %v2653 = vadd.f32 %v1885, %v2589
      %v2654 = vadd.f32 %v1886, %v2590
      %v2655 = vadd.f32 %v1887, %v2591
      %v2656 = vadd.f32 %v1888, %v2592
      %v2657 = vadd.f32 %v1889, %v2593
      %v2658 = vadd.f32 %v1890, %v2594
      %v2659 = vadd.f32 %v1891, %v2595
      %v2660 = vadd.f32 %v1892, %v2596
      %v2661 = vadd.f32 %v1893, %v2597
      %v2662 = vadd.f32 %v1894, %v2598
      %v2663 = vadd.f32 %v1895, %v2599
      %v2664 = vadd.f32 %v1896, %v2600
      %v2665 = vadd.f32 %v1897, %v2601
      %v2666 = vadd.f32 %v1898, %v2602
      %v2667 = vadd.f32 %v1899, %v2603
      %v2668 = vadd.f32 %v1900, %v2604
      %v2669 = vadd.f32 %v1901, %v2605
      %v2670 = vadd.f32 %v1902, %v2606
      %v2671 = vadd.f32 %v1903, %v2607
      %v2672 = vadd.f32 %v1904, %v2608
      %v2673 = vadd.f32 %v1905, %v2609
      %v2674 = vadd.f32 %v1906, %v2610
      %v2675 = vadd.f32 %v1907, %v2611
      %v2676 = vadd.f32 %v1908, %v2612
      %v2677 = vadd.f32 %v1909, %v2613
      %v2678 = vadd.f32 %v1910, %v2614
      %v2679 = vadd.f32 %v1911, %v2615
      %v2680 = vadd.f32 %v1912, %v2616
      %v2681 = vadd.f32 %v1913, %v2617
      %v2682 = vadd.f32 %v1914, %v2618
      %v2683 = vadd.f32 %v1915, %v2619
      %v2684 = vadd.f32 %v1916, %v2620
      %v2685 = vadd.f32 %v1917, %v2621
      %v2686 = vadd.f32 %v1918, %v2622
      %v2687 = vadd.f32 %v1919, %v2623
      %v2688 = vadd.f32 %v1920, %v2624
      %v2689 = vadd.f32 %v1921, %v2625
      %v2690 = vadd.f32 %v1922, %v2626
      %v2691 = vadd.f32 %v1923, %v2627
      %v2692 = vadd.f32 %v1924, %v2628
      %v2693 = vadd.f32 %v1925, %v2629
      %v2694 = vadd.f32 %v1926, %v2630
      %v2695 = vadd.f32 %v1927, %v2631
      %v2696 = vadd.f32 %v1928, %v2632
      %v2697 = vadd.f32 %v1929, %v2633
      %v2698 = vadd.f32 %v1930, %v2634
      %v2699 = vadd.f32 %v1931, %v2635
      %v2700 = vadd.f32 %v1932, %v2636
      %v2701 = vadd.f32 %v1933, %v2637
      %v2702 = vadd.f32 %v1934, %v2638
      %2703 = vset.pattern.permute.xlu0 3
      %2704 = vperm.xlu0 %2703, %v207
      %v2705 = vpop.permute.xlu0 %2704
      %2706 = vset.pattern.permute.xlu0 3
      %2707 = vperm.xlu0 %2706, %v208
      %v2708 = vpop.permute.xlu0 %2707
      %2709 = vset.pattern.permute.xlu0 3
      %2710 = vperm.xlu0 %2709, %v209
      %v2711 = vpop.permute.xlu0 %2710
      %2712 = vset.pattern.permute.xlu0 3
      %2713 = vperm.xlu0 %2712, %v210
      %v2714 = vpop.permute.xlu0 %2713
      %2715 = vset.pattern.permute.xlu0 3
      %2716 = vperm.xlu0 %2715, %v211
      %v2717 = vpop.permute.xlu0 %2716
      %2718 = vset.pattern.permute.xlu0 3
      %2719 = vperm.xlu0 %2718, %v212
      %v2720 = vpop.permute.xlu0 %2719
      %2721 = vset.pattern.permute.xlu0 3
      %2722 = vperm.xlu0 %2721, %v213
      %v2723 = vpop.permute.xlu0 %2722
      %2724 = vset.pattern.permute.xlu0 3
      %2725 = vperm.xlu0 %2724, %v214
      %v2726 = vpop.permute.xlu0 %2725
      %2727 = vset.pattern.permute.xlu0 3
      %2728 = vperm.xlu0 %2727, %v215
      %v2729 = vpop.permute.xlu0 %2728
      %2730 = vset.pattern.permute.xlu0 3
      %2731 = vperm.xlu0 %2730, %v216
      %v2732 = vpop.permute.xlu0 %2731
      %2733 = vset.pattern.permute.xlu0 3
      %2734 = vperm.xlu0 %2733, %v217
      %v2735 = vpop.permute.xlu0 %2734
      %2736 = vset.pattern.permute.xlu0 3
      %2737 = vperm.xlu0 %2736, %v218
      %v2738 = vpop.permute.xlu0 %2737
      %2739 = vset.pattern.permute.xlu0 3
      %2740 = vperm.xlu0 %2739, %v219
      %v2741 = vpop.permute.xlu0 %2740
      %2742 = vset.pattern.permute.xlu0 3
      %2743 = vperm.xlu0 %2742, %v220
      %v2744 = vpop.permute.xlu0 %2743
      %2745 = vset.pattern.permute.xlu0 3
      %2746 = vperm.xlu0 %2745, %v221
      %v2747 = vpop.permute.xlu0 %2746
      %2748 = vset.pattern.permute.xlu0 3
      %2749 = vperm.xlu0 %2748, %v222
      %v2750 = vpop.permute.xlu0 %2749
      %2751 = vset.pattern.permute.xlu0 3
      %2752 = vperm.xlu0 %2751, %v223
      %v2753 = vpop.permute.xlu0 %2752
      %2754 = vset.pattern.permute.xlu0 3
      %2755 = vperm.xlu0 %2754, %v224
      %v2756 = vpop.permute.xlu0 %2755
      %2757 = vset.pattern.permute.xlu0 3
      %2758 = vperm.xlu0 %2757, %v225
      %v2759 = vpop.permute.xlu0 %2758
      %2760 = vset.pattern.permute.xlu0 3
      %2761 = vperm.xlu0 %2760, %v226
      %v2762 = vpop.permute.xlu0 %2761
      %2763 = vset.pattern.permute.xlu0 3
      %2764 = vperm.xlu0 %2763, %v227
      %v2765 = vpop.permute.xlu0 %2764
      %2766 = vset.pattern.permute.xlu0 3
      %2767 = vperm.xlu0 %2766, %v228
      %v2768 = vpop.permute.xlu0 %2767
      %2769 = vset.pattern.permute.xlu0 3
      %2770 = vperm.xlu0 %2769, %v229
      %v2771 = vpop.permute.xlu0 %2770
      %2772 = vset.pattern.permute.xlu0 3
      %2773 = vperm.xlu0 %2772, %v230
      %v2774 = vpop.permute.xlu0 %2773
      %2775 = vset.pattern.permute.xlu0 3
      %2776 = vperm.xlu0 %2775, %v231
      %v2777 = vpop.permute.xlu0 %2776
      %2778 = vset.pattern.permute.xlu0 3
      %2779 = vperm.xlu0 %2778, %v232
      %v2780 = vpop.permute.xlu0 %2779
      %2781 = vset.pattern.permute.xlu0 3
      %2782 = vperm.xlu0 %2781, %v233
      %v2783 = vpop.permute.xlu0 %2782
      %2784 = vset.pattern.permute.xlu0 3
      %2785 = vperm.xlu0 %2784, %v234
      %v2786 = vpop.permute.xlu0 %2785
      %2787 = vset.pattern.permute.xlu0 3
      %2788 = vperm.xlu0 %2787, %v235
      %v2789 = vpop.permute.xlu0 %2788
      %2790 = vset.pattern.permute.xlu0 3
      %2791 = vperm.xlu0 %2790, %v236
      %v2792 = vpop.permute.xlu0 %2791
      %2793 = vset.pattern.permute.xlu0 3
      %2794 = vperm.xlu0 %2793, %v237
      %v2795 = vpop.permute.xlu0 %2794
      %2796 = vset.pattern.permute.xlu0 3
      %2797 = vperm.xlu0 %2796, %v238
      %v2798 = vpop.permute.xlu0 %2797
      %2799 = vset.pattern.permute.xlu0 3
      %2800 = vperm.xlu0 %2799, %v239
      %v2801 = vpop.permute.xlu0 %2800
      %2802 = vset.pattern.permute.xlu0 3
      %2803 = vperm.xlu0 %2802, %v240
      %v2804 = vpop.permute.xlu0 %2803
      %2805 = vset.pattern.permute.xlu0 3
      %2806 = vperm.xlu0 %2805, %v241
      %v2807 = vpop.permute.xlu0 %2806
      %2808 = vset.pattern.permute.xlu0 3
      %2809 = vperm.xlu0 %2808, %v242
      %v2810 = vpop.permute.xlu0 %2809
      %2811 = vset.pattern.permute.xlu0 3
      %2812 = vperm.xlu0 %2811, %v243
      %v2813 = vpop.permute.xlu0 %2812
      %2814 = vset.pattern.permute.xlu0 3
      %2815 = vperm.xlu0 %2814, %v244
      %v2816 = vpop.permute.xlu0 %2815
      %2817 = vset.pattern.permute.xlu0 3
      %2818 = vperm.xlu0 %2817, %v245
      %v2819 = vpop.permute.xlu0 %2818
      %2820 = vset.pattern.permute.xlu0 3
      %2821 = vperm.xlu0 %2820, %v246
      %v2822 = vpop.permute.xlu0 %2821
      %2823 = vset.pattern.permute.xlu0 3
      %2824 = vperm.xlu0 %2823, %v247
      %v2825 = vpop.permute.xlu0 %2824
      %2826 = vset.pattern.permute.xlu0 3
      %2827 = vperm.xlu0 %2826, %v248
      %v2828 = vpop.permute.xlu0 %2827
      %2829 = vset.pattern.permute.xlu0 3
      %2830 = vperm.xlu0 %2829, %v249
      %v2831 = vpop.permute.xlu0 %2830
      %2832 = vset.pattern.permute.xlu0 3
      %2833 = vperm.xlu0 %2832, %v250
      %v2834 = vpop.permute.xlu0 %2833
      %2835 = vset.pattern.permute.xlu0 3
      %2836 = vperm.xlu0 %2835, %v251
      %v2837 = vpop.permute.xlu0 %2836
      %2838 = vset.pattern.permute.xlu0 3
      %2839 = vperm.xlu0 %2838, %v252
      %v2840 = vpop.permute.xlu0 %2839
      %2841 = vset.pattern.permute.xlu0 3
      %2842 = vperm.xlu0 %2841, %v253
      %v2843 = vpop.permute.xlu0 %2842
      %2844 = vset.pattern.permute.xlu0 3
      %2845 = vperm.xlu0 %2844, %v254
      %v2846 = vpop.permute.xlu0 %2845
      %2847 = vset.pattern.permute.xlu0 3
      %2848 = vperm.xlu0 %2847, %v255
      %v2849 = vpop.permute.xlu0 %2848
      %2850 = vset.pattern.permute.xlu0 3
      %2851 = vperm.xlu0 %2850, %v256
      %v2852 = vpop.permute.xlu0 %2851
      %2853 = vset.pattern.permute.xlu0 3
      %2854 = vperm.xlu0 %2853, %v257
      %v2855 = vpop.permute.xlu0 %2854
      %2856 = vset.pattern.permute.xlu0 3
      %2857 = vperm.xlu0 %2856, %v258
      %v2858 = vpop.permute.xlu0 %2857
      %2859 = vset.pattern.permute.xlu0 3
      %2860 = vperm.xlu0 %2859, %v259
      %v2861 = vpop.permute.xlu0 %2860
      %2862 = vset.pattern.permute.xlu0 3
      %2863 = vperm.xlu0 %2862, %v260
      %v2864 = vpop.permute.xlu0 %2863
      %2865 = vset.pattern.permute.xlu0 3
      %2866 = vperm.xlu0 %2865, %v261
      %v2867 = vpop.permute.xlu0 %2866
      %2868 = vset.pattern.permute.xlu0 3
      %2869 = vperm.xlu0 %2868, %v262
      %v2870 = vpop.permute.xlu0 %2869
      %2871 = vset.pattern.permute.xlu0 3
      %2872 = vperm.xlu0 %2871, %v263
      %v2873 = vpop.permute.xlu0 %2872
      %2874 = vset.pattern.permute.xlu0 3
      %2875 = vperm.xlu0 %2874, %v264
      %v2876 = vpop.permute.xlu0 %2875
      %2877 = vset.pattern.permute.xlu0 3
      %2878 = vperm.xlu0 %2877, %v265
      %v2879 = vpop.permute.xlu0 %2878
      %2880 = vset.pattern.permute.xlu0 3
      %2881 = vperm.xlu0 %2880, %v266
      %v2882 = vpop.permute.xlu0 %2881
      %2883 = vset.pattern.permute.xlu0 3
      %2884 = vperm.xlu0 %2883, %v267
      %v2885 = vpop.permute.xlu0 %2884
      %2886 = vset.pattern.permute.xlu0 3
      %2887 = vperm.xlu0 %2886, %v268
      %v2888 = vpop.permute.xlu0 %2887
      %2889 = vset.pattern.permute.xlu0 3
      %2890 = vperm.xlu0 %2889, %v269
      %v2891 = vpop.permute.xlu0 %2890
      %2892 = vset.pattern.permute.xlu0 3
      %2893 = vperm.xlu0 %2892, %v270
      %v2894 = vpop.permute.xlu0 %2893
      %vm2895 = vcmp.eq.s32.totalorder %v2705, %v206
      %vm2896 = vcmp.eq.s32.totalorder %v2708, %v206
      %vm2897 = vcmp.eq.s32.totalorder %v2711, %v206
      %vm2898 = vcmp.eq.s32.totalorder %v2714, %v206
      %vm2899 = vcmp.eq.s32.totalorder %v2717, %v206
      %vm2900 = vcmp.eq.s32.totalorder %v2720, %v206
      %vm2901 = vcmp.eq.s32.totalorder %v2723, %v206
      %vm2902 = vcmp.eq.s32.totalorder %v2726, %v206
      %vm2903 = vcmp.eq.s32.totalorder %v2729, %v206
      %vm2904 = vcmp.eq.s32.totalorder %v2732, %v206
      %vm2905 = vcmp.eq.s32.totalorder %v2735, %v206
      %vm2906 = vcmp.eq.s32.totalorder %v2738, %v206
      %vm2907 = vcmp.eq.s32.totalorder %v2741, %v206
      %vm2908 = vcmp.eq.s32.totalorder %v2744, %v206
      %vm2909 = vcmp.eq.s32.totalorder %v2747, %v206
      %vm2910 = vcmp.eq.s32.totalorder %v2750, %v206
      %vm2911 = vcmp.eq.s32.totalorder %v2753, %v206
      %vm2912 = vcmp.eq.s32.totalorder %v2756, %v206
      %vm2913 = vcmp.eq.s32.totalorder %v2759, %v206
      %vm2914 = vcmp.eq.s32.totalorder %v2762, %v206
      %vm2915 = vcmp.eq.s32.totalorder %v2765, %v206
      %vm2916 = vcmp.eq.s32.totalorder %v2768, %v206
      %vm2917 = vcmp.eq.s32.totalorder %v2771, %v206
      %vm2918 = vcmp.eq.s32.totalorder %v2774, %v206
      %vm2919 = vcmp.eq.s32.totalorder %v2777, %v206
      %vm2920 = vcmp.eq.s32.totalorder %v2780, %v206
      %vm2921 = vcmp.eq.s32.totalorder %v2783, %v206
      %vm2922 = vcmp.eq.s32.totalorder %v2786, %v206
      %vm2923 = vcmp.eq.s32.totalorder %v2789, %v206
      %vm2924 = vcmp.eq.s32.totalorder %v2792, %v206
      %vm2925 = vcmp.eq.s32.totalorder %v2795, %v206
      %vm2926 = vcmp.eq.s32.totalorder %v2798, %v206
      %vm2927 = vcmp.eq.s32.totalorder %v2801, %v206
      %vm2928 = vcmp.eq.s32.totalorder %v2804, %v206
      %vm2929 = vcmp.eq.s32.totalorder %v2807, %v206
      %vm2930 = vcmp.eq.s32.totalorder %v2810, %v206
      %vm2931 = vcmp.eq.s32.totalorder %v2813, %v206
      %vm2932 = vcmp.eq.s32.totalorder %v2816, %v206
      %vm2933 = vcmp.eq.s32.totalorder %v2819, %v206
      %vm2934 = vcmp.eq.s32.totalorder %v2822, %v206
      %vm2935 = vcmp.eq.s32.totalorder %v2825, %v206
      %vm2936 = vcmp.eq.s32.totalorder %v2828, %v206
      %vm2937 = vcmp.eq.s32.totalorder %v2831, %v206
      %vm2938 = vcmp.eq.s32.totalorder %v2834, %v206
      %vm2939 = vcmp.eq.s32.totalorder %v2837, %v206
      %vm2940 = vcmp.eq.s32.totalorder %v2840, %v206
      %vm2941 = vcmp.eq.s32.totalorder %v2843, %v206
      %vm2942 = vcmp.eq.s32.totalorder %v2846, %v206
      %vm2943 = vcmp.eq.s32.totalorder %v2849, %v206
      %vm2944 = vcmp.eq.s32.totalorder %v2852, %v206
      %vm2945 = vcmp.eq.s32.totalorder %v2855, %v206
      %vm2946 = vcmp.eq.s32.totalorder %v2858, %v206
      %vm2947 = vcmp.eq.s32.totalorder %v2861, %v206
      %vm2948 = vcmp.eq.s32.totalorder %v2864, %v206
      %vm2949 = vcmp.eq.s32.totalorder %v2867, %v206
      %vm2950 = vcmp.eq.s32.totalorder %v2870, %v206
      %vm2951 = vcmp.eq.s32.totalorder %v2873, %v206
      %vm2952 = vcmp.eq.s32.totalorder %v2876, %v206
      %vm2953 = vcmp.eq.s32.totalorder %v2879, %v206
      %vm2954 = vcmp.eq.s32.totalorder %v2882, %v206
      %vm2955 = vcmp.eq.s32.totalorder %v2885, %v206
      %vm2956 = vcmp.eq.s32.totalorder %v2888, %v206
      %vm2957 = vcmp.eq.s32.totalorder %v2891, %v206
      %vm2958 = vcmp.eq.s32.totalorder %v2894, %v206
      %v2959 = vsel %vm2895, 1, 0
      %v2960 = vsel %vm2896, 1, 0
      %v2961 = vsel %vm2897, 1, 0
      %v2962 = vsel %vm2898, 1, 0
      %v2963 = vsel %vm2899, 1, 0
      %v2964 = vsel %vm2900, 1, 0
      %v2965 = vsel %vm2901, 1, 0
      %v2966 = vsel %vm2902, 1, 0
      %v2967 = vsel %vm2903, 1, 0
      %v2968 = vsel %vm2904, 1, 0
      %v2969 = vsel %vm2905, 1, 0
      %v2970 = vsel %vm2906, 1, 0
      %v2971 = vsel %vm2907, 1, 0
      %v2972 = vsel %vm2908, 1, 0
      %v2973 = vsel %vm2909, 1, 0
      %v2974 = vsel %vm2910, 1, 0
      %v2975 = vsel %vm2911, 1, 0
      %v2976 = vsel %vm2912, 1, 0
      %v2977 = vsel %vm2913, 1, 0
      %v2978 = vsel %vm2914, 1, 0
      %v2979 = vsel %vm2915, 1, 0
      %v2980 = vsel %vm2916, 1, 0
      %v2981 = vsel %vm2917, 1, 0
      %v2982 = vsel %vm2918, 1, 0
      %v2983 = vsel %vm2919, 1, 0
      %v2984 = vsel %vm2920, 1, 0
      %v2985 = vsel %vm2921, 1, 0
      %v2986 = vsel %vm2922, 1, 0
      %v2987 = vsel %vm2923, 1, 0
      %v2988 = vsel %vm2924, 1, 0
      %v2989 = vsel %vm2925, 1, 0
      %v2990 = vsel %vm2926, 1, 0
      %v2991 = vsel %vm2927, 1, 0
      %v2992 = vsel %vm2928, 1, 0
      %v2993 = vsel %vm2929, 1, 0
      %v2994 = vsel %vm2930, 1, 0
      %v2995 = vsel %vm2931, 1, 0
      %v2996 = vsel %vm2932, 1, 0
      %v2997 = vsel %vm2933, 1, 0
      %v2998 = vsel %vm2934, 1, 0
      %v2999 = vsel %vm2935, 1, 0
      %v3000 = vsel %vm2936, 1, 0
      %v3001 = vsel %vm2937, 1, 0
      %v3002 = vsel %vm2938, 1, 0
      %v3003 = vsel %vm2939, 1, 0
      %v3004 = vsel %vm2940, 1, 0
      %v3005 = vsel %vm2941, 1, 0
      %v3006 = vsel %vm2942, 1, 0
      %v3007 = vsel %vm2943, 1, 0
      %v3008 = vsel %vm2944, 1, 0
      %v3009 = vsel %vm2945, 1, 0
      %v3010 = vsel %vm2946, 1, 0
      %v3011 = vsel %vm2947, 1, 0
      %v3012 = vsel %vm2948, 1, 0
      %v3013 = vsel %vm2949, 1, 0
      %v3014 = vsel %vm2950, 1, 0
      %v3015 = vsel %vm2951, 1, 0
      %v3016 = vsel %vm2952, 1, 0
      %v3017 = vsel %vm2953, 1, 0
      %v3018 = vsel %vm2954, 1, 0
      %v3019 = vsel %vm2955, 1, 0
      %v3020 = vsel %vm2956, 1, 0
      %v3021 = vsel %vm2957, 1, 0
      %v3022 = vsel %vm2958, 1, 0
      %v3023 = vcvt.s32.f32 %v2959
      %v3024 = vcvt.s32.f32 %v2960
      %v3025 = vcvt.s32.f32 %v2961
      %v3026 = vcvt.s32.f32 %v2962
      %v3027 = vcvt.s32.f32 %v2963
      %v3028 = vcvt.s32.f32 %v2964
      %v3029 = vcvt.s32.f32 %v2965
      %v3030 = vcvt.s32.f32 %v2966
      %v3031 = vcvt.s32.f32 %v2967
      %v3032 = vcvt.s32.f32 %v2968
      %v3033 = vcvt.s32.f32 %v2969
      %v3034 = vcvt.s32.f32 %v2970
      %v3035 = vcvt.s32.f32 %v2971
      %v3036 = vcvt.s32.f32 %v2972
      %v3037 = vcvt.s32.f32 %v2973
      %v3038 = vcvt.s32.f32 %v2974
      %v3039 = vcvt.s32.f32 %v2975
      %v3040 = vcvt.s32.f32 %v2976
      %v3041 = vcvt.s32.f32 %v2977
      %v3042 = vcvt.s32.f32 %v2978
      %v3043 = vcvt.s32.f32 %v2979
      %v3044 = vcvt.s32.f32 %v2980
      %v3045 = vcvt.s32.f32 %v2981
      %v3046 = vcvt.s32.f32 %v2982
      %v3047 = vcvt.s32.f32 %v2983
      %v3048 = vcvt.s32.f32 %v2984
      %v3049 = vcvt.s32.f32 %v2985
      %v3050 = vcvt.s32.f32 %v2986
      %v3051 = vcvt.s32.f32 %v2987
      %v3052 = vcvt.s32.f32 %v2988
      %v3053 = vcvt.s32.f32 %v2989
      %v3054 = vcvt.s32.f32 %v2990
      %v3055 = vcvt.s32.f32 %v2991
      %v3056 = vcvt.s32.f32 %v2992
      %v3057 = vcvt.s32.f32 %v2993
      %v3058 = vcvt.s32.f32 %v2994
      %v3059 = vcvt.s32.f32 %v2995
      %v3060 = vcvt.s32.f32 %v2996
      %v3061 = vcvt.s32.f32 %v2997
      %v3062 = vcvt.s32.f32 %v2998
      %v3063 = vcvt.s32.f32 %v2999
      %v3064 = vcvt.s32.f32 %v3000
      %v3065 = vcvt.s32.f32 %v3001
      %v3066 = vcvt.s32.f32 %v3002
      %v3067 = vcvt.s32.f32 %v3003
      %v3068 = vcvt.s32.f32 %v3004
      %v3069 = vcvt.s32.f32 %v3005
      %v3070 = vcvt.s32.f32 %v3006
      %v3071 = vcvt.s32.f32 %v3007
      %v3072 = vcvt.s32.f32 %v3008
      %v3073 = vcvt.s32.f32 %v3009
      %v3074 = vcvt.s32.f32 %v3010
      %v3075 = vcvt.s32.f32 %v3011
      %v3076 = vcvt.s32.f32 %v3012
      %v3077 = vcvt.s32.f32 %v3013
      %v3078 = vcvt.s32.f32 %v3014
      %v3079 = vcvt.s32.f32 %v3015
      %v3080 = vcvt.s32.f32 %v3016
      %v3081 = vcvt.s32.f32 %v3017
      %v3082 = vcvt.s32.f32 %v3018
      %v3083 = vcvt.s32.f32 %v3019
      %v3084 = vcvt.s32.f32 %v3020
      %v3085 = vcvt.s32.f32 %v3021
      %v3086 = vcvt.s32.f32 %v3022
      %3087 = vset.pattern.permute.xlu0 3
      %3088 = vperm.xlu0 %3087, %v655
      %v3089 = vpop.permute.xlu0 %3088
      %3091 = vset.pattern.permute.xlu0 3
      %3092 = vperm.xlu0 %3091, %v656
      %v3093 = vpop.permute.xlu0 %3092
      %3095 = vset.pattern.permute.xlu0 3
      %3096 = vperm.xlu0 %3095, %v657
      %v3097 = vpop.permute.xlu0 %3096
      %3099 = vset.pattern.permute.xlu0 3
      %3100 = vperm.xlu0 %3099, %v658
      %v3101 = vpop.permute.xlu0 %3100
      %3103 = vset.pattern.permute.xlu0 3
      %3104 = vperm.xlu0 %3103, %v659
      %v3105 = vpop.permute.xlu0 %3104
      %3107 = vset.pattern.permute.xlu0 3
      %3108 = vperm.xlu0 %3107, %v660
      %v3109 = vpop.permute.xlu0 %3108
      %3111 = vset.pattern.permute.xlu0 3
      %3112 = vperm.xlu0 %3111, %v661
      %v3113 = vpop.permute.xlu0 %3112
      %3115 = vset.pattern.permute.xlu0 3
      %3116 = vperm.xlu0 %3115, %v662
      %v3117 = vpop.permute.xlu0 %3116
      %3119 = vset.pattern.permute.xlu0 3
      %3120 = vperm.xlu0 %3119, %v663
      %v3121 = vpop.permute.xlu0 %3120
      %3123 = vset.pattern.permute.xlu0 3
      %3124 = vperm.xlu0 %3123, %v664
      %v3125 = vpop.permute.xlu0 %3124
      %3127 = vset.pattern.permute.xlu0 3
      %3128 = vperm.xlu0 %3127, %v665
      %v3129 = vpop.permute.xlu0 %3128
      %3131 = vset.pattern.permute.xlu0 3
      %3132 = vperm.xlu0 %3131, %v666
      %v3133 = vpop.permute.xlu0 %3132
      %3135 = vset.pattern.permute.xlu0 3
      %3136 = vperm.xlu0 %3135, %v667
      %v3137 = vpop.permute.xlu0 %3136
      %3139 = vset.pattern.permute.xlu0 3
      %3140 = vperm.xlu0 %3139, %v668
      %v3141 = vpop.permute.xlu0 %3140
      %3143 = vset.pattern.permute.xlu0 3
      %3144 = vperm.xlu0 %3143, %v669
      %v3145 = vpop.permute.xlu0 %3144
      %3147 = vset.pattern.permute.xlu0 3
      %3148 = vperm.xlu0 %3147, %v670
      %v3149 = vpop.permute.xlu0 %3148
      %3151 = vset.pattern.permute.xlu0 3
      %3152 = vperm.xlu0 %3151, %v671
      %v3153 = vpop.permute.xlu0 %3152
      %3155 = vset.pattern.permute.xlu0 3
      %3156 = vperm.xlu0 %3155, %v672
      %v3157 = vpop.permute.xlu0 %3156
      %3159 = vset.pattern.permute.xlu0 3
      %3160 = vperm.xlu0 %3159, %v673
      %v3161 = vpop.permute.xlu0 %3160
      %3163 = vset.pattern.permute.xlu0 3
      %3164 = vperm.xlu0 %3163, %v674
      %v3165 = vpop.permute.xlu0 %3164
      %3167 = vset.pattern.permute.xlu0 3
      %3168 = vperm.xlu0 %3167, %v675
      %v3169 = vpop.permute.xlu0 %3168
      %3171 = vset.pattern.permute.xlu0 3
      %3172 = vperm.xlu0 %3171, %v676
      %v3173 = vpop.permute.xlu0 %3172
      %3175 = vset.pattern.permute.xlu0 3
      %3176 = vperm.xlu0 %3175, %v677
      %v3177 = vpop.permute.xlu0 %3176
      %3179 = vset.pattern.permute.xlu0 3
      %3180 = vperm.xlu0 %3179, %v678
      %v3181 = vpop.permute.xlu0 %3180
      %3183 = vset.pattern.permute.xlu0 3
      %3184 = vperm.xlu0 %3183, %v679
      %v3185 = vpop.permute.xlu0 %3184
      %3187 = vset.pattern.permute.xlu0 3
      %3188 = vperm.xlu0 %3187, %v680
      %v3189 = vpop.permute.xlu0 %3188
      %3191 = vset.pattern.permute.xlu0 3
      %3192 = vperm.xlu0 %3191, %v681
      %v3193 = vpop.permute.xlu0 %3192
      %3195 = vset.pattern.permute.xlu0 3
      %3196 = vperm.xlu0 %3195, %v682
      %v3197 = vpop.permute.xlu0 %3196
      %3199 = vset.pattern.permute.xlu0 3
      %3200 = vperm.xlu0 %3199, %v683
      %v3201 = vpop.permute.xlu0 %3200
      %3203 = vset.pattern.permute.xlu0 3
      %3204 = vperm.xlu0 %3203, %v684
      %v3205 = vpop.permute.xlu0 %3204
      %3207 = vset.pattern.permute.xlu0 3
      %3208 = vperm.xlu0 %3207, %v685
      %v3209 = vpop.permute.xlu0 %3208
      %3211 = vset.pattern.permute.xlu0 3
      %3212 = vperm.xlu0 %3211, %v686
      %v3213 = vpop.permute.xlu0 %3212
      %3215 = vset.pattern.permute.xlu0 3
      %3216 = vperm.xlu0 %3215, %v687
      %v3217 = vpop.permute.xlu0 %3216
      %3219 = vset.pattern.permute.xlu0 3
      %3220 = vperm.xlu0 %3219, %v688
      %v3221 = vpop.permute.xlu0 %3220
      %3223 = vset.pattern.permute.xlu0 3
      %3224 = vperm.xlu0 %3223, %v689
      %v3225 = vpop.permute.xlu0 %3224
      %3227 = vset.pattern.permute.xlu0 3
      %3228 = vperm.xlu0 %3227, %v690
      %v3229 = vpop.permute.xlu0 %3228
      %3231 = vset.pattern.permute.xlu0 3
      %3232 = vperm.xlu0 %3231, %v691
      %v3233 = vpop.permute.xlu0 %3232
      %3235 = vset.pattern.permute.xlu0 3
      %3236 = vperm.xlu0 %3235, %v692
      %v3237 = vpop.permute.xlu0 %3236
      %3239 = vset.pattern.permute.xlu0 3
      %3240 = vperm.xlu0 %3239, %v693
      %v3241 = vpop.permute.xlu0 %3240
      %3243 = vset.pattern.permute.xlu0 3
      %3244 = vperm.xlu0 %3243, %v694
      %v3245 = vpop.permute.xlu0 %3244
      %3247 = vset.pattern.permute.xlu0 3
      %3248 = vperm.xlu0 %3247, %v695
      %v3249 = vpop.permute.xlu0 %3248
      %3251 = vset.pattern.permute.xlu0 3
      %3252 = vperm.xlu0 %3251, %v696
      %v3253 = vpop.permute.xlu0 %3252
      %3255 = vset.pattern.permute.xlu0 3
      %3256 = vperm.xlu0 %3255, %v697
      %v3257 = vpop.permute.xlu0 %3256
      %3259 = vset.pattern.permute.xlu0 3
      %3260 = vperm.xlu0 %3259, %v698
      %v3261 = vpop.permute.xlu0 %3260
      %3263 = vset.pattern.permute.xlu0 3
      %3264 = vperm.xlu0 %3263, %v699
      %v3265 = vpop.permute.xlu0 %3264
      %3267 = vset.pattern.permute.xlu0 3
      %3268 = vperm.xlu0 %3267, %v700
      %v3269 = vpop.permute.xlu0 %3268
      %3271 = vset.pattern.permute.xlu0 3
      %3272 = vperm.xlu0 %3271, %v701
      %v3273 = vpop.permute.xlu0 %3272
      %3275 = vset.pattern.permute.xlu0 3
      %3276 = vperm.xlu0 %3275, %v702
      %v3277 = vpop.permute.xlu0 %3276
      %3279 = vset.pattern.permute.xlu0 3
      %3280 = vperm.xlu0 %3279, %v703
      %v3281 = vpop.permute.xlu0 %3280
      %3283 = vset.pattern.permute.xlu0 3
      %3284 = vperm.xlu0 %3283, %v704
      %v3285 = vpop.permute.xlu0 %3284
      %3287 = vset.pattern.permute.xlu0 3
      %3288 = vperm.xlu0 %3287, %v705
      %v3289 = vpop.permute.xlu0 %3288
      %3291 = vset.pattern.permute.xlu0 3
      %3292 = vperm.xlu0 %3291, %v706
      %v3293 = vpop.permute.xlu0 %3292
      %3295 = vset.pattern.permute.xlu0 3
      %3296 = vperm.xlu0 %3295, %v707
      %v3297 = vpop.permute.xlu0 %3296
      %3299 = vset.pattern.permute.xlu0 3
      %3300 = vperm.xlu0 %3299, %v708
      %v3301 = vpop.permute.xlu0 %3300
      %3303 = vset.pattern.permute.xlu0 3
      %3304 = vperm.xlu0 %3303, %v709
      %v3305 = vpop.permute.xlu0 %3304
      %3307 = vset.pattern.permute.xlu0 3
      %3308 = vperm.xlu0 %3307, %v710
      %v3309 = vpop.permute.xlu0 %3308
      %3311 = vset.pattern.permute.xlu0 3
      %3312 = vperm.xlu0 %3311, %v711
      %v3313 = vpop.permute.xlu0 %3312
      %3315 = vset.pattern.permute.xlu0 3
      %3316 = vperm.xlu0 %3315, %v712
      %v3317 = vpop.permute.xlu0 %3316
      %3319 = vset.pattern.permute.xlu0 3
      %3320 = vperm.xlu0 %3319, %v713
      %v3321 = vpop.permute.xlu0 %3320
      %3323 = vset.pattern.permute.xlu0 3
      %3324 = vperm.xlu0 %3323, %v714
      %v3325 = vpop.permute.xlu0 %3324
      %3327 = vset.pattern.permute.xlu0 3
      %3328 = vperm.xlu0 %3327, %v715
      %v3329 = vpop.permute.xlu0 %3328
      %3331 = vset.pattern.permute.xlu0 3
      %3332 = vperm.xlu0 %3331, %v716
      %v3333 = vpop.permute.xlu0 %3332
      %3335 = vset.pattern.permute.xlu0 3
      %3336 = vperm.xlu0 %3335, %v717
      %v3337 = vpop.permute.xlu0 %3336
      %3339 = vset.pattern.permute.xlu0 3
      %3340 = vperm.xlu0 %3339, %v718
      %v3341 = vpop.permute.xlu0 %3340
      %v3343 = vmul.f32 %v3023, %v3089
      %v3344 = vmul.f32 %v3024, %v3093
      %v3345 = vmul.f32 %v3025, %v3097
      %v3346 = vmul.f32 %v3026, %v3101
      %v3347 = vmul.f32 %v3027, %v3105
      %v3348 = vmul.f32 %v3028, %v3109
      %v3349 = vmul.f32 %v3029, %v3113
      %v3350 = vmul.f32 %v3030, %v3117
      %v3351 = vmul.f32 %v3031, %v3121
      %v3352 = vmul.f32 %v3032, %v3125
      %v3353 = vmul.f32 %v3033, %v3129
      %v3354 = vmul.f32 %v3034, %v3133
      %v3355 = vmul.f32 %v3035, %v3137
      %v3356 = vmul.f32 %v3036, %v3141
      %v3357 = vmul.f32 %v3037, %v3145
      %v3358 = vmul.f32 %v3038, %v3149
      %v3359 = vmul.f32 %v3039, %v3153
      %v3360 = vmul.f32 %v3040, %v3157
      %v3361 = vmul.f32 %v3041, %v3161
      %v3362 = vmul.f32 %v3042, %v3165
      %v3363 = vmul.f32 %v3043, %v3169
      %v3364 = vmul.f32 %v3044, %v3173
      %v3365 = vmul.f32 %v3045, %v3177
      %v3366 = vmul.f32 %v3046, %v3181
      %v3367 = vmul.f32 %v3047, %v3185
      %v3368 = vmul.f32 %v3048, %v3189
      %v3369 = vmul.f32 %v3049, %v3193
      %v3370 = vmul.f32 %v3050, %v3197
      %v3371 = vmul.f32 %v3051, %v3201
      %v3372 = vmul.f32 %v3052, %v3205
      %v3373 = vmul.f32 %v3053, %v3209
      %v3374 = vmul.f32 %v3054, %v3213
      %v3375 = vmul.f32 %v3055, %v3217
      %v3376 = vmul.f32 %v3056, %v3221
      %v3377 = vmul.f32 %v3057, %v3225
      %v3378 = vmul.f32 %v3058, %v3229
      %v3379 = vmul.f32 %v3059, %v3233
      %v3380 = vmul.f32 %v3060, %v3237
      %v3381 = vmul.f32 %v3061, %v3241
      %v3382 = vmul.f32 %v3062, %v3245
      %v3383 = vmul.f32 %v3063, %v3249
      %v3384 = vmul.f32 %v3064, %v3253
      %v3385 = vmul.f32 %v3065, %v3257
      %v3386 = vmul.f32 %v3066, %v3261
      %v3387 = vmul.f32 %v3067, %v3265
      %v3388 = vmul.f32 %v3068, %v3269
      %v3389 = vmul.f32 %v3069, %v3273
      %v3390 = vmul.f32 %v3070, %v3277
      %v3391 = vmul.f32 %v3071, %v3281
      %v3392 = vmul.f32 %v3072, %v3285
      %v3393 = vmul.f32 %v3073, %v3289
      %v3394 = vmul.f32 %v3074, %v3293
      %v3395 = vmul.f32 %v3075, %v3297
      %v3396 = vmul.f32 %v3076, %v3301
      %v3397 = vmul.f32 %v3077, %v3305
      %v3398 = vmul.f32 %v3078, %v3309
      %v3399 = vmul.f32 %v3079, %v3313
      %v3400 = vmul.f32 %v3080, %v3317
      %v3401 = vmul.f32 %v3081, %v3321
      %v3402 = vmul.f32 %v3082, %v3325
      %v3403 = vmul.f32 %v3083, %v3329
      %v3404 = vmul.f32 %v3084, %v3333
      %v3405 = vmul.f32 %v3085, %v3337
      %v3406 = vmul.f32 %v3086, %v3341
      %v3407 = vadd.f32 %v2639, %v3343
      %v3408 = vadd.f32 %v2640, %v3344
      %v3409 = vadd.f32 %v2641, %v3345
      %v3410 = vadd.f32 %v2642, %v3346
      %v3411 = vadd.f32 %v2643, %v3347
      %v3412 = vadd.f32 %v2644, %v3348
      %v3413 = vadd.f32 %v2645, %v3349
      %v3414 = vadd.f32 %v2646, %v3350
      %v3415 = vadd.f32 %v2647, %v3351
      %v3416 = vadd.f32 %v2648, %v3352
      %v3417 = vadd.f32 %v2649, %v3353
      %v3418 = vadd.f32 %v2650, %v3354
      %v3419 = vadd.f32 %v2651, %v3355
      %v3420 = vadd.f32 %v2652, %v3356
      %v3421 = vadd.f32 %v2653, %v3357
      %v3422 = vadd.f32 %v2654, %v3358
      %v3423 = vadd.f32 %v2655, %v3359
      %v3424 = vadd.f32 %v2656, %v3360
      %v3425 = vadd.f32 %v2657, %v3361
      %v3426 = vadd.f32 %v2658, %v3362
      %v3427 = vadd.f32 %v2659, %v3363
      %v3428 = vadd.f32 %v2660, %v3364
      %v3429 = vadd.f32 %v2661, %v3365
      %v3430 = vadd.f32 %v2662, %v3366
      %v3431 = vadd.f32 %v2663, %v3367
      %v3432 = vadd.f32 %v2664, %v3368
      %v3433 = vadd.f32 %v2665, %v3369
      %v3434 = vadd.f32 %v2666, %v3370
      %v3435 = vadd.f32 %v2667, %v3371
      %v3436 = vadd.f32 %v2668, %v3372
      %v3437 = vadd.f32 %v2669, %v3373
      %v3438 = vadd.f32 %v2670, %v3374
      %v3439 = vadd.f32 %v2671, %v3375
      %v3440 = vadd.f32 %v2672, %v3376
      %v3441 = vadd.f32 %v2673, %v3377
      %v3442 = vadd.f32 %v2674, %v3378
      %v3443 = vadd.f32 %v2675, %v3379
      %v3444 = vadd.f32 %v2676, %v3380
      %v3445 = vadd.f32 %v2677, %v3381
      %v3446 = vadd.f32 %v2678, %v3382
      %v3447 = vadd.f32 %v2679, %v3383
      %v3448 = vadd.f32 %v2680, %v3384
      %v3449 = vadd.f32 %v2681, %v3385
      %v3450 = vadd.f32 %v2682, %v3386
      %v3451 = vadd.f32 %v2683, %v3387
      %v3452 = vadd.f32 %v2684, %v3388
      %v3453 = vadd.f32 %v2685, %v3389
      %v3454 = vadd.f32 %v2686, %v3390
      %v3455 = vadd.f32 %v2687, %v3391
      %v3456 = vadd.f32 %v2688, %v3392
      %v3457 = vadd.f32 %v2689, %v3393
      %v3458 = vadd.f32 %v2690, %v3394
      %v3459 = vadd.f32 %v2691, %v3395
      %v3460 = vadd.f32 %v2692, %v3396
      %v3461 = vadd.f32 %v2693, %v3397
      %v3462 = vadd.f32 %v2694, %v3398
      %v3463 = vadd.f32 %v2695, %v3399
      %v3464 = vadd.f32 %v2696, %v3400
      %v3465 = vadd.f32 %v2697, %v3401
      %v3466 = vadd.f32 %v2698, %v3402
      %v3467 = vadd.f32 %v2699, %v3403
      %v3468 = vadd.f32 %v2700, %v3404
      %v3469 = vadd.f32 %v2701, %v3405
      %v3470 = vadd.f32 %v2702, %v3406
      %v3471 = vpack.c.bf16 %v3408, %v3407
      %v3472 = vpack.c.bf16 %v3410, %v3409
      %v3473 = vpack.c.bf16 %v3412, %v3411
      %v3474 = vpack.c.bf16 %v3414, %v3413
      %v3475 = vpack.c.bf16 %v3416, %v3415
      %v3476 = vpack.c.bf16 %v3418, %v3417
      %v3477 = vpack.c.bf16 %v3420, %v3419
      %v3478 = vpack.c.bf16 %v3422, %v3421
      %v3479 = vpack.c.bf16 %v3424, %v3423
      %v3480 = vpack.c.bf16 %v3426, %v3425
      %v3481 = vpack.c.bf16 %v3428, %v3427
      %v3482 = vpack.c.bf16 %v3430, %v3429
      %v3483 = vpack.c.bf16 %v3432, %v3431
      %v3484 = vpack.c.bf16 %v3434, %v3433
      %v3485 = vpack.c.bf16 %v3436, %v3435
      %v3486 = vpack.c.bf16 %v3438, %v3437
      %v3487 = vpack.c.bf16 %v3440, %v3439
      %v3488 = vpack.c.bf16 %v3442, %v3441
      %v3489 = vpack.c.bf16 %v3444, %v3443
      %v3490 = vpack.c.bf16 %v3446, %v3445
      %v3491 = vpack.c.bf16 %v3448, %v3447
      %v3492 = vpack.c.bf16 %v3450, %v3449
      %v3493 = vpack.c.bf16 %v3452, %v3451
      %v3494 = vpack.c.bf16 %v3454, %v3453
      %v3495 = vpack.c.bf16 %v3456, %v3455
      %v3496 = vpack.c.bf16 %v3458, %v3457
      %v3497 = vpack.c.bf16 %v3460, %v3459
      %v3498 = vpack.c.bf16 %v3462, %v3461
      %v3499 = vpack.c.bf16 %v3464, %v3463
      %v3500 = vpack.c.bf16 %v3466, %v3465
      %v3501 = vpack.c.bf16 %v3468, %v3467
      %v3502 = vpack.c.bf16 %v3470, %v3469
      %v3503 = vld [vmem:[%s2] sm:$0xf]
      %v3504 = vld [vmem:[%s2 + $0x4] sm:$0xf]
      %v3505 = vld [vmem:[%s2 + $0x8] sm:$0xf]
      %v3506 = vld [vmem:[%s2 + $0xc] sm:$0xf]
      %v3507 = vld [vmem:[%s2 + $0x10] sm:$0xf]
      %v3508 = vld [vmem:[%s2 + $0x14] sm:$0xf]
      %v3509 = vld [vmem:[%s2 + $0x18] sm:$0xf]
      %v3510 = vld [vmem:[%s2 + $0x1c] sm:$0xf]
      %v3511 = vld [vmem:[%s2 + $0x20] sm:$0xf]
      %v3512 = vld [vmem:[%s2 + $0x24] sm:$0xf]
      %v3513 = vld [vmem:[%s2 + $0x28] sm:$0xf]
      %v3514 = vld [vmem:[%s2 + $0x2c] sm:$0xf]
      %v3515 = vld [vmem:[%s2 + $0x30] sm:$0xf]
      %v3516 = vld [vmem:[%s2 + $0x34] sm:$0xf]
      %v3517 = vld [vmem:[%s2 + $0x38] sm:$0xf]
      %v3518 = vld [vmem:[%s2 + $0x3c] sm:$0xf]
      %v3519 = vld [vmem:[%s2 + $0x40] sm:$0xf]
      %v3520 = vld [vmem:[%s2 + $0x44] sm:$0xf]
      %v3521 = vld [vmem:[%s2 + $0x48] sm:$0xf]
      %v3522 = vld [vmem:[%s2 + $0x4c] sm:$0xf]
      %v3523 = vld [vmem:[%s2 + $0x50] sm:$0xf]
      %v3524 = vld [vmem:[%s2 + $0x54] sm:$0xf]
      %v3525 = vld [vmem:[%s2 + $0x58] sm:$0xf]
      %v3526 = vld [vmem:[%s2 + $0x5c] sm:$0xf]
      %v3527 = vld [vmem:[%s2 + $0x60] sm:$0xf]
      %v3528 = vld [vmem:[%s2 + $0x64] sm:$0xf]
      %v3529 = vld [vmem:[%s2 + $0x68] sm:$0xf]
      %v3530 = vld [vmem:[%s2 + $0x6c] sm:$0xf]
      %v3531 = vld [vmem:[%s2 + $0x70] sm:$0xf]
      %v3532 = vld [vmem:[%s2 + $0x74] sm:$0xf]
      %v3533 = vld [vmem:[%s2 + $0x78] sm:$0xf]
      %v3534 = vld [vmem:[%s2 + $0x7c] sm:$0xf]
      %v3535 = vld [vmem:[%s2 + $0x80] sm:$0xf]
      %v3536 = vld [vmem:[%s2 + $0x84] sm:$0xf]
      %v3537 = vld [vmem:[%s2 + $0x88] sm:$0xf]
      %v3538 = vld [vmem:[%s2 + $0x8c] sm:$0xf]
      %v3539 = vld [vmem:[%s2 + $0x90] sm:$0xf]
      %v3540 = vld [vmem:[%s2 + $0x94] sm:$0xf]
      %v3541 = vld [vmem:[%s2 + $0x98] sm:$0xf]
      %v3542 = vld [vmem:[%s2 + $0x9c] sm:$0xf]
      %v3543 = vld [vmem:[%s2 + $0xa0] sm:$0xf]
      %v3544 = vld [vmem:[%s2 + $0xa4] sm:$0xf]
      %v3545 = vld [vmem:[%s2 + $0xa8] sm:$0xf]
      %v3546 = vld [vmem:[%s2 + $0xac] sm:$0xf]
      %v3547 = vld [vmem:[%s2 + $0xb0] sm:$0xf]
      %v3548 = vld [vmem:[%s2 + $0xb4] sm:$0xf]
      %v3549 = vld [vmem:[%s2 + $0xb8] sm:$0xf]
      %v3550 = vld [vmem:[%s2 + $0xbc] sm:$0xf]
      %v3551 = vld [vmem:[%s2 + $0xc0] sm:$0xf]
      %v3552 = vld [vmem:[%s2 + $0xc4] sm:$0xf]
      %v3553 = vld [vmem:[%s2 + $0xc8] sm:$0xf]
      %v3554 = vld [vmem:[%s2 + $0xcc] sm:$0xf]
      %v3555 = vld [vmem:[%s2 + $0xd0] sm:$0xf]
      %v3556 = vld [vmem:[%s2 + $0xd4] sm:$0xf]
      %v3557 = vld [vmem:[%s2 + $0xd8] sm:$0xf]
      %v3558 = vld [vmem:[%s2 + $0xdc] sm:$0xf]
      %v3559 = vld [vmem:[%s2 + $0xe0] sm:$0xf]
      %v3560 = vld [vmem:[%s2 + $0xe4] sm:$0xf]
      %v3561 = vld [vmem:[%s2 + $0xe8] sm:$0xf]
      %v3562 = vld [vmem:[%s2 + $0xec] sm:$0xf]
      %v3563 = vld [vmem:[%s2 + $0xf0] sm:$0xf]
      %v3564 = vld [vmem:[%s2 + $0xf4] sm:$0xf]
      %v3565 = vld [vmem:[%s2 + $0xf8] sm:$0xf]
      %v3566 = vld [vmem:[%s2 + $0xfc] sm:$0xf]
      %v3575 = vunpack.c.l.b16 %v3503
      %v3576 = vunpack.c.l.b16 %v3504
      %v3577 = vunpack.c.l.b16 %v3505
      %v3578 = vunpack.c.l.b16 %v3506
      %v3579 = vunpack.c.l.b16 %v3507
      %v3580 = vunpack.c.l.b16 %v3508
      %v3581 = vunpack.c.l.b16 %v3509
      %v3582 = vunpack.c.l.b16 %v3510
      %v3583 = vpack.c.b16 %v3576, %v3575
      %v3584 = vpack.c.b16 %v3578, %v3577
      %v3585 = vpack.c.b16 %v3580, %v3579
      %v3586 = vpack.c.b16 %v3582, %v3581
      %vm3591 = vcmask 523264
      %v3593 = vsel %vm3591, %v3471, 0
      %v3596 = vsel %vm3591, %v3472, 0
      %v3599 = vsel %vm3591, %v3473, 0
      %v3602 = vsel %vm3591, %v3474, 0
      %3604 = vmatprep.subr.bf16.mxu0 0
      %3605 = vmatpush1.bf16.msra.mxu0 %v3583
      %3606 = vmatprep.subr.bf16.mxu0 0
      %3607 = vmatpush1.bf16.msra.mxu0 %v3584
      %3608 = vmatprep.subr.bf16.mxu0 0
      %3609 = vmatpush1.bf16.msra.mxu0 %v3585
      %3610 = vmatprep.subr.bf16.mxu0 0
      %3611 = vmatpush1.bf16.msra.mxu0 %v3586
      %3612 = vmatprep.subr.bf16.mxu0 0
      %3613 = vmatpush1.bf16.msra.mxu0 0
      %3614 = vmatprep.subr.bf16.mxu0 0
      %3615 = vmatpush1.bf16.msra.mxu0 0
      %3616 = vmatprep.subr.bf16.mxu0 0
      %3617 = vmatpush1.bf16.msra.mxu0 0
      %3618 = vmatprep.subr.bf16.mxu0 0
      %3619 = vmatpush1.bf16.msra.mxu0 0
      %3620 = vmatprep.subr.bf16.mxu0 0
      %3621 = vmatpush1.bf16.msra.mxu0 0
      %3622 = vmatprep.subr.bf16.mxu0 0
      %3623 = vmatpush1.bf16.msra.mxu0 0
      %3624 = vmatprep.subr.bf16.mxu0 0
      %3625 = vmatpush1.bf16.msra.mxu0 0
      %3626 = vmatprep.subr.bf16.mxu0 0
      %3627 = vmatpush1.bf16.msra.mxu0 0
      %3628 = vmatprep.subr.bf16.mxu0 0
      %3629 = vmatpush1.bf16.msra.mxu0 0
      %3630 = vmatprep.subr.bf16.mxu0 0
      %3631 = vmatpush1.bf16.msra.mxu0 0
      %3632 = vmatprep.subr.bf16.mxu0 0
      %3633 = vmatpush1.bf16.msra.mxu0 0
      %3634 = vmatprep.subr.bf16.mxu0 0
      %3635 = vmatpush1.bf16.msra.mxu0 0
      %3636 = vmatprep.mubr.bf16.mxu0 0
      %3637 = vmatmul.mubr.bf16.gmra.mrb[0].mxu0 %v3593
      %v3638 = vpop.f32.mrb[0].mxu0
      %v3639 = vadd.f32 0.0, %v3638
      %v3640 = vpop.f32.mrb[0].mxu0
      %v3641 = vpop.f32.mrb[0].mxu0
      %v3642 = vadd.f32 0.0, %v3641
      %v3643 = vpop.f32.mrb[0].mxu0
      %3644 = vmatprep.mubr.bf16.mxu0 0
      %3645 = vmatmul.mubr.bf16.gmra.mrb[0].mxu0 %v3596
      %v3646 = vpop.f32.mrb[0].mxu0
      %v3647 = vadd.f32 0.0, %v3646
      %v3648 = vpop.f32.mrb[0].mxu0
      %v3649 = vpop.f32.mrb[0].mxu0
      %v3650 = vadd.f32 0.0, %v3649
      %v3651 = vpop.f32.mrb[0].mxu0
      %3652 = vmatprep.mubr.bf16.mxu0 0
      %3653 = vmatmul.mubr.bf16.gmra.mrb[0].mxu0 %v3599
      %v3654 = vpop.f32.mrb[0].mxu0
      %v3655 = vadd.f32 0.0, %v3654
      %v3656 = vpop.f32.mrb[0].mxu0
      %v3657 = vpop.f32.mrb[0].mxu0
      %v3658 = vadd.f32 0.0, %v3657
      %v3659 = vpop.f32.mrb[0].mxu0
      %3660 = vmatprep.mubr.bf16.mxu0 0
      %3661 = vmatmul.mubr.bf16.gmra.mrb[0].mxu0 %v3602
      %v3662 = vpop.f32.mrb[0].mxu0
      %v3663 = vadd.f32 0.0, %v3662
      %v3664 = vpop.f32.mrb[0].mxu0
      %v3665 = vpop.f32.mrb[0].mxu0
      %v3666 = vadd.f32 0.0, %v3665
      %v3667 = vpop.f32.mrb[0].mxu0
      %3668 = vdwg.mxu0
      %v3677 = vunpack.c.l.b16 %v3511
      %v3678 = vunpack.c.l.b16 %v3512
      %v3679 = vunpack.c.l.b16 %v3513
      %v3680 = vunpack.c.l.b16 %v3514
      %v3681 = vunpack.c.l.b16 %v3515
      %v3682 = vunpack.c.l.b16 %v3516
      %v3683 = vunpack.c.l.b16 %v3517
      %v3684 = vunpack.c.l.b16 %v3518
      %v3685 = vpack.c.b16 %v3678, %v3677
      %v3686 = vpack.c.b16 %v3680, %v3679
      %v3687 = vpack.c.b16 %v3682, %v3681
      %v3688 = vpack.c.b16 %v3684, %v3683
      %v3694 = vsel %vm3591, %v3475, 0
      %v3697 = vsel %vm3591, %v3476, 0
      %v3700 = vsel %vm3591, %v3477, 0
      %v3703 = vsel %vm3591, %v3478, 0
      %3705 = vmatprep.subr.bf16.mxu0 0
      %3706 = vmatpush1.bf16.msra.mxu0 %v3685
      %3707 = vmatprep.subr.bf16.mxu0 0
      %3708 = vmatpush1.bf16.msra.mxu0 %v3686
      %3709 = vmatprep.subr.bf16.mxu0 0
      %3710 = vmatpush1.bf16.msra.mxu0 %v3687
      %3711 = vmatprep.subr.bf16.mxu0 0
      %3712 = vmatpush1.bf16.msra.mxu0 %v3688
      %3713 = vmatprep.subr.bf16.mxu0 0
      %3714 = vmatpush1.bf16.msra.mxu0 0
      %3715 = vmatprep.subr.bf16.mxu0 0
      %3716 = vmatpush1.bf16.msra.mxu0 0
      %3717 = vmatprep.subr.bf16.mxu0 0
      %3718 = vmatpush1.bf16.msra.mxu0 0
      %3719 = vmatprep.subr.bf16.mxu0 0
      %3720 = vmatpush1.bf16.msra.mxu0 0
      %3721 = vmatprep.subr.bf16.mxu0 0
      %3722 = vmatpush1.bf16.msra.mxu0 0
      %3723 = vmatprep.subr.bf16.mxu0 0
      %3724 = vmatpush1.bf16.msra.mxu0 0
      %3725 = vmatprep.subr.bf16.mxu0 0
      %3726 = vmatpush1.bf16.msra.mxu0 0
      %3727 = vmatprep.subr.bf16.mxu0 0
      %3728 = vmatpush1.bf16.msra.mxu0 0
      %3729 = vmatprep.subr.bf16.mxu0 0
      %3730 = vmatpush1.bf16.msra.mxu0 0
      %3731 = vmatprep.subr.bf16.mxu0 0
      %3732 = vmatpush1.bf16.msra.mxu0 0
      %3733 = vmatprep.subr.bf16.mxu0 0
      %3734 = vmatpush1.bf16.msra.mxu0 0
      %3735 = vmatprep.subr.bf16.mxu0 0
      %3736 = vmatpush1.bf16.msra.mxu0 0
      %3737 = vmatprep.mubr.bf16.mxu0 0
      %3738 = vmatmul.mubr.bf16.gmra.mrb[0].mxu0 %v3694
      %v3739 = vpop.f32.mrb[0].mxu0
      %v3740 = vadd.f32 0.0, %v3739
      %v3741 = vpop.f32.mrb[0].mxu0
      %v3742 = vpop.f32.mrb[0].mxu0
      %v3743 = vadd.f32 0.0, %v3742
      %v3744 = vpop.f32.mrb[0].mxu0
      %3745 = vmatprep.mubr.bf16.mxu0 0
      %3746 = vmatmul.mubr.bf16.gmra.mrb[0].mxu0 %v3697
      %v3747 = vpop.f32.mrb[0].mxu0
      %v3748 = vadd.f32 0.0, %v3747
      %v3749 = vpop.f32.mrb[0].mxu0
      %v3750 = vpop.f32.mrb[0].mxu0
      %v3751 = vadd.f32 0.0, %v3750
      %v3752 = vpop.f32.mrb[0].mxu0
      %3753 = vmatprep.mubr.bf16.mxu0 0
      %3754 = vmatmul.mubr.bf16.gmra.mrb[0].mxu0 %v3700
      %v3755 = vpop.f32.mrb[0].mxu0
      %v3756 = vadd.f32 0.0, %v3755
      %v3757 = vpop.f32.mrb[0].mxu0
      %v3758 = vpop.f32.mrb[0].mxu0
      %v3759 = vadd.f32 0.0, %v3758
      %v3760 = vpop.f32.mrb[0].mxu0
      %3761 = vmatprep.mubr.bf16.mxu0 0
      %3762 = vmatmul.mubr.bf16.gmra.mrb[0].mxu0 %v3703
      %v3763 = vpop.f32.mrb[0].mxu0
      %v3764 = vadd.f32 0.0, %v3763
      %v3765 = vpop.f32.mrb[0].mxu0
      %v3766 = vpop.f32.mrb[0].mxu0
      %v3767 = vadd.f32 0.0, %v3766
      %v3768 = vpop.f32.mrb[0].mxu0
      %3769 = vdwg.mxu0
      %v3778 = vunpack.c.l.b16 %v3519
      %v3779 = vunpack.c.l.b16 %v3520
      %v3780 = vunpack.c.l.b16 %v3521
      %v3781 = vunpack.c.l.b16 %v3522
      %v3782 = vunpack.c.l.b16 %v3523
      %v3783 = vunpack.c.l.b16 %v3524
      %v3784 = vunpack.c.l.b16 %v3525
      %v3785 = vunpack.c.l.b16 %v3526
      %v3786 = vpack.c.b16 %v3779, %v3778
      %v3787 = vpack.c.b16 %v3781, %v3780
      %v3788 = vpack.c.b16 %v3783, %v3782
      %v3789 = vpack.c.b16 %v3785, %v3784
      %v3795 = vsel %vm3591, %v3479, 0
      %v3798 = vsel %vm3591, %v3480, 0
      %v3801 = vsel %vm3591, %v3481, 0
      %v3804 = vsel %vm3591, %v3482, 0
      %3806 = vmatprep.subr.bf16.mxu0 0
      %3807 = vmatpush1.bf16.msra.mxu0 %v3786
      %3808 = vmatprep.subr.bf16.mxu0 0
      %3809 = vmatpush1.bf16.msra.mxu0 %v3787
      %3810 = vmatprep.subr.bf16.mxu0 0
      %3811 = vmatpush1.bf16.msra.mxu0 %v3788
      %3812 = vmatprep.subr.bf16.mxu0 0
      %3813 = vmatpush1.bf16.msra.mxu0 %v3789
      %3814 = vmatprep.subr.bf16.mxu0 0
      %3815 = vmatpush1.bf16.msra.mxu0 0
      %3816 = vmatprep.subr.bf16.mxu0 0
      %3817 = vmatpush1.bf16.msra.mxu0 0
      %3818 = vmatprep.subr.bf16.mxu0 0
      %3819 = vmatpush1.bf16.msra.mxu0 0
      %3820 = vmatprep.subr.bf16.mxu0 0
      %3821 = vmatpush1.bf16.msra.mxu0 0
      %3822 = vmatprep.subr.bf16.mxu0 0
      %3823 = vmatpush1.bf16.msra.mxu0 0
      %3824 = vmatprep.subr.bf16.mxu0 0
      %3825 = vmatpush1.bf16.msra.mxu0 0
      %3826 = vmatprep.subr.bf16.mxu0 0
      %3827 = vmatpush1.bf16.msra.mxu0 0
      %3828 = vmatprep.subr.bf16.mxu0 0
      %3829 = vmatpush1.bf16.msra.mxu0 0
      %3830 = vmatprep.subr.bf16.mxu0 0
      %3831 = vmatpush1.bf16.msra.mxu0 0
      %3832 = vmatprep.subr.bf16.mxu0 0
      %3833 = vmatpush1.bf16.msra.mxu0 0
      %3834 = vmatprep.subr.bf16.mxu0 0
      %3835 = vmatpush1.bf16.msra.mxu0 0
      %3836 = vmatprep.subr.bf16.mxu0 0
      %3837 = vmatpush1.bf16.msra.mxu0 0
      %3838 = vmatprep.mubr.bf16.mxu0 0
      %3839 = vmatmul.mubr.bf16.gmra.mrb[0].mxu0 %v3795
      %v3840 = vpop.f32.mrb[0].mxu0
      %v3841 = vadd.f32 0.0, %v3840
      %v3842 = vpop.f32.mrb[0].mxu0
      %v3843 = vpop.f32.mrb[0].mxu0
      %v3844 = vadd.f32 0.0, %v3843
      %v3845 = vpop.f32.mrb[0].mxu0
      %3846 = vmatprep.mubr.bf16.mxu0 0
      %3847 = vmatmul.mubr.bf16.gmra.mrb[0].mxu0 %v3798
      %v3848 = vpop.f32.mrb[0].mxu0
      %v3849 = vadd.f32 0.0, %v3848
      %v3850 = vpop.f32.mrb[0].mxu0
      %v3851 = vpop.f32.mrb[0].mxu0
      %v3852 = vadd.f32 0.0, %v3851
      %v3853 = vpop.f32.mrb[0].mxu0
      %3854 = vmatprep.mubr.bf16.mxu0 0
      %3855 = vmatmul.mubr.bf16.gmra.mrb[0].mxu0 %v3801
      %v3856 = vpop.f32.mrb[0].mxu0
      %v3857 = vadd.f32 0.0, %v3856
      %v3858 = vpop.f32.mrb[0].mxu0
      %v3859 = vpop.f32.mrb[0].mxu0
      %v3860 = vadd.f32 0.0, %v3859
      %v3861 = vpop.f32.mrb[0].mxu0
      %3862 = vmatprep.mubr.bf16.mxu0 0
      %3863 = vmatmul.mubr.bf16.gmra.mrb[0].mxu0 %v3804
      %v3864 = vpop.f32.mrb[0].mxu0
      %v3865 = vadd.f32 0.0, %v3864
      %v3866 = vpop.f32.mrb[0].mxu0
      %v3867 = vpop.f32.mrb[0].mxu0
      %v3868 = vadd.f32 0.0, %v3867
      %v3869 = vpop.f32.mrb[0].mxu0
      %3870 = vdwg.mxu0
      %v3879 = vunpack.c.l.b16 %v3527
      %v3880 = vunpack.c.l.b16 %v3528
      %v3881 = vunpack.c.l.b16 %v3529
      %v3882 = vunpack.c.l.b16 %v3530
      %v3883 = vunpack.c.l.b16 %v3531
      %v3884 = vunpack.c.l.b16 %v3532
      %v3885 = vunpack.c.l.b16 %v3533
      %v3886 = vunpack.c.l.b16 %v3534
      %v3887 = vpack.c.b16 %v3880, %v3879
      %v3888 = vpack.c.b16 %v3882, %v3881
      %v3889 = vpack.c.b16 %v3884, %v3883
      %v3890 = vpack.c.b16 %v3886, %v3885
      %v3896 = vsel %vm3591, %v3483, 0
      %v3899 = vsel %vm3591, %v3484, 0
      %v3902 = vsel %vm3591, %v3485, 0
      %v3905 = vsel %vm3591, %v3486, 0
      %3907 = vmatprep.subr.bf16.mxu0 0
      %3908 = vmatpush1.bf16.msra.mxu0 %v3887
      %3909 = vmatprep.subr.bf16.mxu0 0
      %3910 = vmatpush1.bf16.msra.mxu0 %v3888
      %3911 = vmatprep.subr.bf16.mxu0 0
      %3912 = vmatpush1.bf16.msra.mxu0 %v3889
      %3913 = vmatprep.subr.bf16.mxu0 0
      %3914 = vmatpush1.bf16.msra.mxu0 %v3890
      %3915 = vmatprep.subr.bf16.mxu0 0
      %3916 = vmatpush1.bf16.msra.mxu0 0
      %3917 = vmatprep.subr.bf16.mxu0 0
      %3918 = vmatpush1.bf16.msra.mxu0 0
      %3919 = vmatprep.subr.bf16.mxu0 0
      %3920 = vmatpush1.bf16.msra.mxu0 0
      %3921 = vmatprep.subr.bf16.mxu0 0
      %3922 = vmatpush1.bf16.msra.mxu0 0
      %3923 = vmatprep.subr.bf16.mxu0 0
      %3924 = vmatpush1.bf16.msra.mxu0 0
      %3925 = vmatprep.subr.bf16.mxu0 0
      %3926 = vmatpush1.bf16.msra.mxu0 0
      %3927 = vmatprep.subr.bf16.mxu0 0
      %3928 = vmatpush1.bf16.msra.mxu0 0
      %3929 = vmatprep.subr.bf16.mxu0 0
      %3930 = vmatpush1.bf16.msra.mxu0 0
      %3931 = vmatprep.subr.bf16.mxu0 0
      %3932 = vmatpush1.bf16.msra.mxu0 0
      %3933 = vmatprep.subr.bf16.mxu0 0
      %3934 = vmatpush1.bf16.msra.mxu0 0
      %3935 = vmatprep.subr.bf16.mxu0 0
      %3936 = vmatpush1.bf16.msra.mxu0 0
      %3937 = vmatprep.subr.bf16.mxu0 0
      %3938 = vmatpush1.bf16.msra.mxu0 0
      %3939 = vmatprep.mubr.bf16.mxu0 0
      %3940 = vmatmul.mubr.bf16.gmra.mrb[0].mxu0 %v3896
      %v3941 = vpop.f32.mrb[0].mxu0
      %v3942 = vadd.f32 0.0, %v3941
      %v3943 = vpop.f32.mrb[0].mxu0
      %v3944 = vpop.f32.mrb[0].mxu0
      %v3945 = vadd.f32 0.0, %v3944
      %v3946 = vpop.f32.mrb[0].mxu0
      %3947 = vmatprep.mubr.bf16.mxu0 0
      %3948 = vmatmul.mubr.bf16.gmra.mrb[0].mxu0 %v3899
      %v3949 = vpop.f32.mrb[0].mxu0
      %v3950 = vadd.f32 0.0, %v3949
      %v3951 = vpop.f32.mrb[0].mxu0
      %v3952 = vpop.f32.mrb[0].mxu0
      %v3953 = vadd.f32 0.0, %v3952
      %v3954 = vpop.f32.mrb[0].mxu0
      %3955 = vmatprep.mubr.bf16.mxu0 0
      %3956 = vmatmul.mubr.bf16.gmra.mrb[0].mxu0 %v3902
      %v3957 = vpop.f32.mrb[0].mxu0
      %v3958 = vadd.f32 0.0, %v3957
      %v3959 = vpop.f32.mrb[0].mxu0
      %v3960 = vpop.f32.mrb[0].mxu0
      %v3961 = vadd.f32 0.0, %v3960
      %v3962 = vpop.f32.mrb[0].mxu0
      %3963 = vmatprep.mubr.bf16.mxu0 0
      %3964 = vmatmul.mubr.bf16.gmra.mrb[0].mxu0 %v3905
      %v3965 = vpop.f32.mrb[0].mxu0
      %v3966 = vadd.f32 0.0, %v3965
      %v3967 = vpop.f32.mrb[0].mxu0
      %v3968 = vpop.f32.mrb[0].mxu0
      %v3969 = vadd.f32 0.0, %v3968
      %v3970 = vpop.f32.mrb[0].mxu0
      %3971 = vdwg.mxu0
      %v3980 = vunpack.c.l.b16 %v3535
      %v3981 = vunpack.c.l.b16 %v3536
      %v3982 = vunpack.c.l.b16 %v3537
      %v3983 = vunpack.c.l.b16 %v3538
      %v3984 = vunpack.c.l.b16 %v3539
      %v3985 = vunpack.c.l.b16 %v3540
      %v3986 = vunpack.c.l.b16 %v3541
      %v3987 = vunpack.c.l.b16 %v3542
      %v3988 = vpack.c.b16 %v3981, %v3980
      %v3989 = vpack.c.b16 %v3983, %v3982
      %v3990 = vpack.c.b16 %v3985, %v3984
      %v3991 = vpack.c.b16 %v3987, %v3986
      %v3997 = vsel %vm3591, %v3487, 0
      %v4000 = vsel %vm3591, %v3488, 0
      %v4003 = vsel %vm3591, %v3489, 0
      %v4006 = vsel %vm3591, %v3490, 0
      %4008 = vmatprep.subr.bf16.mxu0 0
      %4009 = vmatpush1.bf16.msra.mxu0 %v3988
      %4010 = vmatprep.subr.bf16.mxu0 0
      %4011 = vmatpush1.bf16.msra.mxu0 %v3989
      %4012 = vmatprep.subr.bf16.mxu0 0
      %4013 = vmatpush1.bf16.msra.mxu0 %v3990
      %4014 = vmatprep.subr.bf16.mxu0 0
      %4015 = vmatpush1.bf16.msra.mxu0 %v3991
      %4016 = vmatprep.subr.bf16.mxu0 0
      %4017 = vmatpush1.bf16.msra.mxu0 0
      %4018 = vmatprep.subr.bf16.mxu0 0
      %4019 = vmatpush1.bf16.msra.mxu0 0
      %4020 = vmatprep.subr.bf16.mxu0 0
      %4021 = vmatpush1.bf16.msra.mxu0 0
      %4022 = vmatprep.subr.bf16.mxu0 0
      %4023 = vmatpush1.bf16.msra.mxu0 0
      %4024 = vmatprep.subr.bf16.mxu0 0
      %4025 = vmatpush1.bf16.msra.mxu0 0
      %4026 = vmatprep.subr.bf16.mxu0 0
      %4027 = vmatpush1.bf16.msra.mxu0 0
      %4028 = vmatprep.subr.bf16.mxu0 0
      %4029 = vmatpush1.bf16.msra.mxu0 0
      %4030 = vmatprep.subr.bf16.mxu0 0
      %4031 = vmatpush1.bf16.msra.mxu0 0
      %4032 = vmatprep.subr.bf16.mxu0 0
      %4033 = vmatpush1.bf16.msra.mxu0 0
      %4034 = vmatprep.subr.bf16.mxu0 0
      %4035 = vmatpush1.bf16.msra.mxu0 0
      %4036 = vmatprep.subr.bf16.mxu0 0
      %4037 = vmatpush1.bf16.msra.mxu0 0
      %4038 = vmatprep.subr.bf16.mxu0 0
      %4039 = vmatpush1.bf16.msra.mxu0 0
      %4040 = vmatprep.mubr.bf16.mxu0 0
      %4041 = vmatmul.mubr.bf16.gmra.mrb[0].mxu0 %v3997
      %v4042 = vpop.f32.mrb[0].mxu0
      %v4043 = vadd.f32 0.0, %v4042
      %v4044 = vpop.f32.mrb[0].mxu0
      %v4045 = vpop.f32.mrb[0].mxu0
      %v4046 = vadd.f32 0.0, %v4045
      %v4047 = vpop.f32.mrb[0].mxu0
      %4048 = vmatprep.mubr.bf16.mxu0 0
      %4049 = vmatmul.mubr.bf16.gmra.mrb[0].mxu0 %v4000
      %v4050 = vpop.f32.mrb[0].mxu0
      %v4051 = vadd.f32 0.0, %v4050
      %v4052 = vpop.f32.mrb[0].mxu0
      %v4053 = vpop.f32.mrb[0].mxu0
      %v4054 = vadd.f32 0.0, %v4053
      %v4055 = vpop.f32.mrb[0].mxu0
      %4056 = vmatprep.mubr.bf16.mxu0 0
      %4057 = vmatmul.mubr.bf16.gmra.mrb[0].mxu0 %v4003
      %v4058 = vpop.f32.mrb[0].mxu0
      %v4059 = vadd.f32 0.0, %v4058
      %v4060 = vpop.f32.mrb[0].mxu0
      %v4061 = vpop.f32.mrb[0].mxu0
      %v4062 = vadd.f32 0.0, %v4061
      %v4063 = vpop.f32.mrb[0].mxu0
      %4064 = vmatprep.mubr.bf16.mxu0 0
      %4065 = vmatmul.mubr.bf16.gmra.mrb[0].mxu0 %v4006
      %v4066 = vpop.f32.mrb[0].mxu0
      %v4067 = vadd.f32 0.0, %v4066
      %v4068 = vpop.f32.mrb[0].mxu0
      %v4069 = vpop.f32.mrb[0].mxu0
      %v4070 = vadd.f32 0.0, %v4069
      %v4071 = vpop.f32.mrb[0].mxu0
      %4072 = vdwg.mxu0
      %v4081 = vunpack.c.l.b16 %v3543
      %v4082 = vunpack.c.l.b16 %v3544
      %v4083 = vunpack.c.l.b16 %v3545
      %v4084 = vunpack.c.l.b16 %v3546
      %v4085 = vunpack.c.l.b16 %v3547
      %v4086 = vunpack.c.l.b16 %v3548
      %v4087 = vunpack.c.l.b16 %v3549
      %v4088 = vunpack.c.l.b16 %v3550
      %v4089 = vpack.c.b16 %v4082, %v4081
      %v4090 = vpack.c.b16 %v4084, %v4083
      %v4091 = vpack.c.b16 %v4086, %v4085
      %v4092 = vpack.c.b16 %v4088, %v4087
      %v4098 = vsel %vm3591, %v3491, 0
      %v4101 = vsel %vm3591, %v3492, 0
      %v4104 = vsel %vm3591, %v3493, 0
      %v4107 = vsel %vm3591, %v3494, 0
      %4109 = vmatprep.subr.bf16.mxu0 0
      %4110 = vmatpush1.bf16.msra.mxu0 %v4089
      %4111 = vmatprep.subr.bf16.mxu0 0
      %4112 = vmatpush1.bf16.msra.mxu0 %v4090
      %4113 = vmatprep.subr.bf16.mxu0 0
      %4114 = vmatpush1.bf16.msra.mxu0 %v4091
      %4115 = vmatprep.subr.bf16.mxu0 0
      %4116 = vmatpush1.bf16.msra.mxu0 %v4092
      %4117 = vmatprep.subr.bf16.mxu0 0
      %4118 = vmatpush1.bf16.msra.mxu0 0
      %4119 = vmatprep.subr.bf16.mxu0 0
      %4120 = vmatpush1.bf16.msra.mxu0 0
      %4121 = vmatprep.subr.bf16.mxu0 0
      %4122 = vmatpush1.bf16.msra.mxu0 0
      %4123 = vmatprep.subr.bf16.mxu0 0
      %4124 = vmatpush1.bf16.msra.mxu0 0
      %4125 = vmatprep.subr.bf16.mxu0 0
      %4126 = vmatpush1.bf16.msra.mxu0 0
      %4127 = vmatprep.subr.bf16.mxu0 0
      %4128 = vmatpush1.bf16.msra.mxu0 0
      %4129 = vmatprep.subr.bf16.mxu0 0
      %4130 = vmatpush1.bf16.msra.mxu0 0
      %4131 = vmatprep.subr.bf16.mxu0 0
      %4132 = vmatpush1.bf16.msra.mxu0 0
      %4133 = vmatprep.subr.bf16.mxu0 0
      %4134 = vmatpush1.bf16.msra.mxu0 0
      %4135 = vmatprep.subr.bf16.mxu0 0
      %4136 = vmatpush1.bf16.msra.mxu0 0
      %4137 = vmatprep.subr.bf16.mxu0 0
      %4138 = vmatpush1.bf16.msra.mxu0 0
      %4139 = vmatprep.subr.bf16.mxu0 0
      %4140 = vmatpush1.bf16.msra.mxu0 0
      %4141 = vmatprep.mubr.bf16.mxu0 0
      %4142 = vmatmul.mubr.bf16.gmra.mrb[0].mxu0 %v4098
      %v4143 = vpop.f32.mrb[0].mxu0
      %v4144 = vadd.f32 0.0, %v4143
      %v4145 = vpop.f32.mrb[0].mxu0
      %v4146 = vpop.f32.mrb[0].mxu0
      %v4147 = vadd.f32 0.0, %v4146
      %v4148 = vpop.f32.mrb[0].mxu0
      %4149 = vmatprep.mubr.bf16.mxu0 0
      %4150 = vmatmul.mubr.bf16.gmra.mrb[0].mxu0 %v4101
      %v4151 = vpop.f32.mrb[0].mxu0
      %v4152 = vadd.f32 0.0, %v4151
      %v4153 = vpop.f32.mrb[0].mxu0
      %v4154 = vpop.f32.mrb[0].mxu0
      %v4155 = vadd.f32 0.0, %v4154
      %v4156 = vpop.f32.mrb[0].mxu0
      %4157 = vmatprep.mubr.bf16.mxu0 0
      %4158 = vmatmul.mubr.bf16.gmra.mrb[0].mxu0 %v4104
      %v4159 = vpop.f32.mrb[0].mxu0
      %v4160 = vadd.f32 0.0, %v4159
      %v4161 = vpop.f32.mrb[0].mxu0
      %v4162 = vpop.f32.mrb[0].mxu0
      %v4163 = vadd.f32 0.0, %v4162
      %v4164 = vpop.f32.mrb[0].mxu0
      %4165 = vmatprep.mubr.bf16.mxu0 0
      %4166 = vmatmul.mubr.bf16.gmra.mrb[0].mxu0 %v4107
      %v4167 = vpop.f32.mrb[0].mxu0
      %v4168 = vadd.f32 0.0, %v4167
      %v4169 = vpop.f32.mrb[0].mxu0
      %v4170 = vpop.f32.mrb[0].mxu0
      %v4171 = vadd.f32 0.0, %v4170
      %v4172 = vpop.f32.mrb[0].mxu0
      %4173 = vdwg.mxu0
      %v4182 = vunpack.c.l.b16 %v3551
      %v4183 = vunpack.c.l.b16 %v3552
      %v4184 = vunpack.c.l.b16 %v3553
      %v4185 = vunpack.c.l.b16 %v3554
      %v4186 = vunpack.c.l.b16 %v3555
      %v4187 = vunpack.c.l.b16 %v3556
      %v4188 = vunpack.c.l.b16 %v3557
      %v4189 = vunpack.c.l.b16 %v3558
      %v4190 = vpack.c.b16 %v4183, %v4182
      %v4191 = vpack.c.b16 %v4185, %v4184
      %v4192 = vpack.c.b16 %v4187, %v4186
      %v4193 = vpack.c.b16 %v4189, %v4188
      %v4199 = vsel %vm3591, %v3495, 0
      %v4202 = vsel %vm3591, %v3496, 0
      %v4205 = vsel %vm3591, %v3497, 0
      %v4208 = vsel %vm3591, %v3498, 0
      %4210 = vmatprep.subr.bf16.mxu0 0
      %4211 = vmatpush1.bf16.msra.mxu0 %v4190
      %4212 = vmatprep.subr.bf16.mxu0 0
      %4213 = vmatpush1.bf16.msra.mxu0 %v4191
      %4214 = vmatprep.subr.bf16.mxu0 0
      %4215 = vmatpush1.bf16.msra.mxu0 %v4192
      %4216 = vmatprep.subr.bf16.mxu0 0
      %4217 = vmatpush1.bf16.msra.mxu0 %v4193
      %4218 = vmatprep.subr.bf16.mxu0 0
      %4219 = vmatpush1.bf16.msra.mxu0 0
      %4220 = vmatprep.subr.bf16.mxu0 0
      %4221 = vmatpush1.bf16.msra.mxu0 0
      %4222 = vmatprep.subr.bf16.mxu0 0
      %4223 = vmatpush1.bf16.msra.mxu0 0
      %4224 = vmatprep.subr.bf16.mxu0 0
      %4225 = vmatpush1.bf16.msra.mxu0 0
      %4226 = vmatprep.subr.bf16.mxu0 0
      %4227 = vmatpush1.bf16.msra.mxu0 0
      %4228 = vmatprep.subr.bf16.mxu0 0
      %4229 = vmatpush1.bf16.msra.mxu0 0
      %4230 = vmatprep.subr.bf16.mxu0 0
      %4231 = vmatpush1.bf16.msra.mxu0 0
      %4232 = vmatprep.subr.bf16.mxu0 0
      %4233 = vmatpush1.bf16.msra.mxu0 0
      %4234 = vmatprep.subr.bf16.mxu0 0
      %4235 = vmatpush1.bf16.msra.mxu0 0
      %4236 = vmatprep.subr.bf16.mxu0 0
      %4237 = vmatpush1.bf16.msra.mxu0 0
      %4238 = vmatprep.subr.bf16.mxu0 0
      %4239 = vmatpush1.bf16.msra.mxu0 0
      %4240 = vmatprep.subr.bf16.mxu0 0
      %4241 = vmatpush1.bf16.msra.mxu0 0
      %4242 = vmatprep.mubr.bf16.mxu0 0
      %4243 = vmatmul.mubr.bf16.gmra.mrb[0].mxu0 %v4199
      %v4244 = vpop.f32.mrb[0].mxu0
      %v4245 = vadd.f32 0.0, %v4244
      %v4246 = vpop.f32.mrb[0].mxu0
      %v4247 = vpop.f32.mrb[0].mxu0
      %v4248 = vadd.f32 0.0, %v4247
      %v4249 = vpop.f32.mrb[0].mxu0
      %4250 = vmatprep.mubr.bf16.mxu0 0
      %4251 = vmatmul.mubr.bf16.gmra.mrb[0].mxu0 %v4202
      %v4252 = vpop.f32.mrb[0].mxu0
      %v4253 = vadd.f32 0.0, %v4252
      %v4254 = vpop.f32.mrb[0].mxu0
      %v4255 = vpop.f32.mrb[0].mxu0
      %v4256 = vadd.f32 0.0, %v4255
      %v4257 = vpop.f32.mrb[0].mxu0
      %4258 = vmatprep.mubr.bf16.mxu0 0
      %4259 = vmatmul.mubr.bf16.gmra.mrb[0].mxu0 %v4205
      %v4260 = vpop.f32.mrb[0].mxu0
      %v4261 = vadd.f32 0.0, %v4260
      %v4262 = vpop.f32.mrb[0].mxu0
      %v4263 = vpop.f32.mrb[0].mxu0
      %v4264 = vadd.f32 0.0, %v4263
      %v4265 = vpop.f32.mrb[0].mxu0
      %4266 = vmatprep.mubr.bf16.mxu0 0
      %4267 = vmatmul.mubr.bf16.gmra.mrb[0].mxu0 %v4208
      %v4268 = vpop.f32.mrb[0].mxu0
      %v4269 = vadd.f32 0.0, %v4268
      %v4270 = vpop.f32.mrb[0].mxu0
      %v4271 = vpop.f32.mrb[0].mxu0
      %v4272 = vadd.f32 0.0, %v4271
      %v4273 = vpop.f32.mrb[0].mxu0
      %4274 = vdwg.mxu0
      %v4283 = vunpack.c.l.b16 %v3559
      %v4284 = vunpack.c.l.b16 %v3560
      %v4285 = vunpack.c.l.b16 %v3561
      %v4286 = vunpack.c.l.b16 %v3562
      %v4287 = vunpack.c.l.b16 %v3563
      %v4288 = vunpack.c.l.b16 %v3564
      %v4289 = vunpack.c.l.b16 %v3565
      %v4290 = vunpack.c.l.b16 %v3566
      %v4291 = vpack.c.b16 %v4284, %v4283
      %v4292 = vpack.c.b16 %v4286, %v4285
      %v4293 = vpack.c.b16 %v4288, %v4287
      %v4294 = vpack.c.b16 %v4290, %v4289
      %v4300 = vsel %vm3591, %v3499, 0
      %v4303 = vsel %vm3591, %v3500, 0
      %v4306 = vsel %vm3591, %v3501, 0
      %v4309 = vsel %vm3591, %v3502, 0
      %4311 = vmatprep.subr.bf16.mxu0 0
      %4312 = vmatpush1.bf16.msra.mxu0 %v4291
      %4313 = vmatprep.subr.bf16.mxu0 0
      %4314 = vmatpush1.bf16.msra.mxu0 %v4292
      %4315 = vmatprep.subr.bf16.mxu0 0
      %4316 = vmatpush1.bf16.msra.mxu0 %v4293
      %4317 = vmatprep.subr.bf16.mxu0 0
      %4318 = vmatpush1.bf16.msra.mxu0 %v4294
      %4319 = vmatprep.subr.bf16.mxu0 0
      %4320 = vmatpush1.bf16.msra.mxu0 0
      %4321 = vmatprep.subr.bf16.mxu0 0
      %4322 = vmatpush1.bf16.msra.mxu0 0
      %4323 = vmatprep.subr.bf16.mxu0 0
      %4324 = vmatpush1.bf16.msra.mxu0 0
      %4325 = vmatprep.subr.bf16.mxu0 0
      %4326 = vmatpush1.bf16.msra.mxu0 0
      %4327 = vmatprep.subr.bf16.mxu0 0
      %4328 = vmatpush1.bf16.msra.mxu0 0
      %4329 = vmatprep.subr.bf16.mxu0 0
      %4330 = vmatpush1.bf16.msra.mxu0 0
      %4331 = vmatprep.subr.bf16.mxu0 0
      %4332 = vmatpush1.bf16.msra.mxu0 0
      %4333 = vmatprep.subr.bf16.mxu0 0
      %4334 = vmatpush1.bf16.msra.mxu0 0
      %4335 = vmatprep.subr.bf16.mxu0 0
      %4336 = vmatpush1.bf16.msra.mxu0 0
      %4337 = vmatprep.subr.bf16.mxu0 0
      %4338 = vmatpush1.bf16.msra.mxu0 0
      %4339 = vmatprep.subr.bf16.mxu0 0
      %4340 = vmatpush1.bf16.msra.mxu0 0
      %4341 = vmatprep.subr.bf16.mxu0 0
      %4342 = vmatpush1.bf16.msra.mxu0 0
      %4343 = vmatprep.mubr.bf16.mxu0 0
      %4344 = vmatmul.mubr.bf16.gmra.mrb[0].mxu0 %v4300
      %v4345 = vpop.f32.mrb[0].mxu0
      %v4346 = vadd.f32 0.0, %v4345
      %v4347 = vpop.f32.mrb[0].mxu0
      %v4348 = vpop.f32.mrb[0].mxu0
      %v4349 = vadd.f32 0.0, %v4348
      %v4350 = vpop.f32.mrb[0].mxu0
      %4351 = vmatprep.mubr.bf16.mxu0 0
      %4352 = vmatmul.mubr.bf16.gmra.mrb[0].mxu0 %v4303
      %v4353 = vpop.f32.mrb[0].mxu0
      %v4354 = vadd.f32 0.0, %v4353
      %v4355 = vpop.f32.mrb[0].mxu0
      %v4356 = vpop.f32.mrb[0].mxu0
      %v4357 = vadd.f32 0.0, %v4356
      %v4358 = vpop.f32.mrb[0].mxu0
      %4359 = vmatprep.mubr.bf16.mxu0 0
      %4360 = vmatmul.mubr.bf16.gmra.mrb[0].mxu0 %v4306
      %v4361 = vpop.f32.mrb[0].mxu0
      %v4362 = vadd.f32 0.0, %v4361
      %v4363 = vpop.f32.mrb[0].mxu0
      %v4364 = vpop.f32.mrb[0].mxu0
      %v4365 = vadd.f32 0.0, %v4364
      %v4366 = vpop.f32.mrb[0].mxu0
      %4367 = vmatprep.mubr.bf16.mxu0 0
      %4368 = vmatmul.mubr.bf16.gmra.mrb[0].mxu0 %v4309
      %v4369 = vpop.f32.mrb[0].mxu0
      %v4370 = vadd.f32 0.0, %v4369
      %v4371 = vpop.f32.mrb[0].mxu0
      %v4372 = vpop.f32.mrb[0].mxu0
      %v4373 = vadd.f32 0.0, %v4372
      %v4374 = vpop.f32.mrb[0].mxu0
      %4375 = vdwg.mxu0
      %vm4376 = vcmask 31744
      %4377 = vst.msk [vmem:[%s202] sm:$0xff] %vm4376, %v3639
      %4378 = vst.msk [vmem:[%s202 + $0x8] sm:$0xff] %vm4376, %v3642
      %4379 = vst.msk [vmem:[%s202 + $0x10] sm:$0xff] %vm4376, %v3647
      %4380 = vst.msk [vmem:[%s202 + $0x18] sm:$0xff] %vm4376, %v3650
      %4381 = vst.msk [vmem:[%s202 + $0x20] sm:$0xff] %vm4376, %v3655
      %4382 = vst.msk [vmem:[%s202 + $0x28] sm:$0xff] %vm4376, %v3658
      %4383 = vst.msk [vmem:[%s202 + $0x30] sm:$0xff] %vm4376, %v3663
      %4384 = vst.msk [vmem:[%s202 + $0x38] sm:$0xff] %vm4376, %v3666
      %4385 = vst.msk [vmem:[%s202 + $0x40] sm:$0xff] %vm4376, %v3740
      %4386 = vst.msk [vmem:[%s202 + $0x48] sm:$0xff] %vm4376, %v3743
      %4387 = vst.msk [vmem:[%s202 + $0x50] sm:$0xff] %vm4376, %v3748
      %4388 = vst.msk [vmem:[%s202 + $0x58] sm:$0xff] %vm4376, %v3751
      %4389 = vst.msk [vmem:[%s202 + $0x60] sm:$0xff] %vm4376, %v3756
      %4390 = vst.msk [vmem:[%s202 + $0x68] sm:$0xff] %vm4376, %v3759
      %4391 = vst.msk [vmem:[%s202 + $0x70] sm:$0xff] %vm4376, %v3764
      %4392 = vst.msk [vmem:[%s202 + $0x78] sm:$0xff] %vm4376, %v3767
      %4393 = vst.msk [vmem:[%s202 + $0x80] sm:$0xff] %vm4376, %v3841
      %4394 = vst.msk [vmem:[%s202 + $0x88] sm:$0xff] %vm4376, %v3844
      %4395 = vst.msk [vmem:[%s202 + $0x90] sm:$0xff] %vm4376, %v3849
      %4396 = vst.msk [vmem:[%s202 + $0x98] sm:$0xff] %vm4376, %v3852
      %4397 = vst.msk [vmem:[%s202 + $0xa0] sm:$0xff] %vm4376, %v3857
      %4398 = vst.msk [vmem:[%s202 + $0xa8] sm:$0xff] %vm4376, %v3860
      %4399 = vst.msk [vmem:[%s202 + $0xb0] sm:$0xff] %vm4376, %v3865
      %4400 = vst.msk [vmem:[%s202 + $0xb8] sm:$0xff] %vm4376, %v3868
      %4401 = vst.msk [vmem:[%s202 + $0xc0] sm:$0xff] %vm4376, %v3942
      %4402 = vst.msk [vmem:[%s202 + $0xc8] sm:$0xff] %vm4376, %v3945
      %4403 = vst.msk [vmem:[%s202 + $0xd0] sm:$0xff] %vm4376, %v3950
      %4404 = vst.msk [vmem:[%s202 + $0xd8] sm:$0xff] %vm4376, %v3953
      %4405 = vst.msk [vmem:[%s202 + $0xe0] sm:$0xff] %vm4376, %v3958
      %4406 = vst.msk [vmem:[%s202 + $0xe8] sm:$0xff] %vm4376, %v3961
      %4407 = vst.msk [vmem:[%s202 + $0xf0] sm:$0xff] %vm4376, %v3966
      %4408 = vst.msk [vmem:[%s202 + $0xf8] sm:$0xff] %vm4376, %v3969
      %4409 = vst.msk [vmem:[%s202 + $0x100] sm:$0xff] %vm4376, %v4043
      %4410 = vst.msk [vmem:[%s202 + $0x108] sm:$0xff] %vm4376, %v4046
      %4411 = vst.msk [vmem:[%s202 + $0x110] sm:$0xff] %vm4376, %v4051
      %4412 = vst.msk [vmem:[%s202 + $0x118] sm:$0xff] %vm4376, %v4054
      %4413 = vst.msk [vmem:[%s202 + $0x120] sm:$0xff] %vm4376, %v4059
      %4414 = vst.msk [vmem:[%s202 + $0x128] sm:$0xff] %vm4376, %v4062
      %4415 = vst.msk [vmem:[%s202 + $0x130] sm:$0xff] %vm4376, %v4067
      %4416 = vst.msk [vmem:[%s202 + $0x138] sm:$0xff] %vm4376, %v4070
      %4417 = vst.msk [vmem:[%s202 + $0x140] sm:$0xff] %vm4376, %v4144
      %4418 = vst.msk [vmem:[%s202 + $0x148] sm:$0xff] %vm4376, %v4147
      %4419 = vst.msk [vmem:[%s202 + $0x150] sm:$0xff] %vm4376, %v4152
      %4420 = vst.msk [vmem:[%s202 + $0x158] sm:$0xff] %vm4376, %v4155
      %4421 = vst.msk [vmem:[%s202 + $0x160] sm:$0xff] %vm4376, %v4160
      %4422 = vst.msk [vmem:[%s202 + $0x168] sm:$0xff] %vm4376, %v4163
      %4423 = vst.msk [vmem:[%s202 + $0x170] sm:$0xff] %vm4376, %v4168
      %4424 = vst.msk [vmem:[%s202 + $0x178] sm:$0xff] %vm4376, %v4171
      %4425 = vst.msk [vmem:[%s202 + $0x180] sm:$0xff] %vm4376, %v4245
      %4426 = vst.msk [vmem:[%s202 + $0x188] sm:$0xff] %vm4376, %v4248
      %4427 = vst.msk [vmem:[%s202 + $0x190] sm:$0xff] %vm4376, %v4253
      %4428 = vst.msk [vmem:[%s202 + $0x198] sm:$0xff] %vm4376, %v4256
      %4429 = vst.msk [vmem:[%s202 + $0x1a0] sm:$0xff] %vm4376, %v4261
      %4430 = vst.msk [vmem:[%s202 + $0x1a8] sm:$0xff] %vm4376, %v4264
      %4431 = vst.msk [vmem:[%s202 + $0x1b0] sm:$0xff] %vm4376, %v4269
      %4432 = vst.msk [vmem:[%s202 + $0x1b8] sm:$0xff] %vm4376, %v4272
      %4433 = vst.msk [vmem:[%s202 + $0x1c0] sm:$0xff] %vm4376, %v4346
      %4434 = vst.msk [vmem:[%s202 + $0x1c8] sm:$0xff] %vm4376, %v4349
      %4435 = vst.msk [vmem:[%s202 + $0x1d0] sm:$0xff] %vm4376, %v4354
      %4436 = vst.msk [vmem:[%s202 + $0x1d8] sm:$0xff] %vm4376, %v4357
      %4437 = vst.msk [vmem:[%s202 + $0x1e0] sm:$0xff] %vm4376, %v4362
      %4438 = vst.msk [vmem:[%s202 + $0x1e8] sm:$0xff] %vm4376, %v4365
      %4439 = vst.msk [vmem:[%s202 + $0x1f0] sm:$0xff] %vm4376, %v4370
      %4440 = vst.msk [vmem:[%s202 + $0x1f8] sm:$0xff] %vm4376, %v4373
      %s4441 = smul.u32 8, %s14
      %p4442 = scmp.lt.s32.totalorder %s4441, 15
      %s4443 = scalar_select %p4442, %s4441, 15
      %s4444 = smul.addr %s4443, 8
      %s4445 = smul.addr %s4444, 8
      %s4446 = scalar_lea.vmem %s3, %s4445
      // Predicated region
      $region33: #{_lambda_.13} parent=31 // pred_check
        %p4447 = pneg %p105
      $region34: #{_lambda_.13} parent=31 // pred_check_branch
        %4449 = sbr.rel (%p4447) target = $region36
      $region35: #{_lambda_.13} parent=31 // pred_region
        %s4450 = smul.u32 8, %s14
      $region36: #{_lambda_.13} parent=31 // pred_fallthru
        _
    $region32: #{_lambda_.13} parent=5 // pred_fallthru
      _
    %p4451 = scmp.le.s32.totalorder 2, %s9
    // Predicated region
    $region37: #{_lambda_.13} parent=5 // pred_check
      %p4452 = pneg %p4451
    $region38: #{_lambda_.13} parent=5 // pred_check_branch
      %4454 = sbr.rel (%p4452) target = $region40
    $region39: #{_lambda_.13} parent=5 // pred_region
      %s4455 = ssub.s32 %s9, 2
      // Predicated region
      $region41: #{_lambda_.13} parent=39 // pred_check
        %p4456 = pneg %p111
      $region42: #{_lambda_.13} parent=39 // pred_check_branch
        %4458 = sbr.rel (%p4456) target = $region44
      $region43: #{_lambda_.13} parent=39 // pred_region
        %s4459 = smul.u32 8, %s15
        %p4460 = scmp.lt.s32.totalorder %s4459, 15
        %s4461 = scalar_select %p4460, %s4459, 15
        %s4462 = smul.addr %s4461, 8
        %s4463 = smul.addr %s4462, 8
        %s4464 = scalar_lea.vmem %s3, %s4463
      $region44: #{_lambda_.13} parent=39 // pred_fallthru
        _
    $region40: #{_lambda_.13} parent=5 // pred_fallthru
      _
  $region6: #{_lambda_.13} parent=0 // loop_footer
    %s13 = sadd.s32 1, %s9
  $region7: #{_lambda_.13} parent=0 // loop_footer_branch
    %8 = sbr.rel target = $region3
  $region8: #{_lambda_.13} parent=0 // loop_exit
    _

</llo_original>
